<compile_context>
chip_gen: v7x
topology: tpu7x:2x2x1
jax: 0.10.0
libtpu: 0.0.40
codegen_flags: <defaults>
</compile_context>

<pallas_src>
import math

import numpy as np
import jax
import jax.numpy as jnp
from jax.experimental import pallas as pl
from jax.experimental.pallas import tpu as pltpu


# ----------------------------- Pallas kernel -------------------------------
def srgnn_kernel(
    feat_ref, a_in_ref, a_out_ref, aux_ref,
    w_feat_ref, b_feat_ref, w_ih_ref, b_ih_ref,
    wu_ref, wv_ref, bv_ref, we_ref,
    out_ref,
):
    f32 = jnp.float32
    bf16 = jnp.bfloat16
    G, N, D = feat_ref.shape

    feat = feat_ref[...]                          # (G, N, D) f32
    feat_flat = feat.reshape(G * N, D)            # (G*N, D)  f32 (exact GRU carry)
    feat_b = feat_flat.astype(bf16)               # MXU operand

    # ---- single fused feat-side matmul: [W_hh(r|z|n) | fc_in | fc_out] ----
    fo = jnp.dot(feat_b, w_feat_ref[...],
                 preferred_element_type=f32) + b_feat_ref[...]     # (G*N, 5D)
    gh = fo[:, :3 * D]                                             # GRU hidden gates
    feat_in = fo[:, 3 * D:4 * D].reshape(G, N, D)                  # fc_in(feat)
    feat_out = fo[:, 4 * D:].reshape(G, N, D)                      # fc_out(feat)

    # ---- mean aggregation (GGNN.propagate, num_steps = 1) -----------------
    # Adjacency is already degree-normalized in the wrapper; the per-graph
    # (N,N)@(N,D) mixing has K=N=8, far too small for the MXU, so it runs on
    # the VPU as an unrolled broadcast-MAC over source nodes (N is small).
    a_in_m = a_in_ref[...]      # (G, N, N) f32 : row-normalized adj^T
    a_out_m = a_out_ref[...]    # (G, N, N) f32 : row-normalized adj
    a_in = jnp.zeros((G, N, D), f32)
    a_out = jnp.zeros((G, N, D), f32)
    for j in range(N):          # static unroll
        a_in = a_in + a_in_m[:, :, j:j + 1] * feat_in[:, j:j + 1, :]
        a_out = a_out + a_out_m[:, :, j:j + 1] * feat_out[:, j:j + 1, :]
    a = jnp.concatenate([a_in, a_out], axis=-1).reshape(G * N, 2 * D)

    # ---- GRUCell(a, feat), PyTorch semantics, fused input-gate weights ----
    gi = jnp.dot(a.astype(bf16), w_ih_ref[...],
                 preferred_element_type=f32) + b_ih_ref[...]       # (G*N, 3D)
    r = jax.nn.sigmoid(gi[:, :D] + gh[:, :D])
    z = jax.nn.sigmoid(gi[:, D:2 * D] + gh[:, D:2 * D])
    n = jnp.tanh(gi[:, 2 * D:] + r * gh[:, 2 * D:])
    hn = (1.0 - z) * n + z * feat_flat                             # (G*N, D) f32

    # -------------------------- AttentionReadout ---------------------------
    hn_b = hn.astype(bf16)
    feat_u = jnp.dot(hn_b, wu_ref[...], preferred_element_type=f32)   # (G*N, D)
    hn3 = hn.reshape(G, N, D)

    aux = aux_ref[...]                       # (G, N, 2) = [cnt*mask | last]
    cntm = aux[:, :, 0:1]
    lastv = aux[:, :, 1:2]

    # ct_l = feat[last_nodes]  (one-hot select via VPU mul + XLU sublane reduce)
    ct_l = jnp.sum(hn3 * lastv, axis=1)                                # (G, D)
    feat_v = jnp.dot(ct_l.astype(bf16), wv_ref[...],
                     preferred_element_type=f32) + bv_ref[...]         # (G, D)
    sig = jax.nn.sigmoid(feat_u.reshape(G, N, D) + feat_v[:, None, :])
    # fc_e as elementwise mul + lane reduce (avoids a degenerate (D,1) MXU op).
    e = jnp.sum(sig * we_ref[...].reshape(1, 1, D), axis=-1, keepdims=True)
    alpha = e * cntm                                                   # (G, N, 1)
    ct_g = jnp.sum(hn3 * alpha, axis=1)                                # (G, D)

    out_ref[...] = jnp.concatenate([ct_g, ct_l], axis=1)              # (G, 2D)


# ----------------------------- Parameters -----------------------------------
PARAM_ORDER = [
    "w_in", "b_in", "w_out", "b_out",
    "wir", "wiz", "win", "whr", "whz", "whn",
    "bir", "biz", "bin", "bhr", "bhz", "bhn",
    "wu", "wv", "bv", "we",
]


def init_params(key, dim):
    h = dim
    shapes = {
        "w_in": (h, h), "b_in": (1, h), "w_out": (h, h), "b_out": (1, h),
        "wir": (2 * h, h), "wiz": (2 * h, h), "win": (2 * h, h),
        "whr": (h, h), "whz": (h, h), "whn": (h, h),
        "bir": (1, h), "biz": (1, h), "bin": (1, h),
        "bhr": (1, h), "bhz": (1, h), "bhn": (1, h),
        "wu": (h, h), "wv": (h, h), "bv": (1, h), "we": (h, 1),
    }
    keys = jax.random.split(key, len(PARAM_ORDER))
    bound = 1.0 / math.sqrt(h)
    return {
        name: jax.random.uniform(k, shapes[name], jnp.float32, -bound, bound)
        for k, name in zip(keys, PARAM_ORDER)
    }


def fuse_params(p):
    """Fuse weights into wide matmuls (call ONCE, outside the per-step jit path).

    MXU operands in bf16, biases f32.  Ordering of the fused feat-side weight is
    [W_hh(r,z,n) | fc_in | fc_out] so no kernel slice crosses a 128-lane boundary.
    """
    bf16 = jnp.bfloat16
    w_feat = jnp.concatenate(
        [p["whr"], p["whz"], p["whn"], p["w_in"], p["w_out"]], axis=1).astype(bf16)   # (D, 5D)
    b_feat = jnp.concatenate(
        [p["bhr"], p["bhz"], p["bhn"], p["b_in"], p["b_out"]], axis=1)                # (1, 5D)
    w_ih = jnp.concatenate([p["wir"], p["wiz"], p["win"]], axis=1).astype(bf16)       # (2D, 3D)
    b_ih = jnp.concatenate([p["bir"], p["biz"], p["bin"]], axis=1)                    # (1, 3D)
    wu = p["wu"].astype(bf16)
    wv = p["wv"].astype(bf16)
    bv = p["bv"]
    we = p["we"].reshape(1, -1).astype(jnp.float32)                                   # (1, D)
    return [w_feat, b_feat, w_ih, b_ih, wu, wv, bv, we]


# ----------------------------- Wrapper --------------------------------------
def srgnn_layer(feat, adj, mask, cnt, last, fused_params, *, graphs_per_block=128):
    B, N, D = feat.shape

    # Pick G: as large as possible (amortize per-step overhead, feed the MXU),
    # multiple of 8 (sublane rule on the (G, 2D) output block), grid >= 2 where
    # possible so both v7x TensorCores get work via "parallel" semantics.
    if B >= 16:
        G = max(8, min(graphs_per_block, (B // 2 // 8) * 8))
    else:
        G = B                       # single block; block dim == full array dim is legal
    num_blocks = pl.cdiv(B, G)
    B_pad = num_blocks * G

    feat = feat.astype(jnp.float32)
    adj = adj.astype(jnp.float32)

    if B_pad != B:
        pad = B_pad - B
        pad3 = lambda x: jnp.pad(x, ((0, pad), (0, 0), (0, 0)))
        feat, adj, mask, cnt, last = map(pad3, (feat, adj, mask, cnt, last))

    # Exact degree normalization, wrapper-side (removes in-kernel degree work and
    # the approximate-reciprocal error).
    in_deg = jnp.sum(adj, axis=1)                   # (B_pad, N): incoming degree
    out_deg = jnp.sum(adj, axis=2)                  # (B_pad, N): outgoing degree
    a_in_n = jnp.swapaxes(adj, 1, 2) / jnp.maximum(in_deg, 1.0)[:, :, None]
    a_out_n = adj / jnp.maximum(out_deg, 1.0)[:, :, None]

    # Fold mask into cnt and pack with the last-node one-hot: one (B, N, 2) stream.
    aux = jnp.concatenate(
        [cnt.astype(jnp.float32) * mask.astype(jnp.float32),
         last.astype(jnp.float32)], axis=-1)

    graph_specs = [
        pl.BlockSpec((G, N, D), lambda i: (i, 0, 0)),   # feat  (f32)
        pl.BlockSpec((G, N, N), lambda i: (i, 0, 0)),   # normalized adj^T
        pl.BlockSpec((G, N, N), lambda i: (i, 0, 0)),   # normalized adj
        pl.BlockSpec((G, N, 2), lambda i: (i, 0, 0)),   # [cnt*mask | last]
    ]
    param_specs = [pl.BlockSpec(p.shape, lambda i: (0, 0)) for p in fused_params]

    call = pl.pallas_call(
        srgnn_kernel,
        out_shape=jax.ShapeDtypeStruct((B_pad, 2 * D), jnp.float32),
        grid_spec=pltpu.PrefetchScalarGridSpec(
            num_scalar_prefetch=0,
            grid=(num_blocks,),
            in_specs=graph_specs + param_specs,
            out_specs=pl.BlockSpec((G, 2 * D), lambda i: (i, 0)),
            scratch_shapes=[],
        ),
        compiler_params=pltpu.CompilerParams(
            dimension_semantics=("parallel",),          # independent graph blocks
            vmem_limit_bytes=32 * 1024 * 1024,
        ),
    )
    sr = call(feat, a_in_n, a_out_n, aux, *fused_params)
    return sr[:B]


# ----------------------- Pure-JAX reference (per graph) ---------------------
def _ref_one(feat, adj, mask, cnt, last, p):
    hp = jax.lax.Precision.HIGHEST
    mm = lambda x, w: jnp.dot(x, w, precision=hp)
    feat_in = mm(feat, p["w_in"]) + p["b_in"]
    feat_out = mm(feat, p["w_out"]) + p["b_out"]
    in_deg = adj.sum(0)[:, None]
    out_deg = adj.sum(1)[:, None]
    a_in = mm(adj.T, feat_in) / jnp.maximum(in_deg, 1.0)
    a_out = mm(adj, feat_out) / jnp.maximum(out_deg, 1.0)
    a = jnp.concatenate([a_in, a_out], axis=1)
    r = jax.nn.sigmoid(mm(a, p["wir"]) + p["bir"] + mm(feat, p["whr"]) + p["bhr"])
    z = jax.nn.sigmoid(mm(a, p["wiz"]) + p["biz"] + mm(feat, p["whz"]) + p["bhz"])
    n = jnp.tanh(mm(a, p["win"]) + p["bin"] + r * (mm(feat, p["whn"]) + p["bhn"]))
    hn = (1.0 - z) * n + z * feat
    feat_u = mm(hn, p["wu"])
    ct_l = (last * hn).sum(0, keepdims=True)
    feat_v = mm(ct_l, p["wv"]) + p["bv"]
    e = mm(jax.nn.sigmoid(feat_u + feat_v), p["we"])
    alpha = e * cnt * mask
    ct_g = (hn * alpha).sum(0, keepdims=True)
    return jnp.concatenate([ct_g, ct_l], axis=1)[0]


# --------------------------------- Main --------------------------------------
if __name__ == "__main__":
    B, N, D = 64, 8, 32   # 64 session graphs, 8 padded nodes, embedding_dim=32
    key = jax.random.PRNGKey(0)
    k_feat, k_cnt, k_param = jax.random.split(key, 3)

    feat = jax.random.normal(k_feat, (B, N, D), jnp.float32)

    # Session graphs: chains over the valid nodes (+ a revisit edge on some).
    adj_np = np.zeros((B, N, N), np.float32)
    mask_np = np.zeros((B, N, 1), np.float32)
    last_np = np.zeros((B, N, 1), np.float32)
    for b in range(B):
        nv = 3 + (b % 6)                    # 3..8 valid nodes
        for i in range(nv - 1):
            adj_np[b, i, i + 1] = 1.0
        if b % 3 == 0 and nv >= 4:
            adj_np[b, nv - 2, 1] = 1.0      # revisit edge
        mask_np[b, :nv, 0] = 1.0
        last_np[b, nv - 1, 0] = 1.0
    adj = jnp.asarray(adj_np)
    mask = jnp.asarray(mask_np)
    last = jnp.asarray(last_np)
    cnt = jax.random.uniform(k_cnt, (B, N, 1), jnp.float32, 0.5, 1.5) * mask

    params = init_params(k_param, D)
    fused = fuse_params(params)             # fused/bf16-cast once, outside jit

    fwd = jax.jit(srgnn_layer)
    sr = jax.block_until_ready(fwd(feat, adj, mask, cnt, last, fused))
    assert sr.shape == (B, 2 * D)

    ref = jax.vmap(_ref_one, in_axes=(0, 0, 0, 0, 0, None))(
        feat, adj, mask, cnt, last, params)
    max_err = float(jnp.max(jnp.abs(sr - ref)))
    assert jnp.allclose(sr, ref, atol=3e-2, rtol=3e-2), (
        f"mismatch vs reference: max abs err = {max_err}")

    print("KERNEL_OK")
</pallas_src>

<mosaic_0001>
module attributes {stable_mosaic.version = 11 : i64} {
  func.func @srgnn_kernel(%arg0: i32, %arg1: memref<32x8x32xf32, #tpu.memory_space<vmem>>, %arg2: memref<32x8x8xf32, #tpu.memory_space<vmem>>, %arg3: memref<32x8x8xf32, #tpu.memory_space<vmem>>, %arg4: memref<32x8x2xf32, #tpu.memory_space<vmem>>, %arg5: memref<32x160xbf16, #tpu.memory_space<vmem>>, %arg6: memref<1x160xf32, #tpu.memory_space<vmem>>, %arg7: memref<64x96xbf16, #tpu.memory_space<vmem>>, %arg8: memref<1x96xf32, #tpu.memory_space<vmem>>, %arg9: memref<32x32xbf16, #tpu.memory_space<vmem>>, %arg10: memref<32x32xbf16, #tpu.memory_space<vmem>>, %arg11: memref<1x32xf32, #tpu.memory_space<vmem>>, %arg12: memref<1x32xf32, #tpu.memory_space<vmem>>, %arg13: memref<32x64xf32, #tpu.memory_space<vmem>>) attributes {dimension_semantics = [#tpu.dimension_semantics<parallel>], iteration_bounds = array<i64: 2>, scalar_prefetch = 0 : i64, scratch_operands = 0 : i64, tpu.core_type = #tpu.core_type<tc>, window_params = [{transform_indices = @transform_0, window_bounds = array<i64: 32, 8, 32>}, {transform_indices = @transform_1, window_bounds = array<i64: 32, 8, 8>}, {transform_indices = @transform_2, window_bounds = array<i64: 32, 8, 8>}, {transform_indices = @transform_3, window_bounds = array<i64: 32, 8, 2>}, {pipeline_mode = #tpu.pipeline_mode<synchronous>, transform_indices = @transform_4, window_bounds = array<i64: 32, 160>}, {pipeline_mode = #tpu.pipeline_mode<synchronous>, transform_indices = @transform_5, window_bounds = array<i64: 1, 160>}, {pipeline_mode = #tpu.pipeline_mode<synchronous>, transform_indices = @transform_6, window_bounds = array<i64: 64, 96>}, {pipeline_mode = #tpu.pipeline_mode<synchronous>, transform_indices = @transform_7, window_bounds = array<i64: 1, 96>}, {pipeline_mode = #tpu.pipeline_mode<synchronous>, transform_indices = @transform_8, window_bounds = array<i64: 32, 32>}, {pipeline_mode = #tpu.pipeline_mode<synchronous>, transform_indices = @transform_9, window_bounds = array<i64: 32, 32>}, {pipeline_mode = #tpu.pipeline_mode<synchronous>, transform_indices = @transform_10, window_bounds = array<i64: 1, 32>}, {pipeline_mode = #tpu.pipeline_mode<synchronous>, transform_indices = @transform_11, window_bounds = array<i64: 1, 32>}, {transform_indices = @transform_12, window_bounds = array<i64: 32, 64>}]} {
    %c0 = arith.constant 0 : index
    %c0_0 = arith.constant 0 : index
    %c0_1 = arith.constant 0 : index
    %0 = vector.load %arg1[%c0, %c0_0, %c0_1] : memref<32x8x32xf32, #tpu.memory_space<vmem>>, vector<32x8x32xf32>
    %1 = vector.shape_cast %0 : vector<32x8x32xf32> to vector<256x32xf32>
    %2 = arith.truncf %1 : vector<256x32xf32> to vector<256x32xbf16>
    %c0_2 = arith.constant 0 : index
    %c0_3 = arith.constant 0 : index
    %3 = vector.load %arg5[%c0_2, %c0_3] : memref<32x160xbf16, #tpu.memory_space<vmem>>, vector<32x160xbf16>
    %cst = arith.constant dense<0.000000e+00> : vector<256x160xf32>
    %4 = tpu.matmul %2, %3, %cst {dimension_numbers = #tpu.dot_dimension_numbers<[1], [0], [0], [1], [0, 0, 1, 1], [], []>} : vector<256x32xbf16>, vector<32x160xbf16>, vector<256x160xf32> -> vector<256x160xf32>
    %c0_4 = arith.constant 0 : index
    %c0_5 = arith.constant 0 : index
    %5 = vector.load %arg6[%c0_4, %c0_5] : memref<1x160xf32, #tpu.memory_space<vmem>>, vector<1x160xf32>
    %6 = vector.broadcast %5 : vector<1x160xf32> to vector<256x160xf32>
    %7 = arith.addf %4, %6 : vector<256x160xf32>
    %8 = vector.extract_strided_slice %7 {offsets = [0, 0], sizes = [256, 96], strides = [1, 1]} : vector<256x160xf32> to vector<256x96xf32>
    %9 = vector.extract_strided_slice %7 {offsets = [0, 96], sizes = [256, 32], strides = [1, 1]} : vector<256x160xf32> to vector<256x32xf32>
    %10 = vector.shape_cast %9 : vector<256x32xf32> to vector<32x8x32xf32>
    %11 = vector.extract_strided_slice %7 {offsets = [0, 128], sizes = [256, 32], strides = [1, 1]} : vector<256x160xf32> to vector<256x32xf32>
    %12 = vector.shape_cast %11 : vector<256x32xf32> to vector<32x8x32xf32>
    %c0_6 = arith.constant 0 : index
    %c0_7 = arith.constant 0 : index
    %c0_8 = arith.constant 0 : index
    %13 = vector.load %arg2[%c0_6, %c0_7, %c0_8] : memref<32x8x8xf32, #tpu.memory_space<vmem>>, vector<32x8x8xf32>
    %c0_9 = arith.constant 0 : index
    %c0_10 = arith.constant 0 : index
    %c0_11 = arith.constant 0 : index
    %14 = vector.load %arg3[%c0_9, %c0_10, %c0_11] : memref<32x8x8xf32, #tpu.memory_space<vmem>>, vector<32x8x8xf32>
    %cst_12 = arith.constant 0.000000e+00 : f32
    %15 = vector.broadcast %cst_12 : f32 to vector<32x8x32xf32>
    %cst_13 = arith.constant 0.000000e+00 : f32
    %16 = vector.broadcast %cst_13 : f32 to vector<32x8x32xf32>
    %17 = vector.extract_strided_slice %13 {offsets = [0, 0, 0], sizes = [32, 8, 1], strides = [1, 1, 1]} : vector<32x8x8xf32> to vector<32x8x1xf32>
    %18 = vector.extract_strided_slice %10 {offsets = [0, 0, 0], sizes = [32, 1, 32], strides = [1, 1, 1]} : vector<32x8x32xf32> to vector<32x1x32xf32>
    %19 = vector.broadcast %17 : vector<32x8x1xf32> to vector<32x8x32xf32>
    %20 = vector.broadcast %18 : vector<32x1x32xf32> to vector<32x8x32xf32>
    %21 = arith.mulf %19, %20 : vector<32x8x32xf32>
    %22 = arith.addf %15, %21 : vector<32x8x32xf32>
    %23 = vector.extract_strided_slice %14 {offsets = [0, 0, 0], sizes = [32, 8, 1], strides = [1, 1, 1]} : vector<32x8x8xf32> to vector<32x8x1xf32>
    %24 = vector.extract_strided_slice %12 {offsets = [0, 0, 0], sizes = [32, 1, 32], strides = [1, 1, 1]} : vector<32x8x32xf32> to vector<32x1x32xf32>
    %25 = vector.broadcast %23 : vector<32x8x1xf32> to vector<32x8x32xf32>
    %26 = vector.broadcast %24 : vector<32x1x32xf32> to vector<32x8x32xf32>
    %27 = arith.mulf %25, %26 : vector<32x8x32xf32>
    %28 = arith.addf %16, %27 : vector<32x8x32xf32>
    %29 = vector.extract_strided_slice %13 {offsets = [0, 0, 1], sizes = [32, 8, 1], strides = [1, 1, 1]} : vector<32x8x8xf32> to vector<32x8x1xf32>
    %30 = vector.extract_strided_slice %10 {offsets = [0, 1, 0], sizes = [32, 1, 32], strides = [1, 1, 1]} : vector<32x8x32xf32> to vector<32x1x32xf32>
    %31 = vector.broadcast %29 : vector<32x8x1xf32> to vector<32x8x32xf32>
    %32 = vector.broadcast %30 : vector<32x1x32xf32> to vector<32x8x32xf32>
    %33 = arith.mulf %31, %32 : vector<32x8x32xf32>
    %34 = arith.addf %22, %33 : vector<32x8x32xf32>
    %35 = vector.extract_strided_slice %14 {offsets = [0, 0, 1], sizes = [32, 8, 1], strides = [1, 1, 1]} : vector<32x8x8xf32> to vector<32x8x1xf32>
    %36 = vector.extract_strided_slice %12 {offsets = [0, 1, 0], sizes = [32, 1, 32], strides = [1, 1, 1]} : vector<32x8x32xf32> to vector<32x1x32xf32>
    %37 = vector.broadcast %35 : vector<32x8x1xf32> to vector<32x8x32xf32>
    %38 = vector.broadcast %36 : vector<32x1x32xf32> to vector<32x8x32xf32>
    %39 = arith.mulf %37, %38 : vector<32x8x32xf32>
    %40 = arith.addf %28, %39 : vector<32x8x32xf32>
    %41 = vector.extract_strided_slice %13 {offsets = [0, 0, 2], sizes = [32, 8, 1], strides = [1, 1, 1]} : vector<32x8x8xf32> to vector<32x8x1xf32>
    %42 = vector.extract_strided_slice %10 {offsets = [0, 2, 0], sizes = [32, 1, 32], strides = [1, 1, 1]} : vector<32x8x32xf32> to vector<32x1x32xf32>
    %43 = vector.broadcast %41 : vector<32x8x1xf32> to vector<32x8x32xf32>
    %44 = vector.broadcast %42 : vector<32x1x32xf32> to vector<32x8x32xf32>
    %45 = arith.mulf %43, %44 : vector<32x8x32xf32>
    %46 = arith.addf %34, %45 : vector<32x8x32xf32>
    %47 = vector.extract_strided_slice %14 {offsets = [0, 0, 2], sizes = [32, 8, 1], strides = [1, 1, 1]} : vector<32x8x8xf32> to vector<32x8x1xf32>
    %48 = vector.extract_strided_slice %12 {offsets = [0, 2, 0], sizes = [32, 1, 32], strides = [1, 1, 1]} : vector<32x8x32xf32> to vector<32x1x32xf32>
    %49 = vector.broadcast %47 : vector<32x8x1xf32> to vector<32x8x32xf32>
    %50 = vector.broadcast %48 : vector<32x1x32xf32> to vector<32x8x32xf32>
    %51 = arith.mulf %49, %50 : vector<32x8x32xf32>
    %52 = arith.addf %40, %51 : vector<32x8x32xf32>
    %53 = vector.extract_strided_slice %13 {offsets = [0, 0, 3], sizes = [32, 8, 1], strides = [1, 1, 1]} : vector<32x8x8xf32> to vector<32x8x1xf32>
    %54 = vector.extract_strided_slice %10 {offsets = [0, 3, 0], sizes = [32, 1, 32], strides = [1, 1, 1]} : vector<32x8x32xf32> to vector<32x1x32xf32>
    %55 = vector.broadcast %53 : vector<32x8x1xf32> to vector<32x8x32xf32>
    %56 = vector.broadcast %54 : vector<32x1x32xf32> to vector<32x8x32xf32>
    %57 = arith.mulf %55, %56 : vector<32x8x32xf32>
    %58 = arith.addf %46, %57 : vector<32x8x32xf32>
    %59 = vector.extract_strided_slice %14 {offsets = [0, 0, 3], sizes = [32, 8, 1], strides = [1, 1, 1]} : vector<32x8x8xf32> to vector<32x8x1xf32>
    %60 = vector.extract_strided_slice %12 {offsets = [0, 3, 0], sizes = [32, 1, 32], strides = [1, 1, 1]} : vector<32x8x32xf32> to vector<32x1x32xf32>
    %61 = vector.broadcast %59 : vector<32x8x1xf32> to vector<32x8x32xf32>
    %62 = vector.broadcast %60 : vector<32x1x32xf32> to vector<32x8x32xf32>
    %63 = arith.mulf %61, %62 : vector<32x8x32xf32>
    %64 = arith.addf %52, %63 : vector<32x8x32xf32>
    %65 = vector.extract_strided_slice %13 {offsets = [0, 0, 4], sizes = [32, 8, 1], strides = [1, 1, 1]} : vector<32x8x8xf32> to vector<32x8x1xf32>
    %66 = vector.extract_strided_slice %10 {offsets = [0, 4, 0], sizes = [32, 1, 32], strides = [1, 1, 1]} : vector<32x8x32xf32> to vector<32x1x32xf32>
    %67 = vector.broadcast %65 : vector<32x8x1xf32> to vector<32x8x32xf32>
    %68 = vector.broadcast %66 : vector<32x1x32xf32> to vector<32x8x32xf32>
    %69 = arith.mulf %67, %68 : vector<32x8x32xf32>
    %70 = arith.addf %58, %69 : vector<32x8x32xf32>
    %71 = vector.extract_strided_slice %14 {offsets = [0, 0, 4], sizes = [32, 8, 1], strides = [1, 1, 1]} : vector<32x8x8xf32> to vector<32x8x1xf32>
    %72 = vector.extract_strided_slice %12 {offsets = [0, 4, 0], sizes = [32, 1, 32], strides = [1, 1, 1]} : vector<32x8x32xf32> to vector<32x1x32xf32>
    %73 = vector.broadcast %71 : vector<32x8x1xf32> to vector<32x8x32xf32>
    %74 = vector.broadcast %72 : vector<32x1x32xf32> to vector<32x8x32xf32>
    %75 = arith.mulf %73, %74 : vector<32x8x32xf32>
    %76 = arith.addf %64, %75 : vector<32x8x32xf32>
    %77 = vector.extract_strided_slice %13 {offsets = [0, 0, 5], sizes = [32, 8, 1], strides = [1, 1, 1]} : vector<32x8x8xf32> to vector<32x8x1xf32>
    %78 = vector.extract_strided_slice %10 {offsets = [0, 5, 0], sizes = [32, 1, 32], strides = [1, 1, 1]} : vector<32x8x32xf32> to vector<32x1x32xf32>
    %79 = vector.broadcast %77 : vector<32x8x1xf32> to vector<32x8x32xf32>
    %80 = vector.broadcast %78 : vector<32x1x32xf32> to vector<32x8x32xf32>
    %81 = arith.mulf %79, %80 : vector<32x8x32xf32>
    %82 = arith.addf %70, %81 : vector<32x8x32xf32>
    %83 = vector.extract_strided_slice %14 {offsets = [0, 0, 5], sizes = [32, 8, 1], strides = [1, 1, 1]} : vector<32x8x8xf32> to vector<32x8x1xf32>
    %84 = vector.extract_strided_slice %12 {offsets = [0, 5, 0], sizes = [32, 1, 32], strides = [1, 1, 1]} : vector<32x8x32xf32> to vector<32x1x32xf32>
    %85 = vector.broadcast %83 : vector<32x8x1xf32> to vector<32x8x32xf32>
    %86 = vector.broadcast %84 : vector<32x1x32xf32> to vector<32x8x32xf32>
    %87 = arith.mulf %85, %86 : vector<32x8x32xf32>
    %88 = arith.addf %76, %87 : vector<32x8x32xf32>
    %89 = vector.extract_strided_slice %13 {offsets = [0, 0, 6], sizes = [32, 8, 1], strides = [1, 1, 1]} : vector<32x8x8xf32> to vector<32x8x1xf32>
    %90 = vector.extract_strided_slice %10 {offsets = [0, 6, 0], sizes = [32, 1, 32], strides = [1, 1, 1]} : vector<32x8x32xf32> to vector<32x1x32xf32>
    %91 = vector.broadcast %89 : vector<32x8x1xf32> to vector<32x8x32xf32>
    %92 = vector.broadcast %90 : vector<32x1x32xf32> to vector<32x8x32xf32>
    %93 = arith.mulf %91, %92 : vector<32x8x32xf32>
    %94 = arith.addf %82, %93 : vector<32x8x32xf32>
    %95 = vector.extract_strided_slice %14 {offsets = [0, 0, 6], sizes = [32, 8, 1], strides = [1, 1, 1]} : vector<32x8x8xf32> to vector<32x8x1xf32>
    %96 = vector.extract_strided_slice %12 {offsets = [0, 6, 0], sizes = [32, 1, 32], strides = [1, 1, 1]} : vector<32x8x32xf32> to vector<32x1x32xf32>
    %97 = vector.broadcast %95 : vector<32x8x1xf32> to vector<32x8x32xf32>
    %98 = vector.broadcast %96 : vector<32x1x32xf32> to vector<32x8x32xf32>
    %99 = arith.mulf %97, %98 : vector<32x8x32xf32>
    %100 = arith.addf %88, %99 : vector<32x8x32xf32>
    %101 = vector.extract_strided_slice %13 {offsets = [0, 0, 7], sizes = [32, 8, 1], strides = [1, 1, 1]} : vector<32x8x8xf32> to vector<32x8x1xf32>
    %102 = vector.extract_strided_slice %10 {offsets = [0, 7, 0], sizes = [32, 1, 32], strides = [1, 1, 1]} : vector<32x8x32xf32> to vector<32x1x32xf32>
    %103 = vector.broadcast %101 : vector<32x8x1xf32> to vector<32x8x32xf32>
    %104 = vector.broadcast %102 : vector<32x1x32xf32> to vector<32x8x32xf32>
    %105 = arith.mulf %103, %104 : vector<32x8x32xf32>
    %106 = arith.addf %94, %105 : vector<32x8x32xf32>
    %107 = vector.extract_strided_slice %14 {offsets = [0, 0, 7], sizes = [32, 8, 1], strides = [1, 1, 1]} : vector<32x8x8xf32> to vector<32x8x1xf32>
    %108 = vector.extract_strided_slice %12 {offsets = [0, 7, 0], sizes = [32, 1, 32], strides = [1, 1, 1]} : vector<32x8x32xf32> to vector<32x1x32xf32>
    %109 = vector.broadcast %107 : vector<32x8x1xf32> to vector<32x8x32xf32>
    %110 = vector.broadcast %108 : vector<32x1x32xf32> to vector<32x8x32xf32>
    %111 = arith.mulf %109, %110 : vector<32x8x32xf32>
    %112 = arith.addf %100, %111 : vector<32x8x32xf32>
    %113 = tpu.concatenate %106, %112 in 2 : vector<32x8x32xf32>, vector<32x8x32xf32> -> vector<32x8x64xf32>
    %114 = vector.shape_cast %113 : vector<32x8x64xf32> to vector<256x64xf32>
    %115 = arith.truncf %114 : vector<256x64xf32> to vector<256x64xbf16>
    %c0_14 = arith.constant 0 : index
    %c0_15 = arith.constant 0 : index
    %116 = vector.load %arg7[%c0_14, %c0_15] : memref<64x96xbf16, #tpu.memory_space<vmem>>, vector<64x96xbf16>
    %cst_16 = arith.constant dense<0.000000e+00> : vector<256x96xf32>
    %117 = tpu.matmul %115, %116, %cst_16 {dimension_numbers = #tpu.dot_dimension_numbers<[1], [0], [0], [1], [0, 0, 1, 1], [], []>} : vector<256x64xbf16>, vector<64x96xbf16>, vector<256x96xf32> -> vector<256x96xf32>
    %c0_17 = arith.constant 0 : index
    %c0_18 = arith.constant 0 : index
    %118 = vector.load %arg8[%c0_17, %c0_18] : memref<1x96xf32, #tpu.memory_space<vmem>>, vector<1x96xf32>
    %119 = vector.broadcast %118 : vector<1x96xf32> to vector<256x96xf32>
    %120 = arith.addf %117, %119 : vector<256x96xf32>
    %121 = vector.extract_strided_slice %120 {offsets = [0, 0], sizes = [256, 32], strides = [1, 1]} : vector<256x96xf32> to vector<256x32xf32>
    %122 = vector.extract_strided_slice %8 {offsets = [0, 0], sizes = [256, 32], strides = [1, 1]} : vector<256x96xf32> to vector<256x32xf32>
    %123 = arith.addf %121, %122 : vector<256x32xf32>
    %124 = arith.negf %123 : vector<256x32xf32>
    %125 = math.exp %124 : vector<256x32xf32>
    %cst_19 = arith.constant 1.000000e+00 : f32
    %126 = vector.broadcast %cst_19 : f32 to vector<256x32xf32>
    %127 = arith.addf %126, %125 : vector<256x32xf32>
    %128 = arith.divf %126, %127 : vector<256x32xf32>
    %129 = vector.extract_strided_slice %120 {offsets = [0, 32], sizes = [256, 32], strides = [1, 1]} : vector<256x96xf32> to vector<256x32xf32>
    %130 = vector.extract_strided_slice %8 {offsets = [0, 32], sizes = [256, 32], strides = [1, 1]} : vector<256x96xf32> to vector<256x32xf32>
    %131 = arith.addf %129, %130 : vector<256x32xf32>
    %132 = arith.negf %131 : vector<256x32xf32>
    %133 = math.exp %132 : vector<256x32xf32>
    %cst_20 = arith.constant 1.000000e+00 : f32
    %134 = vector.broadcast %cst_20 : f32 to vector<256x32xf32>
    %135 = arith.addf %134, %133 : vector<256x32xf32>
    %136 = arith.divf %134, %135 : vector<256x32xf32>
    %137 = vector.extract_strided_slice %120 {offsets = [0, 64], sizes = [256, 32], strides = [1, 1]} : vector<256x96xf32> to vector<256x32xf32>
    %138 = vector.extract_strided_slice %8 {offsets = [0, 64], sizes = [256, 32], strides = [1, 1]} : vector<256x96xf32> to vector<256x32xf32>
    %139 = arith.mulf %128, %138 : vector<256x32xf32>
    %140 = arith.addf %137, %139 : vector<256x32xf32>
    %141 = math.tanh %140 : vector<256x32xf32>
    %cst_21 = arith.constant 1.000000e+00 : f32
    %142 = vector.broadcast %cst_21 : f32 to vector<256x32xf32>
    %143 = arith.subf %142, %136 : vector<256x32xf32>
    %144 = arith.mulf %143, %141 : vector<256x32xf32>
    %145 = arith.mulf %136, %1 : vector<256x32xf32>
    %146 = arith.addf %144, %145 : vector<256x32xf32>
    %147 = arith.truncf %146 : vector<256x32xf32> to vector<256x32xbf16>
    %c0_22 = arith.constant 0 : index
    %c0_23 = arith.constant 0 : index
    %148 = vector.load %arg9[%c0_22, %c0_23] : memref<32x32xbf16, #tpu.memory_space<vmem>>, vector<32x32xbf16>
    %cst_24 = arith.constant dense<0.000000e+00> : vector<256x32xf32>
    %149 = tpu.matmul %147, %148, %cst_24 {dimension_numbers = #tpu.dot_dimension_numbers<[1], [0], [0], [1], [0, 0, 1, 1], [], []>} : vector<256x32xbf16>, vector<32x32xbf16>, vector<256x32xf32> -> vector<256x32xf32>
    %150 = vector.shape_cast %146 : vector<256x32xf32> to vector<32x8x32xf32>
    %c0_25 = arith.constant 0 : index
    %c0_26 = arith.constant 0 : index
    %c0_27 = arith.constant 0 : index
    %151 = vector.load %arg4[%c0_25, %c0_26, %c0_27] : memref<32x8x2xf32, #tpu.memory_space<vmem>>, vector<32x8x2xf32>
    %152 = vector.extract_strided_slice %151 {offsets = [0, 0, 0], sizes = [32, 8, 1], strides = [1, 1, 1]} : vector<32x8x2xf32> to vector<32x8x1xf32>
    %153 = vector.extract_strided_slice %151 {offsets = [0, 0, 1], sizes = [32, 8, 1], strides = [1, 1, 1]} : vector<32x8x2xf32> to vector<32x8x1xf32>
    %154 = vector.broadcast %153 : vector<32x8x1xf32> to vector<32x8x32xf32>
    %155 = arith.mulf %150, %154 : vector<32x8x32xf32>
    %cst_28 = arith.constant dense<0.000000e+00> : vector<32x32xf32>
    %156 = vector.multi_reduction <add>, %155, %cst_28 [1] : vector<32x8x32xf32> to vector<32x32xf32>
    %157 = arith.truncf %156 : vector<32x32xf32> to vector<32x32xbf16>
    %c0_29 = arith.constant 0 : index
    %c0_30 = arith.constant 0 : index
    %158 = vector.load %arg10[%c0_29, %c0_30] : memref<32x32xbf16, #tpu.memory_space<vmem>>, vector<32x32xbf16>
    %cst_31 = arith.constant dense<0.000000e+00> : vector<32x32xf32>
    %159 = tpu.matmul %157, %158, %cst_31 {dimension_numbers = #tpu.dot_dimension_numbers<[1], [0], [0], [1], [0, 0, 1, 1], [], []>} : vector<32x32xbf16>, vector<32x32xbf16>, vector<32x32xf32> -> vector<32x32xf32>
    %c0_32 = arith.constant 0 : index
    %c0_33 = arith.constant 0 : index
    %160 = vector.load %arg11[%c0_32, %c0_33] : memref<1x32xf32, #tpu.memory_space<vmem>>, vector<1x32xf32>
    %161 = vector.broadcast %160 : vector<1x32xf32> to vector<32x32xf32>
    %162 = arith.addf %159, %161 : vector<32x32xf32>
    %163 = vector.shape_cast %149 : vector<256x32xf32> to vector<32x8x32xf32>
    %164 = vector.shape_cast %162 : vector<32x32xf32> to vector<32x1x32xf32>
    %165 = vector.broadcast %164 : vector<32x1x32xf32> to vector<32x8x32xf32>
    %166 = arith.addf %163, %165 : vector<32x8x32xf32>
    %167 = arith.negf %166 : vector<32x8x32xf32>
    %168 = math.exp %167 : vector<32x8x32xf32>
    %cst_34 = arith.constant 1.000000e+00 : f32
    %169 = vector.broadcast %cst_34 : f32 to vector<32x8x32xf32>
    %170 = arith.addf %169, %168 : vector<32x8x32xf32>
    %171 = arith.divf %169, %170 : vector<32x8x32xf32>
    %c0_35 = arith.constant 0 : index
    %c0_36 = arith.constant 0 : index
    %172 = vector.load %arg12[%c0_35, %c0_36] : memref<1x32xf32, #tpu.memory_space<vmem>>, vector<1x32xf32>
    %173 = vector.shape_cast %172 : vector<1x32xf32> to vector<1x1x32xf32>
    %174 = vector.broadcast %173 : vector<1x1x32xf32> to vector<32x8x32xf32>
    %175 = arith.mulf %171, %174 : vector<32x8x32xf32>
    %cst_37 = arith.constant dense<0.000000e+00> : vector<32x8xf32>
    %176 = vector.multi_reduction <add>, %175, %cst_37 [2] : vector<32x8x32xf32> to vector<32x8xf32>
    %177 = vector.shape_cast %176 : vector<32x8xf32> to vector<32x8x1xf32>
    %178 = arith.mulf %177, %152 : vector<32x8x1xf32>
    %179 = vector.broadcast %178 : vector<32x8x1xf32> to vector<32x8x32xf32>
    %180 = arith.mulf %150, %179 : vector<32x8x32xf32>
    %cst_38 = arith.constant dense<0.000000e+00> : vector<32x32xf32>
    %181 = vector.multi_reduction <add>, %180, %cst_38 [1] : vector<32x8x32xf32> to vector<32x32xf32>
    %182 = tpu.concatenate %181, %156 in 1 : vector<32x32xf32>, vector<32x32xf32> -> vector<32x64xf32>
    %c0_39 = arith.constant 0 : index
    %c0_40 = arith.constant 0 : index
    %183 = vector.load %arg13[%c0_39, %c0_40] : memref<32x64xf32, #tpu.memory_space<vmem>>, vector<32x64xf32>
    tpu.vector_store %arg13[%c0_39, %c0_40], %182 {strides = array<i32>} : memref<32x64xf32, #tpu.memory_space<vmem>>, vector<32x64xf32>,
    return
  }
  func.func @transform_0(%arg0: i32) -> (i32, i32, i32) {
    %c0_i32 = arith.constant 0 : i32
    %c0_i32_0 = arith.constant 0 : i32
    %c0_i32_1 = arith.constant 0 : i32
    return %arg0, %c0_i32, %c0_i32_0 : i32, i32, i32
  }
  func.func @transform_1(%arg0: i32) -> (i32, i32, i32) {
    %c0_i32 = arith.constant 0 : i32
    %c0_i32_0 = arith.constant 0 : i32
    %c0_i32_1 = arith.constant 0 : i32
    return %arg0, %c0_i32, %c0_i32_0 : i32, i32, i32
  }
  func.func @transform_2(%arg0: i32) -> (i32, i32, i32) {
    %c0_i32 = arith.constant 0 : i32
    %c0_i32_0 = arith.constant 0 : i32
    %c0_i32_1 = arith.constant 0 : i32
    return %arg0, %c0_i32, %c0_i32_0 : i32, i32, i32
  }
  func.func @transform_3(%arg0: i32) -> (i32, i32, i32) {
    %c0_i32 = arith.constant 0 : i32
    %c0_i32_0 = arith.constant 0 : i32
    %c0_i32_1 = arith.constant 0 : i32
    return %arg0, %c0_i32, %c0_i32_0 : i32, i32, i32
  }
  func.func @transform_4(%arg0: i32) -> (i32, i32) {
    %c0_i32 = arith.constant 0 : i32
    %c0_i32_0 = arith.constant 0 : i32
    %c0_i32_1 = arith.constant 0 : i32
    return %c0_i32, %c0_i32_0 : i32, i32
  }
  func.func @transform_5(%arg0: i32) -> (i32, i32) {
    %c0_i32 = arith.constant 0 : i32
    %c0_i32_0 = arith.constant 0 : i32
    %c0_i32_1 = arith.constant 0 : i32
    return %c0_i32, %c0_i32_0 : i32, i32
  }
  func.func @transform_6(%arg0: i32) -> (i32, i32) {
    %c0_i32 = arith.constant 0 : i32
    %c0_i32_0 = arith.constant 0 : i32
    %c0_i32_1 = arith.constant 0 : i32
    return %c0_i32, %c0_i32_0 : i32, i32
  }
  func.func @transform_7(%arg0: i32) -> (i32, i32) {
    %c0_i32 = arith.constant 0 : i32
    %c0_i32_0 = arith.constant 0 : i32
    %c0_i32_1 = arith.constant 0 : i32
    return %c0_i32, %c0_i32_0 : i32, i32
  }
  func.func @transform_8(%arg0: i32) -> (i32, i32) {
    %c0_i32 = arith.constant 0 : i32
    %c0_i32_0 = arith.constant 0 : i32
    %c0_i32_1 = arith.constant 0 : i32
    return %c0_i32, %c0_i32_0 : i32, i32
  }
  func.func @transform_9(%arg0: i32) -> (i32, i32) {
    %c0_i32 = arith.constant 0 : i32
    %c0_i32_0 = arith.constant 0 : i32
    %c0_i32_1 = arith.constant 0 : i32
    return %c0_i32, %c0_i32_0 : i32, i32
  }
  func.func @transform_10(%arg0: i32) -> (i32, i32) {
    %c0_i32 = arith.constant 0 : i32
    %c0_i32_0 = arith.constant 0 : i32
    %c0_i32_1 = arith.constant 0 : i32
    return %c0_i32, %c0_i32_0 : i32, i32
  }
  func.func @transform_11(%arg0: i32) -> (i32, i32) {
    %c0_i32 = arith.constant 0 : i32
    %c0_i32_0 = arith.constant 0 : i32
    %c0_i32_1 = arith.constant 0 : i32
    return %c0_i32, %c0_i32_0 : i32, i32
  }
  func.func @transform_12(%arg0: i32) -> (i32, i32) {
    %c0_i32 = arith.constant 0 : i32
    %c0_i32_0 = arith.constant 0 : i32
    return %arg0, %c0_i32 : i32, i32
  }
}

</mosaic_0001>

<llo_original>
// kernel: mul.1
$region0: #{mul.1}
  #allocation0 [shape = 's32[1]{0}', space=sflag, size = 0x4, scoped, tag = 'scoped memory for mul.1']
  %s0 = inlined_call_operand.vmem [shape: f32[64,8,1], index: 0, kind: input, shape index: {}]
  %s1 = inlined_call_operand.vmem [shape: f32[64,8,1], index: 1, kind: input, shape index: {}]
  %s2 = inlined_call_operand.vmem [shape: f32[64,8,1], index: 2, kind: output, shape index: {}]
  %v3 = vld [vmem:[%s0] sm:$0xff]
  %v4 = vld [vmem:[%s1] sm:$0xff]
  %5 = xla_tuple %v3, %v4
  %6 = xla_tuple %5
  %v7 = vmul.f32 %v3, %v4
  %8 = xla_tuple %v7
  %9 = vst [vmem:[%s2] sm:$0xff] %v7

// kernel: srgnn_layer.1
$region0: #{srgnn_layer.1}
  #allocation0 [shape = 'u32[]', space=smem, size = 0x4, offset = 0x4, fixed_abs, tag = 'smem constant byte address 0x4 - core index']
  #allocation1 [shape = 'u32[144,128]{1,0:T(1,128)}', space=vmem, size = 0x12000, scoped, tag = 'internal scratch']
  %s0 = inlined_call_operand.vmem [shape: f32[64,8,32], index: 0, kind: input, shape index: {}]
  %s1 = inlined_call_operand.vmem [shape: f32[64,8,8], index: 1, kind: input, shape index: {}]
  %s2 = inlined_call_operand.vmem [shape: f32[64,8,8], index: 2, kind: input, shape index: {}]
  %s3 = inlined_call_operand.vmem [shape: f32[64,8,2], index: 3, kind: input, shape index: {}]
  %s4 = inlined_call_operand.vmem [shape: bf16[32,160], index: 4, kind: input, shape index: {}]
  %s5 = inlined_call_operand.vmem [shape: f32[1,160], index: 5, kind: input, shape index: {}]
  %s6 = inlined_call_operand.vmem [shape: bf16[64,96], index: 6, kind: input, shape index: {}]
  %s7 = inlined_call_operand.vmem [shape: f32[1,96], index: 7, kind: input, shape index: {}]
  %s8 = inlined_call_operand.vmem [shape: bf16[32,32], index: 8, kind: input, shape index: {}]
  %s9 = inlined_call_operand.vmem [shape: bf16[32,32], index: 9, kind: input, shape index: {}]
  %s10 = inlined_call_operand.vmem [shape: f32[1,32], index: 10, kind: input, shape index: {}]
  %s11 = inlined_call_operand.vmem [shape: f32[1,32], index: 11, kind: input, shape index: {}]
  %s12 = inlined_call_operand.hbm [shape: f32[64,64], index: 12, kind: output, shape index: {}]
  %s13 = sld [smem:[#allocation0]]
  $region81: #{srgnn_layer.1} parent=0
    _
  %s15 = ssub.s32 1, %s13
  %s16 = scalar_select 0, %s15, %s13
  $region1: #{srgnn_layer.1} parent=0
    #allocation2 [shape = 'u8[32768]{0}', space=vmem, size = 0x8000, scoped, tag = 'output window, operand 0']
    #allocation3 [shape = 's32[2]{0}', space=sflag, size = 0x8, scoped, tag = 'scoped memory for srgnn_layer.1']
    %17 = vsyncpa [#allocation3], 0
    %s18 = scalar_lea.sflag [#allocation3], 1
    %19 = vsyncpa %s18, 0
    loop: start=0, step=1, limit=4
    $region2: #{srgnn_layer.1} parent=1 // loop_pre_header
      _
    $region3: #{srgnn_layer.1} parent=1 // loop_header
      %s21 = sphi 0, %s25
      %p22 = scmp.ge.s32.totalorder %s21, 4
      %s31 = sphi 0, %s33
      %s34 = sphi 0, %s31
      %s35 = sphi 0, %s34
      %s51 = sphi 0, %s35
      %s57 = sphi 0, %s59
      %s60 = sphi 0, %s57
      %s61 = sphi 0, %s60
      %s77 = sphi 0, %s61
      %s83 = sphi 0, %s85
      %s86 = sphi 0, %s83
      %s87 = sphi 0, %s86
      %s103 = sphi 0, %s87
      %s109 = sphi 0, %s111
      %s112 = sphi 0, %s109
      %s113 = sphi 0, %s112
      %s129 = sphi 0, %s113
      %s133 = sphi 0, %s133
      %s135 = sphi 0, %s133
      %s136 = sphi 0, %s135
      %s150 = sphi 0, %s136
      %s154 = sphi 0, %s154
      %s156 = sphi 0, %s154
      %s157 = sphi 0, %s156
      %s171 = sphi 0, %s157
      %s175 = sphi 0, %s175
      %s177 = sphi 0, %s175
      %s178 = sphi 0, %s177
      %s192 = sphi 0, %s178
      %s196 = sphi 0, %s196
      %s198 = sphi 0, %s196
      %s199 = sphi 0, %s198
      %s213 = sphi 0, %s199
      %s217 = sphi 0, %s217
      %s219 = sphi 0, %s217
      %s220 = sphi 0, %s219
      %s234 = sphi 0, %s220
      %s238 = sphi 0, %s238
      %s240 = sphi 0, %s238
      %s241 = sphi 0, %s240
      %s255 = sphi 0, %s241
      %s259 = sphi 0, %s259
      %s261 = sphi 0, %s259
      %s262 = sphi 0, %s261
      %s276 = sphi 0, %s262
      %s280 = sphi 0, %s280
      %s282 = sphi 0, %s280
      %s283 = sphi 0, %s282
      %s297 = sphi 0, %s283
      %s303 = sphi 0, %s305
      %s306 = sphi 0, %s303
      %s307 = sphi 0, %s306
      %s323 = sphi 0, %s307
    $region4: #{srgnn_layer.1} parent=1 // loop_header_branch
      %24 = sbr.rel (%p22) target = $region8
    $region5: #{srgnn_layer.1} parent=1 // loop_body
      %s26 = ssub.s32 %s21, 1
      %s27 = ssub.s32 %s21, 2
      %s28 = sadd.s32 %s21, 1
      %s29 = ssub.s32 %s21, %s28
      %p30 = scmp.eq.s32.totalorder %s29, 0
      %s32 = sadd.s32 %s31, 1
      %s33 = scalar_select %p30, %s31, %s32
      %p36 = pneg %p30
      %p37 = scmp.eq.s32.totalorder %s21, 1
      %p38 = por %p36, %p37
      %p39 = scmp.ne.s32.totalorder %s31, %s34
      %p40 = scmp.eq.s32.totalorder %s21, 0
      %p41 = por %p39, %p40
      %p42 = scmp.ne.s32.totalorder %s31, %s34
      %p43 = scmp.eq.s32.totalorder %s26, 1
      %p44 = por %p42, %p43
      %p45 = scmp.ne.s32.totalorder %s34, %s35
      %p46 = scmp.eq.s32.totalorder %s26, 0
      %p47 = por %p45, %p46
      %p48 = scmp.ne.s32.totalorder %s34, %s35
      %p49 = scmp.eq.s32.totalorder %s27, 1
      %p50 = por %p48, %p49
      %p52 = scmp.ne.s32.totalorder %s35, %s51
      %p53 = scmp.eq.s32.totalorder %s27, 0
      %p54 = por %p52, %p53
      %s55 = ssub.s32 %s21, %s28
      %p56 = scmp.eq.s32.totalorder %s55, 0
      %s58 = sadd.s32 %s57, 1
      %s59 = scalar_select %p56, %s57, %s58
      %p62 = pneg %p56
      %p63 = scmp.eq.s32.totalorder %s21, 1
      %p64 = por %p62, %p63
      %p65 = scmp.ne.s32.totalorder %s57, %s60
      %p66 = scmp.eq.s32.totalorder %s21, 0
      %p67 = por %p65, %p66
      %p68 = scmp.ne.s32.totalorder %s57, %s60
      %p69 = scmp.eq.s32.totalorder %s26, 1
      %p70 = por %p68, %p69
      %p71 = scmp.ne.s32.totalorder %s60, %s61
      %p72 = scmp.eq.s32.totalorder %s26, 0
      %p73 = por %p71, %p72
      %p74 = scmp.ne.s32.totalorder %s60, %s61
      %p75 = scmp.eq.s32.totalorder %s27, 1
      %p76 = por %p74, %p75
      %p78 = scmp.ne.s32.totalorder %s61, %s77
      %p79 = scmp.eq.s32.totalorder %s27, 0
      %p80 = por %p78, %p79
      %s81 = ssub.s32 %s21, %s28
      %p82 = scmp.eq.s32.totalorder %s81, 0
      %s84 = sadd.s32 %s83, 1
      %s85 = scalar_select %p82, %s83, %s84
      %p88 = pneg %p82
      %p89 = scmp.eq.s32.totalorder %s21, 1
      %p90 = por %p88, %p89
      %p91 = scmp.ne.s32.totalorder %s83, %s86
      %p92 = scmp.eq.s32.totalorder %s21, 0
      %p93 = por %p91, %p92
      %p94 = scmp.ne.s32.totalorder %s83, %s86
      %p95 = scmp.eq.s32.totalorder %s26, 1
      %p96 = por %p94, %p95
      %p97 = scmp.ne.s32.totalorder %s86, %s87
      %p98 = scmp.eq.s32.totalorder %s26, 0
      %p99 = por %p97, %p98
      %p100 = scmp.ne.s32.totalorder %s86, %s87
      %p101 = scmp.eq.s32.totalorder %s27, 1
      %p102 = por %p100, %p101
      %p104 = scmp.ne.s32.totalorder %s87, %s103
      %p105 = scmp.eq.s32.totalorder %s27, 0
      %p106 = por %p104, %p105
      %s107 = ssub.s32 %s21, %s28
      %p108 = scmp.eq.s32.totalorder %s107, 0
      %s110 = sadd.s32 %s109, 1
      %s111 = scalar_select %p108, %s109, %s110
      %p114 = pneg %p108
      %p115 = scmp.eq.s32.totalorder %s21, 1
      %p116 = por %p114, %p115
      %p117 = scmp.ne.s32.totalorder %s109, %s112
      %p118 = scmp.eq.s32.totalorder %s21, 0
      %p119 = por %p117, %p118
      %p120 = scmp.ne.s32.totalorder %s109, %s112
      %p121 = scmp.eq.s32.totalorder %s26, 1
      %p122 = por %p120, %p121
      %p123 = scmp.ne.s32.totalorder %s112, %s113
      %p124 = scmp.eq.s32.totalorder %s26, 0
      %p125 = por %p123, %p124
      %p126 = scmp.ne.s32.totalorder %s112, %s113
      %p127 = scmp.eq.s32.totalorder %s27, 1
      %p128 = por %p126, %p127
      %p130 = scmp.ne.s32.totalorder %s113, %s129
      %p131 = scmp.eq.s32.totalorder %s27, 0
      %p132 = por %p130, %p131
      %s134 = sadd.s32 %s133, 1
      %p137 = scmp.eq.s32.totalorder %s21, 1
      %p138 = scmp.ne.s32.totalorder %s133, %s135
      %p139 = scmp.eq.s32.totalorder %s21, 0
      %p140 = por %p138, %p139
      %p141 = scmp.ne.s32.totalorder %s133, %s135
      %p142 = scmp.eq.s32.totalorder %s26, 1
      %p143 = por %p141, %p142
      %p144 = scmp.ne.s32.totalorder %s135, %s136
      %p145 = scmp.eq.s32.totalorder %s26, 0
      %p146 = por %p144, %p145
      %p147 = scmp.ne.s32.totalorder %s135, %s136
      %p148 = scmp.eq.s32.totalorder %s27, 1
      %p149 = por %p147, %p148
      %p151 = scmp.ne.s32.totalorder %s136, %s150
      %p152 = scmp.eq.s32.totalorder %s27, 0
      %p153 = por %p151, %p152
      %s155 = sadd.s32 %s154, 1
      %p158 = scmp.eq.s32.totalorder %s21, 1
      %p159 = scmp.ne.s32.totalorder %s154, %s156
      %p160 = scmp.eq.s32.totalorder %s21, 0
      %p161 = por %p159, %p160
      %p162 = scmp.ne.s32.totalorder %s154, %s156
      %p163 = scmp.eq.s32.totalorder %s26, 1
      %p164 = por %p162, %p163
      %p165 = scmp.ne.s32.totalorder %s156, %s157
      %p166 = scmp.eq.s32.totalorder %s26, 0
      %p167 = por %p165, %p166
      %p168 = scmp.ne.s32.totalorder %s156, %s157
      %p169 = scmp.eq.s32.totalorder %s27, 1
      %p170 = por %p168, %p169
      %p172 = scmp.ne.s32.totalorder %s157, %s171
      %p173 = scmp.eq.s32.totalorder %s27, 0
      %p174 = por %p172, %p173
      %s176 = sadd.s32 %s175, 1
      %p179 = scmp.eq.s32.totalorder %s21, 1
      %p180 = scmp.ne.s32.totalorder %s175, %s177
      %p181 = scmp.eq.s32.totalorder %s21, 0
      %p182 = por %p180, %p181
      %p183 = scmp.ne.s32.totalorder %s175, %s177
      %p184 = scmp.eq.s32.totalorder %s26, 1
      %p185 = por %p183, %p184
      %p186 = scmp.ne.s32.totalorder %s177, %s178
      %p187 = scmp.eq.s32.totalorder %s26, 0
      %p188 = por %p186, %p187
      %p189 = scmp.ne.s32.totalorder %s177, %s178
      %p190 = scmp.eq.s32.totalorder %s27, 1
      %p191 = por %p189, %p190
      %p193 = scmp.ne.s32.totalorder %s178, %s192
      %p194 = scmp.eq.s32.totalorder %s27, 0
      %p195 = por %p193, %p194
      %s197 = sadd.s32 %s196, 1
      %p200 = scmp.eq.s32.totalorder %s21, 1
      %p201 = scmp.ne.s32.totalorder %s196, %s198
      %p202 = scmp.eq.s32.totalorder %s21, 0
      %p203 = por %p201, %p202
      %p204 = scmp.ne.s32.totalorder %s196, %s198
      %p205 = scmp.eq.s32.totalorder %s26, 1
      %p206 = por %p204, %p205
      %p207 = scmp.ne.s32.totalorder %s198, %s199
      %p208 = scmp.eq.s32.totalorder %s26, 0
      %p209 = por %p207, %p208
      %p210 = scmp.ne.s32.totalorder %s198, %s199
      %p211 = scmp.eq.s32.totalorder %s27, 1
      %p212 = por %p210, %p211
      %p214 = scmp.ne.s32.totalorder %s199, %s213
      %p215 = scmp.eq.s32.totalorder %s27, 0
      %p216 = por %p214, %p215
      %s218 = sadd.s32 %s217, 1
      %p221 = scmp.eq.s32.totalorder %s21, 1
      %p222 = scmp.ne.s32.totalorder %s217, %s219
      %p223 = scmp.eq.s32.totalorder %s21, 0
      %p224 = por %p222, %p223
      %p225 = scmp.ne.s32.totalorder %s217, %s219
      %p226 = scmp.eq.s32.totalorder %s26, 1
      %p227 = por %p225, %p226
      %p228 = scmp.ne.s32.totalorder %s219, %s220
      %p229 = scmp.eq.s32.totalorder %s26, 0
      %p230 = por %p228, %p229
      %p231 = scmp.ne.s32.totalorder %s219, %s220
      %p232 = scmp.eq.s32.totalorder %s27, 1
      %p233 = por %p231, %p232
      %p235 = scmp.ne.s32.totalorder %s220, %s234
      %p236 = scmp.eq.s32.totalorder %s27, 0
      %p237 = por %p235, %p236
      %s239 = sadd.s32 %s238, 1
      %p242 = scmp.eq.s32.totalorder %s21, 1
      %p243 = scmp.ne.s32.totalorder %s238, %s240
      %p244 = scmp.eq.s32.totalorder %s21, 0
      %p245 = por %p243, %p244
      %p246 = scmp.ne.s32.totalorder %s238, %s240
      %p247 = scmp.eq.s32.totalorder %s26, 1
      %p248 = por %p246, %p247
      %p249 = scmp.ne.s32.totalorder %s240, %s241
      %p250 = scmp.eq.s32.totalorder %s26, 0
      %p251 = por %p249, %p250
      %p252 = scmp.ne.s32.totalorder %s240, %s241
      %p253 = scmp.eq.s32.totalorder %s27, 1
      %p254 = por %p252, %p253
      %p256 = scmp.ne.s32.totalorder %s241, %s255
      %p257 = scmp.eq.s32.totalorder %s27, 0
      %p258 = por %p256, %p257
      %s260 = sadd.s32 %s259, 1
      %p263 = scmp.eq.s32.totalorder %s21, 1
      %p264 = scmp.ne.s32.totalorder %s259, %s261
      %p265 = scmp.eq.s32.totalorder %s21, 0
      %p266 = por %p264, %p265
      %p267 = scmp.ne.s32.totalorder %s259, %s261
      %p268 = scmp.eq.s32.totalorder %s26, 1
      %p269 = por %p267, %p268
      %p270 = scmp.ne.s32.totalorder %s261, %s262
      %p271 = scmp.eq.s32.totalorder %s26, 0
      %p272 = por %p270, %p271
      %p273 = scmp.ne.s32.totalorder %s261, %s262
      %p274 = scmp.eq.s32.totalorder %s27, 1
      %p275 = por %p273, %p274
      %p277 = scmp.ne.s32.totalorder %s262, %s276
      %p278 = scmp.eq.s32.totalorder %s27, 0
      %p279 = por %p277, %p278
      %s281 = sadd.s32 %s280, 1
      %p284 = scmp.eq.s32.totalorder %s21, 1
      %p285 = scmp.ne.s32.totalorder %s280, %s282
      %p286 = scmp.eq.s32.totalorder %s21, 0
      %p287 = por %p285, %p286
      %p288 = scmp.ne.s32.totalorder %s280, %s282
      %p289 = scmp.eq.s32.totalorder %s26, 1
      %p290 = por %p288, %p289
      %p291 = scmp.ne.s32.totalorder %s282, %s283
      %p292 = scmp.eq.s32.totalorder %s26, 0
      %p293 = por %p291, %p292
      %p294 = scmp.ne.s32.totalorder %s282, %s283
      %p295 = scmp.eq.s32.totalorder %s27, 1
      %p296 = por %p294, %p295
      %p298 = scmp.ne.s32.totalorder %s283, %s297
      %p299 = scmp.eq.s32.totalorder %s27, 0
      %p300 = por %p298, %p299
      %s301 = ssub.s32 %s21, %s28
      %p302 = scmp.eq.s32.totalorder %s301, 0
      %s304 = sadd.s32 %s303, 1
      %s305 = scalar_select %p302, %s303, %s304
      %p308 = pneg %p302
      %p309 = scmp.eq.s32.totalorder %s21, 1
      %p310 = por %p308, %p309
      %p311 = scmp.ne.s32.totalorder %s303, %s306
      %p312 = scmp.eq.s32.totalorder %s21, 0
      %p313 = por %p311, %p312
      %p314 = scmp.ne.s32.totalorder %s303, %s306
      %p315 = scmp.eq.s32.totalorder %s26, 1
      %p316 = por %p314, %p315
      %p317 = scmp.ne.s32.totalorder %s306, %s307
      %p318 = scmp.eq.s32.totalorder %s26, 0
      %p319 = por %p317, %p318
      %p320 = scmp.ne.s32.totalorder %s306, %s307
      %p321 = scmp.eq.s32.totalorder %s27, 1
      %p322 = por %p320, %p321
      %p324 = scmp.ne.s32.totalorder %s307, %s323
      %p325 = scmp.eq.s32.totalorder %s27, 0
      %p326 = por %p324, %p325
      %p327 = scmp.le.s32.totalorder 1, %s21
      %p328 = scmp.lt.s32.totalorder %s21, 3
      %p329 = pnand %p327, %p328
      %p330 = pneg %p329
      // Predicated region
      $region9: #{srgnn_layer.1} parent=5 // pred_check
        _
      $region10: #{srgnn_layer.1} parent=5 // pred_check_branch
        %332 = sbr.rel (%p329) target = $region12
      $region11: #{srgnn_layer.1} parent=5 // pred_region
        %s333 = ssub.s32 %s21, 1
        // Predicated region
        $region13: #{srgnn_layer.1} parent=11 // pred_check
          %p334 = pneg %p146
        $region14: #{srgnn_layer.1} parent=11 // pred_check_branch
          %336 = sbr.rel (%p334) target = $region16
        $region15: #{srgnn_layer.1} parent=11 // pred_region
          _
        $region16: #{srgnn_layer.1} parent=11 // pred_fallthru
          _
        // Predicated region
        $region17: #{srgnn_layer.1} parent=11 // pred_check
          %p337 = pneg %p167
        $region18: #{srgnn_layer.1} parent=11 // pred_check_branch
          %339 = sbr.rel (%p337) target = $region20
        $region19: #{srgnn_layer.1} parent=11 // pred_region
          _
        $region20: #{srgnn_layer.1} parent=11 // pred_fallthru
          _
        // Predicated region
        $region21: #{srgnn_layer.1} parent=11 // pred_check
          %p340 = pneg %p188
        $region22: #{srgnn_layer.1} parent=11 // pred_check_branch
          %342 = sbr.rel (%p340) target = $region24
        $region23: #{srgnn_layer.1} parent=11 // pred_region
          _
        $region24: #{srgnn_layer.1} parent=11 // pred_fallthru
          _
        // Predicated region
        $region25: #{srgnn_layer.1} parent=11 // pred_check
          %p343 = pneg %p209
        $region26: #{srgnn_layer.1} parent=11 // pred_check_branch
          %345 = sbr.rel (%p343) target = $region28
        $region27: #{srgnn_layer.1} parent=11 // pred_region
          _
        $region28: #{srgnn_layer.1} parent=11 // pred_fallthru
          _
        // Predicated region
        $region29: #{srgnn_layer.1} parent=11 // pred_check
          %p346 = pneg %p230
        $region30: #{srgnn_layer.1} parent=11 // pred_check_branch
          %348 = sbr.rel (%p346) target = $region32
        $region31: #{srgnn_layer.1} parent=11 // pred_region
          _
        $region32: #{srgnn_layer.1} parent=11 // pred_fallthru
          _
        // Predicated region
        $region33: #{srgnn_layer.1} parent=11 // pred_check
          %p349 = pneg %p251
        $region34: #{srgnn_layer.1} parent=11 // pred_check_branch
          %351 = sbr.rel (%p349) target = $region36
        $region35: #{srgnn_layer.1} parent=11 // pred_region
          _
        $region36: #{srgnn_layer.1} parent=11 // pred_fallthru
          _
        // Predicated region
        $region37: #{srgnn_layer.1} parent=11 // pred_check
          %p352 = pneg %p272
        $region38: #{srgnn_layer.1} parent=11 // pred_check_branch
          %354 = sbr.rel (%p352) target = $region40
        $region39: #{srgnn_layer.1} parent=11 // pred_region
          _
        $region40: #{srgnn_layer.1} parent=11 // pred_fallthru
          _
        // Predicated region
        $region41: #{srgnn_layer.1} parent=11 // pred_check
          %p355 = pneg %p293
        $region42: #{srgnn_layer.1} parent=11 // pred_check_branch
          %357 = sbr.rel (%p355) target = $region44
        $region43: #{srgnn_layer.1} parent=11 // pred_region
          _
        $region44: #{srgnn_layer.1} parent=11 // pred_fallthru
          _
      $region12: #{srgnn_layer.1} parent=5 // pred_fallthru
        _
      %p358 = scmp.lt.s32.totalorder %s21, 2
      // Predicated region
      $region45: #{srgnn_layer.1} parent=5 // pred_check
        %p359 = pneg %p358
      $region46: #{srgnn_layer.1} parent=5 // pred_check_branch
        %361 = sbr.rel (%p359) target = $region48
      $region47: #{srgnn_layer.1} parent=5 // pred_region
        // Predicated region
        $region49: #{srgnn_layer.1} parent=47 // pred_check
          %p362 = pneg %p41
        $region50: #{srgnn_layer.1} parent=47 // pred_check_branch
          %364 = sbr.rel (%p362) target = $region52
        $region51: #{srgnn_layer.1} parent=47 // pred_region
          %s365 = smul.u32 32, %s21
          %p366 = scmp.lt.s32.totalorder %s365, 63
          %s367 = scalar_select %p366, %s365, 63
          %s368 = smul.addr %s367, 8
          %s369 = scalar_lea.vmem %s0, %s368
          %s370 = smul.u32 32, %s21
        $region52: #{srgnn_layer.1} parent=47 // pred_fallthru
          _
        // Predicated region
        $region53: #{srgnn_layer.1} parent=47 // pred_check
          %p371 = pneg %p67
        $region54: #{srgnn_layer.1} parent=47 // pred_check_branch
          %373 = sbr.rel (%p371) target = $region56
        $region55: #{srgnn_layer.1} parent=47 // pred_region
          %s374 = smul.u32 32, %s21
          %p375 = scmp.lt.s32.totalorder %s374, 63
          %s376 = scalar_select %p375, %s374, 63
          %s377 = smul.addr %s376, 8
          %s378 = scalar_lea.vmem %s1, %s377
          %s379 = smul.u32 32, %s21
        $region56: #{srgnn_layer.1} parent=47 // pred_fallthru
          _
        // Predicated region
        $region57: #{srgnn_layer.1} parent=47 // pred_check
          %p380 = pneg %p93
        $region58: #{srgnn_layer.1} parent=47 // pred_check_branch
          %382 = sbr.rel (%p380) target = $region60
        $region59: #{srgnn_layer.1} parent=47 // pred_region
          %s383 = smul.u32 32, %s21
          %p384 = scmp.lt.s32.totalorder %s383, 63
          %s385 = scalar_select %p384, %s383, 63
          %s386 = smul.addr %s385, 8
          %s387 = scalar_lea.vmem %s2, %s386
          %s388 = smul.u32 32, %s21
        $region60: #{srgnn_layer.1} parent=47 // pred_fallthru
          _
        // Predicated region
        $region61: #{srgnn_layer.1} parent=47 // pred_check
          %p389 = pneg %p119
        $region62: #{srgnn_layer.1} parent=47 // pred_check_branch
          %391 = sbr.rel (%p389) target = $region64
        $region63: #{srgnn_layer.1} parent=47 // pred_region
          %s392 = smul.u32 32, %s21
          %p393 = scmp.lt.s32.totalorder %s392, 63
          %s394 = scalar_select %p393, %s392, 63
          %s395 = smul.addr %s394, 8
          %s396 = scalar_lea.vmem %s3, %s395
          %s397 = smul.u32 32, %s21
        $region64: #{srgnn_layer.1} parent=47 // pred_fallthru
          _
      $region48: #{srgnn_layer.1} parent=5 // pred_fallthru
        _
      %p398 = scmp.le.s32.totalorder 1, %s21
      %p399 = scmp.lt.s32.totalorder %s21, 3
      %p400 = pnand %p398, %p399
      %p401 = pneg %p400
      // Predicated region
      $region65: #{srgnn_layer.1} parent=5 // pred_check
        _
      $region66: #{srgnn_layer.1} parent=5 // pred_check_branch
        %403 = sbr.rel (%p400) target = $region68
      $region67: #{srgnn_layer.1} parent=5 // pred_region
        %s404 = ssub.s32 %s21, 1
        %s405 = smul.u32 32, %s26
        %p406 = scmp.lt.s32.totalorder %s405, 63
        %s407 = scalar_select %p406, %s405, 63
        %s408 = smul.addr %s407, 8
        %s409 = scalar_lea.vmem %s0, %s408
        %p410 = pneg %p47
        %p411 = pneg %p44
        %s412 = smul.u32 32, %s26
        %p413 = scmp.lt.s32.totalorder %s412, 63
        %s414 = scalar_select %p413, %s412, 63
        %s415 = smul.addr %s414, 8
        %s416 = scalar_lea.vmem %s1, %s415
        %p417 = pneg %p73
        %p418 = pneg %p70
        %s419 = smul.u32 32, %s26
        %p420 = scmp.lt.s32.totalorder %s419, 63
        %s421 = scalar_select %p420, %s419, 63
        %s422 = smul.addr %s421, 8
        %s423 = scalar_lea.vmem %s2, %s422
        %p424 = pneg %p99
        %p425 = pneg %p96
        %s426 = smul.u32 32, %s26
        %p427 = scmp.lt.s32.totalorder %s426, 63
        %s428 = scalar_select %p427, %s426, 63
        %s429 = smul.addr %s428, 8
        %s430 = scalar_lea.vmem %s3, %s429
        %p431 = pneg %p125
        %p432 = pneg %p122
        %p433 = pneg %p146
        %p434 = pneg %p143
        %p435 = pneg %p167
        %p436 = pneg %p164
        %p437 = pneg %p188
        %p438 = pneg %p185
        %p439 = pneg %p209
        %p440 = pneg %p206
        %p441 = pneg %p230
        %p442 = pneg %p227
        %p443 = pneg %p251
        %p444 = pneg %p248
        %p445 = pneg %p272
        %p446 = pneg %p269
        %p447 = pneg %p293
        %p448 = pneg %p290
        %p449 = pneg %p319
        %p450 = pneg %p316
        %s451 = sand.u32 %s306, 1
        %s452 = scalar_lea.sflag [#allocation3], %s451
        %s453 = sand.u32 %s306, 1
        %s454 = smul.addr %s453, 32
        %s455 = scalar_lea.vmem [#allocation2], %s454
        %s456 = smul.u32 32, %s26
        %p457 = scmp.lt.s32.totalorder %s456, 63
        %s458 = scalar_select %p457, %s456, 63
        %s459 = smul.addr %s458, 8
        %s460 = scalar_lea.vmem %s0, %s459
        %s461 = smul.u32 32, %s26
        %s462 = smul.u32 32, %s26
        %p463 = scmp.lt.s32.totalorder %s462, 63
        %s464 = scalar_select %p463, %s462, 63
        %s465 = smul.addr %s464, 8
        %s466 = scalar_lea.vmem %s1, %s465
        %s467 = smul.u32 32, %s26
        %s468 = smul.u32 32, %s26
        %p469 = scmp.lt.s32.totalorder %s468, 63
        %s470 = scalar_select %p469, %s468, 63
        %s471 = smul.addr %s470, 8
        %s472 = scalar_lea.vmem %s2, %s471
        %s473 = smul.u32 32, %s26
        %s474 = smul.u32 32, %s26
        %p475 = scmp.lt.s32.totalorder %s474, 63
        %s476 = scalar_select %p475, %s474, 63
        %s477 = smul.addr %s476, 8
        %s478 = scalar_lea.vmem %s3, %s477
        %s479 = smul.u32 32, %s26
        %s480 = smul.u32 4, %s26
        %v482 = vld [vmem:[%s460] sm:$0xff]
        %v483 = vld [vmem:[%s460 + $0x8] sm:$0xff]
        %v484 = vld [vmem:[%s460 + $0x10] sm:$0xff]
        %v485 = vld [vmem:[%s460 + $0x18] sm:$0xff]
        %v486 = vld [vmem:[%s460 + $0x20] sm:$0xff]
        %v487 = vld [vmem:[%s460 + $0x28] sm:$0xff]
        %v488 = vld [vmem:[%s460 + $0x30] sm:$0xff]
        %v489 = vld [vmem:[%s460 + $0x38] sm:$0xff]
        %v490 = vld [vmem:[%s460 + $0x40] sm:$0xff]
        %v491 = vld [vmem:[%s460 + $0x48] sm:$0xff]
        %v492 = vld [vmem:[%s460 + $0x50] sm:$0xff]
        %v493 = vld [vmem:[%s460 + $0x58] sm:$0xff]
        %v494 = vld [vmem:[%s460 + $0x60] sm:$0xff]
        %v495 = vld [vmem:[%s460 + $0x68] sm:$0xff]
        %v496 = vld [vmem:[%s460 + $0x70] sm:$0xff]
        %v497 = vld [vmem:[%s460 + $0x78] sm:$0xff]
        %v498 = vld [vmem:[%s460 + $0x80] sm:$0xff]
        %v499 = vld [vmem:[%s460 + $0x88] sm:$0xff]
        %v500 = vld [vmem:[%s460 + $0x90] sm:$0xff]
        %v501 = vld [vmem:[%s460 + $0x98] sm:$0xff]
        %v502 = vld [vmem:[%s460 + $0xa0] sm:$0xff]
        %v503 = vld [vmem:[%s460 + $0xa8] sm:$0xff]
        %v504 = vld [vmem:[%s460 + $0xb0] sm:$0xff]
        %v505 = vld [vmem:[%s460 + $0xb8] sm:$0xff]
        %v506 = vld [vmem:[%s460 + $0xc0] sm:$0xff]
        %v507 = vld [vmem:[%s460 + $0xc8] sm:$0xff]
        %v508 = vld [vmem:[%s460 + $0xd0] sm:$0xff]
        %v509 = vld [vmem:[%s460 + $0xd8] sm:$0xff]
        %v510 = vld [vmem:[%s460 + $0xe0] sm:$0xff]
        %v511 = vld [vmem:[%s460 + $0xe8] sm:$0xff]
        %v512 = vld [vmem:[%s460 + $0xf0] sm:$0xff]
        %v513 = vld [vmem:[%s460 + $0xf8] sm:$0xff]
        %v514 = vpack.c.bf16 %v483, %v482
        %v515 = vpack.c.bf16 %v485, %v484
        %v516 = vpack.c.bf16 %v487, %v486
        %v517 = vpack.c.bf16 %v489, %v488
        %v518 = vpack.c.bf16 %v491, %v490
        %v519 = vpack.c.bf16 %v493, %v492
        %v520 = vpack.c.bf16 %v495, %v494
        %v521 = vpack.c.bf16 %v497, %v496
        %v522 = vpack.c.bf16 %v499, %v498
        %v523 = vpack.c.bf16 %v501, %v500
        %v524 = vpack.c.bf16 %v503, %v502
        %v525 = vpack.c.bf16 %v505, %v504
        %v526 = vpack.c.bf16 %v507, %v506
        %v527 = vpack.c.bf16 %v509, %v508
        %v528 = vpack.c.bf16 %v511, %v510
        %v529 = vpack.c.bf16 %v513, %v512
        %v530 = vld [vmem:[%s4] sm:$0xff]
        %v531 = vld [vmem:[%s4 + $0x8] sm:$0xff]
        %v532 = vld [vmem:[%s4 + $0x10] sm:$0xff]
        %v533 = vld [vmem:[%s4 + $0x18] sm:$0xff]
        %v534 = vld [vmem:[%s5] sm:$0x3]
        %v536 = vlaneseq
        %v537 = vshrl.u32 %v536, 7
        %v538 = vsub.s32 0, %v537
        %v539 = vrot.slane %v534, %v538
        %v540 = vlaneseq
        %v541 = vshrl.u32 %v540, 7
        %v542 = vsub.s32 1, %v541
        %v543 = vrot.slane %v534, %v542
        %v550 = vunpack.c.l.b16 %v530
        %v551 = vunpack.c.h.b16 %v530
        %v552 = vunpack.c.l.b16 %v531
        %v553 = vunpack.c.h.b16 %v531
        %v554 = vunpack.c.l.b16 %v532
        %v555 = vunpack.c.h.b16 %v532
        %v556 = vunpack.c.l.b16 %v533
        %v557 = vunpack.c.h.b16 %v533
        %v558 = vpack.c.b16 %v552, %v550
        %v559 = vpack.c.b16 %v553, %v551
        %v560 = vpack.c.b16 %v556, %v554
        %v561 = vpack.c.b16 %v557, %v555
        %vm566 = vcmask 261120
        %v568 = vsel %vm566, %v514, 0
        %v571 = vsel %vm566, %v515, 0
        %v574 = vsel %vm566, %v516, 0
        %v577 = vsel %vm566, %v517, 0
        %v580 = vsel %vm566, %v518, 0
        %v583 = vsel %vm566, %v519, 0
        %v586 = vsel %vm566, %v520, 0
        %v589 = vsel %vm566, %v521, 0
        %v592 = vsel %vm566, %v522, 0
        %v595 = vsel %vm566, %v523, 0
        %v598 = vsel %vm566, %v524, 0
        %v601 = vsel %vm566, %v525, 0
        %v604 = vsel %vm566, %v526, 0
        %v607 = vsel %vm566, %v527, 0
        %v610 = vsel %vm566, %v528, 0
        %v613 = vsel %vm566, %v529, 0
        %615 = vmatprep.subr.bf16.mxu0 %v559
        %616 = vmatpush1.bf16.msra.mxu0 %v558
        %617 = vmatprep.subr.bf16.mxu0 %v561
        %618 = vmatpush1.bf16.msra.mxu0 %v560
        %619 = vmatprep.subr.bf16.mxu0 0
        %620 = vmatpush1.bf16.msra.mxu0 0
        %621 = vmatprep.subr.bf16.mxu0 0
        %622 = vmatpush1.bf16.msra.mxu0 0
        %623 = vmatprep.subr.bf16.mxu0 0
        %624 = vmatpush1.bf16.msra.mxu0 0
        %625 = vmatprep.subr.bf16.mxu0 0
        %626 = vmatpush1.bf16.msra.mxu0 0
        %627 = vmatprep.subr.bf16.mxu0 0
        %628 = vmatpush1.bf16.msra.mxu0 0
        %629 = vmatprep.subr.bf16.mxu0 0
        %630 = vmatpush1.bf16.msra.mxu0 0
        %631 = vmatprep.subr.bf16.mxu0 0
        %632 = vmatpush1.bf16.msra.mxu0 0
        %633 = vmatprep.subr.bf16.mxu0 0
        %634 = vmatpush1.bf16.msra.mxu0 0
        %635 = vmatprep.subr.bf16.mxu0 0
        %636 = vmatpush1.bf16.msra.mxu0 0
        %637 = vmatprep.subr.bf16.mxu0 0
        %638 = vmatpush1.bf16.msra.mxu0 0
        %639 = vmatprep.subr.bf16.mxu0 0
        %640 = vmatpush1.bf16.msra.mxu0 0
        %641 = vmatprep.subr.bf16.mxu0 0
        %642 = vmatpush1.bf16.msra.mxu0 0
        %643 = vmatprep.subr.bf16.mxu0 0
        %644 = vmatpush1.bf16.msra.mxu0 0
        %645 = vmatprep.subr.bf16.mxu0 0
        %646 = vmatpush1.bf16.msra.mxu0 0
        %647 = vmatprep.mubr.bf16.mxu0 0
        %648 = vmatmul.mubr.bf16.gmra.mrb[0].mxu0 %v568
        %v649 = vpop.f32.mrb[0].mxu0
        %v650 = vadd.f32 %v539, %v649
        %v651 = vpop.f32.mrb[0].mxu0
        %v652 = vadd.f32 %v543, %v651
        %v653 = vpop.f32.mrb[0].mxu0
        %v654 = vadd.f32 %v539, %v653
        %v655 = vpop.f32.mrb[0].mxu0
        %v656 = vadd.f32 %v543, %v655
        %657 = vmatprep.mubr.bf16.mxu0 0
        %658 = vmatmul.mubr.bf16.gmra.mrb[0].mxu0 %v571
        %v659 = vpop.f32.mrb[0].mxu0
        %v660 = vadd.f32 %v539, %v659
        %v661 = vpop.f32.mrb[0].mxu0
        %v662 = vadd.f32 %v543, %v661
        %v663 = vpop.f32.mrb[0].mxu0
        %v664 = vadd.f32 %v539, %v663
        %v665 = vpop.f32.mrb[0].mxu0
        %v666 = vadd.f32 %v543, %v665
        %667 = vmatprep.mubr.bf16.mxu0 0
        %668 = vmatmul.mubr.bf16.gmra.mrb[0].mxu0 %v574
        %v669 = vpop.f32.mrb[0].mxu0
        %v670 = vadd.f32 %v539, %v669
        %v671 = vpop.f32.mrb[0].mxu0
        %v672 = vadd.f32 %v543, %v671
        %v673 = vpop.f32.mrb[0].mxu0
        %v674 = vadd.f32 %v539, %v673
        %v675 = vpop.f32.mrb[0].mxu0
        %v676 = vadd.f32 %v543, %v675
        %677 = vmatprep.mubr.bf16.mxu0 0
        %678 = vmatmul.mubr.bf16.gmra.mrb[0].mxu0 %v577
        %v679 = vpop.f32.mrb[0].mxu0
        %v680 = vadd.f32 %v539, %v679
        %v681 = vpop.f32.mrb[0].mxu0
        %v682 = vadd.f32 %v543, %v681
        %v683 = vpop.f32.mrb[0].mxu0
        %v684 = vadd.f32 %v539, %v683
        %v685 = vpop.f32.mrb[0].mxu0
        %v686 = vadd.f32 %v543, %v685
        %687 = vmatprep.mubr.bf16.mxu0 0
        %688 = vmatmul.mubr.bf16.gmra.mrb[0].mxu0 %v580
        %v689 = vpop.f32.mrb[0].mxu0
        %v690 = vadd.f32 %v539, %v689
        %v691 = vpop.f32.mrb[0].mxu0
        %v692 = vadd.f32 %v543, %v691
        %v693 = vpop.f32.mrb[0].mxu0
        %v694 = vadd.f32 %v539, %v693
        %v695 = vpop.f32.mrb[0].mxu0
        %v696 = vadd.f32 %v543, %v695
        %697 = vmatprep.mubr.bf16.mxu0 0
        %698 = vmatmul.mubr.bf16.gmra.mrb[0].mxu0 %v583
        %v699 = vpop.f32.mrb[0].mxu0
        %v700 = vadd.f32 %v539, %v699
        %v701 = vpop.f32.mrb[0].mxu0
        %v702 = vadd.f32 %v543, %v701
        %v703 = vpop.f32.mrb[0].mxu0
        %v704 = vadd.f32 %v539, %v703
        %v705 = vpop.f32.mrb[0].mxu0
        %v706 = vadd.f32 %v543, %v705
        %707 = vmatprep.mubr.bf16.mxu0 0
        %708 = vmatmul.mubr.bf16.gmra.mrb[0].mxu0 %v586
        %v709 = vpop.f32.mrb[0].mxu0
        %v710 = vadd.f32 %v539, %v709
        %v711 = vpop.f32.mrb[0].mxu0
        %v712 = vadd.f32 %v543, %v711
        %v713 = vpop.f32.mrb[0].mxu0
        %v714 = vadd.f32 %v539, %v713
        %v715 = vpop.f32.mrb[0].mxu0
        %v716 = vadd.f32 %v543, %v715
        %717 = vmatprep.mubr.bf16.mxu0 0
        %718 = vmatmul.mubr.bf16.gmra.mrb[0].mxu0 %v589
        %v719 = vpop.f32.mrb[0].mxu0
        %v720 = vadd.f32 %v539, %v719
        %v721 = vpop.f32.mrb[0].mxu0
        %v722 = vadd.f32 %v543, %v721
        %v723 = vpop.f32.mrb[0].mxu0
        %v724 = vadd.f32 %v539, %v723
        %v725 = vpop.f32.mrb[0].mxu0
        %v726 = vadd.f32 %v543, %v725
        %727 = vmatprep.mubr.bf16.mxu0 0
        %728 = vmatmul.mubr.bf16.gmra.mrb[0].mxu0 %v592
        %v729 = vpop.f32.mrb[0].mxu0
        %v730 = vadd.f32 %v539, %v729
        %v731 = vpop.f32.mrb[0].mxu0
        %v732 = vadd.f32 %v543, %v731
        %v733 = vpop.f32.mrb[0].mxu0
        %v734 = vadd.f32 %v539, %v733
        %v735 = vpop.f32.mrb[0].mxu0
        %v736 = vadd.f32 %v543, %v735
        %737 = vmatprep.mubr.bf16.mxu0 0
        %738 = vmatmul.mubr.bf16.gmra.mrb[0].mxu0 %v595
        %v739 = vpop.f32.mrb[0].mxu0
        %v740 = vadd.f32 %v539, %v739
        %v741 = vpop.f32.mrb[0].mxu0
        %v742 = vadd.f32 %v543, %v741
        %v743 = vpop.f32.mrb[0].mxu0
        %v744 = vadd.f32 %v539, %v743
        %v745 = vpop.f32.mrb[0].mxu0
        %v746 = vadd.f32 %v543, %v745
        %747 = vmatprep.mubr.bf16.mxu0 0
        %748 = vmatmul.mubr.bf16.gmra.mrb[0].mxu0 %v598
        %v749 = vpop.f32.mrb[0].mxu0
        %v750 = vadd.f32 %v539, %v749
        %v751 = vpop.f32.mrb[0].mxu0
        %v752 = vadd.f32 %v543, %v751
        %v753 = vpop.f32.mrb[0].mxu0
        %v754 = vadd.f32 %v539, %v753
        %v755 = vpop.f32.mrb[0].mxu0
        %v756 = vadd.f32 %v543, %v755
        %757 = vmatprep.mubr.bf16.mxu0 0
        %758 = vmatmul.mubr.bf16.gmra.mrb[0].mxu0 %v601
        %v759 = vpop.f32.mrb[0].mxu0
        %v760 = vadd.f32 %v539, %v759
        %v761 = vpop.f32.mrb[0].mxu0
        %v762 = vadd.f32 %v543, %v761
        %v763 = vpop.f32.mrb[0].mxu0
        %v764 = vadd.f32 %v539, %v763
        %v765 = vpop.f32.mrb[0].mxu0
        %v766 = vadd.f32 %v543, %v765
        %767 = vmatprep.mubr.bf16.mxu0 0
        %768 = vmatmul.mubr.bf16.gmra.mrb[0].mxu0 %v604
        %v769 = vpop.f32.mrb[0].mxu0
        %v770 = vadd.f32 %v539, %v769
        %v771 = vpop.f32.mrb[0].mxu0
        %v772 = vadd.f32 %v543, %v771
        %v773 = vpop.f32.mrb[0].mxu0
        %v774 = vadd.f32 %v539, %v773
        %v775 = vpop.f32.mrb[0].mxu0
        %v776 = vadd.f32 %v543, %v775
        %777 = vmatprep.mubr.bf16.mxu0 0
        %778 = vmatmul.mubr.bf16.gmra.mrb[0].mxu0 %v607
        %v779 = vpop.f32.mrb[0].mxu0
        %v780 = vadd.f32 %v539, %v779
        %v781 = vpop.f32.mrb[0].mxu0
        %v782 = vadd.f32 %v543, %v781
        %v783 = vpop.f32.mrb[0].mxu0
        %v784 = vadd.f32 %v539, %v783
        %v785 = vpop.f32.mrb[0].mxu0
        %v786 = vadd.f32 %v543, %v785
        %787 = vmatprep.mubr.bf16.mxu0 0
        %788 = vmatmul.mubr.bf16.gmra.mrb[0].mxu0 %v610
        %v789 = vpop.f32.mrb[0].mxu0
        %v790 = vadd.f32 %v539, %v789
        %v791 = vpop.f32.mrb[0].mxu0
        %v792 = vadd.f32 %v543, %v791
        %v793 = vpop.f32.mrb[0].mxu0
        %v794 = vadd.f32 %v539, %v793
        %v795 = vpop.f32.mrb[0].mxu0
        %v796 = vadd.f32 %v543, %v795
        %797 = vmatprep.mubr.bf16.mxu0 0
        %798 = vmatmul.mubr.bf16.gmra.mrb[0].mxu0 %v613
        %v799 = vpop.f32.mrb[0].mxu0
        %v800 = vadd.f32 %v539, %v799
        %v801 = vpop.f32.mrb[0].mxu0
        %v802 = vadd.f32 %v543, %v801
        %v803 = vpop.f32.mrb[0].mxu0
        %v804 = vadd.f32 %v539, %v803
        %v805 = vpop.f32.mrb[0].mxu0
        %v806 = vadd.f32 %v543, %v805
        %807 = vdwg.mxu0
        %v808 = vld [vmem:[%s466] sm:$0xff]
        %v809 = vld [vmem:[%s466 + $0x8] sm:$0xff]
        %v810 = vld [vmem:[%s466 + $0x10] sm:$0xff]
        %v811 = vld [vmem:[%s466 + $0x18] sm:$0xff]
        %v812 = vld [vmem:[%s466 + $0x20] sm:$0xff]
        %v813 = vld [vmem:[%s466 + $0x28] sm:$0xff]
        %v814 = vld [vmem:[%s466 + $0x30] sm:$0xff]
        %v815 = vld [vmem:[%s466 + $0x38] sm:$0xff]
        %v816 = vld [vmem:[%s466 + $0x40] sm:$0xff]
        %v817 = vld [vmem:[%s466 + $0x48] sm:$0xff]
        %v818 = vld [vmem:[%s466 + $0x50] sm:$0xff]
        %v819 = vld [vmem:[%s466 + $0x58] sm:$0xff]
        %v820 = vld [vmem:[%s466 + $0x60] sm:$0xff]
        %v821 = vld [vmem:[%s466 + $0x68] sm:$0xff]
        %v822 = vld [vmem:[%s466 + $0x70] sm:$0xff]
        %v823 = vld [vmem:[%s466 + $0x78] sm:$0xff]
        %v824 = vld [vmem:[%s466 + $0x80] sm:$0xff]
        %v825 = vld [vmem:[%s466 + $0x88] sm:$0xff]
        %v826 = vld [vmem:[%s466 + $0x90] sm:$0xff]
        %v827 = vld [vmem:[%s466 + $0x98] sm:$0xff]
        %v828 = vld [vmem:[%s466 + $0xa0] sm:$0xff]
        %v829 = vld [vmem:[%s466 + $0xa8] sm:$0xff]
        %v830 = vld [vmem:[%s466 + $0xb0] sm:$0xff]
        %v831 = vld [vmem:[%s466 + $0xb8] sm:$0xff]
        %v832 = vld [vmem:[%s466 + $0xc0] sm:$0xff]
        %v833 = vld [vmem:[%s466 + $0xc8] sm:$0xff]
        %v834 = vld [vmem:[%s466 + $0xd0] sm:$0xff]
        %v835 = vld [vmem:[%s466 + $0xd8] sm:$0xff]
        %v836 = vld [vmem:[%s466 + $0xe0] sm:$0xff]
        %v837 = vld [vmem:[%s466 + $0xe8] sm:$0xff]
        %v838 = vld [vmem:[%s466 + $0xf0] sm:$0xff]
        %v839 = vld [vmem:[%s466 + $0xf8] sm:$0xff]
        %v840 = vld [vmem:[%s472] sm:$0xff]
        %v841 = vld [vmem:[%s472 + $0x8] sm:$0xff]
        %v842 = vld [vmem:[%s472 + $0x10] sm:$0xff]
        %v843 = vld [vmem:[%s472 + $0x18] sm:$0xff]
        %v844 = vld [vmem:[%s472 + $0x20] sm:$0xff]
        %v845 = vld [vmem:[%s472 + $0x28] sm:$0xff]
        %v846 = vld [vmem:[%s472 + $0x30] sm:$0xff]
        %v847 = vld [vmem:[%s472 + $0x38] sm:$0xff]
        %v848 = vld [vmem:[%s472 + $0x40] sm:$0xff]
        %v849 = vld [vmem:[%s472 + $0x48] sm:$0xff]
        %v850 = vld [vmem:[%s472 + $0x50] sm:$0xff]
        %v851 = vld [vmem:[%s472 + $0x58] sm:$0xff]
        %v852 = vld [vmem:[%s472 + $0x60] sm:$0xff]
        %v853 = vld [vmem:[%s472 + $0x68] sm:$0xff]
        %v854 = vld [vmem:[%s472 + $0x70] sm:$0xff]
        %v855 = vld [vmem:[%s472 + $0x78] sm:$0xff]
        %v856 = vld [vmem:[%s472 + $0x80] sm:$0xff]
        %v857 = vld [vmem:[%s472 + $0x88] sm:$0xff]
        %v858 = vld [vmem:[%s472 + $0x90] sm:$0xff]
        %v859 = vld [vmem:[%s472 + $0x98] sm:$0xff]
        %v860 = vld [vmem:[%s472 + $0xa0] sm:$0xff]
        %v861 = vld [vmem:[%s472 + $0xa8] sm:$0xff]
        %v862 = vld [vmem:[%s472 + $0xb0] sm:$0xff]
        %v863 = vld [vmem:[%s472 + $0xb8] sm:$0xff]
        %v864 = vld [vmem:[%s472 + $0xc0] sm:$0xff]
        %v865 = vld [vmem:[%s472 + $0xc8] sm:$0xff]
        %v866 = vld [vmem:[%s472 + $0xd0] sm:$0xff]
        %v867 = vld [vmem:[%s472 + $0xd8] sm:$0xff]
        %v868 = vld [vmem:[%s472 + $0xe0] sm:$0xff]
        %v869 = vld [vmem:[%s472 + $0xe8] sm:$0xff]
        %v870 = vld [vmem:[%s472 + $0xf0] sm:$0xff]
        %v871 = vld [vmem:[%s472 + $0xf8] sm:$0xff]
        %873 = vset.pattern.permute.xlu0 0
        %874 = vperm.xlu0 %873, %v808
        %v875 = vpop.permute.xlu0 %874
        %878 = vset.pattern.permute.xlu0 0
        %879 = vperm.xlu0 %878, %v809
        %v880 = vpop.permute.xlu0 %879
        %883 = vset.pattern.permute.xlu0 0
        %884 = vperm.xlu0 %883, %v810
        %v885 = vpop.permute.xlu0 %884
        %888 = vset.pattern.permute.xlu0 0
        %889 = vperm.xlu0 %888, %v811
        %v890 = vpop.permute.xlu0 %889
        %893 = vset.pattern.permute.xlu0 0
        %894 = vperm.xlu0 %893, %v812
        %v895 = vpop.permute.xlu0 %894
        %898 = vset.pattern.permute.xlu0 0
        %899 = vperm.xlu0 %898, %v813
        %v900 = vpop.permute.xlu0 %899
        %903 = vset.pattern.permute.xlu0 0
        %904 = vperm.xlu0 %903, %v814
        %v905 = vpop.permute.xlu0 %904
        %908 = vset.pattern.permute.xlu0 0
        %909 = vperm.xlu0 %908, %v815
        %v910 = vpop.permute.xlu0 %909
        %913 = vset.pattern.permute.xlu0 0
        %914 = vperm.xlu0 %913, %v816
        %v915 = vpop.permute.xlu0 %914
        %918 = vset.pattern.permute.xlu0 0
        %919 = vperm.xlu0 %918, %v817
        %v920 = vpop.permute.xlu0 %919
        %923 = vset.pattern.permute.xlu0 0
        %924 = vperm.xlu0 %923, %v818
        %v925 = vpop.permute.xlu0 %924
        %928 = vset.pattern.permute.xlu0 0
        %929 = vperm.xlu0 %928, %v819
        %v930 = vpop.permute.xlu0 %929
        %933 = vset.pattern.permute.xlu0 0
        %934 = vperm.xlu0 %933, %v820
        %v935 = vpop.permute.xlu0 %934
        %938 = vset.pattern.permute.xlu0 0
        %939 = vperm.xlu0 %938, %v821
        %v940 = vpop.permute.xlu0 %939
        %943 = vset.pattern.permute.xlu0 0
        %944 = vperm.xlu0 %943, %v822
        %v945 = vpop.permute.xlu0 %944
        %948 = vset.pattern.permute.xlu0 0
        %949 = vperm.xlu0 %948, %v823
        %v950 = vpop.permute.xlu0 %949
        %953 = vset.pattern.permute.xlu0 0
        %954 = vperm.xlu0 %953, %v824
        %v955 = vpop.permute.xlu0 %954
        %958 = vset.pattern.permute.xlu0 0
        %959 = vperm.xlu0 %958, %v825
        %v960 = vpop.permute.xlu0 %959
        %963 = vset.pattern.permute.xlu0 0
        %964 = vperm.xlu0 %963, %v826
        %v965 = vpop.permute.xlu0 %964
        %968 = vset.pattern.permute.xlu0 0
        %969 = vperm.xlu0 %968, %v827
        %v970 = vpop.permute.xlu0 %969
        %973 = vset.pattern.permute.xlu0 0
        %974 = vperm.xlu0 %973, %v828
        %v975 = vpop.permute.xlu0 %974
        %978 = vset.pattern.permute.xlu0 0
        %979 = vperm.xlu0 %978, %v829
        %v980 = vpop.permute.xlu0 %979
        %983 = vset.pattern.permute.xlu0 0
        %984 = vperm.xlu0 %983, %v830
        %v985 = vpop.permute.xlu0 %984
        %988 = vset.pattern.permute.xlu0 0
        %989 = vperm.xlu0 %988, %v831
        %v990 = vpop.permute.xlu0 %989
        %993 = vset.pattern.permute.xlu0 0
        %994 = vperm.xlu0 %993, %v832
        %v995 = vpop.permute.xlu0 %994
        %998 = vset.pattern.permute.xlu0 0
        %999 = vperm.xlu0 %998, %v833
        %v1000 = vpop.permute.xlu0 %999
        %1003 = vset.pattern.permute.xlu0 0
        %1004 = vperm.xlu0 %1003, %v834
        %v1005 = vpop.permute.xlu0 %1004
        %1008 = vset.pattern.permute.xlu0 0
        %1009 = vperm.xlu0 %1008, %v835
        %v1010 = vpop.permute.xlu0 %1009
        %1013 = vset.pattern.permute.xlu0 0
        %1014 = vperm.xlu0 %1013, %v836
        %v1015 = vpop.permute.xlu0 %1014
        %1018 = vset.pattern.permute.xlu0 0
        %1019 = vperm.xlu0 %1018, %v837
        %v1020 = vpop.permute.xlu0 %1019
        %1023 = vset.pattern.permute.xlu0 0
        %1024 = vperm.xlu0 %1023, %v838
        %v1025 = vpop.permute.xlu0 %1024
        %1028 = vset.pattern.permute.xlu0 0
        %1029 = vperm.xlu0 %1028, %v839
        %v1030 = vpop.permute.xlu0 %1029
        %v1032 = vlaneseq
        %v1033 = vshrl.u32 %v1032, 7
        %v1034 = vsub.s32 0, %v1033
        %v1035 = vrot.slane %v650, %v1034
        %v1036 = vlaneseq
        %v1037 = vshrl.u32 %v1036, 7
        %v1038 = vsub.s32 0, %v1037
        %v1039 = vrot.slane %v654, %v1038
        %v1040 = vlaneseq
        %v1041 = vshrl.u32 %v1040, 7
        %v1042 = vsub.s32 0, %v1041
        %v1043 = vrot.slane %v660, %v1042
        %v1044 = vlaneseq
        %v1045 = vshrl.u32 %v1044, 7
        %v1046 = vsub.s32 0, %v1045
        %v1047 = vrot.slane %v664, %v1046
        %v1048 = vlaneseq
        %v1049 = vshrl.u32 %v1048, 7
        %v1050 = vsub.s32 0, %v1049
        %v1051 = vrot.slane %v670, %v1050
        %v1052 = vlaneseq
        %v1053 = vshrl.u32 %v1052, 7
        %v1054 = vsub.s32 0, %v1053
        %v1055 = vrot.slane %v674, %v1054
        %v1056 = vlaneseq
        %v1057 = vshrl.u32 %v1056, 7
        %v1058 = vsub.s32 0, %v1057
        %v1059 = vrot.slane %v680, %v1058
        %v1060 = vlaneseq
        %v1061 = vshrl.u32 %v1060, 7
        %v1062 = vsub.s32 0, %v1061
        %v1063 = vrot.slane %v684, %v1062
        %v1064 = vlaneseq
        %v1065 = vshrl.u32 %v1064, 7
        %v1066 = vsub.s32 0, %v1065
        %v1067 = vrot.slane %v690, %v1066
        %v1068 = vlaneseq
        %v1069 = vshrl.u32 %v1068, 7
        %v1070 = vsub.s32 0, %v1069
        %v1071 = vrot.slane %v694, %v1070
        %v1072 = vlaneseq
        %v1073 = vshrl.u32 %v1072, 7
        %v1074 = vsub.s32 0, %v1073
        %v1075 = vrot.slane %v700, %v1074
        %v1076 = vlaneseq
        %v1077 = vshrl.u32 %v1076, 7
        %v1078 = vsub.s32 0, %v1077
        %v1079 = vrot.slane %v704, %v1078
        %v1080 = vlaneseq
        %v1081 = vshrl.u32 %v1080, 7
        %v1082 = vsub.s32 0, %v1081
        %v1083 = vrot.slane %v710, %v1082
        %v1084 = vlaneseq
        %v1085 = vshrl.u32 %v1084, 7
        %v1086 = vsub.s32 0, %v1085
        %v1087 = vrot.slane %v714, %v1086
        %v1088 = vlaneseq
        %v1089 = vshrl.u32 %v1088, 7
        %v1090 = vsub.s32 0, %v1089
        %v1091 = vrot.slane %v720, %v1090
        %v1092 = vlaneseq
        %v1093 = vshrl.u32 %v1092, 7
        %v1094 = vsub.s32 0, %v1093
        %v1095 = vrot.slane %v724, %v1094
        %v1096 = vlaneseq
        %v1097 = vshrl.u32 %v1096, 7
        %v1098 = vsub.s32 0, %v1097
        %v1099 = vrot.slane %v730, %v1098
        %v1100 = vlaneseq
        %v1101 = vshrl.u32 %v1100, 7
        %v1102 = vsub.s32 0, %v1101
        %v1103 = vrot.slane %v734, %v1102
        %v1104 = vlaneseq
        %v1105 = vshrl.u32 %v1104, 7
        %v1106 = vsub.s32 0, %v1105
        %v1107 = vrot.slane %v740, %v1106
        %v1108 = vlaneseq
        %v1109 = vshrl.u32 %v1108, 7
        %v1110 = vsub.s32 0, %v1109
        %v1111 = vrot.slane %v744, %v1110
        %v1112 = vlaneseq
        %v1113 = vshrl.u32 %v1112, 7
        %v1114 = vsub.s32 0, %v1113
        %v1115 = vrot.slane %v750, %v1114
        %v1116 = vlaneseq
        %v1117 = vshrl.u32 %v1116, 7
        %v1118 = vsub.s32 0, %v1117
        %v1119 = vrot.slane %v754, %v1118
        %v1120 = vlaneseq
        %v1121 = vshrl.u32 %v1120, 7
        %v1122 = vsub.s32 0, %v1121
        %v1123 = vrot.slane %v760, %v1122
        %v1124 = vlaneseq
        %v1125 = vshrl.u32 %v1124, 7
        %v1126 = vsub.s32 0, %v1125
        %v1127 = vrot.slane %v764, %v1126
        %v1128 = vlaneseq
        %v1129 = vshrl.u32 %v1128, 7
        %v1130 = vsub.s32 0, %v1129
        %v1131 = vrot.slane %v770, %v1130
        %v1132 = vlaneseq
        %v1133 = vshrl.u32 %v1132, 7
        %v1134 = vsub.s32 0, %v1133
        %v1135 = vrot.slane %v774, %v1134
        %v1136 = vlaneseq
        %v1137 = vshrl.u32 %v1136, 7
        %v1138 = vsub.s32 0, %v1137
        %v1139 = vrot.slane %v780, %v1138
        %v1140 = vlaneseq
        %v1141 = vshrl.u32 %v1140, 7
        %v1142 = vsub.s32 0, %v1141
        %v1143 = vrot.slane %v784, %v1142
        %v1144 = vlaneseq
        %v1145 = vshrl.u32 %v1144, 7
        %v1146 = vsub.s32 0, %v1145
        %v1147 = vrot.slane %v790, %v1146
        %v1148 = vlaneseq
        %v1149 = vshrl.u32 %v1148, 7
        %v1150 = vsub.s32 0, %v1149
        %v1151 = vrot.slane %v794, %v1150
        %v1152 = vlaneseq
        %v1153 = vshrl.u32 %v1152, 7
        %v1154 = vsub.s32 0, %v1153
        %v1155 = vrot.slane %v800, %v1154
        %v1156 = vlaneseq
        %v1157 = vshrl.u32 %v1156, 7
        %v1158 = vsub.s32 0, %v1157
        %v1159 = vrot.slane %v804, %v1158
        %v1160 = vmul.f32 %v875, %v1035
        %v1161 = vmul.f32 %v880, %v1039
        %v1162 = vmul.f32 %v885, %v1043
        %v1163 = vmul.f32 %v890, %v1047
        %v1164 = vmul.f32 %v895, %v1051
        %v1165 = vmul.f32 %v900, %v1055
        %v1166 = vmul.f32 %v905, %v1059
        %v1167 = vmul.f32 %v910, %v1063
        %v1168 = vmul.f32 %v915, %v1067
        %v1169 = vmul.f32 %v920, %v1071
        %v1170 = vmul.f32 %v925, %v1075
        %v1171 = vmul.f32 %v930, %v1079
        %v1172 = vmul.f32 %v935, %v1083
        %v1173 = vmul.f32 %v940, %v1087
        %v1174 = vmul.f32 %v945, %v1091
        %v1175 = vmul.f32 %v950, %v1095
        %v1176 = vmul.f32 %v955, %v1099
        %v1177 = vmul.f32 %v960, %v1103
        %v1178 = vmul.f32 %v965, %v1107
        %v1179 = vmul.f32 %v970, %v1111
        %v1180 = vmul.f32 %v975, %v1115
        %v1181 = vmul.f32 %v980, %v1119
        %v1182 = vmul.f32 %v985, %v1123
        %v1183 = vmul.f32 %v990, %v1127
        %v1184 = vmul.f32 %v995, %v1131
        %v1185 = vmul.f32 %v1000, %v1135
        %v1186 = vmul.f32 %v1005, %v1139
        %v1187 = vmul.f32 %v1010, %v1143
        %v1188 = vmul.f32 %v1015, %v1147
        %v1189 = vmul.f32 %v1020, %v1151
        %v1190 = vmul.f32 %v1025, %v1155
        %v1191 = vmul.f32 %v1030, %v1159
        %v1192 = vadd.f32 %v1160, 0.0
        %v1193 = vadd.f32 %v1161, 0.0
        %v1194 = vadd.f32 %v1162, 0.0
        %v1195 = vadd.f32 %v1163, 0.0
        %v1196 = vadd.f32 %v1164, 0.0
        %v1197 = vadd.f32 %v1165, 0.0
        %v1198 = vadd.f32 %v1166, 0.0
        %v1199 = vadd.f32 %v1167, 0.0
        %v1200 = vadd.f32 %v1168, 0.0
        %v1201 = vadd.f32 %v1169, 0.0
        %v1202 = vadd.f32 %v1170, 0.0
        %v1203 = vadd.f32 %v1171, 0.0
        %v1204 = vadd.f32 %v1172, 0.0
        %v1205 = vadd.f32 %v1173, 0.0
        %v1206 = vadd.f32 %v1174, 0.0
        %v1207 = vadd.f32 %v1175, 0.0
        %v1208 = vadd.f32 %v1176, 0.0
        %v1209 = vadd.f32 %v1177, 0.0
        %v1210 = vadd.f32 %v1178, 0.0
        %v1211 = vadd.f32 %v1179, 0.0
        %v1212 = vadd.f32 %v1180, 0.0
        %v1213 = vadd.f32 %v1181, 0.0
        %v1214 = vadd.f32 %v1182, 0.0
        %v1215 = vadd.f32 %v1183, 0.0
        %v1216 = vadd.f32 %v1184, 0.0
        %v1217 = vadd.f32 %v1185, 0.0
        %v1218 = vadd.f32 %v1186, 0.0
        %v1219 = vadd.f32 %v1187, 0.0
        %v1220 = vadd.f32 %v1188, 0.0
        %v1221 = vadd.f32 %v1189, 0.0
        %v1222 = vadd.f32 %v1190, 0.0
        %v1223 = vadd.f32 %v1191, 0.0
        %1225 = vset.pattern.permute.xlu0 0
        %1226 = vperm.xlu0 %1225, %v840
        %v1227 = vpop.permute.xlu0 %1226
        %1230 = vset.pattern.permute.xlu0 0
        %1231 = vperm.xlu0 %1230, %v841
        %v1232 = vpop.permute.xlu0 %1231
        %1235 = vset.pattern.permute.xlu0 0
        %1236 = vperm.xlu0 %1235, %v842
        %v1237 = vpop.permute.xlu0 %1236
        %1240 = vset.pattern.permute.xlu0 0
        %1241 = vperm.xlu0 %1240, %v843
        %v1242 = vpop.permute.xlu0 %1241
        %1245 = vset.pattern.permute.xlu0 0
        %1246 = vperm.xlu0 %1245, %v844
        %v1247 = vpop.permute.xlu0 %1246
        %1250 = vset.pattern.permute.xlu0 0
        %1251 = vperm.xlu0 %1250, %v845
        %v1252 = vpop.permute.xlu0 %1251
        %1255 = vset.pattern.permute.xlu0 0
        %1256 = vperm.xlu0 %1255, %v846
        %v1257 = vpop.permute.xlu0 %1256
        %1260 = vset.pattern.permute.xlu0 0
        %1261 = vperm.xlu0 %1260, %v847
        %v1262 = vpop.permute.xlu0 %1261
        %1265 = vset.pattern.permute.xlu0 0
        %1266 = vperm.xlu0 %1265, %v848
        %v1267 = vpop.permute.xlu0 %1266
        %1270 = vset.pattern.permute.xlu0 0
        %1271 = vperm.xlu0 %1270, %v849
        %v1272 = vpop.permute.xlu0 %1271
        %1275 = vset.pattern.permute.xlu0 0
        %1276 = vperm.xlu0 %1275, %v850
        %v1277 = vpop.permute.xlu0 %1276
        %1280 = vset.pattern.permute.xlu0 0
        %1281 = vperm.xlu0 %1280, %v851
        %v1282 = vpop.permute.xlu0 %1281
        %1285 = vset.pattern.permute.xlu0 0
        %1286 = vperm.xlu0 %1285, %v852
        %v1287 = vpop.permute.xlu0 %1286
        %1290 = vset.pattern.permute.xlu0 0
        %1291 = vperm.xlu0 %1290, %v853
        %v1292 = vpop.permute.xlu0 %1291
        %1295 = vset.pattern.permute.xlu0 0
        %1296 = vperm.xlu0 %1295, %v854
        %v1297 = vpop.permute.xlu0 %1296
        %1300 = vset.pattern.permute.xlu0 0
        %1301 = vperm.xlu0 %1300, %v855
        %v1302 = vpop.permute.xlu0 %1301
        %1305 = vset.pattern.permute.xlu0 0
        %1306 = vperm.xlu0 %1305, %v856
        %v1307 = vpop.permute.xlu0 %1306
        %1310 = vset.pattern.permute.xlu0 0
        %1311 = vperm.xlu0 %1310, %v857
        %v1312 = vpop.permute.xlu0 %1311
        %1315 = vset.pattern.permute.xlu0 0
        %1316 = vperm.xlu0 %1315, %v858
        %v1317 = vpop.permute.xlu0 %1316
        %1320 = vset.pattern.permute.xlu0 0
        %1321 = vperm.xlu0 %1320, %v859
        %v1322 = vpop.permute.xlu0 %1321
        %1325 = vset.pattern.permute.xlu0 0
        %1326 = vperm.xlu0 %1325, %v860
        %v1327 = vpop.permute.xlu0 %1326
        %1330 = vset.pattern.permute.xlu0 0
        %1331 = vperm.xlu0 %1330, %v861
        %v1332 = vpop.permute.xlu0 %1331
        %1335 = vset.pattern.permute.xlu0 0
        %1336 = vperm.xlu0 %1335, %v862
        %v1337 = vpop.permute.xlu0 %1336
        %1340 = vset.pattern.permute.xlu0 0
        %1341 = vperm.xlu0 %1340, %v863
        %v1342 = vpop.permute.xlu0 %1341
        %1345 = vset.pattern.permute.xlu0 0
        %1346 = vperm.xlu0 %1345, %v864
        %v1347 = vpop.permute.xlu0 %1346
        %1350 = vset.pattern.permute.xlu0 0
        %1351 = vperm.xlu0 %1350, %v865
        %v1352 = vpop.permute.xlu0 %1351
        %1355 = vset.pattern.permute.xlu0 0
        %1356 = vperm.xlu0 %1355, %v866
        %v1357 = vpop.permute.xlu0 %1356
        %1360 = vset.pattern.permute.xlu0 0
        %1361 = vperm.xlu0 %1360, %v867
        %v1362 = vpop.permute.xlu0 %1361
        %1365 = vset.pattern.permute.xlu0 0
        %1366 = vperm.xlu0 %1365, %v868
        %v1367 = vpop.permute.xlu0 %1366
        %1370 = vset.pattern.permute.xlu0 0
        %1371 = vperm.xlu0 %1370, %v869
        %v1372 = vpop.permute.xlu0 %1371
        %1375 = vset.pattern.permute.xlu0 0
        %1376 = vperm.xlu0 %1375, %v870
        %v1377 = vpop.permute.xlu0 %1376
        %1380 = vset.pattern.permute.xlu0 0
        %1381 = vperm.xlu0 %1380, %v871
        %v1382 = vpop.permute.xlu0 %1381
        %v1384 = vlaneseq
        %v1385 = vshrl.u32 %v1384, 7
        %v1386 = vsub.s32 0, %v1385
        %v1387 = vrot.slane %v652, %v1386
        %v1388 = vlaneseq
        %v1389 = vshrl.u32 %v1388, 7
        %v1390 = vsub.s32 0, %v1389
        %v1391 = vrot.slane %v656, %v1390
        %v1392 = vlaneseq
        %v1393 = vshrl.u32 %v1392, 7
        %v1394 = vsub.s32 0, %v1393
        %v1395 = vrot.slane %v662, %v1394
        %v1396 = vlaneseq
        %v1397 = vshrl.u32 %v1396, 7
        %v1398 = vsub.s32 0, %v1397
        %v1399 = vrot.slane %v666, %v1398
        %v1400 = vlaneseq
        %v1401 = vshrl.u32 %v1400, 7
        %v1402 = vsub.s32 0, %v1401
        %v1403 = vrot.slane %v672, %v1402
        %v1404 = vlaneseq
        %v1405 = vshrl.u32 %v1404, 7
        %v1406 = vsub.s32 0, %v1405
        %v1407 = vrot.slane %v676, %v1406
        %v1408 = vlaneseq
        %v1409 = vshrl.u32 %v1408, 7
        %v1410 = vsub.s32 0, %v1409
        %v1411 = vrot.slane %v682, %v1410
        %v1412 = vlaneseq
        %v1413 = vshrl.u32 %v1412, 7
        %v1414 = vsub.s32 0, %v1413
        %v1415 = vrot.slane %v686, %v1414
        %v1416 = vlaneseq
        %v1417 = vshrl.u32 %v1416, 7
        %v1418 = vsub.s32 0, %v1417
        %v1419 = vrot.slane %v692, %v1418
        %v1420 = vlaneseq
        %v1421 = vshrl.u32 %v1420, 7
        %v1422 = vsub.s32 0, %v1421
        %v1423 = vrot.slane %v696, %v1422
        %v1424 = vlaneseq
        %v1425 = vshrl.u32 %v1424, 7
        %v1426 = vsub.s32 0, %v1425
        %v1427 = vrot.slane %v702, %v1426
        %v1428 = vlaneseq
        %v1429 = vshrl.u32 %v1428, 7
        %v1430 = vsub.s32 0, %v1429
        %v1431 = vrot.slane %v706, %v1430
        %v1432 = vlaneseq
        %v1433 = vshrl.u32 %v1432, 7
        %v1434 = vsub.s32 0, %v1433
        %v1435 = vrot.slane %v712, %v1434
        %v1436 = vlaneseq
        %v1437 = vshrl.u32 %v1436, 7
        %v1438 = vsub.s32 0, %v1437
        %v1439 = vrot.slane %v716, %v1438
        %v1440 = vlaneseq
        %v1441 = vshrl.u32 %v1440, 7
        %v1442 = vsub.s32 0, %v1441
        %v1443 = vrot.slane %v722, %v1442
        %v1444 = vlaneseq
        %v1445 = vshrl.u32 %v1444, 7
        %v1446 = vsub.s32 0, %v1445
        %v1447 = vrot.slane %v726, %v1446
        %v1448 = vlaneseq
        %v1449 = vshrl.u32 %v1448, 7
        %v1450 = vsub.s32 0, %v1449
        %v1451 = vrot.slane %v732, %v1450
        %v1452 = vlaneseq
        %v1453 = vshrl.u32 %v1452, 7
        %v1454 = vsub.s32 0, %v1453
        %v1455 = vrot.slane %v736, %v1454
        %v1456 = vlaneseq
        %v1457 = vshrl.u32 %v1456, 7
        %v1458 = vsub.s32 0, %v1457
        %v1459 = vrot.slane %v742, %v1458
        %v1460 = vlaneseq
        %v1461 = vshrl.u32 %v1460, 7
        %v1462 = vsub.s32 0, %v1461
        %v1463 = vrot.slane %v746, %v1462
        %v1464 = vlaneseq
        %v1465 = vshrl.u32 %v1464, 7
        %v1466 = vsub.s32 0, %v1465
        %v1467 = vrot.slane %v752, %v1466
        %v1468 = vlaneseq
        %v1469 = vshrl.u32 %v1468, 7
        %v1470 = vsub.s32 0, %v1469
        %v1471 = vrot.slane %v756, %v1470
        %v1472 = vlaneseq
        %v1473 = vshrl.u32 %v1472, 7
        %v1474 = vsub.s32 0, %v1473
        %v1475 = vrot.slane %v762, %v1474
        %v1476 = vlaneseq
        %v1477 = vshrl.u32 %v1476, 7
        %v1478 = vsub.s32 0, %v1477
        %v1479 = vrot.slane %v766, %v1478
        %v1480 = vlaneseq
        %v1481 = vshrl.u32 %v1480, 7
        %v1482 = vsub.s32 0, %v1481
        %v1483 = vrot.slane %v772, %v1482
        %v1484 = vlaneseq
        %v1485 = vshrl.u32 %v1484, 7
        %v1486 = vsub.s32 0, %v1485
        %v1487 = vrot.slane %v776, %v1486
        %v1488 = vlaneseq
        %v1489 = vshrl.u32 %v1488, 7
        %v1490 = vsub.s32 0, %v1489
        %v1491 = vrot.slane %v782, %v1490
        %v1492 = vlaneseq
        %v1493 = vshrl.u32 %v1492, 7
        %v1494 = vsub.s32 0, %v1493
        %v1495 = vrot.slane %v786, %v1494
        %v1496 = vlaneseq
        %v1497 = vshrl.u32 %v1496, 7
        %v1498 = vsub.s32 0, %v1497
        %v1499 = vrot.slane %v792, %v1498
        %v1500 = vlaneseq
        %v1501 = vshrl.u32 %v1500, 7
        %v1502 = vsub.s32 0, %v1501
        %v1503 = vrot.slane %v796, %v1502
        %v1504 = vlaneseq
        %v1505 = vshrl.u32 %v1504, 7
        %v1506 = vsub.s32 0, %v1505
        %v1507 = vrot.slane %v802, %v1506
        %v1508 = vlaneseq
        %v1509 = vshrl.u32 %v1508, 7
        %v1510 = vsub.s32 0, %v1509
        %v1511 = vrot.slane %v806, %v1510
        %v1512 = vmul.f32 %v1227, %v1387
        %v1513 = vmul.f32 %v1232, %v1391
        %v1514 = vmul.f32 %v1237, %v1395
        %v1515 = vmul.f32 %v1242, %v1399
        %v1516 = vmul.f32 %v1247, %v1403
        %v1517 = vmul.f32 %v1252, %v1407
        %v1518 = vmul.f32 %v1257, %v1411
        %v1519 = vmul.f32 %v1262, %v1415
        %v1520 = vmul.f32 %v1267, %v1419
        %v1521 = vmul.f32 %v1272, %v1423
        %v1522 = vmul.f32 %v1277, %v1427
        %v1523 = vmul.f32 %v1282, %v1431
        %v1524 = vmul.f32 %v1287, %v1435
        %v1525 = vmul.f32 %v1292, %v1439
        %v1526 = vmul.f32 %v1297, %v1443
        %v1527 = vmul.f32 %v1302, %v1447
        %v1528 = vmul.f32 %v1307, %v1451
        %v1529 = vmul.f32 %v1312, %v1455
        %v1530 = vmul.f32 %v1317, %v1459
        %v1531 = vmul.f32 %v1322, %v1463
        %v1532 = vmul.f32 %v1327, %v1467
        %v1533 = vmul.f32 %v1332, %v1471
        %v1534 = vmul.f32 %v1337, %v1475
        %v1535 = vmul.f32 %v1342, %v1479
        %v1536 = vmul.f32 %v1347, %v1483
        %v1537 = vmul.f32 %v1352, %v1487
        %v1538 = vmul.f32 %v1357, %v1491
        %v1539 = vmul.f32 %v1362, %v1495
        %v1540 = vmul.f32 %v1367, %v1499
        %v1541 = vmul.f32 %v1372, %v1503
        %v1542 = vmul.f32 %v1377, %v1507
        %v1543 = vmul.f32 %v1382, %v1511
        %v1544 = vadd.f32 %v1512, 0.0
        %v1545 = vadd.f32 %v1513, 0.0
        %v1546 = vadd.f32 %v1514, 0.0
        %v1547 = vadd.f32 %v1515, 0.0
        %v1548 = vadd.f32 %v1516, 0.0
        %v1549 = vadd.f32 %v1517, 0.0
        %v1550 = vadd.f32 %v1518, 0.0
        %v1551 = vadd.f32 %v1519, 0.0
        %v1552 = vadd.f32 %v1520, 0.0
        %v1553 = vadd.f32 %v1521, 0.0
        %v1554 = vadd.f32 %v1522, 0.0
        %v1555 = vadd.f32 %v1523, 0.0
        %v1556 = vadd.f32 %v1524, 0.0
        %v1557 = vadd.f32 %v1525, 0.0
        %v1558 = vadd.f32 %v1526, 0.0
        %v1559 = vadd.f32 %v1527, 0.0
        %v1560 = vadd.f32 %v1528, 0.0
        %v1561 = vadd.f32 %v1529, 0.0
        %v1562 = vadd.f32 %v1530, 0.0
        %v1563 = vadd.f32 %v1531, 0.0
        %v1564 = vadd.f32 %v1532, 0.0
        %v1565 = vadd.f32 %v1533, 0.0
        %v1566 = vadd.f32 %v1534, 0.0
        %v1567 = vadd.f32 %v1535, 0.0
        %v1568 = vadd.f32 %v1536, 0.0
        %v1569 = vadd.f32 %v1537, 0.0
        %v1570 = vadd.f32 %v1538, 0.0
        %v1571 = vadd.f32 %v1539, 0.0
        %v1572 = vadd.f32 %v1540, 0.0
        %v1573 = vadd.f32 %v1541, 0.0
        %v1574 = vadd.f32 %v1542, 0.0
        %v1575 = vadd.f32 %v1543, 0.0
        %1576 = vset.pattern.permute.xlu0 1
        %1577 = vperm.xlu0 %1576, %v808
        %v1578 = vpop.permute.xlu0 %1577
        %1580 = vset.pattern.permute.xlu0 1
        %1581 = vperm.xlu0 %1580, %v809
        %v1582 = vpop.permute.xlu0 %1581
        %1584 = vset.pattern.permute.xlu0 1
        %1585 = vperm.xlu0 %1584, %v810
        %v1586 = vpop.permute.xlu0 %1585
        %1588 = vset.pattern.permute.xlu0 1
        %1589 = vperm.xlu0 %1588, %v811
        %v1590 = vpop.permute.xlu0 %1589
        %1592 = vset.pattern.permute.xlu0 1
        %1593 = vperm.xlu0 %1592, %v812
        %v1594 = vpop.permute.xlu0 %1593
        %1596 = vset.pattern.permute.xlu0 1
        %1597 = vperm.xlu0 %1596, %v813
        %v1598 = vpop.permute.xlu0 %1597
        %1600 = vset.pattern.permute.xlu0 1
        %1601 = vperm.xlu0 %1600, %v814
        %v1602 = vpop.permute.xlu0 %1601
        %1604 = vset.pattern.permute.xlu0 1
        %1605 = vperm.xlu0 %1604, %v815
        %v1606 = vpop.permute.xlu0 %1605
        %1608 = vset.pattern.permute.xlu0 1
        %1609 = vperm.xlu0 %1608, %v816
        %v1610 = vpop.permute.xlu0 %1609
        %1612 = vset.pattern.permute.xlu0 1
        %1613 = vperm.xlu0 %1612, %v817
        %v1614 = vpop.permute.xlu0 %1613
        %1616 = vset.pattern.permute.xlu0 1
        %1617 = vperm.xlu0 %1616, %v818
        %v1618 = vpop.permute.xlu0 %1617
        %1620 = vset.pattern.permute.xlu0 1
        %1621 = vperm.xlu0 %1620, %v819
        %v1622 = vpop.permute.xlu0 %1621
        %1624 = vset.pattern.permute.xlu0 1
        %1625 = vperm.xlu0 %1624, %v820
        %v1626 = vpop.permute.xlu0 %1625
        %1628 = vset.pattern.permute.xlu0 1
        %1629 = vperm.xlu0 %1628, %v821
        %v1630 = vpop.permute.xlu0 %1629
        %1632 = vset.pattern.permute.xlu0 1
        %1633 = vperm.xlu0 %1632, %v822
        %v1634 = vpop.permute.xlu0 %1633
        %1636 = vset.pattern.permute.xlu0 1
        %1637 = vperm.xlu0 %1636, %v823
        %v1638 = vpop.permute.xlu0 %1637
        %1640 = vset.pattern.permute.xlu0 1
        %1641 = vperm.xlu0 %1640, %v824
        %v1642 = vpop.permute.xlu0 %1641
        %1644 = vset.pattern.permute.xlu0 1
        %1645 = vperm.xlu0 %1644, %v825
        %v1646 = vpop.permute.xlu0 %1645
        %1648 = vset.pattern.permute.xlu0 1
        %1649 = vperm.xlu0 %1648, %v826
        %v1650 = vpop.permute.xlu0 %1649
        %1652 = vset.pattern.permute.xlu0 1
        %1653 = vperm.xlu0 %1652, %v827
        %v1654 = vpop.permute.xlu0 %1653
        %1656 = vset.pattern.permute.xlu0 1
        %1657 = vperm.xlu0 %1656, %v828
        %v1658 = vpop.permute.xlu0 %1657
        %1660 = vset.pattern.permute.xlu0 1
        %1661 = vperm.xlu0 %1660, %v829
        %v1662 = vpop.permute.xlu0 %1661
        %1664 = vset.pattern.permute.xlu0 1
        %1665 = vperm.xlu0 %1664, %v830
        %v1666 = vpop.permute.xlu0 %1665
        %1668 = vset.pattern.permute.xlu0 1
        %1669 = vperm.xlu0 %1668, %v831
        %v1670 = vpop.permute.xlu0 %1669
        %1672 = vset.pattern.permute.xlu0 1
        %1673 = vperm.xlu0 %1672, %v832
        %v1674 = vpop.permute.xlu0 %1673
        %1676 = vset.pattern.permute.xlu0 1
        %1677 = vperm.xlu0 %1676, %v833
        %v1678 = vpop.permute.xlu0 %1677
        %1680 = vset.pattern.permute.xlu0 1
        %1681 = vperm.xlu0 %1680, %v834
        %v1682 = vpop.permute.xlu0 %1681
        %1684 = vset.pattern.permute.xlu0 1
        %1685 = vperm.xlu0 %1684, %v835
        %v1686 = vpop.permute.xlu0 %1685
        %1688 = vset.pattern.permute.xlu0 1
        %1689 = vperm.xlu0 %1688, %v836
        %v1690 = vpop.permute.xlu0 %1689
        %1692 = vset.pattern.permute.xlu0 1
        %1693 = vperm.xlu0 %1692, %v837
        %v1694 = vpop.permute.xlu0 %1693
        %1696 = vset.pattern.permute.xlu0 1
        %1697 = vperm.xlu0 %1696, %v838
        %v1698 = vpop.permute.xlu0 %1697
        %1700 = vset.pattern.permute.xlu0 1
        %1701 = vperm.xlu0 %1700, %v839
        %v1702 = vpop.permute.xlu0 %1701
        %v1704 = vlaneseq
        %v1705 = vshrl.u32 %v1704, 7
        %v1706 = vsub.s32 1, %v1705
        %v1707 = vrot.slane %v650, %v1706
        %v1708 = vlaneseq
        %v1709 = vshrl.u32 %v1708, 7
        %v1710 = vsub.s32 1, %v1709
        %v1711 = vrot.slane %v654, %v1710
        %v1712 = vlaneseq
        %v1713 = vshrl.u32 %v1712, 7
        %v1714 = vsub.s32 1, %v1713
        %v1715 = vrot.slane %v660, %v1714
        %v1716 = vlaneseq
        %v1717 = vshrl.u32 %v1716, 7
        %v1718 = vsub.s32 1, %v1717
        %v1719 = vrot.slane %v664, %v1718
        %v1720 = vlaneseq
        %v1721 = vshrl.u32 %v1720, 7
        %v1722 = vsub.s32 1, %v1721
        %v1723 = vrot.slane %v670, %v1722
        %v1724 = vlaneseq
        %v1725 = vshrl.u32 %v1724, 7
        %v1726 = vsub.s32 1, %v1725
        %v1727 = vrot.slane %v674, %v1726
        %v1728 = vlaneseq
        %v1729 = vshrl.u32 %v1728, 7
        %v1730 = vsub.s32 1, %v1729
        %v1731 = vrot.slane %v680, %v1730
        %v1732 = vlaneseq
        %v1733 = vshrl.u32 %v1732, 7
        %v1734 = vsub.s32 1, %v1733
        %v1735 = vrot.slane %v684, %v1734
        %v1736 = vlaneseq
        %v1737 = vshrl.u32 %v1736, 7
        %v1738 = vsub.s32 1, %v1737
        %v1739 = vrot.slane %v690, %v1738
        %v1740 = vlaneseq
        %v1741 = vshrl.u32 %v1740, 7
        %v1742 = vsub.s32 1, %v1741
        %v1743 = vrot.slane %v694, %v1742
        %v1744 = vlaneseq
        %v1745 = vshrl.u32 %v1744, 7
        %v1746 = vsub.s32 1, %v1745
        %v1747 = vrot.slane %v700, %v1746
        %v1748 = vlaneseq
        %v1749 = vshrl.u32 %v1748, 7
        %v1750 = vsub.s32 1, %v1749
        %v1751 = vrot.slane %v704, %v1750
        %v1752 = vlaneseq
        %v1753 = vshrl.u32 %v1752, 7
        %v1754 = vsub.s32 1, %v1753
        %v1755 = vrot.slane %v710, %v1754
        %v1756 = vlaneseq
        %v1757 = vshrl.u32 %v1756, 7
        %v1758 = vsub.s32 1, %v1757
        %v1759 = vrot.slane %v714, %v1758
        %v1760 = vlaneseq
        %v1761 = vshrl.u32 %v1760, 7
        %v1762 = vsub.s32 1, %v1761
        %v1763 = vrot.slane %v720, %v1762
        %v1764 = vlaneseq
        %v1765 = vshrl.u32 %v1764, 7
        %v1766 = vsub.s32 1, %v1765
        %v1767 = vrot.slane %v724, %v1766
        %v1768 = vlaneseq
        %v1769 = vshrl.u32 %v1768, 7
        %v1770 = vsub.s32 1, %v1769
        %v1771 = vrot.slane %v730, %v1770
        %v1772 = vlaneseq
        %v1773 = vshrl.u32 %v1772, 7
        %v1774 = vsub.s32 1, %v1773
        %v1775 = vrot.slane %v734, %v1774
        %v1776 = vlaneseq
        %v1777 = vshrl.u32 %v1776, 7
        %v1778 = vsub.s32 1, %v1777
        %v1779 = vrot.slane %v740, %v1778
        %v1780 = vlaneseq
        %v1781 = vshrl.u32 %v1780, 7
        %v1782 = vsub.s32 1, %v1781
        %v1783 = vrot.slane %v744, %v1782
        %v1784 = vlaneseq
        %v1785 = vshrl.u32 %v1784, 7
        %v1786 = vsub.s32 1, %v1785
        %v1787 = vrot.slane %v750, %v1786
        %v1788 = vlaneseq
        %v1789 = vshrl.u32 %v1788, 7
        %v1790 = vsub.s32 1, %v1789
        %v1791 = vrot.slane %v754, %v1790
        %v1792 = vlaneseq
        %v1793 = vshrl.u32 %v1792, 7
        %v1794 = vsub.s32 1, %v1793
        %v1795 = vrot.slane %v760, %v1794
        %v1796 = vlaneseq
        %v1797 = vshrl.u32 %v1796, 7
        %v1798 = vsub.s32 1, %v1797
        %v1799 = vrot.slane %v764, %v1798
        %v1800 = vlaneseq
        %v1801 = vshrl.u32 %v1800, 7
        %v1802 = vsub.s32 1, %v1801
        %v1803 = vrot.slane %v770, %v1802
        %v1804 = vlaneseq
        %v1805 = vshrl.u32 %v1804, 7
        %v1806 = vsub.s32 1, %v1805
        %v1807 = vrot.slane %v774, %v1806
        %v1808 = vlaneseq
        %v1809 = vshrl.u32 %v1808, 7
        %v1810 = vsub.s32 1, %v1809
        %v1811 = vrot.slane %v780, %v1810
        %v1812 = vlaneseq
        %v1813 = vshrl.u32 %v1812, 7
        %v1814 = vsub.s32 1, %v1813
        %v1815 = vrot.slane %v784, %v1814
        %v1816 = vlaneseq
        %v1817 = vshrl.u32 %v1816, 7
        %v1818 = vsub.s32 1, %v1817
        %v1819 = vrot.slane %v790, %v1818
        %v1820 = vlaneseq
        %v1821 = vshrl.u32 %v1820, 7
        %v1822 = vsub.s32 1, %v1821
        %v1823 = vrot.slane %v794, %v1822
        %v1824 = vlaneseq
        %v1825 = vshrl.u32 %v1824, 7
        %v1826 = vsub.s32 1, %v1825
        %v1827 = vrot.slane %v800, %v1826
        %v1828 = vlaneseq
        %v1829 = vshrl.u32 %v1828, 7
        %v1830 = vsub.s32 1, %v1829
        %v1831 = vrot.slane %v804, %v1830
        %v1832 = vmul.f32 %v1578, %v1707
        %v1833 = vmul.f32 %v1582, %v1711
        %v1834 = vmul.f32 %v1586, %v1715
        %v1835 = vmul.f32 %v1590, %v1719
        %v1836 = vmul.f32 %v1594, %v1723
        %v1837 = vmul.f32 %v1598, %v1727
        %v1838 = vmul.f32 %v1602, %v1731
        %v1839 = vmul.f32 %v1606, %v1735
        %v1840 = vmul.f32 %v1610, %v1739
        %v1841 = vmul.f32 %v1614, %v1743
        %v1842 = vmul.f32 %v1618, %v1747
        %v1843 = vmul.f32 %v1622, %v1751
        %v1844 = vmul.f32 %v1626, %v1755
        %v1845 = vmul.f32 %v1630, %v1759
        %v1846 = vmul.f32 %v1634, %v1763
        %v1847 = vmul.f32 %v1638, %v1767
        %v1848 = vmul.f32 %v1642, %v1771
        %v1849 = vmul.f32 %v1646, %v1775
        %v1850 = vmul.f32 %v1650, %v1779
        %v1851 = vmul.f32 %v1654, %v1783
        %v1852 = vmul.f32 %v1658, %v1787
        %v1853 = vmul.f32 %v1662, %v1791
        %v1854 = vmul.f32 %v1666, %v1795
        %v1855 = vmul.f32 %v1670, %v1799
        %v1856 = vmul.f32 %v1674, %v1803
        %v1857 = vmul.f32 %v1678, %v1807
        %v1858 = vmul.f32 %v1682, %v1811
        %v1859 = vmul.f32 %v1686, %v1815
        %v1860 = vmul.f32 %v1690, %v1819
        %v1861 = vmul.f32 %v1694, %v1823
        %v1862 = vmul.f32 %v1698, %v1827
        %v1863 = vmul.f32 %v1702, %v1831
        %v1864 = vadd.f32 %v1192, %v1832
        %v1865 = vadd.f32 %v1193, %v1833
        %v1866 = vadd.f32 %v1194, %v1834
        %v1867 = vadd.f32 %v1195, %v1835
        %v1868 = vadd.f32 %v1196, %v1836
        %v1869 = vadd.f32 %v1197, %v1837
        %v1870 = vadd.f32 %v1198, %v1838
        %v1871 = vadd.f32 %v1199, %v1839
        %v1872 = vadd.f32 %v1200, %v1840
        %v1873 = vadd.f32 %v1201, %v1841
        %v1874 = vadd.f32 %v1202, %v1842
        %v1875 = vadd.f32 %v1203, %v1843
        %v1876 = vadd.f32 %v1204, %v1844
        %v1877 = vadd.f32 %v1205, %v1845
        %v1878 = vadd.f32 %v1206, %v1846
        %v1879 = vadd.f32 %v1207, %v1847
        %v1880 = vadd.f32 %v1208, %v1848
        %v1881 = vadd.f32 %v1209, %v1849
        %v1882 = vadd.f32 %v1210, %v1850
        %v1883 = vadd.f32 %v1211, %v1851
        %v1884 = vadd.f32 %v1212, %v1852
        %v1885 = vadd.f32 %v1213, %v1853
        %v1886 = vadd.f32 %v1214, %v1854
        %v1887 = vadd.f32 %v1215, %v1855
        %v1888 = vadd.f32 %v1216, %v1856
        %v1889 = vadd.f32 %v1217, %v1857
        %v1890 = vadd.f32 %v1218, %v1858
        %v1891 = vadd.f32 %v1219, %v1859
        %v1892 = vadd.f32 %v1220, %v1860
        %v1893 = vadd.f32 %v1221, %v1861
        %v1894 = vadd.f32 %v1222, %v1862
        %v1895 = vadd.f32 %v1223, %v1863
        %1896 = vset.pattern.permute.xlu0 1
        %1897 = vperm.xlu0 %1896, %v840
        %v1898 = vpop.permute.xlu0 %1897
        %1900 = vset.pattern.permute.xlu0 1
        %1901 = vperm.xlu0 %1900, %v841
        %v1902 = vpop.permute.xlu0 %1901
        %1904 = vset.pattern.permute.xlu0 1
        %1905 = vperm.xlu0 %1904, %v842
        %v1906 = vpop.permute.xlu0 %1905
        %1908 = vset.pattern.permute.xlu0 1
        %1909 = vperm.xlu0 %1908, %v843
        %v1910 = vpop.permute.xlu0 %1909
        %1912 = vset.pattern.permute.xlu0 1
        %1913 = vperm.xlu0 %1912, %v844
        %v1914 = vpop.permute.xlu0 %1913
        %1916 = vset.pattern.permute.xlu0 1
        %1917 = vperm.xlu0 %1916, %v845
        %v1918 = vpop.permute.xlu0 %1917
        %1920 = vset.pattern.permute.xlu0 1
        %1921 = vperm.xlu0 %1920, %v846
        %v1922 = vpop.permute.xlu0 %1921
        %1924 = vset.pattern.permute.xlu0 1
        %1925 = vperm.xlu0 %1924, %v847
        %v1926 = vpop.permute.xlu0 %1925
        %1928 = vset.pattern.permute.xlu0 1
        %1929 = vperm.xlu0 %1928, %v848
        %v1930 = vpop.permute.xlu0 %1929
        %1932 = vset.pattern.permute.xlu0 1
        %1933 = vperm.xlu0 %1932, %v849
        %v1934 = vpop.permute.xlu0 %1933
        %1936 = vset.pattern.permute.xlu0 1
        %1937 = vperm.xlu0 %1936, %v850
        %v1938 = vpop.permute.xlu0 %1937
        %1940 = vset.pattern.permute.xlu0 1
        %1941 = vperm.xlu0 %1940, %v851
        %v1942 = vpop.permute.xlu0 %1941
        %1944 = vset.pattern.permute.xlu0 1
        %1945 = vperm.xlu0 %1944, %v852
        %v1946 = vpop.permute.xlu0 %1945
        %1948 = vset.pattern.permute.xlu0 1
        %1949 = vperm.xlu0 %1948, %v853
        %v1950 = vpop.permute.xlu0 %1949
        %1952 = vset.pattern.permute.xlu0 1
        %1953 = vperm.xlu0 %1952, %v854
        %v1954 = vpop.permute.xlu0 %1953
        %1956 = vset.pattern.permute.xlu0 1
        %1957 = vperm.xlu0 %1956, %v855
        %v1958 = vpop.permute.xlu0 %1957
        %1960 = vset.pattern.permute.xlu0 1
        %1961 = vperm.xlu0 %1960, %v856
        %v1962 = vpop.permute.xlu0 %1961
        %1964 = vset.pattern.permute.xlu0 1
        %1965 = vperm.xlu0 %1964, %v857
        %v1966 = vpop.permute.xlu0 %1965
        %1968 = vset.pattern.permute.xlu0 1
        %1969 = vperm.xlu0 %1968, %v858
        %v1970 = vpop.permute.xlu0 %1969
        %1972 = vset.pattern.permute.xlu0 1
        %1973 = vperm.xlu0 %1972, %v859
        %v1974 = vpop.permute.xlu0 %1973
        %1976 = vset.pattern.permute.xlu0 1
        %1977 = vperm.xlu0 %1976, %v860
        %v1978 = vpop.permute.xlu0 %1977
        %1980 = vset.pattern.permute.xlu0 1
        %1981 = vperm.xlu0 %1980, %v861
        %v1982 = vpop.permute.xlu0 %1981
        %1984 = vset.pattern.permute.xlu0 1
        %1985 = vperm.xlu0 %1984, %v862
        %v1986 = vpop.permute.xlu0 %1985
        %1988 = vset.pattern.permute.xlu0 1
        %1989 = vperm.xlu0 %1988, %v863
        %v1990 = vpop.permute.xlu0 %1989
        %1992 = vset.pattern.permute.xlu0 1
        %1993 = vperm.xlu0 %1992, %v864
        %v1994 = vpop.permute.xlu0 %1993
        %1996 = vset.pattern.permute.xlu0 1
        %1997 = vperm.xlu0 %1996, %v865
        %v1998 = vpop.permute.xlu0 %1997
        %2000 = vset.pattern.permute.xlu0 1
        %2001 = vperm.xlu0 %2000, %v866
        %v2002 = vpop.permute.xlu0 %2001
        %2004 = vset.pattern.permute.xlu0 1
        %2005 = vperm.xlu0 %2004, %v867
        %v2006 = vpop.permute.xlu0 %2005
        %2008 = vset.pattern.permute.xlu0 1
        %2009 = vperm.xlu0 %2008, %v868
        %v2010 = vpop.permute.xlu0 %2009
        %2012 = vset.pattern.permute.xlu0 1
        %2013 = vperm.xlu0 %2012, %v869
        %v2014 = vpop.permute.xlu0 %2013
        %2016 = vset.pattern.permute.xlu0 1
        %2017 = vperm.xlu0 %2016, %v870
        %v2018 = vpop.permute.xlu0 %2017
        %2020 = vset.pattern.permute.xlu0 1
        %2021 = vperm.xlu0 %2020, %v871
        %v2022 = vpop.permute.xlu0 %2021
        %v2024 = vlaneseq
        %v2025 = vshrl.u32 %v2024, 7
        %v2026 = vsub.s32 1, %v2025
        %v2027 = vrot.slane %v652, %v2026
        %v2028 = vlaneseq
        %v2029 = vshrl.u32 %v2028, 7
        %v2030 = vsub.s32 1, %v2029
        %v2031 = vrot.slane %v656, %v2030
        %v2032 = vlaneseq
        %v2033 = vshrl.u32 %v2032, 7
        %v2034 = vsub.s32 1, %v2033
        %v2035 = vrot.slane %v662, %v2034
        %v2036 = vlaneseq
        %v2037 = vshrl.u32 %v2036, 7
        %v2038 = vsub.s32 1, %v2037
        %v2039 = vrot.slane %v666, %v2038
        %v2040 = vlaneseq
        %v2041 = vshrl.u32 %v2040, 7
        %v2042 = vsub.s32 1, %v2041
        %v2043 = vrot.slane %v672, %v2042
        %v2044 = vlaneseq
        %v2045 = vshrl.u32 %v2044, 7
        %v2046 = vsub.s32 1, %v2045
        %v2047 = vrot.slane %v676, %v2046
        %v2048 = vlaneseq
        %v2049 = vshrl.u32 %v2048, 7
        %v2050 = vsub.s32 1, %v2049
        %v2051 = vrot.slane %v682, %v2050
        %v2052 = vlaneseq
        %v2053 = vshrl.u32 %v2052, 7
        %v2054 = vsub.s32 1, %v2053
        %v2055 = vrot.slane %v686, %v2054
        %v2056 = vlaneseq
        %v2057 = vshrl.u32 %v2056, 7
        %v2058 = vsub.s32 1, %v2057
        %v2059 = vrot.slane %v692, %v2058
        %v2060 = vlaneseq
        %v2061 = vshrl.u32 %v2060, 7
        %v2062 = vsub.s32 1, %v2061
        %v2063 = vrot.slane %v696, %v2062
        %v2064 = vlaneseq
        %v2065 = vshrl.u32 %v2064, 7
        %v2066 = vsub.s32 1, %v2065
        %v2067 = vrot.slane %v702, %v2066
        %v2068 = vlaneseq
        %v2069 = vshrl.u32 %v2068, 7
        %v2070 = vsub.s32 1, %v2069
        %v2071 = vrot.slane %v706, %v2070
        %v2072 = vlaneseq
        %v2073 = vshrl.u32 %v2072, 7
        %v2074 = vsub.s32 1, %v2073
        %v2075 = vrot.slane %v712, %v2074
        %v2076 = vlaneseq
        %v2077 = vshrl.u32 %v2076, 7
        %v2078 = vsub.s32 1, %v2077
        %v2079 = vrot.slane %v716, %v2078
        %v2080 = vlaneseq
        %v2081 = vshrl.u32 %v2080, 7
        %v2082 = vsub.s32 1, %v2081
        %v2083 = vrot.slane %v722, %v2082
        %v2084 = vlaneseq
        %v2085 = vshrl.u32 %v2084, 7
        %v2086 = vsub.s32 1, %v2085
        %v2087 = vrot.slane %v726, %v2086
        %v2088 = vlaneseq
        %v2089 = vshrl.u32 %v2088, 7
        %v2090 = vsub.s32 1, %v2089
        %v2091 = vrot.slane %v732, %v2090
        %v2092 = vlaneseq
        %v2093 = vshrl.u32 %v2092, 7
        %v2094 = vsub.s32 1, %v2093
        %v2095 = vrot.slane %v736, %v2094
        %v2096 = vlaneseq
        %v2097 = vshrl.u32 %v2096, 7
        %v2098 = vsub.s32 1, %v2097
        %v2099 = vrot.slane %v742, %v2098
        %v2100 = vlaneseq
        %v2101 = vshrl.u32 %v2100, 7
        %v2102 = vsub.s32 1, %v2101
        %v2103 = vrot.slane %v746, %v2102
        %v2104 = vlaneseq
        %v2105 = vshrl.u32 %v2104, 7
        %v2106 = vsub.s32 1, %v2105
        %v2107 = vrot.slane %v752, %v2106
        %v2108 = vlaneseq
        %v2109 = vshrl.u32 %v2108, 7
        %v2110 = vsub.s32 1, %v2109
        %v2111 = vrot.slane %v756, %v2110
        %v2112 = vlaneseq
        %v2113 = vshrl.u32 %v2112, 7
        %v2114 = vsub.s32 1, %v2113
        %v2115 = vrot.slane %v762, %v2114
        %v2116 = vlaneseq
        %v2117 = vshrl.u32 %v2116, 7
        %v2118 = vsub.s32 1, %v2117
        %v2119 = vrot.slane %v766, %v2118
        %v2120 = vlaneseq
        %v2121 = vshrl.u32 %v2120, 7
        %v2122 = vsub.s32 1, %v2121
        %v2123 = vrot.slane %v772, %v2122
        %v2124 = vlaneseq
        %v2125 = vshrl.u32 %v2124, 7
        %v2126 = vsub.s32 1, %v2125
        %v2127 = vrot.slane %v776, %v2126
        %v2128 = vlaneseq
        %v2129 = vshrl.u32 %v2128, 7
        %v2130 = vsub.s32 1, %v2129
        %v2131 = vrot.slane %v782, %v2130
        %v2132 = vlaneseq
        %v2133 = vshrl.u32 %v2132, 7
        %v2134 = vsub.s32 1, %v2133
        %v2135 = vrot.slane %v786, %v2134
        %v2136 = vlaneseq
        %v2137 = vshrl.u32 %v2136, 7
        %v2138 = vsub.s32 1, %v2137
        %v2139 = vrot.slane %v792, %v2138
        %v2140 = vlaneseq
        %v2141 = vshrl.u32 %v2140, 7
        %v2142 = vsub.s32 1, %v2141
        %v2143 = vrot.slane %v796, %v2142
        %v2144 = vlaneseq
        %v2145 = vshrl.u32 %v2144, 7
        %v2146 = vsub.s32 1, %v2145
        %v2147 = vrot.slane %v802, %v2146
        %v2148 = vlaneseq
        %v2149 = vshrl.u32 %v2148, 7
        %v2150 = vsub.s32 1, %v2149
        %v2151 = vrot.slane %v806, %v2150
        %v2152 = vmul.f32 %v1898, %v2027
        %v2153 = vmul.f32 %v1902, %v2031
        %v2154 = vmul.f32 %v1906, %v2035
        %v2155 = vmul.f32 %v1910, %v2039
        %v2156 = vmul.f32 %v1914, %v2043
        %v2157 = vmul.f32 %v1918, %v2047
        %v2158 = vmul.f32 %v1922, %v2051
        %v2159 = vmul.f32 %v1926, %v2055
        %v2160 = vmul.f32 %v1930, %v2059
        %v2161 = vmul.f32 %v1934, %v2063
        %v2162 = vmul.f32 %v1938, %v2067
        %v2163 = vmul.f32 %v1942, %v2071
        %v2164 = vmul.f32 %v1946, %v2075
        %v2165 = vmul.f32 %v1950, %v2079
        %v2166 = vmul.f32 %v1954, %v2083
        %v2167 = vmul.f32 %v1958, %v2087
        %v2168 = vmul.f32 %v1962, %v2091
        %v2169 = vmul.f32 %v1966, %v2095
        %v2170 = vmul.f32 %v1970, %v2099
        %v2171 = vmul.f32 %v1974, %v2103
        %v2172 = vmul.f32 %v1978, %v2107
        %v2173 = vmul.f32 %v1982, %v2111
        %v2174 = vmul.f32 %v1986, %v2115
        %v2175 = vmul.f32 %v1990, %v2119
        %v2176 = vmul.f32 %v1994, %v2123
        %v2177 = vmul.f32 %v1998, %v2127
        %v2178 = vmul.f32 %v2002, %v2131
        %v2179 = vmul.f32 %v2006, %v2135
        %v2180 = vmul.f32 %v2010, %v2139
        %v2181 = vmul.f32 %v2014, %v2143
        %v2182 = vmul.f32 %v2018, %v2147
        %v2183 = vmul.f32 %v2022, %v2151
        %v2184 = vadd.f32 %v1544, %v2152
        %v2185 = vadd.f32 %v1545, %v2153
        %v2186 = vadd.f32 %v1546, %v2154
        %v2187 = vadd.f32 %v1547, %v2155
        %v2188 = vadd.f32 %v1548, %v2156
        %v2189 = vadd.f32 %v1549, %v2157
        %v2190 = vadd.f32 %v1550, %v2158
        %v2191 = vadd.f32 %v1551, %v2159
        %v2192 = vadd.f32 %v1552, %v2160
        %v2193 = vadd.f32 %v1553, %v2161
        %v2194 = vadd.f32 %v1554, %v2162
        %v2195 = vadd.f32 %v1555, %v2163
        %v2196 = vadd.f32 %v1556, %v2164
        %v2197 = vadd.f32 %v1557, %v2165
        %v2198 = vadd.f32 %v1558, %v2166
        %v2199 = vadd.f32 %v1559, %v2167
        %v2200 = vadd.f32 %v1560, %v2168
        %v2201 = vadd.f32 %v1561, %v2169
        %v2202 = vadd.f32 %v1562, %v2170
        %v2203 = vadd.f32 %v1563, %v2171
        %v2204 = vadd.f32 %v1564, %v2172
        %v2205 = vadd.f32 %v1565, %v2173
        %v2206 = vadd.f32 %v1566, %v2174
        %v2207 = vadd.f32 %v1567, %v2175
        %v2208 = vadd.f32 %v1568, %v2176
        %v2209 = vadd.f32 %v1569, %v2177
        %v2210 = vadd.f32 %v1570, %v2178
        %v2211 = vadd.f32 %v1571, %v2179
        %v2212 = vadd.f32 %v1572, %v2180
        %v2213 = vadd.f32 %v1573, %v2181
        %v2214 = vadd.f32 %v1574, %v2182
        %v2215 = vadd.f32 %v1575, %v2183
        %2216 = vset.pattern.permute.xlu0 2
        %2217 = vperm.xlu0 %2216, %v808
        %v2218 = vpop.permute.xlu0 %2217
        %2220 = vset.pattern.permute.xlu0 2
        %2221 = vperm.xlu0 %2220, %v809
        %v2222 = vpop.permute.xlu0 %2221
        %2224 = vset.pattern.permute.xlu0 2
        %2225 = vperm.xlu0 %2224, %v810
        %v2226 = vpop.permute.xlu0 %2225
        %2228 = vset.pattern.permute.xlu0 2
        %2229 = vperm.xlu0 %2228, %v811
        %v2230 = vpop.permute.xlu0 %2229
        %2232 = vset.pattern.permute.xlu0 2
        %2233 = vperm.xlu0 %2232, %v812
        %v2234 = vpop.permute.xlu0 %2233
        %2236 = vset.pattern.permute.xlu0 2
        %2237 = vperm.xlu0 %2236, %v813
        %v2238 = vpop.permute.xlu0 %2237
        %2240 = vset.pattern.permute.xlu0 2
        %2241 = vperm.xlu0 %2240, %v814
        %v2242 = vpop.permute.xlu0 %2241
        %2244 = vset.pattern.permute.xlu0 2
        %2245 = vperm.xlu0 %2244, %v815
        %v2246 = vpop.permute.xlu0 %2245
        %2248 = vset.pattern.permute.xlu0 2
        %2249 = vperm.xlu0 %2248, %v816
        %v2250 = vpop.permute.xlu0 %2249
        %2252 = vset.pattern.permute.xlu0 2
        %2253 = vperm.xlu0 %2252, %v817
        %v2254 = vpop.permute.xlu0 %2253
        %2256 = vset.pattern.permute.xlu0 2
        %2257 = vperm.xlu0 %2256, %v818
        %v2258 = vpop.permute.xlu0 %2257
        %2260 = vset.pattern.permute.xlu0 2
        %2261 = vperm.xlu0 %2260, %v819
        %v2262 = vpop.permute.xlu0 %2261
        %2264 = vset.pattern.permute.xlu0 2
        %2265 = vperm.xlu0 %2264, %v820
        %v2266 = vpop.permute.xlu0 %2265
        %2268 = vset.pattern.permute.xlu0 2
        %2269 = vperm.xlu0 %2268, %v821
        %v2270 = vpop.permute.xlu0 %2269
        %2272 = vset.pattern.permute.xlu0 2
        %2273 = vperm.xlu0 %2272, %v822
        %v2274 = vpop.permute.xlu0 %2273
        %2276 = vset.pattern.permute.xlu0 2
        %2277 = vperm.xlu0 %2276, %v823
        %v2278 = vpop.permute.xlu0 %2277
        %2280 = vset.pattern.permute.xlu0 2
        %2281 = vperm.xlu0 %2280, %v824
        %v2282 = vpop.permute.xlu0 %2281
        %2284 = vset.pattern.permute.xlu0 2
        %2285 = vperm.xlu0 %2284, %v825
        %v2286 = vpop.permute.xlu0 %2285
        %2288 = vset.pattern.permute.xlu0 2
        %2289 = vperm.xlu0 %2288, %v826
        %v2290 = vpop.permute.xlu0 %2289
        %2292 = vset.pattern.permute.xlu0 2
        %2293 = vperm.xlu0 %2292, %v827
        %v2294 = vpop.permute.xlu0 %2293
        %2296 = vset.pattern.permute.xlu0 2
        %2297 = vperm.xlu0 %2296, %v828
        %v2298 = vpop.permute.xlu0 %2297
        %2300 = vset.pattern.permute.xlu0 2
        %2301 = vperm.xlu0 %2300, %v829
        %v2302 = vpop.permute.xlu0 %2301
        %2304 = vset.pattern.permute.xlu0 2
        %2305 = vperm.xlu0 %2304, %v830
        %v2306 = vpop.permute.xlu0 %2305
        %2308 = vset.pattern.permute.xlu0 2
        %2309 = vperm.xlu0 %2308, %v831
        %v2310 = vpop.permute.xlu0 %2309
        %2312 = vset.pattern.permute.xlu0 2
        %2313 = vperm.xlu0 %2312, %v832
        %v2314 = vpop.permute.xlu0 %2313
        %2316 = vset.pattern.permute.xlu0 2
        %2317 = vperm.xlu0 %2316, %v833
        %v2318 = vpop.permute.xlu0 %2317
        %2320 = vset.pattern.permute.xlu0 2
        %2321 = vperm.xlu0 %2320, %v834
        %v2322 = vpop.permute.xlu0 %2321
        %2324 = vset.pattern.permute.xlu0 2
        %2325 = vperm.xlu0 %2324, %v835
        %v2326 = vpop.permute.xlu0 %2325
        %2328 = vset.pattern.permute.xlu0 2
        %2329 = vperm.xlu0 %2328, %v836
        %v2330 = vpop.permute.xlu0 %2329
        %2332 = vset.pattern.permute.xlu0 2
        %2333 = vperm.xlu0 %2332, %v837
        %v2334 = vpop.permute.xlu0 %2333
        %2336 = vset.pattern.permute.xlu0 2
        %2337 = vperm.xlu0 %2336, %v838
        %v2338 = vpop.permute.xlu0 %2337
        %2340 = vset.pattern.permute.xlu0 2
        %2341 = vperm.xlu0 %2340, %v839
        %v2342 = vpop.permute.xlu0 %2341
        %v2344 = vlaneseq
        %v2345 = vshrl.u32 %v2344, 7
        %v2346 = vsub.s32 2, %v2345
        %v2347 = vrot.slane %v650, %v2346
        %v2348 = vlaneseq
        %v2349 = vshrl.u32 %v2348, 7
        %v2350 = vsub.s32 2, %v2349
        %v2351 = vrot.slane %v654, %v2350
        %v2352 = vlaneseq
        %v2353 = vshrl.u32 %v2352, 7
        %v2354 = vsub.s32 2, %v2353
        %v2355 = vrot.slane %v660, %v2354
        %v2356 = vlaneseq
        %v2357 = vshrl.u32 %v2356, 7
        %v2358 = vsub.s32 2, %v2357
        %v2359 = vrot.slane %v664, %v2358
        %v2360 = vlaneseq
        %v2361 = vshrl.u32 %v2360, 7
        %v2362 = vsub.s32 2, %v2361
        %v2363 = vrot.slane %v670, %v2362
        %v2364 = vlaneseq
        %v2365 = vshrl.u32 %v2364, 7
        %v2366 = vsub.s32 2, %v2365
        %v2367 = vrot.slane %v674, %v2366
        %v2368 = vlaneseq
        %v2369 = vshrl.u32 %v2368, 7
        %v2370 = vsub.s32 2, %v2369
        %v2371 = vrot.slane %v680, %v2370
        %v2372 = vlaneseq
        %v2373 = vshrl.u32 %v2372, 7
        %v2374 = vsub.s32 2, %v2373
        %v2375 = vrot.slane %v684, %v2374
        %v2376 = vlaneseq
        %v2377 = vshrl.u32 %v2376, 7
        %v2378 = vsub.s32 2, %v2377
        %v2379 = vrot.slane %v690, %v2378
        %v2380 = vlaneseq
        %v2381 = vshrl.u32 %v2380, 7
        %v2382 = vsub.s32 2, %v2381
        %v2383 = vrot.slane %v694, %v2382
        %v2384 = vlaneseq
        %v2385 = vshrl.u32 %v2384, 7
        %v2386 = vsub.s32 2, %v2385
        %v2387 = vrot.slane %v700, %v2386
        %v2388 = vlaneseq
        %v2389 = vshrl.u32 %v2388, 7
        %v2390 = vsub.s32 2, %v2389
        %v2391 = vrot.slane %v704, %v2390
        %v2392 = vlaneseq
        %v2393 = vshrl.u32 %v2392, 7
        %v2394 = vsub.s32 2, %v2393
        %v2395 = vrot.slane %v710, %v2394
        %v2396 = vlaneseq
        %v2397 = vshrl.u32 %v2396, 7
        %v2398 = vsub.s32 2, %v2397
        %v2399 = vrot.slane %v714, %v2398
        %v2400 = vlaneseq
        %v2401 = vshrl.u32 %v2400, 7
        %v2402 = vsub.s32 2, %v2401
        %v2403 = vrot.slane %v720, %v2402
        %v2404 = vlaneseq
        %v2405 = vshrl.u32 %v2404, 7
        %v2406 = vsub.s32 2, %v2405
        %v2407 = vrot.slane %v724, %v2406
        %v2408 = vlaneseq
        %v2409 = vshrl.u32 %v2408, 7
        %v2410 = vsub.s32 2, %v2409
        %v2411 = vrot.slane %v730, %v2410
        %v2412 = vlaneseq
        %v2413 = vshrl.u32 %v2412, 7
        %v2414 = vsub.s32 2, %v2413
        %v2415 = vrot.slane %v734, %v2414
        %v2416 = vlaneseq
        %v2417 = vshrl.u32 %v2416, 7
        %v2418 = vsub.s32 2, %v2417
        %v2419 = vrot.slane %v740, %v2418
        %v2420 = vlaneseq
        %v2421 = vshrl.u32 %v2420, 7
        %v2422 = vsub.s32 2, %v2421
        %v2423 = vrot.slane %v744, %v2422
        %v2424 = vlaneseq
        %v2425 = vshrl.u32 %v2424, 7
        %v2426 = vsub.s32 2, %v2425
        %v2427 = vrot.slane %v750, %v2426
        %v2428 = vlaneseq
        %v2429 = vshrl.u32 %v2428, 7
        %v2430 = vsub.s32 2, %v2429
        %v2431 = vrot.slane %v754, %v2430
        %v2432 = vlaneseq
        %v2433 = vshrl.u32 %v2432, 7
        %v2434 = vsub.s32 2, %v2433
        %v2435 = vrot.slane %v760, %v2434
        %v2436 = vlaneseq
        %v2437 = vshrl.u32 %v2436, 7
        %v2438 = vsub.s32 2, %v2437
        %v2439 = vrot.slane %v764, %v2438
        %v2440 = vlaneseq
        %v2441 = vshrl.u32 %v2440, 7
        %v2442 = vsub.s32 2, %v2441
        %v2443 = vrot.slane %v770, %v2442
        %v2444 = vlaneseq
        %v2445 = vshrl.u32 %v2444, 7
        %v2446 = vsub.s32 2, %v2445
        %v2447 = vrot.slane %v774, %v2446
        %v2448 = vlaneseq
        %v2449 = vshrl.u32 %v2448, 7
        %v2450 = vsub.s32 2, %v2449
        %v2451 = vrot.slane %v780, %v2450
        %v2452 = vlaneseq
        %v2453 = vshrl.u32 %v2452, 7
        %v2454 = vsub.s32 2, %v2453
        %v2455 = vrot.slane %v784, %v2454
        %v2456 = vlaneseq
        %v2457 = vshrl.u32 %v2456, 7
        %v2458 = vsub.s32 2, %v2457
        %v2459 = vrot.slane %v790, %v2458
        %v2460 = vlaneseq
        %v2461 = vshrl.u32 %v2460, 7
        %v2462 = vsub.s32 2, %v2461
        %v2463 = vrot.slane %v794, %v2462
        %v2464 = vlaneseq
        %v2465 = vshrl.u32 %v2464, 7
        %v2466 = vsub.s32 2, %v2465
        %v2467 = vrot.slane %v800, %v2466
        %v2468 = vlaneseq
        %v2469 = vshrl.u32 %v2468, 7
        %v2470 = vsub.s32 2, %v2469
        %v2471 = vrot.slane %v804, %v2470
        %v2472 = vmul.f32 %v2218, %v2347
        %v2473 = vmul.f32 %v2222, %v2351
        %v2474 = vmul.f32 %v2226, %v2355
        %v2475 = vmul.f32 %v2230, %v2359
        %v2476 = vmul.f32 %v2234, %v2363
        %v2477 = vmul.f32 %v2238, %v2367
        %v2478 = vmul.f32 %v2242, %v2371
        %v2479 = vmul.f32 %v2246, %v2375
        %v2480 = vmul.f32 %v2250, %v2379
        %v2481 = vmul.f32 %v2254, %v2383
        %v2482 = vmul.f32 %v2258, %v2387
        %v2483 = vmul.f32 %v2262, %v2391
        %v2484 = vmul.f32 %v2266, %v2395
        %v2485 = vmul.f32 %v2270, %v2399
        %v2486 = vmul.f32 %v2274, %v2403
        %v2487 = vmul.f32 %v2278, %v2407
        %v2488 = vmul.f32 %v2282, %v2411
        %v2489 = vmul.f32 %v2286, %v2415
        %v2490 = vmul.f32 %v2290, %v2419
        %v2491 = vmul.f32 %v2294, %v2423
        %v2492 = vmul.f32 %v2298, %v2427
        %v2493 = vmul.f32 %v2302, %v2431
        %v2494 = vmul.f32 %v2306, %v2435
        %v2495 = vmul.f32 %v2310, %v2439
        %v2496 = vmul.f32 %v2314, %v2443
        %v2497 = vmul.f32 %v2318, %v2447
        %v2498 = vmul.f32 %v2322, %v2451
        %v2499 = vmul.f32 %v2326, %v2455
        %v2500 = vmul.f32 %v2330, %v2459
        %v2501 = vmul.f32 %v2334, %v2463
        %v2502 = vmul.f32 %v2338, %v2467
        %v2503 = vmul.f32 %v2342, %v2471
        %v2504 = vadd.f32 %v1864, %v2472
        %v2505 = vadd.f32 %v1865, %v2473
        %v2506 = vadd.f32 %v1866, %v2474
        %v2507 = vadd.f32 %v1867, %v2475
        %v2508 = vadd.f32 %v1868, %v2476
        %v2509 = vadd.f32 %v1869, %v2477
        %v2510 = vadd.f32 %v1870, %v2478
        %v2511 = vadd.f32 %v1871, %v2479
        %v2512 = vadd.f32 %v1872, %v2480
        %v2513 = vadd.f32 %v1873, %v2481
        %v2514 = vadd.f32 %v1874, %v2482
        %v2515 = vadd.f32 %v1875, %v2483
        %v2516 = vadd.f32 %v1876, %v2484
        %v2517 = vadd.f32 %v1877, %v2485
        %v2518 = vadd.f32 %v1878, %v2486
        %v2519 = vadd.f32 %v1879, %v2487
        %v2520 = vadd.f32 %v1880, %v2488
        %v2521 = vadd.f32 %v1881, %v2489
        %v2522 = vadd.f32 %v1882, %v2490
        %v2523 = vadd.f32 %v1883, %v2491
        %v2524 = vadd.f32 %v1884, %v2492
        %v2525 = vadd.f32 %v1885, %v2493
        %v2526 = vadd.f32 %v1886, %v2494
        %v2527 = vadd.f32 %v1887, %v2495
        %v2528 = vadd.f32 %v1888, %v2496
        %v2529 = vadd.f32 %v1889, %v2497
        %v2530 = vadd.f32 %v1890, %v2498
        %v2531 = vadd.f32 %v1891, %v2499
        %v2532 = vadd.f32 %v1892, %v2500
        %v2533 = vadd.f32 %v1893, %v2501
        %v2534 = vadd.f32 %v1894, %v2502
        %v2535 = vadd.f32 %v1895, %v2503
        %2536 = vset.pattern.permute.xlu0 2
        %2537 = vperm.xlu0 %2536, %v840
        %v2538 = vpop.permute.xlu0 %2537
        %2540 = vset.pattern.permute.xlu0 2
        %2541 = vperm.xlu0 %2540, %v841
        %v2542 = vpop.permute.xlu0 %2541
        %2544 = vset.pattern.permute.xlu0 2
        %2545 = vperm.xlu0 %2544, %v842
        %v2546 = vpop.permute.xlu0 %2545
        %2548 = vset.pattern.permute.xlu0 2
        %2549 = vperm.xlu0 %2548, %v843
        %v2550 = vpop.permute.xlu0 %2549
        %2552 = vset.pattern.permute.xlu0 2
        %2553 = vperm.xlu0 %2552, %v844
        %v2554 = vpop.permute.xlu0 %2553
        %2556 = vset.pattern.permute.xlu0 2
        %2557 = vperm.xlu0 %2556, %v845
        %v2558 = vpop.permute.xlu0 %2557
        %2560 = vset.pattern.permute.xlu0 2
        %2561 = vperm.xlu0 %2560, %v846
        %v2562 = vpop.permute.xlu0 %2561
        %2564 = vset.pattern.permute.xlu0 2
        %2565 = vperm.xlu0 %2564, %v847
        %v2566 = vpop.permute.xlu0 %2565
        %2568 = vset.pattern.permute.xlu0 2
        %2569 = vperm.xlu0 %2568, %v848
        %v2570 = vpop.permute.xlu0 %2569
        %2572 = vset.pattern.permute.xlu0 2
        %2573 = vperm.xlu0 %2572, %v849
        %v2574 = vpop.permute.xlu0 %2573
        %2576 = vset.pattern.permute.xlu0 2
        %2577 = vperm.xlu0 %2576, %v850
        %v2578 = vpop.permute.xlu0 %2577
        %2580 = vset.pattern.permute.xlu0 2
        %2581 = vperm.xlu0 %2580, %v851
        %v2582 = vpop.permute.xlu0 %2581
        %2584 = vset.pattern.permute.xlu0 2
        %2585 = vperm.xlu0 %2584, %v852
        %v2586 = vpop.permute.xlu0 %2585
        %2588 = vset.pattern.permute.xlu0 2
        %2589 = vperm.xlu0 %2588, %v853
        %v2590 = vpop.permute.xlu0 %2589
        %2592 = vset.pattern.permute.xlu0 2
        %2593 = vperm.xlu0 %2592, %v854
        %v2594 = vpop.permute.xlu0 %2593
        %2596 = vset.pattern.permute.xlu0 2
        %2597 = vperm.xlu0 %2596, %v855
        %v2598 = vpop.permute.xlu0 %2597
        %2600 = vset.pattern.permute.xlu0 2
        %2601 = vperm.xlu0 %2600, %v856
        %v2602 = vpop.permute.xlu0 %2601
        %2604 = vset.pattern.permute.xlu0 2
        %2605 = vperm.xlu0 %2604, %v857
        %v2606 = vpop.permute.xlu0 %2605
        %2608 = vset.pattern.permute.xlu0 2
        %2609 = vperm.xlu0 %2608, %v858
        %v2610 = vpop.permute.xlu0 %2609
        %2612 = vset.pattern.permute.xlu0 2
        %2613 = vperm.xlu0 %2612, %v859
        %v2614 = vpop.permute.xlu0 %2613
        %2616 = vset.pattern.permute.xlu0 2
        %2617 = vperm.xlu0 %2616, %v860
        %v2618 = vpop.permute.xlu0 %2617
        %2620 = vset.pattern.permute.xlu0 2
        %2621 = vperm.xlu0 %2620, %v861
        %v2622 = vpop.permute.xlu0 %2621
        %2624 = vset.pattern.permute.xlu0 2
        %2625 = vperm.xlu0 %2624, %v862
        %v2626 = vpop.permute.xlu0 %2625
        %2628 = vset.pattern.permute.xlu0 2
        %2629 = vperm.xlu0 %2628, %v863
        %v2630 = vpop.permute.xlu0 %2629
        %2632 = vset.pattern.permute.xlu0 2
        %2633 = vperm.xlu0 %2632, %v864
        %v2634 = vpop.permute.xlu0 %2633
        %2636 = vset.pattern.permute.xlu0 2
        %2637 = vperm.xlu0 %2636, %v865
        %v2638 = vpop.permute.xlu0 %2637
        %2640 = vset.pattern.permute.xlu0 2
        %2641 = vperm.xlu0 %2640, %v866
        %v2642 = vpop.permute.xlu0 %2641
        %2644 = vset.pattern.permute.xlu0 2
        %2645 = vperm.xlu0 %2644, %v867
        %v2646 = vpop.permute.xlu0 %2645
        %2648 = vset.pattern.permute.xlu0 2
        %2649 = vperm.xlu0 %2648, %v868
        %v2650 = vpop.permute.xlu0 %2649
        %2652 = vset.pattern.permute.xlu0 2
        %2653 = vperm.xlu0 %2652, %v869
        %v2654 = vpop.permute.xlu0 %2653
        %2656 = vset.pattern.permute.xlu0 2
        %2657 = vperm.xlu0 %2656, %v870
        %v2658 = vpop.permute.xlu0 %2657
        %2660 = vset.pattern.permute.xlu0 2
        %2661 = vperm.xlu0 %2660, %v871
        %v2662 = vpop.permute.xlu0 %2661
        %v2664 = vlaneseq
        %v2665 = vshrl.u32 %v2664, 7
        %v2666 = vsub.s32 2, %v2665
        %v2667 = vrot.slane %v652, %v2666
        %v2668 = vlaneseq
        %v2669 = vshrl.u32 %v2668, 7
        %v2670 = vsub.s32 2, %v2669
        %v2671 = vrot.slane %v656, %v2670
        %v2672 = vlaneseq
        %v2673 = vshrl.u32 %v2672, 7
        %v2674 = vsub.s32 2, %v2673
        %v2675 = vrot.slane %v662, %v2674
        %v2676 = vlaneseq
        %v2677 = vshrl.u32 %v2676, 7
        %v2678 = vsub.s32 2, %v2677
        %v2679 = vrot.slane %v666, %v2678
        %v2680 = vlaneseq
        %v2681 = vshrl.u32 %v2680, 7
        %v2682 = vsub.s32 2, %v2681
        %v2683 = vrot.slane %v672, %v2682
        %v2684 = vlaneseq
        %v2685 = vshrl.u32 %v2684, 7
        %v2686 = vsub.s32 2, %v2685
        %v2687 = vrot.slane %v676, %v2686
        %v2688 = vlaneseq
        %v2689 = vshrl.u32 %v2688, 7
        %v2690 = vsub.s32 2, %v2689
        %v2691 = vrot.slane %v682, %v2690
        %v2692 = vlaneseq
        %v2693 = vshrl.u32 %v2692, 7
        %v2694 = vsub.s32 2, %v2693
        %v2695 = vrot.slane %v686, %v2694
        %v2696 = vlaneseq
        %v2697 = vshrl.u32 %v2696, 7
        %v2698 = vsub.s32 2, %v2697
        %v2699 = vrot.slane %v692, %v2698
        %v2700 = vlaneseq
        %v2701 = vshrl.u32 %v2700, 7
        %v2702 = vsub.s32 2, %v2701
        %v2703 = vrot.slane %v696, %v2702
        %v2704 = vlaneseq
        %v2705 = vshrl.u32 %v2704, 7
        %v2706 = vsub.s32 2, %v2705
        %v2707 = vrot.slane %v702, %v2706
        %v2708 = vlaneseq
        %v2709 = vshrl.u32 %v2708, 7
        %v2710 = vsub.s32 2, %v2709
        %v2711 = vrot.slane %v706, %v2710
        %v2712 = vlaneseq
        %v2713 = vshrl.u32 %v2712, 7
        %v2714 = vsub.s32 2, %v2713
        %v2715 = vrot.slane %v712, %v2714
        %v2716 = vlaneseq
        %v2717 = vshrl.u32 %v2716, 7
        %v2718 = vsub.s32 2, %v2717
        %v2719 = vrot.slane %v716, %v2718
        %v2720 = vlaneseq
        %v2721 = vshrl.u32 %v2720, 7
        %v2722 = vsub.s32 2, %v2721
        %v2723 = vrot.slane %v722, %v2722
        %v2724 = vlaneseq
        %v2725 = vshrl.u32 %v2724, 7
        %v2726 = vsub.s32 2, %v2725
        %v2727 = vrot.slane %v726, %v2726
        %v2728 = vlaneseq
        %v2729 = vshrl.u32 %v2728, 7
        %v2730 = vsub.s32 2, %v2729
        %v2731 = vrot.slane %v732, %v2730
        %v2732 = vlaneseq
        %v2733 = vshrl.u32 %v2732, 7
        %v2734 = vsub.s32 2, %v2733
        %v2735 = vrot.slane %v736, %v2734
        %v2736 = vlaneseq
        %v2737 = vshrl.u32 %v2736, 7
        %v2738 = vsub.s32 2, %v2737
        %v2739 = vrot.slane %v742, %v2738
        %v2740 = vlaneseq
        %v2741 = vshrl.u32 %v2740, 7
        %v2742 = vsub.s32 2, %v2741
        %v2743 = vrot.slane %v746, %v2742
        %v2744 = vlaneseq
        %v2745 = vshrl.u32 %v2744, 7
        %v2746 = vsub.s32 2, %v2745
        %v2747 = vrot.slane %v752, %v2746
        %v2748 = vlaneseq
        %v2749 = vshrl.u32 %v2748, 7
        %v2750 = vsub.s32 2, %v2749
        %v2751 = vrot.slane %v756, %v2750
        %v2752 = vlaneseq
        %v2753 = vshrl.u32 %v2752, 7
        %v2754 = vsub.s32 2, %v2753
        %v2755 = vrot.slane %v762, %v2754
        %v2756 = vlaneseq
        %v2757 = vshrl.u32 %v2756, 7
        %v2758 = vsub.s32 2, %v2757
        %v2759 = vrot.slane %v766, %v2758
        %v2760 = vlaneseq
        %v2761 = vshrl.u32 %v2760, 7
        %v2762 = vsub.s32 2, %v2761
        %v2763 = vrot.slane %v772, %v2762
        %v2764 = vlaneseq
        %v2765 = vshrl.u32 %v2764, 7
        %v2766 = vsub.s32 2, %v2765
        %v2767 = vrot.slane %v776, %v2766
        %v2768 = vlaneseq
        %v2769 = vshrl.u32 %v2768, 7
        %v2770 = vsub.s32 2, %v2769
        %v2771 = vrot.slane %v782, %v2770
        %v2772 = vlaneseq
        %v2773 = vshrl.u32 %v2772, 7
        %v2774 = vsub.s32 2, %v2773
        %v2775 = vrot.slane %v786, %v2774
        %v2776 = vlaneseq
        %v2777 = vshrl.u32 %v2776, 7
        %v2778 = vsub.s32 2, %v2777
        %v2779 = vrot.slane %v792, %v2778
        %v2780 = vlaneseq
        %v2781 = vshrl.u32 %v2780, 7
        %v2782 = vsub.s32 2, %v2781
        %v2783 = vrot.slane %v796, %v2782
        %v2784 = vlaneseq
        %v2785 = vshrl.u32 %v2784, 7
        %v2786 = vsub.s32 2, %v2785
        %v2787 = vrot.slane %v802, %v2786
        %v2788 = vlaneseq
        %v2789 = vshrl.u32 %v2788, 7
        %v2790 = vsub.s32 2, %v2789
        %v2791 = vrot.slane %v806, %v2790
        %v2792 = vmul.f32 %v2538, %v2667
        %v2793 = vmul.f32 %v2542, %v2671
        %v2794 = vmul.f32 %v2546, %v2675
        %v2795 = vmul.f32 %v2550, %v2679
        %v2796 = vmul.f32 %v2554, %v2683
        %v2797 = vmul.f32 %v2558, %v2687
        %v2798 = vmul.f32 %v2562, %v2691
        %v2799 = vmul.f32 %v2566, %v2695
        %v2800 = vmul.f32 %v2570, %v2699
        %v2801 = vmul.f32 %v2574, %v2703
        %v2802 = vmul.f32 %v2578, %v2707
        %v2803 = vmul.f32 %v2582, %v2711
        %v2804 = vmul.f32 %v2586, %v2715
        %v2805 = vmul.f32 %v2590, %v2719
        %v2806 = vmul.f32 %v2594, %v2723
        %v2807 = vmul.f32 %v2598, %v2727
        %v2808 = vmul.f32 %v2602, %v2731
        %v2809 = vmul.f32 %v2606, %v2735
        %v2810 = vmul.f32 %v2610, %v2739
        %v2811 = vmul.f32 %v2614, %v2743
        %v2812 = vmul.f32 %v2618, %v2747
        %v2813 = vmul.f32 %v2622, %v2751
        %v2814 = vmul.f32 %v2626, %v2755
        %v2815 = vmul.f32 %v2630, %v2759
        %v2816 = vmul.f32 %v2634, %v2763
        %v2817 = vmul.f32 %v2638, %v2767
        %v2818 = vmul.f32 %v2642, %v2771
        %v2819 = vmul.f32 %v2646, %v2775
        %v2820 = vmul.f32 %v2650, %v2779
        %v2821 = vmul.f32 %v2654, %v2783
        %v2822 = vmul.f32 %v2658, %v2787
        %v2823 = vmul.f32 %v2662, %v2791
        %v2824 = vadd.f32 %v2184, %v2792
        %v2825 = vadd.f32 %v2185, %v2793
        %v2826 = vadd.f32 %v2186, %v2794
        %v2827 = vadd.f32 %v2187, %v2795
        %v2828 = vadd.f32 %v2188, %v2796
        %v2829 = vadd.f32 %v2189, %v2797
        %v2830 = vadd.f32 %v2190, %v2798
        %v2831 = vadd.f32 %v2191, %v2799
        %v2832 = vadd.f32 %v2192, %v2800
        %v2833 = vadd.f32 %v2193, %v2801
        %v2834 = vadd.f32 %v2194, %v2802
        %v2835 = vadd.f32 %v2195, %v2803
        %v2836 = vadd.f32 %v2196, %v2804
        %v2837 = vadd.f32 %v2197, %v2805
        %v2838 = vadd.f32 %v2198, %v2806
        %v2839 = vadd.f32 %v2199, %v2807
        %v2840 = vadd.f32 %v2200, %v2808
        %v2841 = vadd.f32 %v2201, %v2809
        %v2842 = vadd.f32 %v2202, %v2810
        %v2843 = vadd.f32 %v2203, %v2811
        %v2844 = vadd.f32 %v2204, %v2812
        %v2845 = vadd.f32 %v2205, %v2813
        %v2846 = vadd.f32 %v2206, %v2814
        %v2847 = vadd.f32 %v2207, %v2815
        %v2848 = vadd.f32 %v2208, %v2816
        %v2849 = vadd.f32 %v2209, %v2817
        %v2850 = vadd.f32 %v2210, %v2818
        %v2851 = vadd.f32 %v2211, %v2819
        %v2852 = vadd.f32 %v2212, %v2820
        %v2853 = vadd.f32 %v2213, %v2821
        %v2854 = vadd.f32 %v2214, %v2822
        %v2855 = vadd.f32 %v2215, %v2823
        %2856 = vset.pattern.permute.xlu0 3
        %2857 = vperm.xlu0 %2856, %v808
        %v2858 = vpop.permute.xlu0 %2857
        %2860 = vset.pattern.permute.xlu0 3
        %2861 = vperm.xlu0 %2860, %v809
        %v2862 = vpop.permute.xlu0 %2861
        %2864 = vset.pattern.permute.xlu0 3
        %2865 = vperm.xlu0 %2864, %v810
        %v2866 = vpop.permute.xlu0 %2865
        %2868 = vset.pattern.permute.xlu0 3
        %2869 = vperm.xlu0 %2868, %v811
        %v2870 = vpop.permute.xlu0 %2869
        %2872 = vset.pattern.permute.xlu0 3
        %2873 = vperm.xlu0 %2872, %v812
        %v2874 = vpop.permute.xlu0 %2873
        %2876 = vset.pattern.permute.xlu0 3
        %2877 = vperm.xlu0 %2876, %v813
        %v2878 = vpop.permute.xlu0 %2877
        %2880 = vset.pattern.permute.xlu0 3
        %2881 = vperm.xlu0 %2880, %v814
        %v2882 = vpop.permute.xlu0 %2881
        %2884 = vset.pattern.permute.xlu0 3
        %2885 = vperm.xlu0 %2884, %v815
        %v2886 = vpop.permute.xlu0 %2885
        %2888 = vset.pattern.permute.xlu0 3
        %2889 = vperm.xlu0 %2888, %v816
        %v2890 = vpop.permute.xlu0 %2889
        %2892 = vset.pattern.permute.xlu0 3
        %2893 = vperm.xlu0 %2892, %v817
        %v2894 = vpop.permute.xlu0 %2893
        %2896 = vset.pattern.permute.xlu0 3
        %2897 = vperm.xlu0 %2896, %v818
        %v2898 = vpop.permute.xlu0 %2897
        %2900 = vset.pattern.permute.xlu0 3
        %2901 = vperm.xlu0 %2900, %v819
        %v2902 = vpop.permute.xlu0 %2901
        %2904 = vset.pattern.permute.xlu0 3
        %2905 = vperm.xlu0 %2904, %v820
        %v2906 = vpop.permute.xlu0 %2905
        %2908 = vset.pattern.permute.xlu0 3
        %2909 = vperm.xlu0 %2908, %v821
        %v2910 = vpop.permute.xlu0 %2909
        %2912 = vset.pattern.permute.xlu0 3
        %2913 = vperm.xlu0 %2912, %v822
        %v2914 = vpop.permute.xlu0 %2913
        %2916 = vset.pattern.permute.xlu0 3
        %2917 = vperm.xlu0 %2916, %v823
        %v2918 = vpop.permute.xlu0 %2917
        %2920 = vset.pattern.permute.xlu0 3
        %2921 = vperm.xlu0 %2920, %v824
        %v2922 = vpop.permute.xlu0 %2921
        %2924 = vset.pattern.permute.xlu0 3
        %2925 = vperm.xlu0 %2924, %v825
        %v2926 = vpop.permute.xlu0 %2925
        %2928 = vset.pattern.permute.xlu0 3
        %2929 = vperm.xlu0 %2928, %v826
        %v2930 = vpop.permute.xlu0 %2929
        %2932 = vset.pattern.permute.xlu0 3
        %2933 = vperm.xlu0 %2932, %v827
        %v2934 = vpop.permute.xlu0 %2933
        %2936 = vset.pattern.permute.xlu0 3
        %2937 = vperm.xlu0 %2936, %v828
        %v2938 = vpop.permute.xlu0 %2937
        %2940 = vset.pattern.permute.xlu0 3
        %2941 = vperm.xlu0 %2940, %v829
        %v2942 = vpop.permute.xlu0 %2941
        %2944 = vset.pattern.permute.xlu0 3
        %2945 = vperm.xlu0 %2944, %v830
        %v2946 = vpop.permute.xlu0 %2945
        %2948 = vset.pattern.permute.xlu0 3
        %2949 = vperm.xlu0 %2948, %v831
        %v2950 = vpop.permute.xlu0 %2949
        %2952 = vset.pattern.permute.xlu0 3
        %2953 = vperm.xlu0 %2952, %v832
        %v2954 = vpop.permute.xlu0 %2953
        %2956 = vset.pattern.permute.xlu0 3
        %2957 = vperm.xlu0 %2956, %v833
        %v2958 = vpop.permute.xlu0 %2957
        %2960 = vset.pattern.permute.xlu0 3
        %2961 = vperm.xlu0 %2960, %v834
        %v2962 = vpop.permute.xlu0 %2961
        %2964 = vset.pattern.permute.xlu0 3
        %2965 = vperm.xlu0 %2964, %v835
        %v2966 = vpop.permute.xlu0 %2965
        %2968 = vset.pattern.permute.xlu0 3
        %2969 = vperm.xlu0 %2968, %v836
        %v2970 = vpop.permute.xlu0 %2969
        %2972 = vset.pattern.permute.xlu0 3
        %2973 = vperm.xlu0 %2972, %v837
        %v2974 = vpop.permute.xlu0 %2973
        %2976 = vset.pattern.permute.xlu0 3
        %2977 = vperm.xlu0 %2976, %v838
        %v2978 = vpop.permute.xlu0 %2977
        %2980 = vset.pattern.permute.xlu0 3
        %2981 = vperm.xlu0 %2980, %v839
        %v2982 = vpop.permute.xlu0 %2981
        %v2984 = vlaneseq
        %v2985 = vshrl.u32 %v2984, 7
        %v2986 = vsub.s32 3, %v2985
        %v2987 = vrot.slane %v650, %v2986
        %v2988 = vlaneseq
        %v2989 = vshrl.u32 %v2988, 7
        %v2990 = vsub.s32 3, %v2989
        %v2991 = vrot.slane %v654, %v2990
        %v2992 = vlaneseq
        %v2993 = vshrl.u32 %v2992, 7
        %v2994 = vsub.s32 3, %v2993
        %v2995 = vrot.slane %v660, %v2994
        %v2996 = vlaneseq
        %v2997 = vshrl.u32 %v2996, 7
        %v2998 = vsub.s32 3, %v2997
        %v2999 = vrot.slane %v664, %v2998
        %v3000 = vlaneseq
        %v3001 = vshrl.u32 %v3000, 7
        %v3002 = vsub.s32 3, %v3001
        %v3003 = vrot.slane %v670, %v3002
        %v3004 = vlaneseq
        %v3005 = vshrl.u32 %v3004, 7
        %v3006 = vsub.s32 3, %v3005
        %v3007 = vrot.slane %v674, %v3006
        %v3008 = vlaneseq
        %v3009 = vshrl.u32 %v3008, 7
        %v3010 = vsub.s32 3, %v3009
        %v3011 = vrot.slane %v680, %v3010
        %v3012 = vlaneseq
        %v3013 = vshrl.u32 %v3012, 7
        %v3014 = vsub.s32 3, %v3013
        %v3015 = vrot.slane %v684, %v3014
        %v3016 = vlaneseq
        %v3017 = vshrl.u32 %v3016, 7
        %v3018 = vsub.s32 3, %v3017
        %v3019 = vrot.slane %v690, %v3018
        %v3020 = vlaneseq
        %v3021 = vshrl.u32 %v3020, 7
        %v3022 = vsub.s32 3, %v3021
        %v3023 = vrot.slane %v694, %v3022
        %v3024 = vlaneseq
        %v3025 = vshrl.u32 %v3024, 7
        %v3026 = vsub.s32 3, %v3025
        %v3027 = vrot.slane %v700, %v3026
        %v3028 = vlaneseq
        %v3029 = vshrl.u32 %v3028, 7
        %v3030 = vsub.s32 3, %v3029
        %v3031 = vrot.slane %v704, %v3030
        %v3032 = vlaneseq
        %v3033 = vshrl.u32 %v3032, 7
        %v3034 = vsub.s32 3, %v3033
        %v3035 = vrot.slane %v710, %v3034
        %v3036 = vlaneseq
        %v3037 = vshrl.u32 %v3036, 7
        %v3038 = vsub.s32 3, %v3037
        %v3039 = vrot.slane %v714, %v3038
        %v3040 = vlaneseq
        %v3041 = vshrl.u32 %v3040, 7
        %v3042 = vsub.s32 3, %v3041
        %v3043 = vrot.slane %v720, %v3042
        %v3044 = vlaneseq
        %v3045 = vshrl.u32 %v3044, 7
        %v3046 = vsub.s32 3, %v3045
        %v3047 = vrot.slane %v724, %v3046
        %v3048 = vlaneseq
        %v3049 = vshrl.u32 %v3048, 7
        %v3050 = vsub.s32 3, %v3049
        %v3051 = vrot.slane %v730, %v3050
        %v3052 = vlaneseq
        %v3053 = vshrl.u32 %v3052, 7
        %v3054 = vsub.s32 3, %v3053
        %v3055 = vrot.slane %v734, %v3054
        %v3056 = vlaneseq
        %v3057 = vshrl.u32 %v3056, 7
        %v3058 = vsub.s32 3, %v3057
        %v3059 = vrot.slane %v740, %v3058
        %v3060 = vlaneseq
        %v3061 = vshrl.u32 %v3060, 7
        %v3062 = vsub.s32 3, %v3061
        %v3063 = vrot.slane %v744, %v3062
        %v3064 = vlaneseq
        %v3065 = vshrl.u32 %v3064, 7
        %v3066 = vsub.s32 3, %v3065
        %v3067 = vrot.slane %v750, %v3066
        %v3068 = vlaneseq
        %v3069 = vshrl.u32 %v3068, 7
        %v3070 = vsub.s32 3, %v3069
        %v3071 = vrot.slane %v754, %v3070
        %v3072 = vlaneseq
        %v3073 = vshrl.u32 %v3072, 7
        %v3074 = vsub.s32 3, %v3073
        %v3075 = vrot.slane %v760, %v3074
        %v3076 = vlaneseq
        %v3077 = vshrl.u32 %v3076, 7
        %v3078 = vsub.s32 3, %v3077
        %v3079 = vrot.slane %v764, %v3078
        %v3080 = vlaneseq
        %v3081 = vshrl.u32 %v3080, 7
        %v3082 = vsub.s32 3, %v3081
        %v3083 = vrot.slane %v770, %v3082
        %v3084 = vlaneseq
        %v3085 = vshrl.u32 %v3084, 7
        %v3086 = vsub.s32 3, %v3085
        %v3087 = vrot.slane %v774, %v3086
        %v3088 = vlaneseq
        %v3089 = vshrl.u32 %v3088, 7
        %v3090 = vsub.s32 3, %v3089
        %v3091 = vrot.slane %v780, %v3090
        %v3092 = vlaneseq
        %v3093 = vshrl.u32 %v3092, 7
        %v3094 = vsub.s32 3, %v3093
        %v3095 = vrot.slane %v784, %v3094
        %v3096 = vlaneseq
        %v3097 = vshrl.u32 %v3096, 7
        %v3098 = vsub.s32 3, %v3097
        %v3099 = vrot.slane %v790, %v3098
        %v3100 = vlaneseq
        %v3101 = vshrl.u32 %v3100, 7
        %v3102 = vsub.s32 3, %v3101
        %v3103 = vrot.slane %v794, %v3102
        %v3104 = vlaneseq
        %v3105 = vshrl.u32 %v3104, 7
        %v3106 = vsub.s32 3, %v3105
        %v3107 = vrot.slane %v800, %v3106
        %v3108 = vlaneseq
        %v3109 = vshrl.u32 %v3108, 7
        %v3110 = vsub.s32 3, %v3109
        %v3111 = vrot.slane %v804, %v3110
        %v3112 = vmul.f32 %v2858, %v2987
        %v3113 = vmul.f32 %v2862, %v2991
        %v3114 = vmul.f32 %v2866, %v2995
        %v3115 = vmul.f32 %v2870, %v2999
        %v3116 = vmul.f32 %v2874, %v3003
        %v3117 = vmul.f32 %v2878, %v3007
        %v3118 = vmul.f32 %v2882, %v3011
        %v3119 = vmul.f32 %v2886, %v3015
        %v3120 = vmul.f32 %v2890, %v3019
        %v3121 = vmul.f32 %v2894, %v3023
        %v3122 = vmul.f32 %v2898, %v3027
        %v3123 = vmul.f32 %v2902, %v3031
        %v3124 = vmul.f32 %v2906, %v3035
        %v3125 = vmul.f32 %v2910, %v3039
        %v3126 = vmul.f32 %v2914, %v3043
        %v3127 = vmul.f32 %v2918, %v3047
        %v3128 = vmul.f32 %v2922, %v3051
        %v3129 = vmul.f32 %v2926, %v3055
        %v3130 = vmul.f32 %v2930, %v3059
        %v3131 = vmul.f32 %v2934, %v3063
        %v3132 = vmul.f32 %v2938, %v3067
        %v3133 = vmul.f32 %v2942, %v3071
        %v3134 = vmul.f32 %v2946, %v3075
        %v3135 = vmul.f32 %v2950, %v3079
        %v3136 = vmul.f32 %v2954, %v3083
        %v3137 = vmul.f32 %v2958, %v3087
        %v3138 = vmul.f32 %v2962, %v3091
        %v3139 = vmul.f32 %v2966, %v3095
        %v3140 = vmul.f32 %v2970, %v3099
        %v3141 = vmul.f32 %v2974, %v3103
        %v3142 = vmul.f32 %v2978, %v3107
        %v3143 = vmul.f32 %v2982, %v3111
        %v3144 = vadd.f32 %v2504, %v3112
        %v3145 = vadd.f32 %v2505, %v3113
        %v3146 = vadd.f32 %v2506, %v3114
        %v3147 = vadd.f32 %v2507, %v3115
        %v3148 = vadd.f32 %v2508, %v3116
        %v3149 = vadd.f32 %v2509, %v3117
        %v3150 = vadd.f32 %v2510, %v3118
        %v3151 = vadd.f32 %v2511, %v3119
        %v3152 = vadd.f32 %v2512, %v3120
        %v3153 = vadd.f32 %v2513, %v3121
        %v3154 = vadd.f32 %v2514, %v3122
        %v3155 = vadd.f32 %v2515, %v3123
        %v3156 = vadd.f32 %v2516, %v3124
        %v3157 = vadd.f32 %v2517, %v3125
        %v3158 = vadd.f32 %v2518, %v3126
        %v3159 = vadd.f32 %v2519, %v3127
        %v3160 = vadd.f32 %v2520, %v3128
        %v3161 = vadd.f32 %v2521, %v3129
        %v3162 = vadd.f32 %v2522, %v3130
        %v3163 = vadd.f32 %v2523, %v3131
        %v3164 = vadd.f32 %v2524, %v3132
        %v3165 = vadd.f32 %v2525, %v3133
        %v3166 = vadd.f32 %v2526, %v3134
        %v3167 = vadd.f32 %v2527, %v3135
        %v3168 = vadd.f32 %v2528, %v3136
        %v3169 = vadd.f32 %v2529, %v3137
        %v3170 = vadd.f32 %v2530, %v3138
        %v3171 = vadd.f32 %v2531, %v3139
        %v3172 = vadd.f32 %v2532, %v3140
        %v3173 = vadd.f32 %v2533, %v3141
        %v3174 = vadd.f32 %v2534, %v3142
        %v3175 = vadd.f32 %v2535, %v3143
        %3176 = vset.pattern.permute.xlu0 3
        %3177 = vperm.xlu0 %3176, %v840
        %v3178 = vpop.permute.xlu0 %3177
        %3180 = vset.pattern.permute.xlu0 3
        %3181 = vperm.xlu0 %3180, %v841
        %v3182 = vpop.permute.xlu0 %3181
        %3184 = vset.pattern.permute.xlu0 3
        %3185 = vperm.xlu0 %3184, %v842
        %v3186 = vpop.permute.xlu0 %3185
        %3188 = vset.pattern.permute.xlu0 3
        %3189 = vperm.xlu0 %3188, %v843
        %v3190 = vpop.permute.xlu0 %3189
        %3192 = vset.pattern.permute.xlu0 3
        %3193 = vperm.xlu0 %3192, %v844
        %v3194 = vpop.permute.xlu0 %3193
        %3196 = vset.pattern.permute.xlu0 3
        %3197 = vperm.xlu0 %3196, %v845
        %v3198 = vpop.permute.xlu0 %3197
        %3200 = vset.pattern.permute.xlu0 3
        %3201 = vperm.xlu0 %3200, %v846
        %v3202 = vpop.permute.xlu0 %3201
        %3204 = vset.pattern.permute.xlu0 3
        %3205 = vperm.xlu0 %3204, %v847
        %v3206 = vpop.permute.xlu0 %3205
        %3208 = vset.pattern.permute.xlu0 3
        %3209 = vperm.xlu0 %3208, %v848
        %v3210 = vpop.permute.xlu0 %3209
        %3212 = vset.pattern.permute.xlu0 3
        %3213 = vperm.xlu0 %3212, %v849
        %v3214 = vpop.permute.xlu0 %3213
        %3216 = vset.pattern.permute.xlu0 3
        %3217 = vperm.xlu0 %3216, %v850
        %v3218 = vpop.permute.xlu0 %3217
        %3220 = vset.pattern.permute.xlu0 3
        %3221 = vperm.xlu0 %3220, %v851
        %v3222 = vpop.permute.xlu0 %3221
        %3224 = vset.pattern.permute.xlu0 3
        %3225 = vperm.xlu0 %3224, %v852
        %v3226 = vpop.permute.xlu0 %3225
        %3228 = vset.pattern.permute.xlu0 3
        %3229 = vperm.xlu0 %3228, %v853
        %v3230 = vpop.permute.xlu0 %3229
        %3232 = vset.pattern.permute.xlu0 3
        %3233 = vperm.xlu0 %3232, %v854
        %v3234 = vpop.permute.xlu0 %3233
        %3236 = vset.pattern.permute.xlu0 3
        %3237 = vperm.xlu0 %3236, %v855
        %v3238 = vpop.permute.xlu0 %3237
        %3240 = vset.pattern.permute.xlu0 3
        %3241 = vperm.xlu0 %3240, %v856
        %v3242 = vpop.permute.xlu0 %3241
        %3244 = vset.pattern.permute.xlu0 3
        %3245 = vperm.xlu0 %3244, %v857
        %v3246 = vpop.permute.xlu0 %3245
        %3248 = vset.pattern.permute.xlu0 3
        %3249 = vperm.xlu0 %3248, %v858
        %v3250 = vpop.permute.xlu0 %3249
        %3252 = vset.pattern.permute.xlu0 3
        %3253 = vperm.xlu0 %3252, %v859
        %v3254 = vpop.permute.xlu0 %3253
        %3256 = vset.pattern.permute.xlu0 3
        %3257 = vperm.xlu0 %3256, %v860
        %v3258 = vpop.permute.xlu0 %3257
        %3260 = vset.pattern.permute.xlu0 3
        %3261 = vperm.xlu0 %3260, %v861
        %v3262 = vpop.permute.xlu0 %3261
        %3264 = vset.pattern.permute.xlu0 3
        %3265 = vperm.xlu0 %3264, %v862
        %v3266 = vpop.permute.xlu0 %3265
        %3268 = vset.pattern.permute.xlu0 3
        %3269 = vperm.xlu0 %3268, %v863
        %v3270 = vpop.permute.xlu0 %3269
        %3272 = vset.pattern.permute.xlu0 3
        %3273 = vperm.xlu0 %3272, %v864
        %v3274 = vpop.permute.xlu0 %3273
        %3276 = vset.pattern.permute.xlu0 3
        %3277 = vperm.xlu0 %3276, %v865
        %v3278 = vpop.permute.xlu0 %3277
        %3280 = vset.pattern.permute.xlu0 3
        %3281 = vperm.xlu0 %3280, %v866
        %v3282 = vpop.permute.xlu0 %3281
        %3284 = vset.pattern.permute.xlu0 3
        %3285 = vperm.xlu0 %3284, %v867
        %v3286 = vpop.permute.xlu0 %3285
        %3288 = vset.pattern.permute.xlu0 3
        %3289 = vperm.xlu0 %3288, %v868
        %v3290 = vpop.permute.xlu0 %3289
        %3292 = vset.pattern.permute.xlu0 3
        %3293 = vperm.xlu0 %3292, %v869
        %v3294 = vpop.permute.xlu0 %3293
        %3296 = vset.pattern.permute.xlu0 3
        %3297 = vperm.xlu0 %3296, %v870
        %v3298 = vpop.permute.xlu0 %3297
        %3300 = vset.pattern.permute.xlu0 3
        %3301 = vperm.xlu0 %3300, %v871
        %v3302 = vpop.permute.xlu0 %3301
        %v3304 = vlaneseq
        %v3305 = vshrl.u32 %v3304, 7
        %v3306 = vsub.s32 3, %v3305
        %v3307 = vrot.slane %v652, %v3306
        %v3308 = vlaneseq
        %v3309 = vshrl.u32 %v3308, 7
        %v3310 = vsub.s32 3, %v3309
        %v3311 = vrot.slane %v656, %v3310
        %v3312 = vlaneseq
        %v3313 = vshrl.u32 %v3312, 7
        %v3314 = vsub.s32 3, %v3313
        %v3315 = vrot.slane %v662, %v3314
        %v3316 = vlaneseq
        %v3317 = vshrl.u32 %v3316, 7
        %v3318 = vsub.s32 3, %v3317
        %v3319 = vrot.slane %v666, %v3318
        %v3320 = vlaneseq
        %v3321 = vshrl.u32 %v3320, 7
        %v3322 = vsub.s32 3, %v3321
        %v3323 = vrot.slane %v672, %v3322
        %v3324 = vlaneseq
        %v3325 = vshrl.u32 %v3324, 7
        %v3326 = vsub.s32 3, %v3325
        %v3327 = vrot.slane %v676, %v3326
        %v3328 = vlaneseq
        %v3329 = vshrl.u32 %v3328, 7
        %v3330 = vsub.s32 3, %v3329
        %v3331 = vrot.slane %v682, %v3330
        %v3332 = vlaneseq
        %v3333 = vshrl.u32 %v3332, 7
        %v3334 = vsub.s32 3, %v3333
        %v3335 = vrot.slane %v686, %v3334
        %v3336 = vlaneseq
        %v3337 = vshrl.u32 %v3336, 7
        %v3338 = vsub.s32 3, %v3337
        %v3339 = vrot.slane %v692, %v3338
        %v3340 = vlaneseq
        %v3341 = vshrl.u32 %v3340, 7
        %v3342 = vsub.s32 3, %v3341
        %v3343 = vrot.slane %v696, %v3342
        %v3344 = vlaneseq
        %v3345 = vshrl.u32 %v3344, 7
        %v3346 = vsub.s32 3, %v3345
        %v3347 = vrot.slane %v702, %v3346
        %v3348 = vlaneseq
        %v3349 = vshrl.u32 %v3348, 7
        %v3350 = vsub.s32 3, %v3349
        %v3351 = vrot.slane %v706, %v3350
        %v3352 = vlaneseq
        %v3353 = vshrl.u32 %v3352, 7
        %v3354 = vsub.s32 3, %v3353
        %v3355 = vrot.slane %v712, %v3354
        %v3356 = vlaneseq
        %v3357 = vshrl.u32 %v3356, 7
        %v3358 = vsub.s32 3, %v3357
        %v3359 = vrot.slane %v716, %v3358
        %v3360 = vlaneseq
        %v3361 = vshrl.u32 %v3360, 7
        %v3362 = vsub.s32 3, %v3361
        %v3363 = vrot.slane %v722, %v3362
        %v3364 = vlaneseq
        %v3365 = vshrl.u32 %v3364, 7
        %v3366 = vsub.s32 3, %v3365
        %v3367 = vrot.slane %v726, %v3366
        %v3368 = vlaneseq
        %v3369 = vshrl.u32 %v3368, 7
        %v3370 = vsub.s32 3, %v3369
        %v3371 = vrot.slane %v732, %v3370
        %v3372 = vlaneseq
        %v3373 = vshrl.u32 %v3372, 7
        %v3374 = vsub.s32 3, %v3373
        %v3375 = vrot.slane %v736, %v3374
        %v3376 = vlaneseq
        %v3377 = vshrl.u32 %v3376, 7
        %v3378 = vsub.s32 3, %v3377
        %v3379 = vrot.slane %v742, %v3378
        %v3380 = vlaneseq
        %v3381 = vshrl.u32 %v3380, 7
        %v3382 = vsub.s32 3, %v3381
        %v3383 = vrot.slane %v746, %v3382
        %v3384 = vlaneseq
        %v3385 = vshrl.u32 %v3384, 7
        %v3386 = vsub.s32 3, %v3385
        %v3387 = vrot.slane %v752, %v3386
        %v3388 = vlaneseq
        %v3389 = vshrl.u32 %v3388, 7
        %v3390 = vsub.s32 3, %v3389
        %v3391 = vrot.slane %v756, %v3390
        %v3392 = vlaneseq
        %v3393 = vshrl.u32 %v3392, 7
        %v3394 = vsub.s32 3, %v3393
        %v3395 = vrot.slane %v762, %v3394
        %v3396 = vlaneseq
        %v3397 = vshrl.u32 %v3396, 7
        %v3398 = vsub.s32 3, %v3397
        %v3399 = vrot.slane %v766, %v3398
        %v3400 = vlaneseq
        %v3401 = vshrl.u32 %v3400, 7
        %v3402 = vsub.s32 3, %v3401
        %v3403 = vrot.slane %v772, %v3402
        %v3404 = vlaneseq
        %v3405 = vshrl.u32 %v3404, 7
        %v3406 = vsub.s32 3, %v3405
        %v3407 = vrot.slane %v776, %v3406
        %v3408 = vlaneseq
        %v3409 = vshrl.u32 %v3408, 7
        %v3410 = vsub.s32 3, %v3409
        %v3411 = vrot.slane %v782, %v3410
        %v3412 = vlaneseq
        %v3413 = vshrl.u32 %v3412, 7
        %v3414 = vsub.s32 3, %v3413
        %v3415 = vrot.slane %v786, %v3414
        %v3416 = vlaneseq
        %v3417 = vshrl.u32 %v3416, 7
        %v3418 = vsub.s32 3, %v3417
        %v3419 = vrot.slane %v792, %v3418
        %v3420 = vlaneseq
        %v3421 = vshrl.u32 %v3420, 7
        %v3422 = vsub.s32 3, %v3421
        %v3423 = vrot.slane %v796, %v3422
        %v3424 = vlaneseq
        %v3425 = vshrl.u32 %v3424, 7
        %v3426 = vsub.s32 3, %v3425
        %v3427 = vrot.slane %v802, %v3426
        %v3428 = vlaneseq
        %v3429 = vshrl.u32 %v3428, 7
        %v3430 = vsub.s32 3, %v3429
        %v3431 = vrot.slane %v806, %v3430
        %v3432 = vmul.f32 %v3178, %v3307
        %v3433 = vmul.f32 %v3182, %v3311
        %v3434 = vmul.f32 %v3186, %v3315
        %v3435 = vmul.f32 %v3190, %v3319
        %v3436 = vmul.f32 %v3194, %v3323
        %v3437 = vmul.f32 %v3198, %v3327
        %v3438 = vmul.f32 %v3202, %v3331
        %v3439 = vmul.f32 %v3206, %v3335
        %v3440 = vmul.f32 %v3210, %v3339
        %v3441 = vmul.f32 %v3214, %v3343
        %v3442 = vmul.f32 %v3218, %v3347
        %v3443 = vmul.f32 %v3222, %v3351
        %v3444 = vmul.f32 %v3226, %v3355
        %v3445 = vmul.f32 %v3230, %v3359
        %v3446 = vmul.f32 %v3234, %v3363
        %v3447 = vmul.f32 %v3238, %v3367
        %v3448 = vmul.f32 %v3242, %v3371
        %v3449 = vmul.f32 %v3246, %v3375
        %v3450 = vmul.f32 %v3250, %v3379
        %v3451 = vmul.f32 %v3254, %v3383
        %v3452 = vmul.f32 %v3258, %v3387
        %v3453 = vmul.f32 %v3262, %v3391
        %v3454 = vmul.f32 %v3266, %v3395
        %v3455 = vmul.f32 %v3270, %v3399
        %v3456 = vmul.f32 %v3274, %v3403
        %v3457 = vmul.f32 %v3278, %v3407
        %v3458 = vmul.f32 %v3282, %v3411
        %v3459 = vmul.f32 %v3286, %v3415
        %v3460 = vmul.f32 %v3290, %v3419
        %v3461 = vmul.f32 %v3294, %v3423
        %v3462 = vmul.f32 %v3298, %v3427
        %v3463 = vmul.f32 %v3302, %v3431
        %v3464 = vadd.f32 %v2824, %v3432
        %v3465 = vadd.f32 %v2825, %v3433
        %v3466 = vadd.f32 %v2826, %v3434
        %v3467 = vadd.f32 %v2827, %v3435
        %v3468 = vadd.f32 %v2828, %v3436
        %v3469 = vadd.f32 %v2829, %v3437
        %v3470 = vadd.f32 %v2830, %v3438
        %v3471 = vadd.f32 %v2831, %v3439
        %v3472 = vadd.f32 %v2832, %v3440
        %v3473 = vadd.f32 %v2833, %v3441
        %v3474 = vadd.f32 %v2834, %v3442
        %v3475 = vadd.f32 %v2835, %v3443
        %v3476 = vadd.f32 %v2836, %v3444
        %v3477 = vadd.f32 %v2837, %v3445
        %v3478 = vadd.f32 %v2838, %v3446
        %v3479 = vadd.f32 %v2839, %v3447
        %v3480 = vadd.f32 %v2840, %v3448
        %v3481 = vadd.f32 %v2841, %v3449
        %v3482 = vadd.f32 %v2842, %v3450
        %v3483 = vadd.f32 %v2843, %v3451
        %v3484 = vadd.f32 %v2844, %v3452
        %v3485 = vadd.f32 %v2845, %v3453
        %v3486 = vadd.f32 %v2846, %v3454
        %v3487 = vadd.f32 %v2847, %v3455
        %v3488 = vadd.f32 %v2848, %v3456
        %v3489 = vadd.f32 %v2849, %v3457
        %v3490 = vadd.f32 %v2850, %v3458
        %v3491 = vadd.f32 %v2851, %v3459
        %v3492 = vadd.f32 %v2852, %v3460
        %v3493 = vadd.f32 %v2853, %v3461
        %v3494 = vadd.f32 %v2854, %v3462
        %v3495 = vadd.f32 %v2855, %v3463
        %3496 = vset.pattern.permute.xlu0 4
        %3497 = vperm.xlu0 %3496, %v808
        %v3498 = vpop.permute.xlu0 %3497
        %3500 = vset.pattern.permute.xlu0 4
        %3501 = vperm.xlu0 %3500, %v809
        %v3502 = vpop.permute.xlu0 %3501
        %3504 = vset.pattern.permute.xlu0 4
        %3505 = vperm.xlu0 %3504, %v810
        %v3506 = vpop.permute.xlu0 %3505
        %3508 = vset.pattern.permute.xlu0 4
        %3509 = vperm.xlu0 %3508, %v811
        %v3510 = vpop.permute.xlu0 %3509
        %3512 = vset.pattern.permute.xlu0 4
        %3513 = vperm.xlu0 %3512, %v812
        %v3514 = vpop.permute.xlu0 %3513
        %3516 = vset.pattern.permute.xlu0 4
        %3517 = vperm.xlu0 %3516, %v813
        %v3518 = vpop.permute.xlu0 %3517
        %3520 = vset.pattern.permute.xlu0 4
        %3521 = vperm.xlu0 %3520, %v814
        %v3522 = vpop.permute.xlu0 %3521
        %3524 = vset.pattern.permute.xlu0 4
        %3525 = vperm.xlu0 %3524, %v815
        %v3526 = vpop.permute.xlu0 %3525
        %3528 = vset.pattern.permute.xlu0 4
        %3529 = vperm.xlu0 %3528, %v816
        %v3530 = vpop.permute.xlu0 %3529
        %3532 = vset.pattern.permute.xlu0 4
        %3533 = vperm.xlu0 %3532, %v817
        %v3534 = vpop.permute.xlu0 %3533
        %3536 = vset.pattern.permute.xlu0 4
        %3537 = vperm.xlu0 %3536, %v818
        %v3538 = vpop.permute.xlu0 %3537
        %3540 = vset.pattern.permute.xlu0 4
        %3541 = vperm.xlu0 %3540, %v819
        %v3542 = vpop.permute.xlu0 %3541
        %3544 = vset.pattern.permute.xlu0 4
        %3545 = vperm.xlu0 %3544, %v820
        %v3546 = vpop.permute.xlu0 %3545
        %3548 = vset.pattern.permute.xlu0 4
        %3549 = vperm.xlu0 %3548, %v821
        %v3550 = vpop.permute.xlu0 %3549
        %3552 = vset.pattern.permute.xlu0 4
        %3553 = vperm.xlu0 %3552, %v822
        %v3554 = vpop.permute.xlu0 %3553
        %3556 = vset.pattern.permute.xlu0 4
        %3557 = vperm.xlu0 %3556, %v823
        %v3558 = vpop.permute.xlu0 %3557
        %3560 = vset.pattern.permute.xlu0 4
        %3561 = vperm.xlu0 %3560, %v824
        %v3562 = vpop.permute.xlu0 %3561
        %3564 = vset.pattern.permute.xlu0 4
        %3565 = vperm.xlu0 %3564, %v825
        %v3566 = vpop.permute.xlu0 %3565
        %3568 = vset.pattern.permute.xlu0 4
        %3569 = vperm.xlu0 %3568, %v826
        %v3570 = vpop.permute.xlu0 %3569
        %3572 = vset.pattern.permute.xlu0 4
        %3573 = vperm.xlu0 %3572, %v827
        %v3574 = vpop.permute.xlu0 %3573
        %3576 = vset.pattern.permute.xlu0 4
        %3577 = vperm.xlu0 %3576, %v828
        %v3578 = vpop.permute.xlu0 %3577
        %3580 = vset.pattern.permute.xlu0 4
        %3581 = vperm.xlu0 %3580, %v829
        %v3582 = vpop.permute.xlu0 %3581
        %3584 = vset.pattern.permute.xlu0 4
        %3585 = vperm.xlu0 %3584, %v830
        %v3586 = vpop.permute.xlu0 %3585
        %3588 = vset.pattern.permute.xlu0 4
        %3589 = vperm.xlu0 %3588, %v831
        %v3590 = vpop.permute.xlu0 %3589
        %3592 = vset.pattern.permute.xlu0 4
        %3593 = vperm.xlu0 %3592, %v832
        %v3594 = vpop.permute.xlu0 %3593
        %3596 = vset.pattern.permute.xlu0 4
        %3597 = vperm.xlu0 %3596, %v833
        %v3598 = vpop.permute.xlu0 %3597
        %3600 = vset.pattern.permute.xlu0 4
        %3601 = vperm.xlu0 %3600, %v834
        %v3602 = vpop.permute.xlu0 %3601
        %3604 = vset.pattern.permute.xlu0 4
        %3605 = vperm.xlu0 %3604, %v835
        %v3606 = vpop.permute.xlu0 %3605
        %3608 = vset.pattern.permute.xlu0 4
        %3609 = vperm.xlu0 %3608, %v836
        %v3610 = vpop.permute.xlu0 %3609
        %3612 = vset.pattern.permute.xlu0 4
        %3613 = vperm.xlu0 %3612, %v837
        %v3614 = vpop.permute.xlu0 %3613
        %3616 = vset.pattern.permute.xlu0 4
        %3617 = vperm.xlu0 %3616, %v838
        %v3618 = vpop.permute.xlu0 %3617
        %3620 = vset.pattern.permute.xlu0 4
        %3621 = vperm.xlu0 %3620, %v839
        %v3622 = vpop.permute.xlu0 %3621
        %v3624 = vlaneseq
        %v3625 = vshrl.u32 %v3624, 7
        %v3626 = vsub.s32 4, %v3625
        %v3627 = vrot.slane %v650, %v3626
        %v3628 = vlaneseq
        %v3629 = vshrl.u32 %v3628, 7
        %v3630 = vsub.s32 4, %v3629
        %v3631 = vrot.slane %v654, %v3630
        %v3632 = vlaneseq
        %v3633 = vshrl.u32 %v3632, 7
        %v3634 = vsub.s32 4, %v3633
        %v3635 = vrot.slane %v660, %v3634
        %v3636 = vlaneseq
        %v3637 = vshrl.u32 %v3636, 7
        %v3638 = vsub.s32 4, %v3637
        %v3639 = vrot.slane %v664, %v3638
        %v3640 = vlaneseq
        %v3641 = vshrl.u32 %v3640, 7
        %v3642 = vsub.s32 4, %v3641
        %v3643 = vrot.slane %v670, %v3642
        %v3644 = vlaneseq
        %v3645 = vshrl.u32 %v3644, 7
        %v3646 = vsub.s32 4, %v3645
        %v3647 = vrot.slane %v674, %v3646
        %v3648 = vlaneseq
        %v3649 = vshrl.u32 %v3648, 7
        %v3650 = vsub.s32 4, %v3649
        %v3651 = vrot.slane %v680, %v3650
        %v3652 = vlaneseq
        %v3653 = vshrl.u32 %v3652, 7
        %v3654 = vsub.s32 4, %v3653
        %v3655 = vrot.slane %v684, %v3654
        %v3656 = vlaneseq
        %v3657 = vshrl.u32 %v3656, 7
        %v3658 = vsub.s32 4, %v3657
        %v3659 = vrot.slane %v690, %v3658
        %v3660 = vlaneseq
        %v3661 = vshrl.u32 %v3660, 7
        %v3662 = vsub.s32 4, %v3661
        %v3663 = vrot.slane %v694, %v3662
        %v3664 = vlaneseq
        %v3665 = vshrl.u32 %v3664, 7
        %v3666 = vsub.s32 4, %v3665
        %v3667 = vrot.slane %v700, %v3666
        %v3668 = vlaneseq
        %v3669 = vshrl.u32 %v3668, 7
        %v3670 = vsub.s32 4, %v3669
        %v3671 = vrot.slane %v704, %v3670
        %v3672 = vlaneseq
        %v3673 = vshrl.u32 %v3672, 7
        %v3674 = vsub.s32 4, %v3673
        %v3675 = vrot.slane %v710, %v3674
        %v3676 = vlaneseq
        %v3677 = vshrl.u32 %v3676, 7
        %v3678 = vsub.s32 4, %v3677
        %v3679 = vrot.slane %v714, %v3678
        %v3680 = vlaneseq
        %v3681 = vshrl.u32 %v3680, 7
        %v3682 = vsub.s32 4, %v3681
        %v3683 = vrot.slane %v720, %v3682
        %v3684 = vlaneseq
        %v3685 = vshrl.u32 %v3684, 7
        %v3686 = vsub.s32 4, %v3685
        %v3687 = vrot.slane %v724, %v3686
        %v3688 = vlaneseq
        %v3689 = vshrl.u32 %v3688, 7
        %v3690 = vsub.s32 4, %v3689
        %v3691 = vrot.slane %v730, %v3690
        %v3692 = vlaneseq
        %v3693 = vshrl.u32 %v3692, 7
        %v3694 = vsub.s32 4, %v3693
        %v3695 = vrot.slane %v734, %v3694
        %v3696 = vlaneseq
        %v3697 = vshrl.u32 %v3696, 7
        %v3698 = vsub.s32 4, %v3697
        %v3699 = vrot.slane %v740, %v3698
        %v3700 = vlaneseq
        %v3701 = vshrl.u32 %v3700, 7
        %v3702 = vsub.s32 4, %v3701
        %v3703 = vrot.slane %v744, %v3702
        %v3704 = vlaneseq
        %v3705 = vshrl.u32 %v3704, 7
        %v3706 = vsub.s32 4, %v3705
        %v3707 = vrot.slane %v750, %v3706
        %v3708 = vlaneseq
        %v3709 = vshrl.u32 %v3708, 7
        %v3710 = vsub.s32 4, %v3709
        %v3711 = vrot.slane %v754, %v3710
        %v3712 = vlaneseq
        %v3713 = vshrl.u32 %v3712, 7
        %v3714 = vsub.s32 4, %v3713
        %v3715 = vrot.slane %v760, %v3714
        %v3716 = vlaneseq
        %v3717 = vshrl.u32 %v3716, 7
        %v3718 = vsub.s32 4, %v3717
        %v3719 = vrot.slane %v764, %v3718
        %v3720 = vlaneseq
        %v3721 = vshrl.u32 %v3720, 7
        %v3722 = vsub.s32 4, %v3721
        %v3723 = vrot.slane %v770, %v3722
        %v3724 = vlaneseq
        %v3725 = vshrl.u32 %v3724, 7
        %v3726 = vsub.s32 4, %v3725
        %v3727 = vrot.slane %v774, %v3726
        %v3728 = vlaneseq
        %v3729 = vshrl.u32 %v3728, 7
        %v3730 = vsub.s32 4, %v3729
        %v3731 = vrot.slane %v780, %v3730
        %v3732 = vlaneseq
        %v3733 = vshrl.u32 %v3732, 7
        %v3734 = vsub.s32 4, %v3733
        %v3735 = vrot.slane %v784, %v3734
        %v3736 = vlaneseq
        %v3737 = vshrl.u32 %v3736, 7
        %v3738 = vsub.s32 4, %v3737
        %v3739 = vrot.slane %v790, %v3738
        %v3740 = vlaneseq
        %v3741 = vshrl.u32 %v3740, 7
        %v3742 = vsub.s32 4, %v3741
        %v3743 = vrot.slane %v794, %v3742
        %v3744 = vlaneseq
        %v3745 = vshrl.u32 %v3744, 7
        %v3746 = vsub.s32 4, %v3745
        %v3747 = vrot.slane %v800, %v3746
        %v3748 = vlaneseq
        %v3749 = vshrl.u32 %v3748, 7
        %v3750 = vsub.s32 4, %v3749
        %v3751 = vrot.slane %v804, %v3750
        %v3752 = vmul.f32 %v3498, %v3627
        %v3753 = vmul.f32 %v3502, %v3631
        %v3754 = vmul.f32 %v3506, %v3635
        %v3755 = vmul.f32 %v3510, %v3639
        %v3756 = vmul.f32 %v3514, %v3643
        %v3757 = vmul.f32 %v3518, %v3647
        %v3758 = vmul.f32 %v3522, %v3651
        %v3759 = vmul.f32 %v3526, %v3655
        %v3760 = vmul.f32 %v3530, %v3659
        %v3761 = vmul.f32 %v3534, %v3663
        %v3762 = vmul.f32 %v3538, %v3667
        %v3763 = vmul.f32 %v3542, %v3671
        %v3764 = vmul.f32 %v3546, %v3675
        %v3765 = vmul.f32 %v3550, %v3679
        %v3766 = vmul.f32 %v3554, %v3683
        %v3767 = vmul.f32 %v3558, %v3687
        %v3768 = vmul.f32 %v3562, %v3691
        %v3769 = vmul.f32 %v3566, %v3695
        %v3770 = vmul.f32 %v3570, %v3699
        %v3771 = vmul.f32 %v3574, %v3703
        %v3772 = vmul.f32 %v3578, %v3707
        %v3773 = vmul.f32 %v3582, %v3711
        %v3774 = vmul.f32 %v3586, %v3715
        %v3775 = vmul.f32 %v3590, %v3719
        %v3776 = vmul.f32 %v3594, %v3723
        %v3777 = vmul.f32 %v3598, %v3727
        %v3778 = vmul.f32 %v3602, %v3731
        %v3779 = vmul.f32 %v3606, %v3735
        %v3780 = vmul.f32 %v3610, %v3739
        %v3781 = vmul.f32 %v3614, %v3743
        %v3782 = vmul.f32 %v3618, %v3747
        %v3783 = vmul.f32 %v3622, %v3751
        %v3784 = vadd.f32 %v3144, %v3752
        %v3785 = vadd.f32 %v3145, %v3753
        %v3786 = vadd.f32 %v3146, %v3754
        %v3787 = vadd.f32 %v3147, %v3755
        %v3788 = vadd.f32 %v3148, %v3756
        %v3789 = vadd.f32 %v3149, %v3757
        %v3790 = vadd.f32 %v3150, %v3758
        %v3791 = vadd.f32 %v3151, %v3759
        %v3792 = vadd.f32 %v3152, %v3760
        %v3793 = vadd.f32 %v3153, %v3761
        %v3794 = vadd.f32 %v3154, %v3762
        %v3795 = vadd.f32 %v3155, %v3763
        %v3796 = vadd.f32 %v3156, %v3764
        %v3797 = vadd.f32 %v3157, %v3765
        %v3798 = vadd.f32 %v3158, %v3766
        %v3799 = vadd.f32 %v3159, %v3767
        %v3800 = vadd.f32 %v3160, %v3768
        %v3801 = vadd.f32 %v3161, %v3769
        %v3802 = vadd.f32 %v3162, %v3770
        %v3803 = vadd.f32 %v3163, %v3771
        %v3804 = vadd.f32 %v3164, %v3772
        %v3805 = vadd.f32 %v3165, %v3773
        %v3806 = vadd.f32 %v3166, %v3774
        %v3807 = vadd.f32 %v3167, %v3775
        %v3808 = vadd.f32 %v3168, %v3776
        %v3809 = vadd.f32 %v3169, %v3777
        %v3810 = vadd.f32 %v3170, %v3778
        %v3811 = vadd.f32 %v3171, %v3779
        %v3812 = vadd.f32 %v3172, %v3780
        %v3813 = vadd.f32 %v3173, %v3781
        %v3814 = vadd.f32 %v3174, %v3782
        %v3815 = vadd.f32 %v3175, %v3783
        %3816 = vset.pattern.permute.xlu0 4
        %3817 = vperm.xlu0 %3816, %v840
        %v3818 = vpop.permute.xlu0 %3817
        %3820 = vset.pattern.permute.xlu0 4
        %3821 = vperm.xlu0 %3820, %v841
        %v3822 = vpop.permute.xlu0 %3821
        %3824 = vset.pattern.permute.xlu0 4
        %3825 = vperm.xlu0 %3824, %v842
        %v3826 = vpop.permute.xlu0 %3825
        %3828 = vset.pattern.permute.xlu0 4
        %3829 = vperm.xlu0 %3828, %v843
        %v3830 = vpop.permute.xlu0 %3829
        %3832 = vset.pattern.permute.xlu0 4
        %3833 = vperm.xlu0 %3832, %v844
        %v3834 = vpop.permute.xlu0 %3833
        %3836 = vset.pattern.permute.xlu0 4
        %3837 = vperm.xlu0 %3836, %v845
        %v3838 = vpop.permute.xlu0 %3837
        %3840 = vset.pattern.permute.xlu0 4
        %3841 = vperm.xlu0 %3840, %v846
        %v3842 = vpop.permute.xlu0 %3841
        %3844 = vset.pattern.permute.xlu0 4
        %3845 = vperm.xlu0 %3844, %v847
        %v3846 = vpop.permute.xlu0 %3845
        %3848 = vset.pattern.permute.xlu0 4
        %3849 = vperm.xlu0 %3848, %v848
        %v3850 = vpop.permute.xlu0 %3849
        %3852 = vset.pattern.permute.xlu0 4
        %3853 = vperm.xlu0 %3852, %v849
        %v3854 = vpop.permute.xlu0 %3853
        %3856 = vset.pattern.permute.xlu0 4
        %3857 = vperm.xlu0 %3856, %v850
        %v3858 = vpop.permute.xlu0 %3857
        %3860 = vset.pattern.permute.xlu0 4
        %3861 = vperm.xlu0 %3860, %v851
        %v3862 = vpop.permute.xlu0 %3861
        %3864 = vset.pattern.permute.xlu0 4
        %3865 = vperm.xlu0 %3864, %v852
        %v3866 = vpop.permute.xlu0 %3865
        %3868 = vset.pattern.permute.xlu0 4
        %3869 = vperm.xlu0 %3868, %v853
        %v3870 = vpop.permute.xlu0 %3869
        %3872 = vset.pattern.permute.xlu0 4
        %3873 = vperm.xlu0 %3872, %v854
        %v3874 = vpop.permute.xlu0 %3873
        %3876 = vset.pattern.permute.xlu0 4
        %3877 = vperm.xlu0 %3876, %v855
        %v3878 = vpop.permute.xlu0 %3877
        %3880 = vset.pattern.permute.xlu0 4
        %3881 = vperm.xlu0 %3880, %v856
        %v3882 = vpop.permute.xlu0 %3881
        %3884 = vset.pattern.permute.xlu0 4
        %3885 = vperm.xlu0 %3884, %v857
        %v3886 = vpop.permute.xlu0 %3885
        %3888 = vset.pattern.permute.xlu0 4
        %3889 = vperm.xlu0 %3888, %v858
        %v3890 = vpop.permute.xlu0 %3889
        %3892 = vset.pattern.permute.xlu0 4
        %3893 = vperm.xlu0 %3892, %v859
        %v3894 = vpop.permute.xlu0 %3893
        %3896 = vset.pattern.permute.xlu0 4
        %3897 = vperm.xlu0 %3896, %v860
        %v3898 = vpop.permute.xlu0 %3897
        %3900 = vset.pattern.permute.xlu0 4
        %3901 = vperm.xlu0 %3900, %v861
        %v3902 = vpop.permute.xlu0 %3901
        %3904 = vset.pattern.permute.xlu0 4
        %3905 = vperm.xlu0 %3904, %v862
        %v3906 = vpop.permute.xlu0 %3905
        %3908 = vset.pattern.permute.xlu0 4
        %3909 = vperm.xlu0 %3908, %v863
        %v3910 = vpop.permute.xlu0 %3909
        %3912 = vset.pattern.permute.xlu0 4
        %3913 = vperm.xlu0 %3912, %v864
        %v3914 = vpop.permute.xlu0 %3913
        %3916 = vset.pattern.permute.xlu0 4
        %3917 = vperm.xlu0 %3916, %v865
        %v3918 = vpop.permute.xlu0 %3917
        %3920 = vset.pattern.permute.xlu0 4
        %3921 = vperm.xlu0 %3920, %v866
        %v3922 = vpop.permute.xlu0 %3921
        %3924 = vset.pattern.permute.xlu0 4
        %3925 = vperm.xlu0 %3924, %v867
        %v3926 = vpop.permute.xlu0 %3925
        %3928 = vset.pattern.permute.xlu0 4
        %3929 = vperm.xlu0 %3928, %v868
        %v3930 = vpop.permute.xlu0 %3929
        %3932 = vset.pattern.permute.xlu0 4
        %3933 = vperm.xlu0 %3932, %v869
        %v3934 = vpop.permute.xlu0 %3933
        %3936 = vset.pattern.permute.xlu0 4
        %3937 = vperm.xlu0 %3936, %v870
        %v3938 = vpop.permute.xlu0 %3937
        %3940 = vset.pattern.permute.xlu0 4
        %3941 = vperm.xlu0 %3940, %v871
        %v3942 = vpop.permute.xlu0 %3941
        %v3944 = vlaneseq
        %v3945 = vshrl.u32 %v3944, 7
        %v3946 = vsub.s32 4, %v3945
        %v3947 = vrot.slane %v652, %v3946
        %v3948 = vlaneseq
        %v3949 = vshrl.u32 %v3948, 7
        %v3950 = vsub.s32 4, %v3949
        %v3951 = vrot.slane %v656, %v3950
        %v3952 = vlaneseq
        %v3953 = vshrl.u32 %v3952, 7
        %v3954 = vsub.s32 4, %v3953
        %v3955 = vrot.slane %v662, %v3954
        %v3956 = vlaneseq
        %v3957 = vshrl.u32 %v3956, 7
        %v3958 = vsub.s32 4, %v3957
        %v3959 = vrot.slane %v666, %v3958
        %v3960 = vlaneseq
        %v3961 = vshrl.u32 %v3960, 7
        %v3962 = vsub.s32 4, %v3961
        %v3963 = vrot.slane %v672, %v3962
        %v3964 = vlaneseq
        %v3965 = vshrl.u32 %v3964, 7
        %v3966 = vsub.s32 4, %v3965
        %v3967 = vrot.slane %v676, %v3966
        %v3968 = vlaneseq
        %v3969 = vshrl.u32 %v3968, 7
        %v3970 = vsub.s32 4, %v3969
        %v3971 = vrot.slane %v682, %v3970
        %v3972 = vlaneseq
        %v3973 = vshrl.u32 %v3972, 7
        %v3974 = vsub.s32 4, %v3973
        %v3975 = vrot.slane %v686, %v3974
        %v3976 = vlaneseq
        %v3977 = vshrl.u32 %v3976, 7
        %v3978 = vsub.s32 4, %v3977
        %v3979 = vrot.slane %v692, %v3978
        %v3980 = vlaneseq
        %v3981 = vshrl.u32 %v3980, 7
        %v3982 = vsub.s32 4, %v3981
        %v3983 = vrot.slane %v696, %v3982
        %v3984 = vlaneseq
        %v3985 = vshrl.u32 %v3984, 7
        %v3986 = vsub.s32 4, %v3985
        %v3987 = vrot.slane %v702, %v3986
        %v3988 = vlaneseq
        %v3989 = vshrl.u32 %v3988, 7
        %v3990 = vsub.s32 4, %v3989
        %v3991 = vrot.slane %v706, %v3990
        %v3992 = vlaneseq
        %v3993 = vshrl.u32 %v3992, 7
        %v3994 = vsub.s32 4, %v3993
        %v3995 = vrot.slane %v712, %v3994
        %v3996 = vlaneseq
        %v3997 = vshrl.u32 %v3996, 7
        %v3998 = vsub.s32 4, %v3997
        %v3999 = vrot.slane %v716, %v3998
        %v4000 = vlaneseq
        %v4001 = vshrl.u32 %v4000, 7
        %v4002 = vsub.s32 4, %v4001
        %v4003 = vrot.slane %v722, %v4002
        %v4004 = vlaneseq
        %v4005 = vshrl.u32 %v4004, 7
        %v4006 = vsub.s32 4, %v4005
        %v4007 = vrot.slane %v726, %v4006
        %v4008 = vlaneseq
        %v4009 = vshrl.u32 %v4008, 7
        %v4010 = vsub.s32 4, %v4009
        %v4011 = vrot.slane %v732, %v4010
        %v4012 = vlaneseq
        %v4013 = vshrl.u32 %v4012, 7
        %v4014 = vsub.s32 4, %v4013
        %v4015 = vrot.slane %v736, %v4014
        %v4016 = vlaneseq
        %v4017 = vshrl.u32 %v4016, 7
        %v4018 = vsub.s32 4, %v4017
        %v4019 = vrot.slane %v742, %v4018
        %v4020 = vlaneseq
        %v4021 = vshrl.u32 %v4020, 7
        %v4022 = vsub.s32 4, %v4021
        %v4023 = vrot.slane %v746, %v4022
        %v4024 = vlaneseq
        %v4025 = vshrl.u32 %v4024, 7
        %v4026 = vsub.s32 4, %v4025
        %v4027 = vrot.slane %v752, %v4026
        %v4028 = vlaneseq
        %v4029 = vshrl.u32 %v4028, 7
        %v4030 = vsub.s32 4, %v4029
        %v4031 = vrot.slane %v756, %v4030
        %v4032 = vlaneseq
        %v4033 = vshrl.u32 %v4032, 7
        %v4034 = vsub.s32 4, %v4033
        %v4035 = vrot.slane %v762, %v4034
        %v4036 = vlaneseq
        %v4037 = vshrl.u32 %v4036, 7
        %v4038 = vsub.s32 4, %v4037
        %v4039 = vrot.slane %v766, %v4038
        %v4040 = vlaneseq
        %v4041 = vshrl.u32 %v4040, 7
        %v4042 = vsub.s32 4, %v4041
        %v4043 = vrot.slane %v772, %v4042
        %v4044 = vlaneseq
        %v4045 = vshrl.u32 %v4044, 7
        %v4046 = vsub.s32 4, %v4045
        %v4047 = vrot.slane %v776, %v4046
        %v4048 = vlaneseq
        %v4049 = vshrl.u32 %v4048, 7
        %v4050 = vsub.s32 4, %v4049
        %v4051 = vrot.slane %v782, %v4050
        %v4052 = vlaneseq
        %v4053 = vshrl.u32 %v4052, 7
        %v4054 = vsub.s32 4, %v4053
        %v4055 = vrot.slane %v786, %v4054
        %v4056 = vlaneseq
        %v4057 = vshrl.u32 %v4056, 7
        %v4058 = vsub.s32 4, %v4057
        %v4059 = vrot.slane %v792, %v4058
        %v4060 = vlaneseq
        %v4061 = vshrl.u32 %v4060, 7
        %v4062 = vsub.s32 4, %v4061
        %v4063 = vrot.slane %v796, %v4062
        %v4064 = vlaneseq
        %v4065 = vshrl.u32 %v4064, 7
        %v4066 = vsub.s32 4, %v4065
        %v4067 = vrot.slane %v802, %v4066
        %v4068 = vlaneseq
        %v4069 = vshrl.u32 %v4068, 7
        %v4070 = vsub.s32 4, %v4069
        %v4071 = vrot.slane %v806, %v4070
        %v4072 = vmul.f32 %v3818, %v3947
        %v4073 = vmul.f32 %v3822, %v3951
        %v4074 = vmul.f32 %v3826, %v3955
        %v4075 = vmul.f32 %v3830, %v3959
        %v4076 = vmul.f32 %v3834, %v3963
        %v4077 = vmul.f32 %v3838, %v3967
        %v4078 = vmul.f32 %v3842, %v3971
        %v4079 = vmul.f32 %v3846, %v3975
        %v4080 = vmul.f32 %v3850, %v3979
        %v4081 = vmul.f32 %v3854, %v3983
        %v4082 = vmul.f32 %v3858, %v3987
        %v4083 = vmul.f32 %v3862, %v3991
        %v4084 = vmul.f32 %v3866, %v3995
        %v4085 = vmul.f32 %v3870, %v3999
        %v4086 = vmul.f32 %v3874, %v4003
        %v4087 = vmul.f32 %v3878, %v4007
        %v4088 = vmul.f32 %v3882, %v4011
        %v4089 = vmul.f32 %v3886, %v4015
        %v4090 = vmul.f32 %v3890, %v4019
        %v4091 = vmul.f32 %v3894, %v4023
        %v4092 = vmul.f32 %v3898, %v4027
        %v4093 = vmul.f32 %v3902, %v4031
        %v4094 = vmul.f32 %v3906, %v4035
        %v4095 = vmul.f32 %v3910, %v4039
        %v4096 = vmul.f32 %v3914, %v4043
        %v4097 = vmul.f32 %v3918, %v4047
        %v4098 = vmul.f32 %v3922, %v4051
        %v4099 = vmul.f32 %v3926, %v4055
        %v4100 = vmul.f32 %v3930, %v4059
        %v4101 = vmul.f32 %v3934, %v4063
        %v4102 = vmul.f32 %v3938, %v4067
        %v4103 = vmul.f32 %v3942, %v4071
        %v4104 = vadd.f32 %v3464, %v4072
        %v4105 = vadd.f32 %v3465, %v4073
        %v4106 = vadd.f32 %v3466, %v4074
        %v4107 = vadd.f32 %v3467, %v4075
        %v4108 = vadd.f32 %v3468, %v4076
        %v4109 = vadd.f32 %v3469, %v4077
        %v4110 = vadd.f32 %v3470, %v4078
        %v4111 = vadd.f32 %v3471, %v4079
        %v4112 = vadd.f32 %v3472, %v4080
        %v4113 = vadd.f32 %v3473, %v4081
        %v4114 = vadd.f32 %v3474, %v4082
        %v4115 = vadd.f32 %v3475, %v4083
        %v4116 = vadd.f32 %v3476, %v4084
        %v4117 = vadd.f32 %v3477, %v4085
        %v4118 = vadd.f32 %v3478, %v4086
        %v4119 = vadd.f32 %v3479, %v4087
        %v4120 = vadd.f32 %v3480, %v4088
        %v4121 = vadd.f32 %v3481, %v4089
        %v4122 = vadd.f32 %v3482, %v4090
        %v4123 = vadd.f32 %v3483, %v4091
        %v4124 = vadd.f32 %v3484, %v4092
        %v4125 = vadd.f32 %v3485, %v4093
        %v4126 = vadd.f32 %v3486, %v4094
        %v4127 = vadd.f32 %v3487, %v4095
        %v4128 = vadd.f32 %v3488, %v4096
        %v4129 = vadd.f32 %v3489, %v4097
        %v4130 = vadd.f32 %v3490, %v4098
        %v4131 = vadd.f32 %v3491, %v4099
        %v4132 = vadd.f32 %v3492, %v4100
        %v4133 = vadd.f32 %v3493, %v4101
        %v4134 = vadd.f32 %v3494, %v4102
        %v4135 = vadd.f32 %v3495, %v4103
        %4136 = vset.pattern.permute.xlu0 5
        %4137 = vperm.xlu0 %4136, %v808
        %v4138 = vpop.permute.xlu0 %4137
        %4140 = vset.pattern.permute.xlu0 5
        %4141 = vperm.xlu0 %4140, %v809
        %v4142 = vpop.permute.xlu0 %4141
        %4144 = vset.pattern.permute.xlu0 5
        %4145 = vperm.xlu0 %4144, %v810
        %v4146 = vpop.permute.xlu0 %4145
        %4148 = vset.pattern.permute.xlu0 5
        %4149 = vperm.xlu0 %4148, %v811
        %v4150 = vpop.permute.xlu0 %4149
        %4152 = vset.pattern.permute.xlu0 5
        %4153 = vperm.xlu0 %4152, %v812
        %v4154 = vpop.permute.xlu0 %4153
        %4156 = vset.pattern.permute.xlu0 5
        %4157 = vperm.xlu0 %4156, %v813
        %v4158 = vpop.permute.xlu0 %4157
        %4160 = vset.pattern.permute.xlu0 5
        %4161 = vperm.xlu0 %4160, %v814
        %v4162 = vpop.permute.xlu0 %4161
        %4164 = vset.pattern.permute.xlu0 5
        %4165 = vperm.xlu0 %4164, %v815
        %v4166 = vpop.permute.xlu0 %4165
        %4168 = vset.pattern.permute.xlu0 5
        %4169 = vperm.xlu0 %4168, %v816
        %v4170 = vpop.permute.xlu0 %4169
        %4172 = vset.pattern.permute.xlu0 5
        %4173 = vperm.xlu0 %4172, %v817
        %v4174 = vpop.permute.xlu0 %4173
        %4176 = vset.pattern.permute.xlu0 5
        %4177 = vperm.xlu0 %4176, %v818
        %v4178 = vpop.permute.xlu0 %4177
        %4180 = vset.pattern.permute.xlu0 5
        %4181 = vperm.xlu0 %4180, %v819
        %v4182 = vpop.permute.xlu0 %4181
        %4184 = vset.pattern.permute.xlu0 5
        %4185 = vperm.xlu0 %4184, %v820
        %v4186 = vpop.permute.xlu0 %4185
        %4188 = vset.pattern.permute.xlu0 5
        %4189 = vperm.xlu0 %4188, %v821
        %v4190 = vpop.permute.xlu0 %4189
        %4192 = vset.pattern.permute.xlu0 5
        %4193 = vperm.xlu0 %4192, %v822
        %v4194 = vpop.permute.xlu0 %4193
        %4196 = vset.pattern.permute.xlu0 5
        %4197 = vperm.xlu0 %4196, %v823
        %v4198 = vpop.permute.xlu0 %4197
        %4200 = vset.pattern.permute.xlu0 5
        %4201 = vperm.xlu0 %4200, %v824
        %v4202 = vpop.permute.xlu0 %4201
        %4204 = vset.pattern.permute.xlu0 5
        %4205 = vperm.xlu0 %4204, %v825
        %v4206 = vpop.permute.xlu0 %4205
        %4208 = vset.pattern.permute.xlu0 5
        %4209 = vperm.xlu0 %4208, %v826
        %v4210 = vpop.permute.xlu0 %4209
        %4212 = vset.pattern.permute.xlu0 5
        %4213 = vperm.xlu0 %4212, %v827
        %v4214 = vpop.permute.xlu0 %4213
        %4216 = vset.pattern.permute.xlu0 5
        %4217 = vperm.xlu0 %4216, %v828
        %v4218 = vpop.permute.xlu0 %4217
        %4220 = vset.pattern.permute.xlu0 5
        %4221 = vperm.xlu0 %4220, %v829
        %v4222 = vpop.permute.xlu0 %4221
        %4224 = vset.pattern.permute.xlu0 5
        %4225 = vperm.xlu0 %4224, %v830
        %v4226 = vpop.permute.xlu0 %4225
        %4228 = vset.pattern.permute.xlu0 5
        %4229 = vperm.xlu0 %4228, %v831
        %v4230 = vpop.permute.xlu0 %4229
        %4232 = vset.pattern.permute.xlu0 5
        %4233 = vperm.xlu0 %4232, %v832
        %v4234 = vpop.permute.xlu0 %4233
        %4236 = vset.pattern.permute.xlu0 5
        %4237 = vperm.xlu0 %4236, %v833
        %v4238 = vpop.permute.xlu0 %4237
        %4240 = vset.pattern.permute.xlu0 5
        %4241 = vperm.xlu0 %4240, %v834
        %v4242 = vpop.permute.xlu0 %4241
        %4244 = vset.pattern.permute.xlu0 5
        %4245 = vperm.xlu0 %4244, %v835
        %v4246 = vpop.permute.xlu0 %4245
        %4248 = vset.pattern.permute.xlu0 5
        %4249 = vperm.xlu0 %4248, %v836
        %v4250 = vpop.permute.xlu0 %4249
        %4252 = vset.pattern.permute.xlu0 5
        %4253 = vperm.xlu0 %4252, %v837
        %v4254 = vpop.permute.xlu0 %4253
        %4256 = vset.pattern.permute.xlu0 5
        %4257 = vperm.xlu0 %4256, %v838
        %v4258 = vpop.permute.xlu0 %4257
        %4260 = vset.pattern.permute.xlu0 5
        %4261 = vperm.xlu0 %4260, %v839
        %v4262 = vpop.permute.xlu0 %4261
        %v4264 = vlaneseq
        %v4265 = vshrl.u32 %v4264, 7
        %v4266 = vsub.s32 5, %v4265
        %v4267 = vrot.slane %v650, %v4266
        %v4268 = vlaneseq
        %v4269 = vshrl.u32 %v4268, 7
        %v4270 = vsub.s32 5, %v4269
        %v4271 = vrot.slane %v654, %v4270
        %v4272 = vlaneseq
        %v4273 = vshrl.u32 %v4272, 7
        %v4274 = vsub.s32 5, %v4273
        %v4275 = vrot.slane %v660, %v4274
        %v4276 = vlaneseq
        %v4277 = vshrl.u32 %v4276, 7
        %v4278 = vsub.s32 5, %v4277
        %v4279 = vrot.slane %v664, %v4278
        %v4280 = vlaneseq
        %v4281 = vshrl.u32 %v4280, 7
        %v4282 = vsub.s32 5, %v4281
        %v4283 = vrot.slane %v670, %v4282
        %v4284 = vlaneseq
        %v4285 = vshrl.u32 %v4284, 7
        %v4286 = vsub.s32 5, %v4285
        %v4287 = vrot.slane %v674, %v4286
        %v4288 = vlaneseq
        %v4289 = vshrl.u32 %v4288, 7
        %v4290 = vsub.s32 5, %v4289
        %v4291 = vrot.slane %v680, %v4290
        %v4292 = vlaneseq
        %v4293 = vshrl.u32 %v4292, 7
        %v4294 = vsub.s32 5, %v4293
        %v4295 = vrot.slane %v684, %v4294
        %v4296 = vlaneseq
        %v4297 = vshrl.u32 %v4296, 7
        %v4298 = vsub.s32 5, %v4297
        %v4299 = vrot.slane %v690, %v4298
        %v4300 = vlaneseq
        %v4301 = vshrl.u32 %v4300, 7
        %v4302 = vsub.s32 5, %v4301
        %v4303 = vrot.slane %v694, %v4302
        %v4304 = vlaneseq
        %v4305 = vshrl.u32 %v4304, 7
        %v4306 = vsub.s32 5, %v4305
        %v4307 = vrot.slane %v700, %v4306
        %v4308 = vlaneseq
        %v4309 = vshrl.u32 %v4308, 7
        %v4310 = vsub.s32 5, %v4309
        %v4311 = vrot.slane %v704, %v4310
        %v4312 = vlaneseq
        %v4313 = vshrl.u32 %v4312, 7
        %v4314 = vsub.s32 5, %v4313
        %v4315 = vrot.slane %v710, %v4314
        %v4316 = vlaneseq
        %v4317 = vshrl.u32 %v4316, 7
        %v4318 = vsub.s32 5, %v4317
        %v4319 = vrot.slane %v714, %v4318
        %v4320 = vlaneseq
        %v4321 = vshrl.u32 %v4320, 7
        %v4322 = vsub.s32 5, %v4321
        %v4323 = vrot.slane %v720, %v4322
        %v4324 = vlaneseq
        %v4325 = vshrl.u32 %v4324, 7
        %v4326 = vsub.s32 5, %v4325
        %v4327 = vrot.slane %v724, %v4326
        %v4328 = vlaneseq
        %v4329 = vshrl.u32 %v4328, 7
        %v4330 = vsub.s32 5, %v4329
        %v4331 = vrot.slane %v730, %v4330
        %v4332 = vlaneseq
        %v4333 = vshrl.u32 %v4332, 7
        %v4334 = vsub.s32 5, %v4333
        %v4335 = vrot.slane %v734, %v4334
        %v4336 = vlaneseq
        %v4337 = vshrl.u32 %v4336, 7
        %v4338 = vsub.s32 5, %v4337
        %v4339 = vrot.slane %v740, %v4338
        %v4340 = vlaneseq
        %v4341 = vshrl.u32 %v4340, 7
        %v4342 = vsub.s32 5, %v4341
        %v4343 = vrot.slane %v744, %v4342
        %v4344 = vlaneseq
        %v4345 = vshrl.u32 %v4344, 7
        %v4346 = vsub.s32 5, %v4345
        %v4347 = vrot.slane %v750, %v4346
        %v4348 = vlaneseq
        %v4349 = vshrl.u32 %v4348, 7
        %v4350 = vsub.s32 5, %v4349
        %v4351 = vrot.slane %v754, %v4350
        %v4352 = vlaneseq
        %v4353 = vshrl.u32 %v4352, 7
        %v4354 = vsub.s32 5, %v4353
        %v4355 = vrot.slane %v760, %v4354
        %v4356 = vlaneseq
        %v4357 = vshrl.u32 %v4356, 7
        %v4358 = vsub.s32 5, %v4357
        %v4359 = vrot.slane %v764, %v4358
        %v4360 = vlaneseq
        %v4361 = vshrl.u32 %v4360, 7
        %v4362 = vsub.s32 5, %v4361
        %v4363 = vrot.slane %v770, %v4362
        %v4364 = vlaneseq
        %v4365 = vshrl.u32 %v4364, 7
        %v4366 = vsub.s32 5, %v4365
        %v4367 = vrot.slane %v774, %v4366
        %v4368 = vlaneseq
        %v4369 = vshrl.u32 %v4368, 7
        %v4370 = vsub.s32 5, %v4369
        %v4371 = vrot.slane %v780, %v4370
        %v4372 = vlaneseq
        %v4373 = vshrl.u32 %v4372, 7
        %v4374 = vsub.s32 5, %v4373
        %v4375 = vrot.slane %v784, %v4374
        %v4376 = vlaneseq
        %v4377 = vshrl.u32 %v4376, 7
        %v4378 = vsub.s32 5, %v4377
        %v4379 = vrot.slane %v790, %v4378
        %v4380 = vlaneseq
        %v4381 = vshrl.u32 %v4380, 7
        %v4382 = vsub.s32 5, %v4381
        %v4383 = vrot.slane %v794, %v4382
        %v4384 = vlaneseq
        %v4385 = vshrl.u32 %v4384, 7
        %v4386 = vsub.s32 5, %v4385
        %v4387 = vrot.slane %v800, %v4386
        %v4388 = vlaneseq
        %v4389 = vshrl.u32 %v4388, 7
        %v4390 = vsub.s32 5, %v4389
        %v4391 = vrot.slane %v804, %v4390
        %v4392 = vmul.f32 %v4138, %v4267
        %v4393 = vmul.f32 %v4142, %v4271
        %v4394 = vmul.f32 %v4146, %v4275
        %v4395 = vmul.f32 %v4150, %v4279
        %v4396 = vmul.f32 %v4154, %v4283
        %v4397 = vmul.f32 %v4158, %v4287
        %v4398 = vmul.f32 %v4162, %v4291
        %v4399 = vmul.f32 %v4166, %v4295
        %v4400 = vmul.f32 %v4170, %v4299
        %v4401 = vmul.f32 %v4174, %v4303
        %v4402 = vmul.f32 %v4178, %v4307
        %v4403 = vmul.f32 %v4182, %v4311
        %v4404 = vmul.f32 %v4186, %v4315
        %v4405 = vmul.f32 %v4190, %v4319
        %v4406 = vmul.f32 %v4194, %v4323
        %v4407 = vmul.f32 %v4198, %v4327
        %v4408 = vmul.f32 %v4202, %v4331
        %v4409 = vmul.f32 %v4206, %v4335
        %v4410 = vmul.f32 %v4210, %v4339
        %v4411 = vmul.f32 %v4214, %v4343
        %v4412 = vmul.f32 %v4218, %v4347
        %v4413 = vmul.f32 %v4222, %v4351
        %v4414 = vmul.f32 %v4226, %v4355
        %v4415 = vmul.f32 %v4230, %v4359
        %v4416 = vmul.f32 %v4234, %v4363
        %v4417 = vmul.f32 %v4238, %v4367
        %v4418 = vmul.f32 %v4242, %v4371
        %v4419 = vmul.f32 %v4246, %v4375
        %v4420 = vmul.f32 %v4250, %v4379
        %v4421 = vmul.f32 %v4254, %v4383
        %v4422 = vmul.f32 %v4258, %v4387
        %v4423 = vmul.f32 %v4262, %v4391
        %v4424 = vadd.f32 %v3784, %v4392
        %v4425 = vadd.f32 %v3785, %v4393
        %v4426 = vadd.f32 %v3786, %v4394
        %v4427 = vadd.f32 %v3787, %v4395
        %v4428 = vadd.f32 %v3788, %v4396
        %v4429 = vadd.f32 %v3789, %v4397
        %v4430 = vadd.f32 %v3790, %v4398
        %v4431 = vadd.f32 %v3791, %v4399
        %v4432 = vadd.f32 %v3792, %v4400
        %v4433 = vadd.f32 %v3793, %v4401
        %v4434 = vadd.f32 %v3794, %v4402
        %v4435 = vadd.f32 %v3795, %v4403
        %v4436 = vadd.f32 %v3796, %v4404
        %v4437 = vadd.f32 %v3797, %v4405
        %v4438 = vadd.f32 %v3798, %v4406
        %v4439 = vadd.f32 %v3799, %v4407
        %v4440 = vadd.f32 %v3800, %v4408
        %v4441 = vadd.f32 %v3801, %v4409
        %v4442 = vadd.f32 %v3802, %v4410
        %v4443 = vadd.f32 %v3803, %v4411
        %v4444 = vadd.f32 %v3804, %v4412
        %v4445 = vadd.f32 %v3805, %v4413
        %v4446 = vadd.f32 %v3806, %v4414
        %v4447 = vadd.f32 %v3807, %v4415
        %v4448 = vadd.f32 %v3808, %v4416
        %v4449 = vadd.f32 %v3809, %v4417
        %v4450 = vadd.f32 %v3810, %v4418
        %v4451 = vadd.f32 %v3811, %v4419
        %v4452 = vadd.f32 %v3812, %v4420
        %v4453 = vadd.f32 %v3813, %v4421
        %v4454 = vadd.f32 %v3814, %v4422
        %v4455 = vadd.f32 %v3815, %v4423
        %4456 = vset.pattern.permute.xlu0 5
        %4457 = vperm.xlu0 %4456, %v840
        %v4458 = vpop.permute.xlu0 %4457
        %4460 = vset.pattern.permute.xlu0 5
        %4461 = vperm.xlu0 %4460, %v841
        %v4462 = vpop.permute.xlu0 %4461
        %4464 = vset.pattern.permute.xlu0 5
        %4465 = vperm.xlu0 %4464, %v842
        %v4466 = vpop.permute.xlu0 %4465
        %4468 = vset.pattern.permute.xlu0 5
        %4469 = vperm.xlu0 %4468, %v843
        %v4470 = vpop.permute.xlu0 %4469
        %4472 = vset.pattern.permute.xlu0 5
        %4473 = vperm.xlu0 %4472, %v844
        %v4474 = vpop.permute.xlu0 %4473
        %4476 = vset.pattern.permute.xlu0 5
        %4477 = vperm.xlu0 %4476, %v845
        %v4478 = vpop.permute.xlu0 %4477
        %4480 = vset.pattern.permute.xlu0 5
        %4481 = vperm.xlu0 %4480, %v846
        %v4482 = vpop.permute.xlu0 %4481
        %4484 = vset.pattern.permute.xlu0 5
        %4485 = vperm.xlu0 %4484, %v847
        %v4486 = vpop.permute.xlu0 %4485
        %4488 = vset.pattern.permute.xlu0 5
        %4489 = vperm.xlu0 %4488, %v848
        %v4490 = vpop.permute.xlu0 %4489
        %4492 = vset.pattern.permute.xlu0 5
        %4493 = vperm.xlu0 %4492, %v849
        %v4494 = vpop.permute.xlu0 %4493
        %4496 = vset.pattern.permute.xlu0 5
        %4497 = vperm.xlu0 %4496, %v850
        %v4498 = vpop.permute.xlu0 %4497
        %4500 = vset.pattern.permute.xlu0 5
        %4501 = vperm.xlu0 %4500, %v851
        %v4502 = vpop.permute.xlu0 %4501
        %4504 = vset.pattern.permute.xlu0 5
        %4505 = vperm.xlu0 %4504, %v852
        %v4506 = vpop.permute.xlu0 %4505
        %4508 = vset.pattern.permute.xlu0 5
        %4509 = vperm.xlu0 %4508, %v853
        %v4510 = vpop.permute.xlu0 %4509
        %4512 = vset.pattern.permute.xlu0 5
        %4513 = vperm.xlu0 %4512, %v854
        %v4514 = vpop.permute.xlu0 %4513
        %4516 = vset.pattern.permute.xlu0 5
        %4517 = vperm.xlu0 %4516, %v855
        %v4518 = vpop.permute.xlu0 %4517
        %4520 = vset.pattern.permute.xlu0 5
        %4521 = vperm.xlu0 %4520, %v856
        %v4522 = vpop.permute.xlu0 %4521
        %4524 = vset.pattern.permute.xlu0 5
        %4525 = vperm.xlu0 %4524, %v857
        %v4526 = vpop.permute.xlu0 %4525
        %4528 = vset.pattern.permute.xlu0 5
        %4529 = vperm.xlu0 %4528, %v858
        %v4530 = vpop.permute.xlu0 %4529
        %4532 = vset.pattern.permute.xlu0 5
        %4533 = vperm.xlu0 %4532, %v859
        %v4534 = vpop.permute.xlu0 %4533
        %4536 = vset.pattern.permute.xlu0 5
        %4537 = vperm.xlu0 %4536, %v860
        %v4538 = vpop.permute.xlu0 %4537
        %4540 = vset.pattern.permute.xlu0 5
        %4541 = vperm.xlu0 %4540, %v861
        %v4542 = vpop.permute.xlu0 %4541
        %4544 = vset.pattern.permute.xlu0 5
        %4545 = vperm.xlu0 %4544, %v862
        %v4546 = vpop.permute.xlu0 %4545
        %4548 = vset.pattern.permute.xlu0 5
        %4549 = vperm.xlu0 %4548, %v863
        %v4550 = vpop.permute.xlu0 %4549
        %4552 = vset.pattern.permute.xlu0 5
        %4553 = vperm.xlu0 %4552, %v864
        %v4554 = vpop.permute.xlu0 %4553
        %4556 = vset.pattern.permute.xlu0 5
        %4557 = vperm.xlu0 %4556, %v865
        %v4558 = vpop.permute.xlu0 %4557
        %4560 = vset.pattern.permute.xlu0 5
        %4561 = vperm.xlu0 %4560, %v866
        %v4562 = vpop.permute.xlu0 %4561
        %4564 = vset.pattern.permute.xlu0 5
        %4565 = vperm.xlu0 %4564, %v867
        %v4566 = vpop.permute.xlu0 %4565
        %4568 = vset.pattern.permute.xlu0 5
        %4569 = vperm.xlu0 %4568, %v868
        %v4570 = vpop.permute.xlu0 %4569
        %4572 = vset.pattern.permute.xlu0 5
        %4573 = vperm.xlu0 %4572, %v869
        %v4574 = vpop.permute.xlu0 %4573
        %4576 = vset.pattern.permute.xlu0 5
        %4577 = vperm.xlu0 %4576, %v870
        %v4578 = vpop.permute.xlu0 %4577
        %4580 = vset.pattern.permute.xlu0 5
        %4581 = vperm.xlu0 %4580, %v871
        %v4582 = vpop.permute.xlu0 %4581
        %v4584 = vlaneseq
        %v4585 = vshrl.u32 %v4584, 7
        %v4586 = vsub.s32 5, %v4585
        %v4587 = vrot.slane %v652, %v4586
        %v4588 = vlaneseq
        %v4589 = vshrl.u32 %v4588, 7
        %v4590 = vsub.s32 5, %v4589
        %v4591 = vrot.slane %v656, %v4590
        %v4592 = vlaneseq
        %v4593 = vshrl.u32 %v4592, 7
        %v4594 = vsub.s32 5, %v4593
        %v4595 = vrot.slane %v662, %v4594
        %v4596 = vlaneseq
        %v4597 = vshrl.u32 %v4596, 7
        %v4598 = vsub.s32 5, %v4597
        %v4599 = vrot.slane %v666, %v4598
        %v4600 = vlaneseq
        %v4601 = vshrl.u32 %v4600, 7
        %v4602 = vsub.s32 5, %v4601
        %v4603 = vrot.slane %v672, %v4602
        %v4604 = vlaneseq
        %v4605 = vshrl.u32 %v4604, 7
        %v4606 = vsub.s32 5, %v4605
        %v4607 = vrot.slane %v676, %v4606
        %v4608 = vlaneseq
        %v4609 = vshrl.u32 %v4608, 7
        %v4610 = vsub.s32 5, %v4609
        %v4611 = vrot.slane %v682, %v4610
        %v4612 = vlaneseq
        %v4613 = vshrl.u32 %v4612, 7
        %v4614 = vsub.s32 5, %v4613
        %v4615 = vrot.slane %v686, %v4614
        %v4616 = vlaneseq
        %v4617 = vshrl.u32 %v4616, 7
        %v4618 = vsub.s32 5, %v4617
        %v4619 = vrot.slane %v692, %v4618
        %v4620 = vlaneseq
        %v4621 = vshrl.u32 %v4620, 7
        %v4622 = vsub.s32 5, %v4621
        %v4623 = vrot.slane %v696, %v4622
        %v4624 = vlaneseq
        %v4625 = vshrl.u32 %v4624, 7
        %v4626 = vsub.s32 5, %v4625
        %v4627 = vrot.slane %v702, %v4626
        %v4628 = vlaneseq
        %v4629 = vshrl.u32 %v4628, 7
        %v4630 = vsub.s32 5, %v4629
        %v4631 = vrot.slane %v706, %v4630
        %v4632 = vlaneseq
        %v4633 = vshrl.u32 %v4632, 7
        %v4634 = vsub.s32 5, %v4633
        %v4635 = vrot.slane %v712, %v4634
        %v4636 = vlaneseq
        %v4637 = vshrl.u32 %v4636, 7
        %v4638 = vsub.s32 5, %v4637
        %v4639 = vrot.slane %v716, %v4638
        %v4640 = vlaneseq
        %v4641 = vshrl.u32 %v4640, 7
        %v4642 = vsub.s32 5, %v4641
        %v4643 = vrot.slane %v722, %v4642
        %v4644 = vlaneseq
        %v4645 = vshrl.u32 %v4644, 7
        %v4646 = vsub.s32 5, %v4645
        %v4647 = vrot.slane %v726, %v4646
        %v4648 = vlaneseq
        %v4649 = vshrl.u32 %v4648, 7
        %v4650 = vsub.s32 5, %v4649
        %v4651 = vrot.slane %v732, %v4650
        %v4652 = vlaneseq
        %v4653 = vshrl.u32 %v4652, 7
        %v4654 = vsub.s32 5, %v4653
        %v4655 = vrot.slane %v736, %v4654
        %v4656 = vlaneseq
        %v4657 = vshrl.u32 %v4656, 7
        %v4658 = vsub.s32 5, %v4657
        %v4659 = vrot.slane %v742, %v4658
        %v4660 = vlaneseq
        %v4661 = vshrl.u32 %v4660, 7
        %v4662 = vsub.s32 5, %v4661
        %v4663 = vrot.slane %v746, %v4662
        %v4664 = vlaneseq
        %v4665 = vshrl.u32 %v4664, 7
        %v4666 = vsub.s32 5, %v4665
        %v4667 = vrot.slane %v752, %v4666
        %v4668 = vlaneseq
        %v4669 = vshrl.u32 %v4668, 7
        %v4670 = vsub.s32 5, %v4669
        %v4671 = vrot.slane %v756, %v4670
        %v4672 = vlaneseq
        %v4673 = vshrl.u32 %v4672, 7
        %v4674 = vsub.s32 5, %v4673
        %v4675 = vrot.slane %v762, %v4674
        %v4676 = vlaneseq
        %v4677 = vshrl.u32 %v4676, 7
        %v4678 = vsub.s32 5, %v4677
        %v4679 = vrot.slane %v766, %v4678
        %v4680 = vlaneseq
        %v4681 = vshrl.u32 %v4680, 7
        %v4682 = vsub.s32 5, %v4681
        %v4683 = vrot.slane %v772, %v4682
        %v4684 = vlaneseq
        %v4685 = vshrl.u32 %v4684, 7
        %v4686 = vsub.s32 5, %v4685
        %v4687 = vrot.slane %v776, %v4686
        %v4688 = vlaneseq
        %v4689 = vshrl.u32 %v4688, 7
        %v4690 = vsub.s32 5, %v4689
        %v4691 = vrot.slane %v782, %v4690
        %v4692 = vlaneseq
        %v4693 = vshrl.u32 %v4692, 7
        %v4694 = vsub.s32 5, %v4693
        %v4695 = vrot.slane %v786, %v4694
        %v4696 = vlaneseq
        %v4697 = vshrl.u32 %v4696, 7
        %v4698 = vsub.s32 5, %v4697
        %v4699 = vrot.slane %v792, %v4698
        %v4700 = vlaneseq
        %v4701 = vshrl.u32 %v4700, 7
        %v4702 = vsub.s32 5, %v4701
        %v4703 = vrot.slane %v796, %v4702
        %v4704 = vlaneseq
        %v4705 = vshrl.u32 %v4704, 7
        %v4706 = vsub.s32 5, %v4705
        %v4707 = vrot.slane %v802, %v4706
        %v4708 = vlaneseq
        %v4709 = vshrl.u32 %v4708, 7
        %v4710 = vsub.s32 5, %v4709
        %v4711 = vrot.slane %v806, %v4710
        %v4712 = vmul.f32 %v4458, %v4587
        %v4713 = vmul.f32 %v4462, %v4591
        %v4714 = vmul.f32 %v4466, %v4595
        %v4715 = vmul.f32 %v4470, %v4599
        %v4716 = vmul.f32 %v4474, %v4603
        %v4717 = vmul.f32 %v4478, %v4607
        %v4718 = vmul.f32 %v4482, %v4611
        %v4719 = vmul.f32 %v4486, %v4615
        %v4720 = vmul.f32 %v4490, %v4619
        %v4721 = vmul.f32 %v4494, %v4623
        %v4722 = vmul.f32 %v4498, %v4627
        %v4723 = vmul.f32 %v4502, %v4631
        %v4724 = vmul.f32 %v4506, %v4635
        %v4725 = vmul.f32 %v4510, %v4639
        %v4726 = vmul.f32 %v4514, %v4643
        %v4727 = vmul.f32 %v4518, %v4647
        %v4728 = vmul.f32 %v4522, %v4651
        %v4729 = vmul.f32 %v4526, %v4655
        %v4730 = vmul.f32 %v4530, %v4659
        %v4731 = vmul.f32 %v4534, %v4663
        %v4732 = vmul.f32 %v4538, %v4667
        %v4733 = vmul.f32 %v4542, %v4671
        %v4734 = vmul.f32 %v4546, %v4675
        %v4735 = vmul.f32 %v4550, %v4679
        %v4736 = vmul.f32 %v4554, %v4683
        %v4737 = vmul.f32 %v4558, %v4687
        %v4738 = vmul.f32 %v4562, %v4691
        %v4739 = vmul.f32 %v4566, %v4695
        %v4740 = vmul.f32 %v4570, %v4699
        %v4741 = vmul.f32 %v4574, %v4703
        %v4742 = vmul.f32 %v4578, %v4707
        %v4743 = vmul.f32 %v4582, %v4711
        %v4744 = vadd.f32 %v4104, %v4712
        %v4745 = vadd.f32 %v4105, %v4713
        %v4746 = vadd.f32 %v4106, %v4714
        %v4747 = vadd.f32 %v4107, %v4715
        %v4748 = vadd.f32 %v4108, %v4716
        %v4749 = vadd.f32 %v4109, %v4717
        %v4750 = vadd.f32 %v4110, %v4718
        %v4751 = vadd.f32 %v4111, %v4719
        %v4752 = vadd.f32 %v4112, %v4720
        %v4753 = vadd.f32 %v4113, %v4721
        %v4754 = vadd.f32 %v4114, %v4722
        %v4755 = vadd.f32 %v4115, %v4723
        %v4756 = vadd.f32 %v4116, %v4724
        %v4757 = vadd.f32 %v4117, %v4725
        %v4758 = vadd.f32 %v4118, %v4726
        %v4759 = vadd.f32 %v4119, %v4727
        %v4760 = vadd.f32 %v4120, %v4728
        %v4761 = vadd.f32 %v4121, %v4729
        %v4762 = vadd.f32 %v4122, %v4730
        %v4763 = vadd.f32 %v4123, %v4731
        %v4764 = vadd.f32 %v4124, %v4732
        %v4765 = vadd.f32 %v4125, %v4733
        %v4766 = vadd.f32 %v4126, %v4734
        %v4767 = vadd.f32 %v4127, %v4735
        %v4768 = vadd.f32 %v4128, %v4736
        %v4769 = vadd.f32 %v4129, %v4737
        %v4770 = vadd.f32 %v4130, %v4738
        %v4771 = vadd.f32 %v4131, %v4739
        %v4772 = vadd.f32 %v4132, %v4740
        %v4773 = vadd.f32 %v4133, %v4741
        %v4774 = vadd.f32 %v4134, %v4742
        %v4775 = vadd.f32 %v4135, %v4743
        %4776 = vset.pattern.permute.xlu0 6
        %4777 = vperm.xlu0 %4776, %v808
        %v4778 = vpop.permute.xlu0 %4777
        %4780 = vset.pattern.permute.xlu0 6
        %4781 = vperm.xlu0 %4780, %v809
        %v4782 = vpop.permute.xlu0 %4781
        %4784 = vset.pattern.permute.xlu0 6
        %4785 = vperm.xlu0 %4784, %v810
        %v4786 = vpop.permute.xlu0 %4785
        %4788 = vset.pattern.permute.xlu0 6
        %4789 = vperm.xlu0 %4788, %v811
        %v4790 = vpop.permute.xlu0 %4789
        %4792 = vset.pattern.permute.xlu0 6
        %4793 = vperm.xlu0 %4792, %v812
        %v4794 = vpop.permute.xlu0 %4793
        %4796 = vset.pattern.permute.xlu0 6
        %4797 = vperm.xlu0 %4796, %v813
        %v4798 = vpop.permute.xlu0 %4797
        %4800 = vset.pattern.permute.xlu0 6
        %4801 = vperm.xlu0 %4800, %v814
        %v4802 = vpop.permute.xlu0 %4801
        %4804 = vset.pattern.permute.xlu0 6
        %4805 = vperm.xlu0 %4804, %v815
        %v4806 = vpop.permute.xlu0 %4805
        %4808 = vset.pattern.permute.xlu0 6
        %4809 = vperm.xlu0 %4808, %v816
        %v4810 = vpop.permute.xlu0 %4809
        %4812 = vset.pattern.permute.xlu0 6
        %4813 = vperm.xlu0 %4812, %v817
        %v4814 = vpop.permute.xlu0 %4813
        %4816 = vset.pattern.permute.xlu0 6
        %4817 = vperm.xlu0 %4816, %v818
        %v4818 = vpop.permute.xlu0 %4817
        %4820 = vset.pattern.permute.xlu0 6
        %4821 = vperm.xlu0 %4820, %v819
        %v4822 = vpop.permute.xlu0 %4821
        %4824 = vset.pattern.permute.xlu0 6
        %4825 = vperm.xlu0 %4824, %v820
        %v4826 = vpop.permute.xlu0 %4825
        %4828 = vset.pattern.permute.xlu0 6
        %4829 = vperm.xlu0 %4828, %v821
        %v4830 = vpop.permute.xlu0 %4829
        %4832 = vset.pattern.permute.xlu0 6
        %4833 = vperm.xlu0 %4832, %v822
        %v4834 = vpop.permute.xlu0 %4833
        %4836 = vset.pattern.permute.xlu0 6
        %4837 = vperm.xlu0 %4836, %v823
        %v4838 = vpop.permute.xlu0 %4837
        %4840 = vset.pattern.permute.xlu0 6
        %4841 = vperm.xlu0 %4840, %v824
        %v4842 = vpop.permute.xlu0 %4841
        %4844 = vset.pattern.permute.xlu0 6
        %4845 = vperm.xlu0 %4844, %v825
        %v4846 = vpop.permute.xlu0 %4845
        %4848 = vset.pattern.permute.xlu0 6
        %4849 = vperm.xlu0 %4848, %v826
        %v4850 = vpop.permute.xlu0 %4849
        %4852 = vset.pattern.permute.xlu0 6
        %4853 = vperm.xlu0 %4852, %v827
        %v4854 = vpop.permute.xlu0 %4853
        %4856 = vset.pattern.permute.xlu0 6
        %4857 = vperm.xlu0 %4856, %v828
        %v4858 = vpop.permute.xlu0 %4857
        %4860 = vset.pattern.permute.xlu0 6
        %4861 = vperm.xlu0 %4860, %v829
        %v4862 = vpop.permute.xlu0 %4861
        %4864 = vset.pattern.permute.xlu0 6
        %4865 = vperm.xlu0 %4864, %v830
        %v4866 = vpop.permute.xlu0 %4865
        %4868 = vset.pattern.permute.xlu0 6
        %4869 = vperm.xlu0 %4868, %v831
        %v4870 = vpop.permute.xlu0 %4869
        %4872 = vset.pattern.permute.xlu0 6
        %4873 = vperm.xlu0 %4872, %v832
        %v4874 = vpop.permute.xlu0 %4873
        %4876 = vset.pattern.permute.xlu0 6
        %4877 = vperm.xlu0 %4876, %v833
        %v4878 = vpop.permute.xlu0 %4877
        %4880 = vset.pattern.permute.xlu0 6
        %4881 = vperm.xlu0 %4880, %v834
        %v4882 = vpop.permute.xlu0 %4881
        %4884 = vset.pattern.permute.xlu0 6
        %4885 = vperm.xlu0 %4884, %v835
        %v4886 = vpop.permute.xlu0 %4885
        %4888 = vset.pattern.permute.xlu0 6
        %4889 = vperm.xlu0 %4888, %v836
        %v4890 = vpop.permute.xlu0 %4889
        %4892 = vset.pattern.permute.xlu0 6
        %4893 = vperm.xlu0 %4892, %v837
        %v4894 = vpop.permute.xlu0 %4893
        %4896 = vset.pattern.permute.xlu0 6
        %4897 = vperm.xlu0 %4896, %v838
        %v4898 = vpop.permute.xlu0 %4897
        %4900 = vset.pattern.permute.xlu0 6
        %4901 = vperm.xlu0 %4900, %v839
        %v4902 = vpop.permute.xlu0 %4901
        %v4904 = vlaneseq
        %v4905 = vshrl.u32 %v4904, 7
        %v4906 = vsub.s32 6, %v4905
        %v4907 = vrot.slane %v650, %v4906
        %v4908 = vlaneseq
        %v4909 = vshrl.u32 %v4908, 7
        %v4910 = vsub.s32 6, %v4909
        %v4911 = vrot.slane %v654, %v4910
        %v4912 = vlaneseq
        %v4913 = vshrl.u32 %v4912, 7
        %v4914 = vsub.s32 6, %v4913
        %v4915 = vrot.slane %v660, %v4914
        %v4916 = vlaneseq
        %v4917 = vshrl.u32 %v4916, 7
        %v4918 = vsub.s32 6, %v4917
        %v4919 = vrot.slane %v664, %v4918
        %v4920 = vlaneseq
        %v4921 = vshrl.u32 %v4920, 7
        %v4922 = vsub.s32 6, %v4921
        %v4923 = vrot.slane %v670, %v4922
        %v4924 = vlaneseq
        %v4925 = vshrl.u32 %v4924, 7
        %v4926 = vsub.s32 6, %v4925
        %v4927 = vrot.slane %v674, %v4926
        %v4928 = vlaneseq
        %v4929 = vshrl.u32 %v4928, 7
        %v4930 = vsub.s32 6, %v4929
        %v4931 = vrot.slane %v680, %v4930
        %v4932 = vlaneseq
        %v4933 = vshrl.u32 %v4932, 7
        %v4934 = vsub.s32 6, %v4933
        %v4935 = vrot.slane %v684, %v4934
        %v4936 = vlaneseq
        %v4937 = vshrl.u32 %v4936, 7
        %v4938 = vsub.s32 6, %v4937
        %v4939 = vrot.slane %v690, %v4938
        %v4940 = vlaneseq
        %v4941 = vshrl.u32 %v4940, 7
        %v4942 = vsub.s32 6, %v4941
        %v4943 = vrot.slane %v694, %v4942
        %v4944 = vlaneseq
        %v4945 = vshrl.u32 %v4944, 7
        %v4946 = vsub.s32 6, %v4945
        %v4947 = vrot.slane %v700, %v4946
        %v4948 = vlaneseq
        %v4949 = vshrl.u32 %v4948, 7
        %v4950 = vsub.s32 6, %v4949
        %v4951 = vrot.slane %v704, %v4950
        %v4952 = vlaneseq
        %v4953 = vshrl.u32 %v4952, 7
        %v4954 = vsub.s32 6, %v4953
        %v4955 = vrot.slane %v710, %v4954
        %v4956 = vlaneseq
        %v4957 = vshrl.u32 %v4956, 7
        %v4958 = vsub.s32 6, %v4957
        %v4959 = vrot.slane %v714, %v4958
        %v4960 = vlaneseq
        %v4961 = vshrl.u32 %v4960, 7
        %v4962 = vsub.s32 6, %v4961
        %v4963 = vrot.slane %v720, %v4962
        %v4964 = vlaneseq
        %v4965 = vshrl.u32 %v4964, 7
        %v4966 = vsub.s32 6, %v4965
        %v4967 = vrot.slane %v724, %v4966
        %v4968 = vlaneseq
        %v4969 = vshrl.u32 %v4968, 7
        %v4970 = vsub.s32 6, %v4969
        %v4971 = vrot.slane %v730, %v4970
        %v4972 = vlaneseq
        %v4973 = vshrl.u32 %v4972, 7
        %v4974 = vsub.s32 6, %v4973
        %v4975 = vrot.slane %v734, %v4974
        %v4976 = vlaneseq
        %v4977 = vshrl.u32 %v4976, 7
        %v4978 = vsub.s32 6, %v4977
        %v4979 = vrot.slane %v740, %v4978
        %v4980 = vlaneseq
        %v4981 = vshrl.u32 %v4980, 7
        %v4982 = vsub.s32 6, %v4981
        %v4983 = vrot.slane %v744, %v4982
        %v4984 = vlaneseq
        %v4985 = vshrl.u32 %v4984, 7
        %v4986 = vsub.s32 6, %v4985
        %v4987 = vrot.slane %v750, %v4986
        %v4988 = vlaneseq
        %v4989 = vshrl.u32 %v4988, 7
        %v4990 = vsub.s32 6, %v4989
        %v4991 = vrot.slane %v754, %v4990
        %v4992 = vlaneseq
        %v4993 = vshrl.u32 %v4992, 7
        %v4994 = vsub.s32 6, %v4993
        %v4995 = vrot.slane %v760, %v4994
        %v4996 = vlaneseq
        %v4997 = vshrl.u32 %v4996, 7
        %v4998 = vsub.s32 6, %v4997
        %v4999 = vrot.slane %v764, %v4998
        %v5000 = vlaneseq
        %v5001 = vshrl.u32 %v5000, 7
        %v5002 = vsub.s32 6, %v5001
        %v5003 = vrot.slane %v770, %v5002
        %v5004 = vlaneseq
        %v5005 = vshrl.u32 %v5004, 7
        %v5006 = vsub.s32 6, %v5005
        %v5007 = vrot.slane %v774, %v5006
        %v5008 = vlaneseq
        %v5009 = vshrl.u32 %v5008, 7
        %v5010 = vsub.s32 6, %v5009
        %v5011 = vrot.slane %v780, %v5010
        %v5012 = vlaneseq
        %v5013 = vshrl.u32 %v5012, 7
        %v5014 = vsub.s32 6, %v5013
        %v5015 = vrot.slane %v784, %v5014
        %v5016 = vlaneseq
        %v5017 = vshrl.u32 %v5016, 7
        %v5018 = vsub.s32 6, %v5017
        %v5019 = vrot.slane %v790, %v5018
        %v5020 = vlaneseq
        %v5021 = vshrl.u32 %v5020, 7
        %v5022 = vsub.s32 6, %v5021
        %v5023 = vrot.slane %v794, %v5022
        %v5024 = vlaneseq
        %v5025 = vshrl.u32 %v5024, 7
        %v5026 = vsub.s32 6, %v5025
        %v5027 = vrot.slane %v800, %v5026
        %v5028 = vlaneseq
        %v5029 = vshrl.u32 %v5028, 7
        %v5030 = vsub.s32 6, %v5029
        %v5031 = vrot.slane %v804, %v5030
        %v5032 = vmul.f32 %v4778, %v4907
        %v5033 = vmul.f32 %v4782, %v4911
        %v5034 = vmul.f32 %v4786, %v4915
        %v5035 = vmul.f32 %v4790, %v4919
        %v5036 = vmul.f32 %v4794, %v4923
        %v5037 = vmul.f32 %v4798, %v4927
        %v5038 = vmul.f32 %v4802, %v4931
        %v5039 = vmul.f32 %v4806, %v4935
        %v5040 = vmul.f32 %v4810, %v4939
        %v5041 = vmul.f32 %v4814, %v4943
        %v5042 = vmul.f32 %v4818, %v4947
        %v5043 = vmul.f32 %v4822, %v4951
        %v5044 = vmul.f32 %v4826, %v4955
        %v5045 = vmul.f32 %v4830, %v4959
        %v5046 = vmul.f32 %v4834, %v4963
        %v5047 = vmul.f32 %v4838, %v4967
        %v5048 = vmul.f32 %v4842, %v4971
        %v5049 = vmul.f32 %v4846, %v4975
        %v5050 = vmul.f32 %v4850, %v4979
        %v5051 = vmul.f32 %v4854, %v4983
        %v5052 = vmul.f32 %v4858, %v4987
        %v5053 = vmul.f32 %v4862, %v4991
        %v5054 = vmul.f32 %v4866, %v4995
        %v5055 = vmul.f32 %v4870, %v4999
        %v5056 = vmul.f32 %v4874, %v5003
        %v5057 = vmul.f32 %v4878, %v5007
        %v5058 = vmul.f32 %v4882, %v5011
        %v5059 = vmul.f32 %v4886, %v5015
        %v5060 = vmul.f32 %v4890, %v5019
        %v5061 = vmul.f32 %v4894, %v5023
        %v5062 = vmul.f32 %v4898, %v5027
        %v5063 = vmul.f32 %v4902, %v5031
        %v5064 = vadd.f32 %v4424, %v5032
        %v5065 = vadd.f32 %v4425, %v5033
        %v5066 = vadd.f32 %v4426, %v5034
        %v5067 = vadd.f32 %v4427, %v5035
        %v5068 = vadd.f32 %v4428, %v5036
        %v5069 = vadd.f32 %v4429, %v5037
        %v5070 = vadd.f32 %v4430, %v5038
        %v5071 = vadd.f32 %v4431, %v5039
        %v5072 = vadd.f32 %v4432, %v5040
        %v5073 = vadd.f32 %v4433, %v5041
        %v5074 = vadd.f32 %v4434, %v5042
        %v5075 = vadd.f32 %v4435, %v5043
        %v5076 = vadd.f32 %v4436, %v5044
        %v5077 = vadd.f32 %v4437, %v5045
        %v5078 = vadd.f32 %v4438, %v5046
        %v5079 = vadd.f32 %v4439, %v5047
        %v5080 = vadd.f32 %v4440, %v5048
        %v5081 = vadd.f32 %v4441, %v5049
        %v5082 = vadd.f32 %v4442, %v5050
        %v5083 = vadd.f32 %v4443, %v5051
        %v5084 = vadd.f32 %v4444, %v5052
        %v5085 = vadd.f32 %v4445, %v5053
        %v5086 = vadd.f32 %v4446, %v5054
        %v5087 = vadd.f32 %v4447, %v5055
        %v5088 = vadd.f32 %v4448, %v5056
        %v5089 = vadd.f32 %v4449, %v5057
        %v5090 = vadd.f32 %v4450, %v5058
        %v5091 = vadd.f32 %v4451, %v5059
        %v5092 = vadd.f32 %v4452, %v5060
        %v5093 = vadd.f32 %v4453, %v5061
        %v5094 = vadd.f32 %v4454, %v5062
        %v5095 = vadd.f32 %v4455, %v5063
        %5096 = vset.pattern.permute.xlu0 6
        %5097 = vperm.xlu0 %5096, %v840
        %v5098 = vpop.permute.xlu0 %5097
        %5100 = vset.pattern.permute.xlu0 6
        %5101 = vperm.xlu0 %5100, %v841
        %v5102 = vpop.permute.xlu0 %5101
        %5104 = vset.pattern.permute.xlu0 6
        %5105 = vperm.xlu0 %5104, %v842
        %v5106 = vpop.permute.xlu0 %5105
        %5108 = vset.pattern.permute.xlu0 6
        %5109 = vperm.xlu0 %5108, %v843
        %v5110 = vpop.permute.xlu0 %5109
        %5112 = vset.pattern.permute.xlu0 6
        %5113 = vperm.xlu0 %5112, %v844
        %v5114 = vpop.permute.xlu0 %5113
        %5116 = vset.pattern.permute.xlu0 6
        %5117 = vperm.xlu0 %5116, %v845
        %v5118 = vpop.permute.xlu0 %5117
        %5120 = vset.pattern.permute.xlu0 6
        %5121 = vperm.xlu0 %5120, %v846
        %v5122 = vpop.permute.xlu0 %5121
        %5124 = vset.pattern.permute.xlu0 6
        %5125 = vperm.xlu0 %5124, %v847
        %v5126 = vpop.permute.xlu0 %5125
        %5128 = vset.pattern.permute.xlu0 6
        %5129 = vperm.xlu0 %5128, %v848
        %v5130 = vpop.permute.xlu0 %5129
        %5132 = vset.pattern.permute.xlu0 6
        %5133 = vperm.xlu0 %5132, %v849
        %v5134 = vpop.permute.xlu0 %5133
        %5136 = vset.pattern.permute.xlu0 6
        %5137 = vperm.xlu0 %5136, %v850
        %v5138 = vpop.permute.xlu0 %5137
        %5140 = vset.pattern.permute.xlu0 6
        %5141 = vperm.xlu0 %5140, %v851
        %v5142 = vpop.permute.xlu0 %5141
        %5144 = vset.pattern.permute.xlu0 6
        %5145 = vperm.xlu0 %5144, %v852
        %v5146 = vpop.permute.xlu0 %5145
        %5148 = vset.pattern.permute.xlu0 6
        %5149 = vperm.xlu0 %5148, %v853
        %v5150 = vpop.permute.xlu0 %5149
        %5152 = vset.pattern.permute.xlu0 6
        %5153 = vperm.xlu0 %5152, %v854
        %v5154 = vpop.permute.xlu0 %5153
        %5156 = vset.pattern.permute.xlu0 6
        %5157 = vperm.xlu0 %5156, %v855
        %v5158 = vpop.permute.xlu0 %5157
        %5160 = vset.pattern.permute.xlu0 6
        %5161 = vperm.xlu0 %5160, %v856
        %v5162 = vpop.permute.xlu0 %5161
        %5164 = vset.pattern.permute.xlu0 6
        %5165 = vperm.xlu0 %5164, %v857
        %v5166 = vpop.permute.xlu0 %5165
        %5168 = vset.pattern.permute.xlu0 6
        %5169 = vperm.xlu0 %5168, %v858
        %v5170 = vpop.permute.xlu0 %5169
        %5172 = vset.pattern.permute.xlu0 6
        %5173 = vperm.xlu0 %5172, %v859
        %v5174 = vpop.permute.xlu0 %5173
        %5176 = vset.pattern.permute.xlu0 6
        %5177 = vperm.xlu0 %5176, %v860
        %v5178 = vpop.permute.xlu0 %5177
        %5180 = vset.pattern.permute.xlu0 6
        %5181 = vperm.xlu0 %5180, %v861
        %v5182 = vpop.permute.xlu0 %5181
        %5184 = vset.pattern.permute.xlu0 6
        %5185 = vperm.xlu0 %5184, %v862
        %v5186 = vpop.permute.xlu0 %5185
        %5188 = vset.pattern.permute.xlu0 6
        %5189 = vperm.xlu0 %5188, %v863
        %v5190 = vpop.permute.xlu0 %5189
        %5192 = vset.pattern.permute.xlu0 6
        %5193 = vperm.xlu0 %5192, %v864
        %v5194 = vpop.permute.xlu0 %5193
        %5196 = vset.pattern.permute.xlu0 6
        %5197 = vperm.xlu0 %5196, %v865
        %v5198 = vpop.permute.xlu0 %5197
        %5200 = vset.pattern.permute.xlu0 6
        %5201 = vperm.xlu0 %5200, %v866
        %v5202 = vpop.permute.xlu0 %5201
        %5204 = vset.pattern.permute.xlu0 6
        %5205 = vperm.xlu0 %5204, %v867
        %v5206 = vpop.permute.xlu0 %5205
        %5208 = vset.pattern.permute.xlu0 6
        %5209 = vperm.xlu0 %5208, %v868
        %v5210 = vpop.permute.xlu0 %5209
        %5212 = vset.pattern.permute.xlu0 6
        %5213 = vperm.xlu0 %5212, %v869
        %v5214 = vpop.permute.xlu0 %5213
        %5216 = vset.pattern.permute.xlu0 6
        %5217 = vperm.xlu0 %5216, %v870
        %v5218 = vpop.permute.xlu0 %5217
        %5220 = vset.pattern.permute.xlu0 6
        %5221 = vperm.xlu0 %5220, %v871
        %v5222 = vpop.permute.xlu0 %5221
        %v5224 = vlaneseq
        %v5225 = vshrl.u32 %v5224, 7
        %v5226 = vsub.s32 6, %v5225
        %v5227 = vrot.slane %v652, %v5226
        %v5228 = vlaneseq
        %v5229 = vshrl.u32 %v5228, 7
        %v5230 = vsub.s32 6, %v5229
        %v5231 = vrot.slane %v656, %v5230
        %v5232 = vlaneseq
        %v5233 = vshrl.u32 %v5232, 7
        %v5234 = vsub.s32 6, %v5233
        %v5235 = vrot.slane %v662, %v5234
        %v5236 = vlaneseq
        %v5237 = vshrl.u32 %v5236, 7
        %v5238 = vsub.s32 6, %v5237
        %v5239 = vrot.slane %v666, %v5238
        %v5240 = vlaneseq
        %v5241 = vshrl.u32 %v5240, 7
        %v5242 = vsub.s32 6, %v5241
        %v5243 = vrot.slane %v672, %v5242
        %v5244 = vlaneseq
        %v5245 = vshrl.u32 %v5244, 7
        %v5246 = vsub.s32 6, %v5245
        %v5247 = vrot.slane %v676, %v5246
        %v5248 = vlaneseq
        %v5249 = vshrl.u32 %v5248, 7
        %v5250 = vsub.s32 6, %v5249
        %v5251 = vrot.slane %v682, %v5250
        %v5252 = vlaneseq
        %v5253 = vshrl.u32 %v5252, 7
        %v5254 = vsub.s32 6, %v5253
        %v5255 = vrot.slane %v686, %v5254
        %v5256 = vlaneseq
        %v5257 = vshrl.u32 %v5256, 7
        %v5258 = vsub.s32 6, %v5257
        %v5259 = vrot.slane %v692, %v5258
        %v5260 = vlaneseq
        %v5261 = vshrl.u32 %v5260, 7
        %v5262 = vsub.s32 6, %v5261
        %v5263 = vrot.slane %v696, %v5262
        %v5264 = vlaneseq
        %v5265 = vshrl.u32 %v5264, 7
        %v5266 = vsub.s32 6, %v5265
        %v5267 = vrot.slane %v702, %v5266
        %v5268 = vlaneseq
        %v5269 = vshrl.u32 %v5268, 7
        %v5270 = vsub.s32 6, %v5269
        %v5271 = vrot.slane %v706, %v5270
        %v5272 = vlaneseq
        %v5273 = vshrl.u32 %v5272, 7
        %v5274 = vsub.s32 6, %v5273
        %v5275 = vrot.slane %v712, %v5274
        %v5276 = vlaneseq
        %v5277 = vshrl.u32 %v5276, 7
        %v5278 = vsub.s32 6, %v5277
        %v5279 = vrot.slane %v716, %v5278
        %v5280 = vlaneseq
        %v5281 = vshrl.u32 %v5280, 7
        %v5282 = vsub.s32 6, %v5281
        %v5283 = vrot.slane %v722, %v5282
        %v5284 = vlaneseq
        %v5285 = vshrl.u32 %v5284, 7
        %v5286 = vsub.s32 6, %v5285
        %v5287 = vrot.slane %v726, %v5286
        %v5288 = vlaneseq
        %v5289 = vshrl.u32 %v5288, 7
        %v5290 = vsub.s32 6, %v5289
        %v5291 = vrot.slane %v732, %v5290
        %v5292 = vlaneseq
        %v5293 = vshrl.u32 %v5292, 7
        %v5294 = vsub.s32 6, %v5293
        %v5295 = vrot.slane %v736, %v5294
        %v5296 = vlaneseq
        %v5297 = vshrl.u32 %v5296, 7
        %v5298 = vsub.s32 6, %v5297
        %v5299 = vrot.slane %v742, %v5298
        %v5300 = vlaneseq
        %v5301 = vshrl.u32 %v5300, 7
        %v5302 = vsub.s32 6, %v5301
        %v5303 = vrot.slane %v746, %v5302
        %v5304 = vlaneseq
        %v5305 = vshrl.u32 %v5304, 7
        %v5306 = vsub.s32 6, %v5305
        %v5307 = vrot.slane %v752, %v5306
        %v5308 = vlaneseq
        %v5309 = vshrl.u32 %v5308, 7
        %v5310 = vsub.s32 6, %v5309
        %v5311 = vrot.slane %v756, %v5310
        %v5312 = vlaneseq
        %v5313 = vshrl.u32 %v5312, 7
        %v5314 = vsub.s32 6, %v5313
        %v5315 = vrot.slane %v762, %v5314
        %v5316 = vlaneseq
        %v5317 = vshrl.u32 %v5316, 7
        %v5318 = vsub.s32 6, %v5317
        %v5319 = vrot.slane %v766, %v5318
        %v5320 = vlaneseq
        %v5321 = vshrl.u32 %v5320, 7
        %v5322 = vsub.s32 6, %v5321
        %v5323 = vrot.slane %v772, %v5322
        %v5324 = vlaneseq
        %v5325 = vshrl.u32 %v5324, 7
        %v5326 = vsub.s32 6, %v5325
        %v5327 = vrot.slane %v776, %v5326
        %v5328 = vlaneseq
        %v5329 = vshrl.u32 %v5328, 7
        %v5330 = vsub.s32 6, %v5329
        %v5331 = vrot.slane %v782, %v5330
        %v5332 = vlaneseq
        %v5333 = vshrl.u32 %v5332, 7
        %v5334 = vsub.s32 6, %v5333
        %v5335 = vrot.slane %v786, %v5334
        %v5336 = vlaneseq
        %v5337 = vshrl.u32 %v5336, 7
        %v5338 = vsub.s32 6, %v5337
        %v5339 = vrot.slane %v792, %v5338
        %v5340 = vlaneseq
        %v5341 = vshrl.u32 %v5340, 7
        %v5342 = vsub.s32 6, %v5341
        %v5343 = vrot.slane %v796, %v5342
        %v5344 = vlaneseq
        %v5345 = vshrl.u32 %v5344, 7
        %v5346 = vsub.s32 6, %v5345
        %v5347 = vrot.slane %v802, %v5346
        %v5348 = vlaneseq
        %v5349 = vshrl.u32 %v5348, 7
        %v5350 = vsub.s32 6, %v5349
        %v5351 = vrot.slane %v806, %v5350
        %v5352 = vmul.f32 %v5098, %v5227
        %v5353 = vmul.f32 %v5102, %v5231
        %v5354 = vmul.f32 %v5106, %v5235
        %v5355 = vmul.f32 %v5110, %v5239
        %v5356 = vmul.f32 %v5114, %v5243
        %v5357 = vmul.f32 %v5118, %v5247
        %v5358 = vmul.f32 %v5122, %v5251
        %v5359 = vmul.f32 %v5126, %v5255
        %v5360 = vmul.f32 %v5130, %v5259
        %v5361 = vmul.f32 %v5134, %v5263
        %v5362 = vmul.f32 %v5138, %v5267
        %v5363 = vmul.f32 %v5142, %v5271
        %v5364 = vmul.f32 %v5146, %v5275
        %v5365 = vmul.f32 %v5150, %v5279
        %v5366 = vmul.f32 %v5154, %v5283
        %v5367 = vmul.f32 %v5158, %v5287
        %v5368 = vmul.f32 %v5162, %v5291
        %v5369 = vmul.f32 %v5166, %v5295
        %v5370 = vmul.f32 %v5170, %v5299
        %v5371 = vmul.f32 %v5174, %v5303
        %v5372 = vmul.f32 %v5178, %v5307
        %v5373 = vmul.f32 %v5182, %v5311
        %v5374 = vmul.f32 %v5186, %v5315
        %v5375 = vmul.f32 %v5190, %v5319
        %v5376 = vmul.f32 %v5194, %v5323
        %v5377 = vmul.f32 %v5198, %v5327
        %v5378 = vmul.f32 %v5202, %v5331
        %v5379 = vmul.f32 %v5206, %v5335
        %v5380 = vmul.f32 %v5210, %v5339
        %v5381 = vmul.f32 %v5214, %v5343
        %v5382 = vmul.f32 %v5218, %v5347
        %v5383 = vmul.f32 %v5222, %v5351
        %v5384 = vadd.f32 %v4744, %v5352
        %v5385 = vadd.f32 %v4745, %v5353
        %v5386 = vadd.f32 %v4746, %v5354
        %v5387 = vadd.f32 %v4747, %v5355
        %v5388 = vadd.f32 %v4748, %v5356
        %v5389 = vadd.f32 %v4749, %v5357
        %v5390 = vadd.f32 %v4750, %v5358
        %v5391 = vadd.f32 %v4751, %v5359
        %v5392 = vadd.f32 %v4752, %v5360
        %v5393 = vadd.f32 %v4753, %v5361
        %v5394 = vadd.f32 %v4754, %v5362
        %v5395 = vadd.f32 %v4755, %v5363
        %v5396 = vadd.f32 %v4756, %v5364
        %v5397 = vadd.f32 %v4757, %v5365
        %v5398 = vadd.f32 %v4758, %v5366
        %v5399 = vadd.f32 %v4759, %v5367
        %v5400 = vadd.f32 %v4760, %v5368
        %v5401 = vadd.f32 %v4761, %v5369
        %v5402 = vadd.f32 %v4762, %v5370
        %v5403 = vadd.f32 %v4763, %v5371
        %v5404 = vadd.f32 %v4764, %v5372
        %v5405 = vadd.f32 %v4765, %v5373
        %v5406 = vadd.f32 %v4766, %v5374
        %v5407 = vadd.f32 %v4767, %v5375
        %v5408 = vadd.f32 %v4768, %v5376
        %v5409 = vadd.f32 %v4769, %v5377
        %v5410 = vadd.f32 %v4770, %v5378
        %v5411 = vadd.f32 %v4771, %v5379
        %v5412 = vadd.f32 %v4772, %v5380
        %v5413 = vadd.f32 %v4773, %v5381
        %v5414 = vadd.f32 %v4774, %v5382
        %v5415 = vadd.f32 %v4775, %v5383
        %5416 = vset.pattern.permute.xlu0 7
        %5417 = vperm.xlu0 %5416, %v808
        %v5418 = vpop.permute.xlu0 %5417
        %5420 = vset.pattern.permute.xlu0 7
        %5421 = vperm.xlu0 %5420, %v809
        %v5422 = vpop.permute.xlu0 %5421
        %5424 = vset.pattern.permute.xlu0 7
        %5425 = vperm.xlu0 %5424, %v810
        %v5426 = vpop.permute.xlu0 %5425
        %5428 = vset.pattern.permute.xlu0 7
        %5429 = vperm.xlu0 %5428, %v811
        %v5430 = vpop.permute.xlu0 %5429
        %5432 = vset.pattern.permute.xlu0 7
        %5433 = vperm.xlu0 %5432, %v812
        %v5434 = vpop.permute.xlu0 %5433
        %5436 = vset.pattern.permute.xlu0 7
        %5437 = vperm.xlu0 %5436, %v813
        %v5438 = vpop.permute.xlu0 %5437
        %5440 = vset.pattern.permute.xlu0 7
        %5441 = vperm.xlu0 %5440, %v814
        %v5442 = vpop.permute.xlu0 %5441
        %5444 = vset.pattern.permute.xlu0 7
        %5445 = vperm.xlu0 %5444, %v815
        %v5446 = vpop.permute.xlu0 %5445
        %5448 = vset.pattern.permute.xlu0 7
        %5449 = vperm.xlu0 %5448, %v816
        %v5450 = vpop.permute.xlu0 %5449
        %5452 = vset.pattern.permute.xlu0 7
        %5453 = vperm.xlu0 %5452, %v817
        %v5454 = vpop.permute.xlu0 %5453
        %5456 = vset.pattern.permute.xlu0 7
        %5457 = vperm.xlu0 %5456, %v818
        %v5458 = vpop.permute.xlu0 %5457
        %5460 = vset.pattern.permute.xlu0 7
        %5461 = vperm.xlu0 %5460, %v819
        %v5462 = vpop.permute.xlu0 %5461
        %5464 = vset.pattern.permute.xlu0 7
        %5465 = vperm.xlu0 %5464, %v820
        %v5466 = vpop.permute.xlu0 %5465
        %5468 = vset.pattern.permute.xlu0 7
        %5469 = vperm.xlu0 %5468, %v821
        %v5470 = vpop.permute.xlu0 %5469
        %5472 = vset.pattern.permute.xlu0 7
        %5473 = vperm.xlu0 %5472, %v822
        %v5474 = vpop.permute.xlu0 %5473
        %5476 = vset.pattern.permute.xlu0 7
        %5477 = vperm.xlu0 %5476, %v823
        %v5478 = vpop.permute.xlu0 %5477
        %5480 = vset.pattern.permute.xlu0 7
        %5481 = vperm.xlu0 %5480, %v824
        %v5482 = vpop.permute.xlu0 %5481
        %5484 = vset.pattern.permute.xlu0 7
        %5485 = vperm.xlu0 %5484, %v825
        %v5486 = vpop.permute.xlu0 %5485
        %5488 = vset.pattern.permute.xlu0 7
        %5489 = vperm.xlu0 %5488, %v826
        %v5490 = vpop.permute.xlu0 %5489
        %5492 = vset.pattern.permute.xlu0 7
        %5493 = vperm.xlu0 %5492, %v827
        %v5494 = vpop.permute.xlu0 %5493
        %5496 = vset.pattern.permute.xlu0 7
        %5497 = vperm.xlu0 %5496, %v828
        %v5498 = vpop.permute.xlu0 %5497
        %5500 = vset.pattern.permute.xlu0 7
        %5501 = vperm.xlu0 %5500, %v829
        %v5502 = vpop.permute.xlu0 %5501
        %5504 = vset.pattern.permute.xlu0 7
        %5505 = vperm.xlu0 %5504, %v830
        %v5506 = vpop.permute.xlu0 %5505
        %5508 = vset.pattern.permute.xlu0 7
        %5509 = vperm.xlu0 %5508, %v831
        %v5510 = vpop.permute.xlu0 %5509
        %5512 = vset.pattern.permute.xlu0 7
        %5513 = vperm.xlu0 %5512, %v832
        %v5514 = vpop.permute.xlu0 %5513
        %5516 = vset.pattern.permute.xlu0 7
        %5517 = vperm.xlu0 %5516, %v833
        %v5518 = vpop.permute.xlu0 %5517
        %5520 = vset.pattern.permute.xlu0 7
        %5521 = vperm.xlu0 %5520, %v834
        %v5522 = vpop.permute.xlu0 %5521
        %5524 = vset.pattern.permute.xlu0 7
        %5525 = vperm.xlu0 %5524, %v835
        %v5526 = vpop.permute.xlu0 %5525
        %5528 = vset.pattern.permute.xlu0 7
        %5529 = vperm.xlu0 %5528, %v836
        %v5530 = vpop.permute.xlu0 %5529
        %5532 = vset.pattern.permute.xlu0 7
        %5533 = vperm.xlu0 %5532, %v837
        %v5534 = vpop.permute.xlu0 %5533
        %5536 = vset.pattern.permute.xlu0 7
        %5537 = vperm.xlu0 %5536, %v838
        %v5538 = vpop.permute.xlu0 %5537
        %5540 = vset.pattern.permute.xlu0 7
        %5541 = vperm.xlu0 %5540, %v839
        %v5542 = vpop.permute.xlu0 %5541
        %v5544 = vlaneseq
        %v5545 = vshrl.u32 %v5544, 7
        %v5546 = vsub.s32 7, %v5545
        %v5547 = vrot.slane %v650, %v5546
        %v5548 = vlaneseq
        %v5549 = vshrl.u32 %v5548, 7
        %v5550 = vsub.s32 7, %v5549
        %v5551 = vrot.slane %v654, %v5550
        %v5552 = vlaneseq
        %v5553 = vshrl.u32 %v5552, 7
        %v5554 = vsub.s32 7, %v5553
        %v5555 = vrot.slane %v660, %v5554
        %v5556 = vlaneseq
        %v5557 = vshrl.u32 %v5556, 7
        %v5558 = vsub.s32 7, %v5557
        %v5559 = vrot.slane %v664, %v5558
        %v5560 = vlaneseq
        %v5561 = vshrl.u32 %v5560, 7
        %v5562 = vsub.s32 7, %v5561
        %v5563 = vrot.slane %v670, %v5562
        %v5564 = vlaneseq
        %v5565 = vshrl.u32 %v5564, 7
        %v5566 = vsub.s32 7, %v5565
        %v5567 = vrot.slane %v674, %v5566
        %v5568 = vlaneseq
        %v5569 = vshrl.u32 %v5568, 7
        %v5570 = vsub.s32 7, %v5569
        %v5571 = vrot.slane %v680, %v5570
        %v5572 = vlaneseq
        %v5573 = vshrl.u32 %v5572, 7
        %v5574 = vsub.s32 7, %v5573
        %v5575 = vrot.slane %v684, %v5574
        %v5576 = vlaneseq
        %v5577 = vshrl.u32 %v5576, 7
        %v5578 = vsub.s32 7, %v5577
        %v5579 = vrot.slane %v690, %v5578
        %v5580 = vlaneseq
        %v5581 = vshrl.u32 %v5580, 7
        %v5582 = vsub.s32 7, %v5581
        %v5583 = vrot.slane %v694, %v5582
        %v5584 = vlaneseq
        %v5585 = vshrl.u32 %v5584, 7
        %v5586 = vsub.s32 7, %v5585
        %v5587 = vrot.slane %v700, %v5586
        %v5588 = vlaneseq
        %v5589 = vshrl.u32 %v5588, 7
        %v5590 = vsub.s32 7, %v5589
        %v5591 = vrot.slane %v704, %v5590
        %v5592 = vlaneseq
        %v5593 = vshrl.u32 %v5592, 7
        %v5594 = vsub.s32 7, %v5593
        %v5595 = vrot.slane %v710, %v5594
        %v5596 = vlaneseq
        %v5597 = vshrl.u32 %v5596, 7
        %v5598 = vsub.s32 7, %v5597
        %v5599 = vrot.slane %v714, %v5598
        %v5600 = vlaneseq
        %v5601 = vshrl.u32 %v5600, 7
        %v5602 = vsub.s32 7, %v5601
        %v5603 = vrot.slane %v720, %v5602
        %v5604 = vlaneseq
        %v5605 = vshrl.u32 %v5604, 7
        %v5606 = vsub.s32 7, %v5605
        %v5607 = vrot.slane %v724, %v5606
        %v5608 = vlaneseq
        %v5609 = vshrl.u32 %v5608, 7
        %v5610 = vsub.s32 7, %v5609
        %v5611 = vrot.slane %v730, %v5610
        %v5612 = vlaneseq
        %v5613 = vshrl.u32 %v5612, 7
        %v5614 = vsub.s32 7, %v5613
        %v5615 = vrot.slane %v734, %v5614
        %v5616 = vlaneseq
        %v5617 = vshrl.u32 %v5616, 7
        %v5618 = vsub.s32 7, %v5617
        %v5619 = vrot.slane %v740, %v5618
        %v5620 = vlaneseq
        %v5621 = vshrl.u32 %v5620, 7
        %v5622 = vsub.s32 7, %v5621
        %v5623 = vrot.slane %v744, %v5622
        %v5624 = vlaneseq
        %v5625 = vshrl.u32 %v5624, 7
        %v5626 = vsub.s32 7, %v5625
        %v5627 = vrot.slane %v750, %v5626
        %v5628 = vlaneseq
        %v5629 = vshrl.u32 %v5628, 7
        %v5630 = vsub.s32 7, %v5629
        %v5631 = vrot.slane %v754, %v5630
        %v5632 = vlaneseq
        %v5633 = vshrl.u32 %v5632, 7
        %v5634 = vsub.s32 7, %v5633
        %v5635 = vrot.slane %v760, %v5634
        %v5636 = vlaneseq
        %v5637 = vshrl.u32 %v5636, 7
        %v5638 = vsub.s32 7, %v5637
        %v5639 = vrot.slane %v764, %v5638
        %v5640 = vlaneseq
        %v5641 = vshrl.u32 %v5640, 7
        %v5642 = vsub.s32 7, %v5641
        %v5643 = vrot.slane %v770, %v5642
        %v5644 = vlaneseq
        %v5645 = vshrl.u32 %v5644, 7
        %v5646 = vsub.s32 7, %v5645
        %v5647 = vrot.slane %v774, %v5646
        %v5648 = vlaneseq
        %v5649 = vshrl.u32 %v5648, 7
        %v5650 = vsub.s32 7, %v5649
        %v5651 = vrot.slane %v780, %v5650
        %v5652 = vlaneseq
        %v5653 = vshrl.u32 %v5652, 7
        %v5654 = vsub.s32 7, %v5653
        %v5655 = vrot.slane %v784, %v5654
        %v5656 = vlaneseq
        %v5657 = vshrl.u32 %v5656, 7
        %v5658 = vsub.s32 7, %v5657
        %v5659 = vrot.slane %v790, %v5658
        %v5660 = vlaneseq
        %v5661 = vshrl.u32 %v5660, 7
        %v5662 = vsub.s32 7, %v5661
        %v5663 = vrot.slane %v794, %v5662
        %v5664 = vlaneseq
        %v5665 = vshrl.u32 %v5664, 7
        %v5666 = vsub.s32 7, %v5665
        %v5667 = vrot.slane %v800, %v5666
        %v5668 = vlaneseq
        %v5669 = vshrl.u32 %v5668, 7
        %v5670 = vsub.s32 7, %v5669
        %v5671 = vrot.slane %v804, %v5670
        %v5672 = vmul.f32 %v5418, %v5547
        %v5673 = vmul.f32 %v5422, %v5551
        %v5674 = vmul.f32 %v5426, %v5555
        %v5675 = vmul.f32 %v5430, %v5559
        %v5676 = vmul.f32 %v5434, %v5563
        %v5677 = vmul.f32 %v5438, %v5567
        %v5678 = vmul.f32 %v5442, %v5571
        %v5679 = vmul.f32 %v5446, %v5575
        %v5680 = vmul.f32 %v5450, %v5579
        %v5681 = vmul.f32 %v5454, %v5583
        %v5682 = vmul.f32 %v5458, %v5587
        %v5683 = vmul.f32 %v5462, %v5591
        %v5684 = vmul.f32 %v5466, %v5595
        %v5685 = vmul.f32 %v5470, %v5599
        %v5686 = vmul.f32 %v5474, %v5603
        %v5687 = vmul.f32 %v5478, %v5607
        %v5688 = vmul.f32 %v5482, %v5611
        %v5689 = vmul.f32 %v5486, %v5615
        %v5690 = vmul.f32 %v5490, %v5619
        %v5691 = vmul.f32 %v5494, %v5623
        %v5692 = vmul.f32 %v5498, %v5627
        %v5693 = vmul.f32 %v5502, %v5631
        %v5694 = vmul.f32 %v5506, %v5635
        %v5695 = vmul.f32 %v5510, %v5639
        %v5696 = vmul.f32 %v5514, %v5643
        %v5697 = vmul.f32 %v5518, %v5647
        %v5698 = vmul.f32 %v5522, %v5651
        %v5699 = vmul.f32 %v5526, %v5655
        %v5700 = vmul.f32 %v5530, %v5659
        %v5701 = vmul.f32 %v5534, %v5663
        %v5702 = vmul.f32 %v5538, %v5667
        %v5703 = vmul.f32 %v5542, %v5671
        %v5704 = vadd.f32 %v5064, %v5672
        %v5705 = vadd.f32 %v5065, %v5673
        %v5706 = vadd.f32 %v5066, %v5674
        %v5707 = vadd.f32 %v5067, %v5675
        %v5708 = vadd.f32 %v5068, %v5676
        %v5709 = vadd.f32 %v5069, %v5677
        %v5710 = vadd.f32 %v5070, %v5678
        %v5711 = vadd.f32 %v5071, %v5679
        %v5712 = vadd.f32 %v5072, %v5680
        %v5713 = vadd.f32 %v5073, %v5681
        %v5714 = vadd.f32 %v5074, %v5682
        %v5715 = vadd.f32 %v5075, %v5683
        %v5716 = vadd.f32 %v5076, %v5684
        %v5717 = vadd.f32 %v5077, %v5685
        %v5718 = vadd.f32 %v5078, %v5686
        %v5719 = vadd.f32 %v5079, %v5687
        %v5720 = vadd.f32 %v5080, %v5688
        %v5721 = vadd.f32 %v5081, %v5689
        %v5722 = vadd.f32 %v5082, %v5690
        %v5723 = vadd.f32 %v5083, %v5691
        %v5724 = vadd.f32 %v5084, %v5692
        %v5725 = vadd.f32 %v5085, %v5693
        %v5726 = vadd.f32 %v5086, %v5694
        %v5727 = vadd.f32 %v5087, %v5695
        %v5728 = vadd.f32 %v5088, %v5696
        %v5729 = vadd.f32 %v5089, %v5697
        %v5730 = vadd.f32 %v5090, %v5698
        %v5731 = vadd.f32 %v5091, %v5699
        %v5732 = vadd.f32 %v5092, %v5700
        %v5733 = vadd.f32 %v5093, %v5701
        %v5734 = vadd.f32 %v5094, %v5702
        %v5735 = vadd.f32 %v5095, %v5703
        %5736 = vset.pattern.permute.xlu0 7
        %5737 = vperm.xlu0 %5736, %v840
        %v5738 = vpop.permute.xlu0 %5737
        %5740 = vset.pattern.permute.xlu0 7
        %5741 = vperm.xlu0 %5740, %v841
        %v5742 = vpop.permute.xlu0 %5741
        %5744 = vset.pattern.permute.xlu0 7
        %5745 = vperm.xlu0 %5744, %v842
        %v5746 = vpop.permute.xlu0 %5745
        %5748 = vset.pattern.permute.xlu0 7
        %5749 = vperm.xlu0 %5748, %v843
        %v5750 = vpop.permute.xlu0 %5749
        %5752 = vset.pattern.permute.xlu0 7
        %5753 = vperm.xlu0 %5752, %v844
        %v5754 = vpop.permute.xlu0 %5753
        %5756 = vset.pattern.permute.xlu0 7
        %5757 = vperm.xlu0 %5756, %v845
        %v5758 = vpop.permute.xlu0 %5757
        %5760 = vset.pattern.permute.xlu0 7
        %5761 = vperm.xlu0 %5760, %v846
        %v5762 = vpop.permute.xlu0 %5761
        %5764 = vset.pattern.permute.xlu0 7
        %5765 = vperm.xlu0 %5764, %v847
        %v5766 = vpop.permute.xlu0 %5765
        %5768 = vset.pattern.permute.xlu0 7
        %5769 = vperm.xlu0 %5768, %v848
        %v5770 = vpop.permute.xlu0 %5769
        %5772 = vset.pattern.permute.xlu0 7
        %5773 = vperm.xlu0 %5772, %v849
        %v5774 = vpop.permute.xlu0 %5773
        %5776 = vset.pattern.permute.xlu0 7
        %5777 = vperm.xlu0 %5776, %v850
        %v5778 = vpop.permute.xlu0 %5777
        %5780 = vset.pattern.permute.xlu0 7
        %5781 = vperm.xlu0 %5780, %v851
        %v5782 = vpop.permute.xlu0 %5781
        %5784 = vset.pattern.permute.xlu0 7
        %5785 = vperm.xlu0 %5784, %v852
        %v5786 = vpop.permute.xlu0 %5785
        %5788 = vset.pattern.permute.xlu0 7
        %5789 = vperm.xlu0 %5788, %v853
        %v5790 = vpop.permute.xlu0 %5789
        %5792 = vset.pattern.permute.xlu0 7
        %5793 = vperm.xlu0 %5792, %v854
        %v5794 = vpop.permute.xlu0 %5793
        %5796 = vset.pattern.permute.xlu0 7
        %5797 = vperm.xlu0 %5796, %v855
        %v5798 = vpop.permute.xlu0 %5797
        %5800 = vset.pattern.permute.xlu0 7
        %5801 = vperm.xlu0 %5800, %v856
        %v5802 = vpop.permute.xlu0 %5801
        %5804 = vset.pattern.permute.xlu0 7
        %5805 = vperm.xlu0 %5804, %v857
        %v5806 = vpop.permute.xlu0 %5805
        %5808 = vset.pattern.permute.xlu0 7
        %5809 = vperm.xlu0 %5808, %v858
        %v5810 = vpop.permute.xlu0 %5809
        %5812 = vset.pattern.permute.xlu0 7
        %5813 = vperm.xlu0 %5812, %v859
        %v5814 = vpop.permute.xlu0 %5813
        %5816 = vset.pattern.permute.xlu0 7
        %5817 = vperm.xlu0 %5816, %v860
        %v5818 = vpop.permute.xlu0 %5817
        %5820 = vset.pattern.permute.xlu0 7
        %5821 = vperm.xlu0 %5820, %v861
        %v5822 = vpop.permute.xlu0 %5821
        %5824 = vset.pattern.permute.xlu0 7
        %5825 = vperm.xlu0 %5824, %v862
        %v5826 = vpop.permute.xlu0 %5825
        %5828 = vset.pattern.permute.xlu0 7
        %5829 = vperm.xlu0 %5828, %v863
        %v5830 = vpop.permute.xlu0 %5829
        %5832 = vset.pattern.permute.xlu0 7
        %5833 = vperm.xlu0 %5832, %v864
        %v5834 = vpop.permute.xlu0 %5833
        %5836 = vset.pattern.permute.xlu0 7
        %5837 = vperm.xlu0 %5836, %v865
        %v5838 = vpop.permute.xlu0 %5837
        %5840 = vset.pattern.permute.xlu0 7
        %5841 = vperm.xlu0 %5840, %v866
        %v5842 = vpop.permute.xlu0 %5841
        %5844 = vset.pattern.permute.xlu0 7
        %5845 = vperm.xlu0 %5844, %v867
        %v5846 = vpop.permute.xlu0 %5845
        %5848 = vset.pattern.permute.xlu0 7
        %5849 = vperm.xlu0 %5848, %v868
        %v5850 = vpop.permute.xlu0 %5849
        %5852 = vset.pattern.permute.xlu0 7
        %5853 = vperm.xlu0 %5852, %v869
        %v5854 = vpop.permute.xlu0 %5853
        %5856 = vset.pattern.permute.xlu0 7
        %5857 = vperm.xlu0 %5856, %v870
        %v5858 = vpop.permute.xlu0 %5857
        %5860 = vset.pattern.permute.xlu0 7
        %5861 = vperm.xlu0 %5860, %v871
        %v5862 = vpop.permute.xlu0 %5861
        %v5864 = vlaneseq
        %v5865 = vshrl.u32 %v5864, 7
        %v5866 = vsub.s32 7, %v5865
        %v5867 = vrot.slane %v652, %v5866
        %v5868 = vlaneseq
        %v5869 = vshrl.u32 %v5868, 7
        %v5870 = vsub.s32 7, %v5869
        %v5871 = vrot.slane %v656, %v5870
        %v5872 = vlaneseq
        %v5873 = vshrl.u32 %v5872, 7
        %v5874 = vsub.s32 7, %v5873
        %v5875 = vrot.slane %v662, %v5874
        %v5876 = vlaneseq
        %v5877 = vshrl.u32 %v5876, 7
        %v5878 = vsub.s32 7, %v5877
        %v5879 = vrot.slane %v666, %v5878
        %v5880 = vlaneseq
        %v5881 = vshrl.u32 %v5880, 7
        %v5882 = vsub.s32 7, %v5881
        %v5883 = vrot.slane %v672, %v5882
        %v5884 = vlaneseq
        %v5885 = vshrl.u32 %v5884, 7
        %v5886 = vsub.s32 7, %v5885
        %v5887 = vrot.slane %v676, %v5886
        %v5888 = vlaneseq
        %v5889 = vshrl.u32 %v5888, 7
        %v5890 = vsub.s32 7, %v5889
        %v5891 = vrot.slane %v682, %v5890
        %v5892 = vlaneseq
        %v5893 = vshrl.u32 %v5892, 7
        %v5894 = vsub.s32 7, %v5893
        %v5895 = vrot.slane %v686, %v5894
        %v5896 = vlaneseq
        %v5897 = vshrl.u32 %v5896, 7
        %v5898 = vsub.s32 7, %v5897
        %v5899 = vrot.slane %v692, %v5898
        %v5900 = vlaneseq
        %v5901 = vshrl.u32 %v5900, 7
        %v5902 = vsub.s32 7, %v5901
        %v5903 = vrot.slane %v696, %v5902
        %v5904 = vlaneseq
        %v5905 = vshrl.u32 %v5904, 7
        %v5906 = vsub.s32 7, %v5905
        %v5907 = vrot.slane %v702, %v5906
        %v5908 = vlaneseq
        %v5909 = vshrl.u32 %v5908, 7
        %v5910 = vsub.s32 7, %v5909
        %v5911 = vrot.slane %v706, %v5910
        %v5912 = vlaneseq
        %v5913 = vshrl.u32 %v5912, 7
        %v5914 = vsub.s32 7, %v5913
        %v5915 = vrot.slane %v712, %v5914
        %v5916 = vlaneseq
        %v5917 = vshrl.u32 %v5916, 7
        %v5918 = vsub.s32 7, %v5917
        %v5919 = vrot.slane %v716, %v5918
        %v5920 = vlaneseq
        %v5921 = vshrl.u32 %v5920, 7
        %v5922 = vsub.s32 7, %v5921
        %v5923 = vrot.slane %v722, %v5922
        %v5924 = vlaneseq
        %v5925 = vshrl.u32 %v5924, 7
        %v5926 = vsub.s32 7, %v5925
        %v5927 = vrot.slane %v726, %v5926
        %v5928 = vlaneseq
        %v5929 = vshrl.u32 %v5928, 7
        %v5930 = vsub.s32 7, %v5929
        %v5931 = vrot.slane %v732, %v5930
        %v5932 = vlaneseq
        %v5933 = vshrl.u32 %v5932, 7
        %v5934 = vsub.s32 7, %v5933
        %v5935 = vrot.slane %v736, %v5934
        %v5936 = vlaneseq
        %v5937 = vshrl.u32 %v5936, 7
        %v5938 = vsub.s32 7, %v5937
        %v5939 = vrot.slane %v742, %v5938
        %v5940 = vlaneseq
        %v5941 = vshrl.u32 %v5940, 7
        %v5942 = vsub.s32 7, %v5941
        %v5943 = vrot.slane %v746, %v5942
        %v5944 = vlaneseq
        %v5945 = vshrl.u32 %v5944, 7
        %v5946 = vsub.s32 7, %v5945
        %v5947 = vrot.slane %v752, %v5946
        %v5948 = vlaneseq
        %v5949 = vshrl.u32 %v5948, 7
        %v5950 = vsub.s32 7, %v5949
        %v5951 = vrot.slane %v756, %v5950
        %v5952 = vlaneseq
        %v5953 = vshrl.u32 %v5952, 7
        %v5954 = vsub.s32 7, %v5953
        %v5955 = vrot.slane %v762, %v5954
        %v5956 = vlaneseq
        %v5957 = vshrl.u32 %v5956, 7
        %v5958 = vsub.s32 7, %v5957
        %v5959 = vrot.slane %v766, %v5958
        %v5960 = vlaneseq
        %v5961 = vshrl.u32 %v5960, 7
        %v5962 = vsub.s32 7, %v5961
        %v5963 = vrot.slane %v772, %v5962
        %v5964 = vlaneseq
        %v5965 = vshrl.u32 %v5964, 7
        %v5966 = vsub.s32 7, %v5965
        %v5967 = vrot.slane %v776, %v5966
        %v5968 = vlaneseq
        %v5969 = vshrl.u32 %v5968, 7
        %v5970 = vsub.s32 7, %v5969
        %v5971 = vrot.slane %v782, %v5970
        %v5972 = vlaneseq
        %v5973 = vshrl.u32 %v5972, 7
        %v5974 = vsub.s32 7, %v5973
        %v5975 = vrot.slane %v786, %v5974
        %v5976 = vlaneseq
        %v5977 = vshrl.u32 %v5976, 7
        %v5978 = vsub.s32 7, %v5977
        %v5979 = vrot.slane %v792, %v5978
        %v5980 = vlaneseq
        %v5981 = vshrl.u32 %v5980, 7
        %v5982 = vsub.s32 7, %v5981
        %v5983 = vrot.slane %v796, %v5982
        %v5984 = vlaneseq
        %v5985 = vshrl.u32 %v5984, 7
        %v5986 = vsub.s32 7, %v5985
        %v5987 = vrot.slane %v802, %v5986
        %v5988 = vlaneseq
        %v5989 = vshrl.u32 %v5988, 7
        %v5990 = vsub.s32 7, %v5989
        %v5991 = vrot.slane %v806, %v5990
        %v5992 = vmul.f32 %v5738, %v5867
        %v5993 = vmul.f32 %v5742, %v5871
        %v5994 = vmul.f32 %v5746, %v5875
        %v5995 = vmul.f32 %v5750, %v5879
        %v5996 = vmul.f32 %v5754, %v5883
        %v5997 = vmul.f32 %v5758, %v5887
        %v5998 = vmul.f32 %v5762, %v5891
        %v5999 = vmul.f32 %v5766, %v5895
        %v6000 = vmul.f32 %v5770, %v5899
        %v6001 = vmul.f32 %v5774, %v5903
        %v6002 = vmul.f32 %v5778, %v5907
        %v6003 = vmul.f32 %v5782, %v5911
        %v6004 = vmul.f32 %v5786, %v5915
        %v6005 = vmul.f32 %v5790, %v5919
        %v6006 = vmul.f32 %v5794, %v5923
        %v6007 = vmul.f32 %v5798, %v5927
        %v6008 = vmul.f32 %v5802, %v5931
        %v6009 = vmul.f32 %v5806, %v5935
        %v6010 = vmul.f32 %v5810, %v5939
        %v6011 = vmul.f32 %v5814, %v5943
        %v6012 = vmul.f32 %v5818, %v5947
        %v6013 = vmul.f32 %v5822, %v5951
        %v6014 = vmul.f32 %v5826, %v5955
        %v6015 = vmul.f32 %v5830, %v5959
        %v6016 = vmul.f32 %v5834, %v5963
        %v6017 = vmul.f32 %v5838, %v5967
        %v6018 = vmul.f32 %v5842, %v5971
        %v6019 = vmul.f32 %v5846, %v5975
        %v6020 = vmul.f32 %v5850, %v5979
        %v6021 = vmul.f32 %v5854, %v5983
        %v6022 = vmul.f32 %v5858, %v5987
        %v6023 = vmul.f32 %v5862, %v5991
        %v6024 = vadd.f32 %v5384, %v5992
        %v6025 = vadd.f32 %v5385, %v5993
        %v6026 = vadd.f32 %v5386, %v5994
        %v6027 = vadd.f32 %v5387, %v5995
        %v6028 = vadd.f32 %v5388, %v5996
        %v6029 = vadd.f32 %v5389, %v5997
        %v6030 = vadd.f32 %v5390, %v5998
        %v6031 = vadd.f32 %v5391, %v5999
        %v6032 = vadd.f32 %v5392, %v6000
        %v6033 = vadd.f32 %v5393, %v6001
        %v6034 = vadd.f32 %v5394, %v6002
        %v6035 = vadd.f32 %v5395, %v6003
        %v6036 = vadd.f32 %v5396, %v6004
        %v6037 = vadd.f32 %v5397, %v6005
        %v6038 = vadd.f32 %v5398, %v6006
        %v6039 = vadd.f32 %v5399, %v6007
        %v6040 = vadd.f32 %v5400, %v6008
        %v6041 = vadd.f32 %v5401, %v6009
        %v6042 = vadd.f32 %v5402, %v6010
        %v6043 = vadd.f32 %v5403, %v6011
        %v6044 = vadd.f32 %v5404, %v6012
        %v6045 = vadd.f32 %v5405, %v6013
        %v6046 = vadd.f32 %v5406, %v6014
        %v6047 = vadd.f32 %v5407, %v6015
        %v6048 = vadd.f32 %v5408, %v6016
        %v6049 = vadd.f32 %v5409, %v6017
        %v6050 = vadd.f32 %v5410, %v6018
        %v6051 = vadd.f32 %v5411, %v6019
        %v6052 = vadd.f32 %v5412, %v6020
        %v6053 = vadd.f32 %v5413, %v6021
        %v6054 = vadd.f32 %v5414, %v6022
        %v6055 = vadd.f32 %v5415, %v6023
        %6088 = vrot.lane.b32.xlu0 %v5704, 32
        %v6089 = vpop.permute.xlu0 %6088
        %6090 = vrot.lane.b32.xlu0 %v5705, 32
        %v6091 = vpop.permute.xlu0 %6090
        %6092 = vrot.lane.b32.xlu0 %v5706, 32
        %v6093 = vpop.permute.xlu0 %6092
        %6094 = vrot.lane.b32.xlu0 %v5707, 32
        %v6095 = vpop.permute.xlu0 %6094
        %6096 = vrot.lane.b32.xlu0 %v5708, 32
        %v6097 = vpop.permute.xlu0 %6096
        %6098 = vrot.lane.b32.xlu0 %v5709, 32
        %v6099 = vpop.permute.xlu0 %6098
        %6100 = vrot.lane.b32.xlu0 %v5710, 32
        %v6101 = vpop.permute.xlu0 %6100
        %6102 = vrot.lane.b32.xlu0 %v5711, 32
        %v6103 = vpop.permute.xlu0 %6102
        %6104 = vrot.lane.b32.xlu0 %v5712, 32
        %v6105 = vpop.permute.xlu0 %6104
        %6106 = vrot.lane.b32.xlu0 %v5713, 32
        %v6107 = vpop.permute.xlu0 %6106
        %6108 = vrot.lane.b32.xlu0 %v5714, 32
        %v6109 = vpop.permute.xlu0 %6108
        %6110 = vrot.lane.b32.xlu0 %v5715, 32
        %v6111 = vpop.permute.xlu0 %6110
        %6112 = vrot.lane.b32.xlu0 %v5716, 32
        %v6113 = vpop.permute.xlu0 %6112
        %6114 = vrot.lane.b32.xlu0 %v5717, 32
        %v6115 = vpop.permute.xlu0 %6114
        %6116 = vrot.lane.b32.xlu0 %v5718, 32
        %v6117 = vpop.permute.xlu0 %6116
        %6118 = vrot.lane.b32.xlu0 %v5719, 32
        %v6119 = vpop.permute.xlu0 %6118
        %6120 = vrot.lane.b32.xlu0 %v5720, 32
        %v6121 = vpop.permute.xlu0 %6120
        %6122 = vrot.lane.b32.xlu0 %v5721, 32
        %v6123 = vpop.permute.xlu0 %6122
        %6124 = vrot.lane.b32.xlu0 %v5722, 32
        %v6125 = vpop.permute.xlu0 %6124
        %6126 = vrot.lane.b32.xlu0 %v5723, 32
        %v6127 = vpop.permute.xlu0 %6126
        %6128 = vrot.lane.b32.xlu0 %v5724, 32
        %v6129 = vpop.permute.xlu0 %6128
        %6130 = vrot.lane.b32.xlu0 %v5725, 32
        %v6131 = vpop.permute.xlu0 %6130
        %6132 = vrot.lane.b32.xlu0 %v5726, 32
        %v6133 = vpop.permute.xlu0 %6132
        %6134 = vrot.lane.b32.xlu0 %v5727, 32
        %v6135 = vpop.permute.xlu0 %6134
        %6136 = vrot.lane.b32.xlu0 %v5728, 32
        %v6137 = vpop.permute.xlu0 %6136
        %6138 = vrot.lane.b32.xlu0 %v5729, 32
        %v6139 = vpop.permute.xlu0 %6138
        %6140 = vrot.lane.b32.xlu0 %v5730, 32
        %v6141 = vpop.permute.xlu0 %6140
        %6142 = vrot.lane.b32.xlu0 %v5731, 32
        %v6143 = vpop.permute.xlu0 %6142
        %6144 = vrot.lane.b32.xlu0 %v5732, 32
        %v6145 = vpop.permute.xlu0 %6144
        %6146 = vrot.lane.b32.xlu0 %v5733, 32
        %v6147 = vpop.permute.xlu0 %6146
        %6148 = vrot.lane.b32.xlu0 %v5734, 32
        %v6149 = vpop.permute.xlu0 %6148
        %6150 = vrot.lane.b32.xlu0 %v5735, 32
        %v6151 = vpop.permute.xlu0 %6150
        %6216 = vrot.lane.b32.xlu0 %v6024, 32
        %v6217 = vpop.permute.xlu0 %6216
        %6218 = vrot.lane.b32.xlu0 %v6025, 32
        %v6219 = vpop.permute.xlu0 %6218
        %6220 = vrot.lane.b32.xlu0 %v6026, 32
        %v6221 = vpop.permute.xlu0 %6220
        %6222 = vrot.lane.b32.xlu0 %v6027, 32
        %v6223 = vpop.permute.xlu0 %6222
        %6224 = vrot.lane.b32.xlu0 %v6028, 32
        %v6225 = vpop.permute.xlu0 %6224
        %6226 = vrot.lane.b32.xlu0 %v6029, 32
        %v6227 = vpop.permute.xlu0 %6226
        %6228 = vrot.lane.b32.xlu0 %v6030, 32
        %v6229 = vpop.permute.xlu0 %6228
        %6230 = vrot.lane.b32.xlu0 %v6031, 32
        %v6231 = vpop.permute.xlu0 %6230
        %6232 = vrot.lane.b32.xlu0 %v6032, 32
        %v6233 = vpop.permute.xlu0 %6232
        %6234 = vrot.lane.b32.xlu0 %v6033, 32
        %v6235 = vpop.permute.xlu0 %6234
        %6236 = vrot.lane.b32.xlu0 %v6034, 32
        %v6237 = vpop.permute.xlu0 %6236
        %6238 = vrot.lane.b32.xlu0 %v6035, 32
        %v6239 = vpop.permute.xlu0 %6238
        %6240 = vrot.lane.b32.xlu0 %v6036, 32
        %v6241 = vpop.permute.xlu0 %6240
        %6242 = vrot.lane.b32.xlu0 %v6037, 32
        %v6243 = vpop.permute.xlu0 %6242
        %6244 = vrot.lane.b32.xlu0 %v6038, 32
        %v6245 = vpop.permute.xlu0 %6244
        %6246 = vrot.lane.b32.xlu0 %v6039, 32
        %v6247 = vpop.permute.xlu0 %6246
        %6248 = vrot.lane.b32.xlu0 %v6040, 32
        %v6249 = vpop.permute.xlu0 %6248
        %6250 = vrot.lane.b32.xlu0 %v6041, 32
        %v6251 = vpop.permute.xlu0 %6250
        %6252 = vrot.lane.b32.xlu0 %v6042, 32
        %v6253 = vpop.permute.xlu0 %6252
        %6254 = vrot.lane.b32.xlu0 %v6043, 32
        %v6255 = vpop.permute.xlu0 %6254
        %6256 = vrot.lane.b32.xlu0 %v6044, 32
        %v6257 = vpop.permute.xlu0 %6256
        %6258 = vrot.lane.b32.xlu0 %v6045, 32
        %v6259 = vpop.permute.xlu0 %6258
        %6260 = vrot.lane.b32.xlu0 %v6046, 32
        %v6261 = vpop.permute.xlu0 %6260
        %6262 = vrot.lane.b32.xlu0 %v6047, 32
        %v6263 = vpop.permute.xlu0 %6262
        %6264 = vrot.lane.b32.xlu0 %v6048, 32
        %v6265 = vpop.permute.xlu0 %6264
        %6266 = vrot.lane.b32.xlu0 %v6049, 32
        %v6267 = vpop.permute.xlu0 %6266
        %6268 = vrot.lane.b32.xlu0 %v6050, 32
        %v6269 = vpop.permute.xlu0 %6268
        %6270 = vrot.lane.b32.xlu0 %v6051, 32
        %v6271 = vpop.permute.xlu0 %6270
        %6272 = vrot.lane.b32.xlu0 %v6052, 32
        %v6273 = vpop.permute.xlu0 %6272
        %6274 = vrot.lane.b32.xlu0 %v6053, 32
        %v6275 = vpop.permute.xlu0 %6274
        %6276 = vrot.lane.b32.xlu0 %v6054, 32
        %v6277 = vpop.permute.xlu0 %6276
        %6278 = vrot.lane.b32.xlu0 %v6055, 32
        %v6279 = vpop.permute.xlu0 %6278
        %v6312 = vsel %vm566, %v6089, %v6217
        %v6313 = vsel %vm566, %v6091, %v6219
        %v6314 = vsel %vm566, %v6093, %v6221
        %v6315 = vsel %vm566, %v6095, %v6223
        %v6316 = vsel %vm566, %v6097, %v6225
        %v6317 = vsel %vm566, %v6099, %v6227
        %v6318 = vsel %vm566, %v6101, %v6229
        %v6319 = vsel %vm566, %v6103, %v6231
        %v6320 = vsel %vm566, %v6105, %v6233
        %v6321 = vsel %vm566, %v6107, %v6235
        %v6322 = vsel %vm566, %v6109, %v6237
        %v6323 = vsel %vm566, %v6111, %v6239
        %v6324 = vsel %vm566, %v6113, %v6241
        %v6325 = vsel %vm566, %v6115, %v6243
        %v6326 = vsel %vm566, %v6117, %v6245
        %v6327 = vsel %vm566, %v6119, %v6247
        %v6328 = vsel %vm566, %v6121, %v6249
        %v6329 = vsel %vm566, %v6123, %v6251
        %v6330 = vsel %vm566, %v6125, %v6253
        %v6331 = vsel %vm566, %v6127, %v6255
        %v6332 = vsel %vm566, %v6129, %v6257
        %v6333 = vsel %vm566, %v6131, %v6259
        %v6334 = vsel %vm566, %v6133, %v6261
        %v6335 = vsel %vm566, %v6135, %v6263
        %v6336 = vsel %vm566, %v6137, %v6265
        %v6337 = vsel %vm566, %v6139, %v6267
        %v6338 = vsel %vm566, %v6141, %v6269
        %v6339 = vsel %vm566, %v6143, %v6271
        %v6340 = vsel %vm566, %v6145, %v6273
        %v6341 = vsel %vm566, %v6147, %v6275
        %v6342 = vsel %vm566, %v6149, %v6277
        %v6343 = vsel %vm566, %v6151, %v6279
        %v6344 = vpack.c.bf16 %v6313, %v6312
        %v6345 = vpack.c.bf16 %v6315, %v6314
        %v6346 = vpack.c.bf16 %v6317, %v6316
        %v6347 = vpack.c.bf16 %v6319, %v6318
        %v6348 = vpack.c.bf16 %v6321, %v6320
        %v6349 = vpack.c.bf16 %v6323, %v6322
        %v6350 = vpack.c.bf16 %v6325, %v6324
        %v6351 = vpack.c.bf16 %v6327, %v6326
        %v6352 = vpack.c.bf16 %v6329, %v6328
        %v6353 = vpack.c.bf16 %v6331, %v6330
        %v6354 = vpack.c.bf16 %v6333, %v6332
        %v6355 = vpack.c.bf16 %v6335, %v6334
        %v6356 = vpack.c.bf16 %v6337, %v6336
        %v6357 = vpack.c.bf16 %v6339, %v6338
        %v6358 = vpack.c.bf16 %v6341, %v6340
        %v6359 = vpack.c.bf16 %v6343, %v6342
        %v6360 = vld [vmem:[%s6] sm:$0xf]
        %v6361 = vld [vmem:[%s6 + $0x4] sm:$0xf]
        %v6362 = vld [vmem:[%s6 + $0x8] sm:$0xf]
        %v6363 = vld [vmem:[%s6 + $0xc] sm:$0xf]
        %v6364 = vld [vmem:[%s6 + $0x10] sm:$0xf]
        %v6365 = vld [vmem:[%s6 + $0x14] sm:$0xf]
        %v6366 = vld [vmem:[%s6 + $0x18] sm:$0xf]
        %v6367 = vld [vmem:[%s6 + $0x1c] sm:$0xf]
        %v6368 = vld [vmem:[%s7] sm:$0x1]
        %v6370 = vlaneseq
        %v6371 = vshrl.u32 %v6370, 7
        %v6372 = vsub.s32 0, %v6371
        %v6373 = vrot.slane %v6368, %v6372
        %v6383 = vunpack.c.l.b16 %v6360
        %v6384 = vunpack.c.l.b16 %v6361
        %v6385 = vunpack.c.l.b16 %v6362
        %v6386 = vunpack.c.l.b16 %v6363
        %v6387 = vunpack.c.l.b16 %v6364
        %v6388 = vunpack.c.l.b16 %v6365
        %v6389 = vunpack.c.l.b16 %v6366
        %v6390 = vunpack.c.l.b16 %v6367
        %v6391 = vpack.c.b16 %v6384, %v6383
        %v6392 = vpack.c.b16 %v6386, %v6385
        %v6393 = vpack.c.b16 %v6388, %v6387
        %v6394 = vpack.c.b16 %v6390, %v6389
        %vm6399 = vcmask 523264
        %v6401 = vsel %vm6399, %v6344, 0
        %v6404 = vsel %vm6399, %v6345, 0
        %v6407 = vsel %vm6399, %v6346, 0
        %v6410 = vsel %vm6399, %v6347, 0
        %v6413 = vsel %vm6399, %v6348, 0
        %v6416 = vsel %vm6399, %v6349, 0
        %v6419 = vsel %vm6399, %v6350, 0
        %v6422 = vsel %vm6399, %v6351, 0
        %v6425 = vsel %vm6399, %v6352, 0
        %v6428 = vsel %vm6399, %v6353, 0
        %v6431 = vsel %vm6399, %v6354, 0
        %v6434 = vsel %vm6399, %v6355, 0
        %v6437 = vsel %vm6399, %v6356, 0
        %v6440 = vsel %vm6399, %v6357, 0
        %v6443 = vsel %vm6399, %v6358, 0
        %v6446 = vsel %vm6399, %v6359, 0
        %6448 = vmatprep.subr.bf16.mxu0 0
        %6449 = vmatpush1.bf16.msra.mxu0 %v6391
        %6450 = vmatprep.subr.bf16.mxu0 0
        %6451 = vmatpush1.bf16.msra.mxu0 %v6392
        %6452 = vmatprep.subr.bf16.mxu0 0
        %6453 = vmatpush1.bf16.msra.mxu0 %v6393
        %6454 = vmatprep.subr.bf16.mxu0 0
        %6455 = vmatpush1.bf16.msra.mxu0 %v6394
        %6456 = vmatprep.subr.bf16.mxu0 0
        %6457 = vmatpush1.bf16.msra.mxu0 0
        %6458 = vmatprep.subr.bf16.mxu0 0
        %6459 = vmatpush1.bf16.msra.mxu0 0
        %6460 = vmatprep.subr.bf16.mxu0 0
        %6461 = vmatpush1.bf16.msra.mxu0 0
        %6462 = vmatprep.subr.bf16.mxu0 0
        %6463 = vmatpush1.bf16.msra.mxu0 0
        %6464 = vmatprep.subr.bf16.mxu0 0
        %6465 = vmatpush1.bf16.msra.mxu0 0
        %6466 = vmatprep.subr.bf16.mxu0 0
        %6467 = vmatpush1.bf16.msra.mxu0 0
        %6468 = vmatprep.subr.bf16.mxu0 0
        %6469 = vmatpush1.bf16.msra.mxu0 0
        %6470 = vmatprep.subr.bf16.mxu0 0
        %6471 = vmatpush1.bf16.msra.mxu0 0
        %6472 = vmatprep.subr.bf16.mxu0 0
        %6473 = vmatpush1.bf16.msra.mxu0 0
        %6474 = vmatprep.subr.bf16.mxu0 0
        %6475 = vmatpush1.bf16.msra.mxu0 0
        %6476 = vmatprep.subr.bf16.mxu0 0
        %6477 = vmatpush1.bf16.msra.mxu0 0
        %6478 = vmatprep.subr.bf16.mxu0 0
        %6479 = vmatpush1.bf16.msra.mxu0 0
        %6480 = vmatprep.mubr.bf16.mxu0 0
        %6481 = vmatmul.mubr.bf16.gmra.mrb[0].mxu0 %v6401
        %v6482 = vpop.f32.mrb[0].mxu0
        %v6483 = vadd.f32 %v6373, %v6482
        %v6484 = vpop.f32.mrb[0].mxu0
        %v6485 = vpop.f32.mrb[0].mxu0
        %v6486 = vadd.f32 %v6373, %v6485
        %v6487 = vpop.f32.mrb[0].mxu0
        %6488 = vmatprep.mubr.bf16.mxu0 0
        %6489 = vmatmul.mubr.bf16.gmra.mrb[0].mxu0 %v6404
        %v6490 = vpop.f32.mrb[0].mxu0
        %v6491 = vadd.f32 %v6373, %v6490
        %v6492 = vpop.f32.mrb[0].mxu0
        %v6493 = vpop.f32.mrb[0].mxu0
        %v6494 = vadd.f32 %v6373, %v6493
        %v6495 = vpop.f32.mrb[0].mxu0
        %6496 = vmatprep.mubr.bf16.mxu0 0
        %6497 = vmatmul.mubr.bf16.gmra.mrb[0].mxu0 %v6407
        %v6498 = vpop.f32.mrb[0].mxu0
        %v6499 = vadd.f32 %v6373, %v6498
        %v6500 = vpop.f32.mrb[0].mxu0
        %v6501 = vpop.f32.mrb[0].mxu0
        %v6502 = vadd.f32 %v6373, %v6501
        %v6503 = vpop.f32.mrb[0].mxu0
        %6504 = vmatprep.mubr.bf16.mxu0 0
        %6505 = vmatmul.mubr.bf16.gmra.mrb[0].mxu0 %v6410
        %v6506 = vpop.f32.mrb[0].mxu0
        %v6507 = vadd.f32 %v6373, %v6506
        %v6508 = vpop.f32.mrb[0].mxu0
        %v6509 = vpop.f32.mrb[0].mxu0
        %v6510 = vadd.f32 %v6373, %v6509
        %v6511 = vpop.f32.mrb[0].mxu0
        %6512 = vmatprep.mubr.bf16.mxu0 0
        %6513 = vmatmul.mubr.bf16.gmra.mrb[0].mxu0 %v6413
        %v6514 = vpop.f32.mrb[0].mxu0
        %v6515 = vadd.f32 %v6373, %v6514
        %v6516 = vpop.f32.mrb[0].mxu0
        %v6517 = vpop.f32.mrb[0].mxu0
        %v6518 = vadd.f32 %v6373, %v6517
        %v6519 = vpop.f32.mrb[0].mxu0
        %6520 = vmatprep.mubr.bf16.mxu0 0
        %6521 = vmatmul.mubr.bf16.gmra.mrb[0].mxu0 %v6416
        %v6522 = vpop.f32.mrb[0].mxu0
        %v6523 = vadd.f32 %v6373, %v6522
        %v6524 = vpop.f32.mrb[0].mxu0
        %v6525 = vpop.f32.mrb[0].mxu0
        %v6526 = vadd.f32 %v6373, %v6525
        %v6527 = vpop.f32.mrb[0].mxu0
        %6528 = vmatprep.mubr.bf16.mxu0 0
        %6529 = vmatmul.mubr.bf16.gmra.mrb[0].mxu0 %v6419
        %v6530 = vpop.f32.mrb[0].mxu0
        %v6531 = vadd.f32 %v6373, %v6530
        %v6532 = vpop.f32.mrb[0].mxu0
        %v6533 = vpop.f32.mrb[0].mxu0
        %v6534 = vadd.f32 %v6373, %v6533
        %v6535 = vpop.f32.mrb[0].mxu0
        %6536 = vmatprep.mubr.bf16.mxu0 0
        %6537 = vmatmul.mubr.bf16.gmra.mrb[0].mxu0 %v6422
        %v6538 = vpop.f32.mrb[0].mxu0
        %v6539 = vadd.f32 %v6373, %v6538
        %v6540 = vpop.f32.mrb[0].mxu0
        %v6541 = vpop.f32.mrb[0].mxu0
        %v6542 = vadd.f32 %v6373, %v6541
        %v6543 = vpop.f32.mrb[0].mxu0
        %6544 = vmatprep.mubr.bf16.mxu0 0
        %6545 = vmatmul.mubr.bf16.gmra.mrb[0].mxu0 %v6425
        %v6546 = vpop.f32.mrb[0].mxu0
        %v6547 = vadd.f32 %v6373, %v6546
        %v6548 = vpop.f32.mrb[0].mxu0
        %v6549 = vpop.f32.mrb[0].mxu0
        %v6550 = vadd.f32 %v6373, %v6549
        %v6551 = vpop.f32.mrb[0].mxu0
        %6552 = vmatprep.mubr.bf16.mxu0 0
        %6553 = vmatmul.mubr.bf16.gmra.mrb[0].mxu0 %v6428
        %v6554 = vpop.f32.mrb[0].mxu0
        %v6555 = vadd.f32 %v6373, %v6554
        %v6556 = vpop.f32.mrb[0].mxu0
        %v6557 = vpop.f32.mrb[0].mxu0
        %v6558 = vadd.f32 %v6373, %v6557
        %v6559 = vpop.f32.mrb[0].mxu0
        %6560 = vmatprep.mubr.bf16.mxu0 0
        %6561 = vmatmul.mubr.bf16.gmra.mrb[0].mxu0 %v6431
        %v6562 = vpop.f32.mrb[0].mxu0
        %v6563 = vadd.f32 %v6373, %v6562
        %v6564 = vpop.f32.mrb[0].mxu0
        %v6565 = vpop.f32.mrb[0].mxu0
        %v6566 = vadd.f32 %v6373, %v6565
        %v6567 = vpop.f32.mrb[0].mxu0
        %6568 = vmatprep.mubr.bf16.mxu0 0
        %6569 = vmatmul.mubr.bf16.gmra.mrb[0].mxu0 %v6434
        %v6570 = vpop.f32.mrb[0].mxu0
        %v6571 = vadd.f32 %v6373, %v6570
        %v6572 = vpop.f32.mrb[0].mxu0
        %v6573 = vpop.f32.mrb[0].mxu0
        %v6574 = vadd.f32 %v6373, %v6573
        %v6575 = vpop.f32.mrb[0].mxu0
        %6576 = vmatprep.mubr.bf16.mxu0 0
        %6577 = vmatmul.mubr.bf16.gmra.mrb[0].mxu0 %v6437
        %v6578 = vpop.f32.mrb[0].mxu0
        %v6579 = vadd.f32 %v6373, %v6578
        %v6580 = vpop.f32.mrb[0].mxu0
        %v6581 = vpop.f32.mrb[0].mxu0
        %v6582 = vadd.f32 %v6373, %v6581
        %v6583 = vpop.f32.mrb[0].mxu0
        %6584 = vmatprep.mubr.bf16.mxu0 0
        %6585 = vmatmul.mubr.bf16.gmra.mrb[0].mxu0 %v6440
        %v6586 = vpop.f32.mrb[0].mxu0
        %v6587 = vadd.f32 %v6373, %v6586
        %v6588 = vpop.f32.mrb[0].mxu0
        %v6589 = vpop.f32.mrb[0].mxu0
        %v6590 = vadd.f32 %v6373, %v6589
        %v6591 = vpop.f32.mrb[0].mxu0
        %6592 = vmatprep.mubr.bf16.mxu0 0
        %6593 = vmatmul.mubr.bf16.gmra.mrb[0].mxu0 %v6443
        %v6594 = vpop.f32.mrb[0].mxu0
        %v6595 = vadd.f32 %v6373, %v6594
        %v6596 = vpop.f32.mrb[0].mxu0
        %v6597 = vpop.f32.mrb[0].mxu0
        %v6598 = vadd.f32 %v6373, %v6597
        %v6599 = vpop.f32.mrb[0].mxu0
        %6600 = vmatprep.mubr.bf16.mxu0 0
        %6601 = vmatmul.mubr.bf16.gmra.mrb[0].mxu0 %v6446
        %v6602 = vpop.f32.mrb[0].mxu0
        %v6603 = vadd.f32 %v6373, %v6602
        %v6604 = vpop.f32.mrb[0].mxu0
        %v6605 = vpop.f32.mrb[0].mxu0
        %v6606 = vadd.f32 %v6373, %v6605
        %v6607 = vpop.f32.mrb[0].mxu0
        %6608 = vdwg.mxu0
        %v6609 = vadd.f32 %v6483, %v650
        %v6610 = vadd.f32 %v6486, %v654
        %v6611 = vadd.f32 %v6491, %v660
        %v6612 = vadd.f32 %v6494, %v664
        %v6613 = vadd.f32 %v6499, %v670
        %v6614 = vadd.f32 %v6502, %v674
        %v6615 = vadd.f32 %v6507, %v680
        %v6616 = vadd.f32 %v6510, %v684
        %v6617 = vadd.f32 %v6515, %v690
        %v6618 = vadd.f32 %v6518, %v694
        %v6619 = vadd.f32 %v6523, %v700
        %v6620 = vadd.f32 %v6526, %v704
        %v6621 = vadd.f32 %v6531, %v710
        %v6622 = vadd.f32 %v6534, %v714
        %v6623 = vadd.f32 %v6539, %v720
        %v6624 = vadd.f32 %v6542, %v724
        %v6625 = vadd.f32 %v6547, %v730
        %v6626 = vadd.f32 %v6550, %v734
        %v6627 = vadd.f32 %v6555, %v740
        %v6628 = vadd.f32 %v6558, %v744
        %v6629 = vadd.f32 %v6563, %v750
        %v6630 = vadd.f32 %v6566, %v754
        %v6631 = vadd.f32 %v6571, %v760
        %v6632 = vadd.f32 %v6574, %v764
        %v6633 = vadd.f32 %v6579, %v770
        %v6634 = vadd.f32 %v6582, %v774
        %v6635 = vadd.f32 %v6587, %v780
        %v6636 = vadd.f32 %v6590, %v784
        %v6637 = vadd.f32 %v6595, %v790
        %v6638 = vadd.f32 %v6598, %v794
        %v6639 = vadd.f32 %v6603, %v800
        %v6640 = vadd.f32 %v6606, %v804
        %v6641 = vxor.u32 %v6609, 2147483648
        %v6642 = vxor.u32 %v6610, 2147483648
        %v6643 = vxor.u32 %v6611, 2147483648
        %v6644 = vxor.u32 %v6612, 2147483648
        %v6645 = vxor.u32 %v6613, 2147483648
        %v6646 = vxor.u32 %v6614, 2147483648
        %v6647 = vxor.u32 %v6615, 2147483648
        %v6648 = vxor.u32 %v6616, 2147483648
        %v6649 = vxor.u32 %v6617, 2147483648
        %v6650 = vxor.u32 %v6618, 2147483648
        %v6651 = vxor.u32 %v6619, 2147483648
        %v6652 = vxor.u32 %v6620, 2147483648
        %v6653 = vxor.u32 %v6621, 2147483648
        %v6654 = vxor.u32 %v6622, 2147483648
        %v6655 = vxor.u32 %v6623, 2147483648
        %v6656 = vxor.u32 %v6624, 2147483648
        %v6657 = vxor.u32 %v6625, 2147483648
        %v6658 = vxor.u32 %v6626, 2147483648
        %v6659 = vxor.u32 %v6627, 2147483648
        %v6660 = vxor.u32 %v6628, 2147483648
        %v6661 = vxor.u32 %v6629, 2147483648
        %v6662 = vxor.u32 %v6630, 2147483648
        %v6663 = vxor.u32 %v6631, 2147483648
        %v6664 = vxor.u32 %v6632, 2147483648
        %v6665 = vxor.u32 %v6633, 2147483648
        %v6666 = vxor.u32 %v6634, 2147483648
        %v6667 = vxor.u32 %v6635, 2147483648
        %v6668 = vxor.u32 %v6636, 2147483648
        %v6669 = vxor.u32 %v6637, 2147483648
        %v6670 = vxor.u32 %v6638, 2147483648
        %v6671 = vxor.u32 %v6639, 2147483648
        %v6672 = vxor.u32 %v6640, 2147483648
        %v6673 = vmul.f32 %v6641, 1.442695
        %v6674 = vpow.pop %v6673
        %v6675 = vmul.f32 %v6642, 1.442695
        %v6676 = vpow.pop %v6675
        %v6677 = vmul.f32 %v6643, 1.442695
        %v6678 = vpow.pop %v6677
        %v6679 = vmul.f32 %v6644, 1.442695
        %v6680 = vpow.pop %v6679
        %v6681 = vmul.f32 %v6645, 1.442695
        %v6682 = vpow.pop %v6681
        %v6683 = vmul.f32 %v6646, 1.442695
        %v6684 = vpow.pop %v6683
        %v6685 = vmul.f32 %v6647, 1.442695
        %v6686 = vpow.pop %v6685
        %v6687 = vmul.f32 %v6648, 1.442695
        %v6688 = vpow.pop %v6687
        %v6689 = vmul.f32 %v6649, 1.442695
        %v6690 = vpow.pop %v6689
        %v6691 = vmul.f32 %v6650, 1.442695
        %v6692 = vpow.pop %v6691
        %v6693 = vmul.f32 %v6651, 1.442695
        %v6694 = vpow.pop %v6693
        %v6695 = vmul.f32 %v6652, 1.442695
        %v6696 = vpow.pop %v6695
        %v6697 = vmul.f32 %v6653, 1.442695
        %v6698 = vpow.pop %v6697
        %v6699 = vmul.f32 %v6654, 1.442695
        %v6700 = vpow.pop %v6699
        %v6701 = vmul.f32 %v6655, 1.442695
        %v6702 = vpow.pop %v6701
        %v6703 = vmul.f32 %v6656, 1.442695
        %v6704 = vpow.pop %v6703
        %v6705 = vmul.f32 %v6657, 1.442695
        %v6706 = vpow.pop %v6705
        %v6707 = vmul.f32 %v6658, 1.442695
        %v6708 = vpow.pop %v6707
        %v6709 = vmul.f32 %v6659, 1.442695
        %v6710 = vpow.pop %v6709
        %v6711 = vmul.f32 %v6660, 1.442695
        %v6712 = vpow.pop %v6711
        %v6713 = vmul.f32 %v6661, 1.442695
        %v6714 = vpow.pop %v6713
        %v6715 = vmul.f32 %v6662, 1.442695
        %v6716 = vpow.pop %v6715
        %v6717 = vmul.f32 %v6663, 1.442695
        %v6718 = vpow.pop %v6717
        %v6719 = vmul.f32 %v6664, 1.442695
        %v6720 = vpow.pop %v6719
        %v6721 = vmul.f32 %v6665, 1.442695
        %v6722 = vpow.pop %v6721
        %v6723 = vmul.f32 %v6666, 1.442695
        %v6724 = vpow.pop %v6723
        %v6725 = vmul.f32 %v6667, 1.442695
        %v6726 = vpow.pop %v6725
        %v6727 = vmul.f32 %v6668, 1.442695
        %v6728 = vpow.pop %v6727
        %v6729 = vmul.f32 %v6669, 1.442695
        %v6730 = vpow.pop %v6729
        %v6731 = vmul.f32 %v6670, 1.442695
        %v6732 = vpow.pop %v6731
        %v6733 = vmul.f32 %v6671, 1.442695
        %v6734 = vpow.pop %v6733
        %v6735 = vmul.f32 %v6672, 1.442695
        %v6736 = vpow.pop %v6735
        %v6737 = vadd.f32 %v6674, 1.0
        %v6738 = vadd.f32 %v6676, 1.0
        %v6739 = vadd.f32 %v6678, 1.0
        %v6740 = vadd.f32 %v6680, 1.0
        %v6741 = vadd.f32 %v6682, 1.0
        %v6742 = vadd.f32 %v6684, 1.0
        %v6743 = vadd.f32 %v6686, 1.0
        %v6744 = vadd.f32 %v6688, 1.0
        %v6745 = vadd.f32 %v6690, 1.0
        %v6746 = vadd.f32 %v6692, 1.0
        %v6747 = vadd.f32 %v6694, 1.0
        %v6748 = vadd.f32 %v6696, 1.0
        %v6749 = vadd.f32 %v6698, 1.0
        %v6750 = vadd.f32 %v6700, 1.0
        %v6751 = vadd.f32 %v6702, 1.0
        %v6752 = vadd.f32 %v6704, 1.0
        %v6753 = vadd.f32 %v6706, 1.0
        %v6754 = vadd.f32 %v6708, 1.0
        %v6755 = vadd.f32 %v6710, 1.0
        %v6756 = vadd.f32 %v6712, 1.0
        %v6757 = vadd.f32 %v6714, 1.0
        %v6758 = vadd.f32 %v6716, 1.0
        %v6759 = vadd.f32 %v6718, 1.0
        %v6760 = vadd.f32 %v6720, 1.0
        %v6761 = vadd.f32 %v6722, 1.0
        %v6762 = vadd.f32 %v6724, 1.0
        %v6763 = vadd.f32 %v6726, 1.0
        %v6764 = vadd.f32 %v6728, 1.0
        %v6765 = vadd.f32 %v6730, 1.0
        %v6766 = vadd.f32 %v6732, 1.0
        %v6767 = vadd.f32 %v6734, 1.0
        %v6768 = vadd.f32 %v6736, 1.0
        %v6769 = vrcp.pop %v6737
        %v6770 = vmul.f32 1.0, %v6769
        %v6771 = vrcp.pop %v6738
        %v6772 = vmul.f32 1.0, %v6771
        %v6773 = vrcp.pop %v6739
        %v6774 = vmul.f32 1.0, %v6773
        %v6775 = vrcp.pop %v6740
        %v6776 = vmul.f32 1.0, %v6775
        %v6777 = vrcp.pop %v6741
        %v6778 = vmul.f32 1.0, %v6777
        %v6779 = vrcp.pop %v6742
        %v6780 = vmul.f32 1.0, %v6779
        %v6781 = vrcp.pop %v6743
        %v6782 = vmul.f32 1.0, %v6781
        %v6783 = vrcp.pop %v6744
        %v6784 = vmul.f32 1.0, %v6783
        %v6785 = vrcp.pop %v6745
        %v6786 = vmul.f32 1.0, %v6785
        %v6787 = vrcp.pop %v6746
        %v6788 = vmul.f32 1.0, %v6787
        %v6789 = vrcp.pop %v6747
        %v6790 = vmul.f32 1.0, %v6789
        %v6791 = vrcp.pop %v6748
        %v6792 = vmul.f32 1.0, %v6791
        %v6793 = vrcp.pop %v6749
        %v6794 = vmul.f32 1.0, %v6793
        %v6795 = vrcp.pop %v6750
        %v6796 = vmul.f32 1.0, %v6795
        %v6797 = vrcp.pop %v6751
        %v6798 = vmul.f32 1.0, %v6797
        %v6799 = vrcp.pop %v6752
        %v6800 = vmul.f32 1.0, %v6799
        %v6801 = vrcp.pop %v6753
        %v6802 = vmul.f32 1.0, %v6801
        %v6803 = vrcp.pop %v6754
        %v6804 = vmul.f32 1.0, %v6803
        %v6805 = vrcp.pop %v6755
        %v6806 = vmul.f32 1.0, %v6805
        %v6807 = vrcp.pop %v6756
        %v6808 = vmul.f32 1.0, %v6807
        %v6809 = vrcp.pop %v6757
        %v6810 = vmul.f32 1.0, %v6809
        %v6811 = vrcp.pop %v6758
        %v6812 = vmul.f32 1.0, %v6811
        %v6813 = vrcp.pop %v6759
        %v6814 = vmul.f32 1.0, %v6813
        %v6815 = vrcp.pop %v6760
        %v6816 = vmul.f32 1.0, %v6815
        %v6817 = vrcp.pop %v6761
        %v6818 = vmul.f32 1.0, %v6817
        %v6819 = vrcp.pop %v6762
        %v6820 = vmul.f32 1.0, %v6819
        %v6821 = vrcp.pop %v6763
        %v6822 = vmul.f32 1.0, %v6821
        %v6823 = vrcp.pop %v6764
        %v6824 = vmul.f32 1.0, %v6823
        %v6825 = vrcp.pop %v6765
        %v6826 = vmul.f32 1.0, %v6825
        %v6827 = vrcp.pop %v6766
        %v6828 = vmul.f32 1.0, %v6827
        %v6829 = vrcp.pop %v6767
        %v6830 = vmul.f32 1.0, %v6829
        %v6831 = vrcp.pop %v6768
        %v6832 = vmul.f32 1.0, %v6831
        %6865 = vrot.lane.b32.xlu0 %v650, 64
        %v6866 = vpop.permute.xlu0 %6865
        %6867 = vrot.lane.b32.xlu0 %v654, 64
        %v6868 = vpop.permute.xlu0 %6867
        %6869 = vrot.lane.b32.xlu0 %v660, 64
        %v6870 = vpop.permute.xlu0 %6869
        %6871 = vrot.lane.b32.xlu0 %v664, 64
        %v6872 = vpop.permute.xlu0 %6871
        %6873 = vrot.lane.b32.xlu0 %v670, 64
        %v6874 = vpop.permute.xlu0 %6873
        %6875 = vrot.lane.b32.xlu0 %v674, 64
        %v6876 = vpop.permute.xlu0 %6875
        %6877 = vrot.lane.b32.xlu0 %v680, 64
        %v6878 = vpop.permute.xlu0 %6877
        %6879 = vrot.lane.b32.xlu0 %v684, 64
        %v6880 = vpop.permute.xlu0 %6879
        %6881 = vrot.lane.b32.xlu0 %v690, 64
        %v6882 = vpop.permute.xlu0 %6881
        %6883 = vrot.lane.b32.xlu0 %v694, 64
        %v6884 = vpop.permute.xlu0 %6883
        %6885 = vrot.lane.b32.xlu0 %v700, 64
        %v6886 = vpop.permute.xlu0 %6885
        %6887 = vrot.lane.b32.xlu0 %v704, 64
        %v6888 = vpop.permute.xlu0 %6887
        %6889 = vrot.lane.b32.xlu0 %v710, 64
        %v6890 = vpop.permute.xlu0 %6889
        %6891 = vrot.lane.b32.xlu0 %v714, 64
        %v6892 = vpop.permute.xlu0 %6891
        %6893 = vrot.lane.b32.xlu0 %v720, 64
        %v6894 = vpop.permute.xlu0 %6893
        %6895 = vrot.lane.b32.xlu0 %v724, 64
        %v6896 = vpop.permute.xlu0 %6895
        %6897 = vrot.lane.b32.xlu0 %v730, 64
        %v6898 = vpop.permute.xlu0 %6897
        %6899 = vrot.lane.b32.xlu0 %v734, 64
        %v6900 = vpop.permute.xlu0 %6899
        %6901 = vrot.lane.b32.xlu0 %v740, 64
        %v6902 = vpop.permute.xlu0 %6901
        %6903 = vrot.lane.b32.xlu0 %v744, 64
        %v6904 = vpop.permute.xlu0 %6903
        %6905 = vrot.lane.b32.xlu0 %v750, 64
        %v6906 = vpop.permute.xlu0 %6905
        %6907 = vrot.lane.b32.xlu0 %v754, 64
        %v6908 = vpop.permute.xlu0 %6907
        %6909 = vrot.lane.b32.xlu0 %v760, 64
        %v6910 = vpop.permute.xlu0 %6909
        %6911 = vrot.lane.b32.xlu0 %v764, 64
        %v6912 = vpop.permute.xlu0 %6911
        %6913 = vrot.lane.b32.xlu0 %v770, 64
        %v6914 = vpop.permute.xlu0 %6913
        %6915 = vrot.lane.b32.xlu0 %v774, 64
        %v6916 = vpop.permute.xlu0 %6915
        %6917 = vrot.lane.b32.xlu0 %v780, 64
        %v6918 = vpop.permute.xlu0 %6917
        %6919 = vrot.lane.b32.xlu0 %v784, 64
        %v6920 = vpop.permute.xlu0 %6919
        %6921 = vrot.lane.b32.xlu0 %v790, 64
        %v6922 = vpop.permute.xlu0 %6921
        %6923 = vrot.lane.b32.xlu0 %v794, 64
        %v6924 = vpop.permute.xlu0 %6923
        %6925 = vrot.lane.b32.xlu0 %v800, 64
        %v6926 = vpop.permute.xlu0 %6925
        %6927 = vrot.lane.b32.xlu0 %v804, 64
        %v6928 = vpop.permute.xlu0 %6927
        %v6961 = vmul.f32 %v6770, %v6866
        %v6962 = vmul.f32 %v6772, %v6868
        %v6963 = vmul.f32 %v6774, %v6870
        %v6964 = vmul.f32 %v6776, %v6872
        %v6965 = vmul.f32 %v6778, %v6874
        %v6966 = vmul.f32 %v6780, %v6876
        %v6967 = vmul.f32 %v6782, %v6878
        %v6968 = vmul.f32 %v6784, %v6880
        %v6969 = vmul.f32 %v6786, %v6882
        %v6970 = vmul.f32 %v6788, %v6884
        %v6971 = vmul.f32 %v6790, %v6886
        %v6972 = vmul.f32 %v6792, %v6888
        %v6973 = vmul.f32 %v6794, %v6890
        %v6974 = vmul.f32 %v6796, %v6892
        %v6975 = vmul.f32 %v6798, %v6894
        %v6976 = vmul.f32 %v6800, %v6896
        %v6977 = vmul.f32 %v6802, %v6898
        %v6978 = vmul.f32 %v6804, %v6900
        %v6979 = vmul.f32 %v6806, %v6902
        %v6980 = vmul.f32 %v6808, %v6904
        %v6981 = vmul.f32 %v6810, %v6906
        %v6982 = vmul.f32 %v6812, %v6908
        %v6983 = vmul.f32 %v6814, %v6910
        %v6984 = vmul.f32 %v6816, %v6912
        %v6985 = vmul.f32 %v6818, %v6914
        %v6986 = vmul.f32 %v6820, %v6916
        %v6987 = vmul.f32 %v6822, %v6918
        %v6988 = vmul.f32 %v6824, %v6920
        %v6989 = vmul.f32 %v6826, %v6922
        %v6990 = vmul.f32 %v6828, %v6924
        %v6991 = vmul.f32 %v6830, %v6926
        %v6992 = vmul.f32 %v6832, %v6928
        %7025 = vrot.lane.b32.xlu0 %v6961, 64
        %v7026 = vpop.permute.xlu0 %7025
        %7027 = vrot.lane.b32.xlu0 %v6962, 64
        %v7028 = vpop.permute.xlu0 %7027
        %7029 = vrot.lane.b32.xlu0 %v6963, 64
        %v7030 = vpop.permute.xlu0 %7029
        %7031 = vrot.lane.b32.xlu0 %v6964, 64
        %v7032 = vpop.permute.xlu0 %7031
        %7033 = vrot.lane.b32.xlu0 %v6965, 64
        %v7034 = vpop.permute.xlu0 %7033
        %7035 = vrot.lane.b32.xlu0 %v6966, 64
        %v7036 = vpop.permute.xlu0 %7035
        %7037 = vrot.lane.b32.xlu0 %v6967, 64
        %v7038 = vpop.permute.xlu0 %7037
        %7039 = vrot.lane.b32.xlu0 %v6968, 64
        %v7040 = vpop.permute.xlu0 %7039
        %7041 = vrot.lane.b32.xlu0 %v6969, 64
        %v7042 = vpop.permute.xlu0 %7041
        %7043 = vrot.lane.b32.xlu0 %v6970, 64
        %v7044 = vpop.permute.xlu0 %7043
        %7045 = vrot.lane.b32.xlu0 %v6971, 64
        %v7046 = vpop.permute.xlu0 %7045
        %7047 = vrot.lane.b32.xlu0 %v6972, 64
        %v7048 = vpop.permute.xlu0 %7047
        %7049 = vrot.lane.b32.xlu0 %v6973, 64
        %v7050 = vpop.permute.xlu0 %7049
        %7051 = vrot.lane.b32.xlu0 %v6974, 64
        %v7052 = vpop.permute.xlu0 %7051
        %7053 = vrot.lane.b32.xlu0 %v6975, 64
        %v7054 = vpop.permute.xlu0 %7053
        %7055 = vrot.lane.b32.xlu0 %v6976, 64
        %v7056 = vpop.permute.xlu0 %7055
        %7057 = vrot.lane.b32.xlu0 %v6977, 64
        %v7058 = vpop.permute.xlu0 %7057
        %7059 = vrot.lane.b32.xlu0 %v6978, 64
        %v7060 = vpop.permute.xlu0 %7059
        %7061 = vrot.lane.b32.xlu0 %v6979, 64
        %v7062 = vpop.permute.xlu0 %7061
        %7063 = vrot.lane.b32.xlu0 %v6980, 64
        %v7064 = vpop.permute.xlu0 %7063
        %7065 = vrot.lane.b32.xlu0 %v6981, 64
        %v7066 = vpop.permute.xlu0 %7065
        %7067 = vrot.lane.b32.xlu0 %v6982, 64
        %v7068 = vpop.permute.xlu0 %7067
        %7069 = vrot.lane.b32.xlu0 %v6983, 64
        %v7070 = vpop.permute.xlu0 %7069
        %7071 = vrot.lane.b32.xlu0 %v6984, 64
        %v7072 = vpop.permute.xlu0 %7071
        %7073 = vrot.lane.b32.xlu0 %v6985, 64
        %v7074 = vpop.permute.xlu0 %7073
        %7075 = vrot.lane.b32.xlu0 %v6986, 64
        %v7076 = vpop.permute.xlu0 %7075
        %7077 = vrot.lane.b32.xlu0 %v6987, 64
        %v7078 = vpop.permute.xlu0 %7077
        %7079 = vrot.lane.b32.xlu0 %v6988, 64
        %v7080 = vpop.permute.xlu0 %7079
        %7081 = vrot.lane.b32.xlu0 %v6989, 64
        %v7082 = vpop.permute.xlu0 %7081
        %7083 = vrot.lane.b32.xlu0 %v6990, 64
        %v7084 = vpop.permute.xlu0 %7083
        %7085 = vrot.lane.b32.xlu0 %v6991, 64
        %v7086 = vpop.permute.xlu0 %7085
        %7087 = vrot.lane.b32.xlu0 %v6992, 64
        %v7088 = vpop.permute.xlu0 %7087
        %v7121 = vadd.f32 %v6483, %v7026
        %v7122 = vadd.f32 %v6486, %v7028
        %v7123 = vadd.f32 %v6491, %v7030
        %v7124 = vadd.f32 %v6494, %v7032
        %v7125 = vadd.f32 %v6499, %v7034
        %v7126 = vadd.f32 %v6502, %v7036
        %v7127 = vadd.f32 %v6507, %v7038
        %v7128 = vadd.f32 %v6510, %v7040
        %v7129 = vadd.f32 %v6515, %v7042
        %v7130 = vadd.f32 %v6518, %v7044
        %v7131 = vadd.f32 %v6523, %v7046
        %v7132 = vadd.f32 %v6526, %v7048
        %v7133 = vadd.f32 %v6531, %v7050
        %v7134 = vadd.f32 %v6534, %v7052
        %v7135 = vadd.f32 %v6539, %v7054
        %v7136 = vadd.f32 %v6542, %v7056
        %v7137 = vadd.f32 %v6547, %v7058
        %v7138 = vadd.f32 %v6550, %v7060
        %v7139 = vadd.f32 %v6555, %v7062
        %v7140 = vadd.f32 %v6558, %v7064
        %v7141 = vadd.f32 %v6563, %v7066
        %v7142 = vadd.f32 %v6566, %v7068
        %v7143 = vadd.f32 %v6571, %v7070
        %v7144 = vadd.f32 %v6574, %v7072
        %v7145 = vadd.f32 %v6579, %v7074
        %v7146 = vadd.f32 %v6582, %v7076
        %v7147 = vadd.f32 %v6587, %v7078
        %v7148 = vadd.f32 %v6590, %v7080
        %v7149 = vadd.f32 %v6595, %v7082
        %v7150 = vadd.f32 %v6598, %v7084
        %v7151 = vadd.f32 %v6603, %v7086
        %v7152 = vadd.f32 %v6606, %v7088
        %v7153 = vtanh.pop %v7121
        %v7154 = vtanh.pop %v7122
        %v7155 = vtanh.pop %v7123
        %v7156 = vtanh.pop %v7124
        %v7157 = vtanh.pop %v7125
        %v7158 = vtanh.pop %v7126
        %v7159 = vtanh.pop %v7127
        %v7160 = vtanh.pop %v7128
        %v7161 = vtanh.pop %v7129
        %v7162 = vtanh.pop %v7130
        %v7163 = vtanh.pop %v7131
        %v7164 = vtanh.pop %v7132
        %v7165 = vtanh.pop %v7133
        %v7166 = vtanh.pop %v7134
        %v7167 = vtanh.pop %v7135
        %v7168 = vtanh.pop %v7136
        %v7169 = vtanh.pop %v7137
        %v7170 = vtanh.pop %v7138
        %v7171 = vtanh.pop %v7139
        %v7172 = vtanh.pop %v7140
        %v7173 = vtanh.pop %v7141
        %v7174 = vtanh.pop %v7142
        %v7175 = vtanh.pop %v7143
        %v7176 = vtanh.pop %v7144
        %v7177 = vtanh.pop %v7145
        %v7178 = vtanh.pop %v7146
        %v7179 = vtanh.pop %v7147
        %v7180 = vtanh.pop %v7148
        %v7181 = vtanh.pop %v7149
        %v7182 = vtanh.pop %v7150
        %v7183 = vtanh.pop %v7151
        %v7184 = vtanh.pop %v7152
        %v7185 = vsub.f32 1.0, %v6770
        %v7186 = vsub.f32 1.0, %v6772
        %v7187 = vsub.f32 1.0, %v6774
        %v7188 = vsub.f32 1.0, %v6776
        %v7189 = vsub.f32 1.0, %v6778
        %v7190 = vsub.f32 1.0, %v6780
        %v7191 = vsub.f32 1.0, %v6782
        %v7192 = vsub.f32 1.0, %v6784
        %v7193 = vsub.f32 1.0, %v6786
        %v7194 = vsub.f32 1.0, %v6788
        %v7195 = vsub.f32 1.0, %v6790
        %v7196 = vsub.f32 1.0, %v6792
        %v7197 = vsub.f32 1.0, %v6794
        %v7198 = vsub.f32 1.0, %v6796
        %v7199 = vsub.f32 1.0, %v6798
        %v7200 = vsub.f32 1.0, %v6800
        %v7201 = vsub.f32 1.0, %v6802
        %v7202 = vsub.f32 1.0, %v6804
        %v7203 = vsub.f32 1.0, %v6806
        %v7204 = vsub.f32 1.0, %v6808
        %v7205 = vsub.f32 1.0, %v6810
        %v7206 = vsub.f32 1.0, %v6812
        %v7207 = vsub.f32 1.0, %v6814
        %v7208 = vsub.f32 1.0, %v6816
        %v7209 = vsub.f32 1.0, %v6818
        %v7210 = vsub.f32 1.0, %v6820
        %v7211 = vsub.f32 1.0, %v6822
        %v7212 = vsub.f32 1.0, %v6824
        %v7213 = vsub.f32 1.0, %v6826
        %v7214 = vsub.f32 1.0, %v6828
        %v7215 = vsub.f32 1.0, %v6830
        %v7216 = vsub.f32 1.0, %v6832
        %7249 = vrot.lane.b32.xlu0 %v7153, 96
        %v7250 = vpop.permute.xlu0 %7249
        %7251 = vrot.lane.b32.xlu0 %v7154, 96
        %v7252 = vpop.permute.xlu0 %7251
        %7253 = vrot.lane.b32.xlu0 %v7155, 96
        %v7254 = vpop.permute.xlu0 %7253
        %7255 = vrot.lane.b32.xlu0 %v7156, 96
        %v7256 = vpop.permute.xlu0 %7255
        %7257 = vrot.lane.b32.xlu0 %v7157, 96
        %v7258 = vpop.permute.xlu0 %7257
        %7259 = vrot.lane.b32.xlu0 %v7158, 96
        %v7260 = vpop.permute.xlu0 %7259
        %7261 = vrot.lane.b32.xlu0 %v7159, 96
        %v7262 = vpop.permute.xlu0 %7261
        %7263 = vrot.lane.b32.xlu0 %v7160, 96
        %v7264 = vpop.permute.xlu0 %7263
        %7265 = vrot.lane.b32.xlu0 %v7161, 96
        %v7266 = vpop.permute.xlu0 %7265
        %7267 = vrot.lane.b32.xlu0 %v7162, 96
        %v7268 = vpop.permute.xlu0 %7267
        %7269 = vrot.lane.b32.xlu0 %v7163, 96
        %v7270 = vpop.permute.xlu0 %7269
        %7271 = vrot.lane.b32.xlu0 %v7164, 96
        %v7272 = vpop.permute.xlu0 %7271
        %7273 = vrot.lane.b32.xlu0 %v7165, 96
        %v7274 = vpop.permute.xlu0 %7273
        %7275 = vrot.lane.b32.xlu0 %v7166, 96
        %v7276 = vpop.permute.xlu0 %7275
        %7277 = vrot.lane.b32.xlu0 %v7167, 96
        %v7278 = vpop.permute.xlu0 %7277
        %7279 = vrot.lane.b32.xlu0 %v7168, 96
        %v7280 = vpop.permute.xlu0 %7279
        %7281 = vrot.lane.b32.xlu0 %v7169, 96
        %v7282 = vpop.permute.xlu0 %7281
        %7283 = vrot.lane.b32.xlu0 %v7170, 96
        %v7284 = vpop.permute.xlu0 %7283
        %7285 = vrot.lane.b32.xlu0 %v7171, 96
        %v7286 = vpop.permute.xlu0 %7285
        %7287 = vrot.lane.b32.xlu0 %v7172, 96
        %v7288 = vpop.permute.xlu0 %7287
        %7289 = vrot.lane.b32.xlu0 %v7173, 96
        %v7290 = vpop.permute.xlu0 %7289
        %7291 = vrot.lane.b32.xlu0 %v7174, 96
        %v7292 = vpop.permute.xlu0 %7291
        %7293 = vrot.lane.b32.xlu0 %v7175, 96
        %v7294 = vpop.permute.xlu0 %7293
        %7295 = vrot.lane.b32.xlu0 %v7176, 96
        %v7296 = vpop.permute.xlu0 %7295
        %7297 = vrot.lane.b32.xlu0 %v7177, 96
        %v7298 = vpop.permute.xlu0 %7297
        %7299 = vrot.lane.b32.xlu0 %v7178, 96
        %v7300 = vpop.permute.xlu0 %7299
        %7301 = vrot.lane.b32.xlu0 %v7179, 96
        %v7302 = vpop.permute.xlu0 %7301
        %7303 = vrot.lane.b32.xlu0 %v7180, 96
        %v7304 = vpop.permute.xlu0 %7303
        %7305 = vrot.lane.b32.xlu0 %v7181, 96
        %v7306 = vpop.permute.xlu0 %7305
        %7307 = vrot.lane.b32.xlu0 %v7182, 96
        %v7308 = vpop.permute.xlu0 %7307
        %7309 = vrot.lane.b32.xlu0 %v7183, 96
        %v7310 = vpop.permute.xlu0 %7309
        %7311 = vrot.lane.b32.xlu0 %v7184, 96
        %v7312 = vpop.permute.xlu0 %7311
        %v7345 = vmul.f32 %v7185, %v7250
        %v7346 = vmul.f32 %v7186, %v7252
        %v7347 = vmul.f32 %v7187, %v7254
        %v7348 = vmul.f32 %v7188, %v7256
        %v7349 = vmul.f32 %v7189, %v7258
        %v7350 = vmul.f32 %v7190, %v7260
        %v7351 = vmul.f32 %v7191, %v7262
        %v7352 = vmul.f32 %v7192, %v7264
        %v7353 = vmul.f32 %v7193, %v7266
        %v7354 = vmul.f32 %v7194, %v7268
        %v7355 = vmul.f32 %v7195, %v7270
        %v7356 = vmul.f32 %v7196, %v7272
        %v7357 = vmul.f32 %v7197, %v7274
        %v7358 = vmul.f32 %v7198, %v7276
        %v7359 = vmul.f32 %v7199, %v7278
        %v7360 = vmul.f32 %v7200, %v7280
        %v7361 = vmul.f32 %v7201, %v7282
        %v7362 = vmul.f32 %v7202, %v7284
        %v7363 = vmul.f32 %v7203, %v7286
        %v7364 = vmul.f32 %v7204, %v7288
        %v7365 = vmul.f32 %v7205, %v7290
        %v7366 = vmul.f32 %v7206, %v7292
        %v7367 = vmul.f32 %v7207, %v7294
        %v7368 = vmul.f32 %v7208, %v7296
        %v7369 = vmul.f32 %v7209, %v7298
        %v7370 = vmul.f32 %v7210, %v7300
        %v7371 = vmul.f32 %v7211, %v7302
        %v7372 = vmul.f32 %v7212, %v7304
        %v7373 = vmul.f32 %v7213, %v7306
        %v7374 = vmul.f32 %v7214, %v7308
        %v7375 = vmul.f32 %v7215, %v7310
        %v7376 = vmul.f32 %v7216, %v7312
        %7409 = vrot.lane.b32.xlu0 %v482, 32
        %v7410 = vpop.permute.xlu0 %7409
        %7411 = vrot.lane.b32.xlu0 %v483, 32
        %v7412 = vpop.permute.xlu0 %7411
        %7413 = vrot.lane.b32.xlu0 %v484, 32
        %v7414 = vpop.permute.xlu0 %7413
        %7415 = vrot.lane.b32.xlu0 %v485, 32
        %v7416 = vpop.permute.xlu0 %7415
        %7417 = vrot.lane.b32.xlu0 %v486, 32
        %v7418 = vpop.permute.xlu0 %7417
        %7419 = vrot.lane.b32.xlu0 %v487, 32
        %v7420 = vpop.permute.xlu0 %7419
        %7421 = vrot.lane.b32.xlu0 %v488, 32
        %v7422 = vpop.permute.xlu0 %7421
        %7423 = vrot.lane.b32.xlu0 %v489, 32
        %v7424 = vpop.permute.xlu0 %7423
        %7425 = vrot.lane.b32.xlu0 %v490, 32
        %v7426 = vpop.permute.xlu0 %7425
        %7427 = vrot.lane.b32.xlu0 %v491, 32
        %v7428 = vpop.permute.xlu0 %7427
        %7429 = vrot.lane.b32.xlu0 %v492, 32
        %v7430 = vpop.permute.xlu0 %7429
        %7431 = vrot.lane.b32.xlu0 %v493, 32
        %v7432 = vpop.permute.xlu0 %7431
        %7433 = vrot.lane.b32.xlu0 %v494, 32
        %v7434 = vpop.permute.xlu0 %7433
        %7435 = vrot.lane.b32.xlu0 %v495, 32
        %v7436 = vpop.permute.xlu0 %7435
        %7437 = vrot.lane.b32.xlu0 %v496, 32
        %v7438 = vpop.permute.xlu0 %7437
        %7439 = vrot.lane.b32.xlu0 %v497, 32
        %v7440 = vpop.permute.xlu0 %7439
        %7441 = vrot.lane.b32.xlu0 %v498, 32
        %v7442 = vpop.permute.xlu0 %7441
        %7443 = vrot.lane.b32.xlu0 %v499, 32
        %v7444 = vpop.permute.xlu0 %7443
        %7445 = vrot.lane.b32.xlu0 %v500, 32
        %v7446 = vpop.permute.xlu0 %7445
        %7447 = vrot.lane.b32.xlu0 %v501, 32
        %v7448 = vpop.permute.xlu0 %7447
        %7449 = vrot.lane.b32.xlu0 %v502, 32
        %v7450 = vpop.permute.xlu0 %7449
        %7451 = vrot.lane.b32.xlu0 %v503, 32
        %v7452 = vpop.permute.xlu0 %7451
        %7453 = vrot.lane.b32.xlu0 %v504, 32
        %v7454 = vpop.permute.xlu0 %7453
        %7455 = vrot.lane.b32.xlu0 %v505, 32
        %v7456 = vpop.permute.xlu0 %7455
        %7457 = vrot.lane.b32.xlu0 %v506, 32
        %v7458 = vpop.permute.xlu0 %7457
        %7459 = vrot.lane.b32.xlu0 %v507, 32
        %v7460 = vpop.permute.xlu0 %7459
        %7461 = vrot.lane.b32.xlu0 %v508, 32
        %v7462 = vpop.permute.xlu0 %7461
        %7463 = vrot.lane.b32.xlu0 %v509, 32
        %v7464 = vpop.permute.xlu0 %7463
        %7465 = vrot.lane.b32.xlu0 %v510, 32
        %v7466 = vpop.permute.xlu0 %7465
        %7467 = vrot.lane.b32.xlu0 %v511, 32
        %v7468 = vpop.permute.xlu0 %7467
        %7469 = vrot.lane.b32.xlu0 %v512, 32
        %v7470 = vpop.permute.xlu0 %7469
        %7471 = vrot.lane.b32.xlu0 %v513, 32
        %v7472 = vpop.permute.xlu0 %7471
        %v7505 = vmul.f32 %v6770, %v7410
        %v7506 = vmul.f32 %v6772, %v7412
        %v7507 = vmul.f32 %v6774, %v7414
        %v7508 = vmul.f32 %v6776, %v7416
        %v7509 = vmul.f32 %v6778, %v7418
        %v7510 = vmul.f32 %v6780, %v7420
        %v7511 = vmul.f32 %v6782, %v7422
        %v7512 = vmul.f32 %v6784, %v7424
        %v7513 = vmul.f32 %v6786, %v7426
        %v7514 = vmul.f32 %v6788, %v7428
        %v7515 = vmul.f32 %v6790, %v7430
        %v7516 = vmul.f32 %v6792, %v7432
        %v7517 = vmul.f32 %v6794, %v7434
        %v7518 = vmul.f32 %v6796, %v7436
        %v7519 = vmul.f32 %v6798, %v7438
        %v7520 = vmul.f32 %v6800, %v7440
        %v7521 = vmul.f32 %v6802, %v7442
        %v7522 = vmul.f32 %v6804, %v7444
        %v7523 = vmul.f32 %v6806, %v7446
        %v7524 = vmul.f32 %v6808, %v7448
        %v7525 = vmul.f32 %v6810, %v7450
        %v7526 = vmul.f32 %v6812, %v7452
        %v7527 = vmul.f32 %v6814, %v7454
        %v7528 = vmul.f32 %v6816, %v7456
        %v7529 = vmul.f32 %v6818, %v7458
        %v7530 = vmul.f32 %v6820, %v7460
        %v7531 = vmul.f32 %v6822, %v7462
        %v7532 = vmul.f32 %v6824, %v7464
        %v7533 = vmul.f32 %v6826, %v7466
        %v7534 = vmul.f32 %v6828, %v7468
        %v7535 = vmul.f32 %v6830, %v7470
        %v7536 = vmul.f32 %v6832, %v7472
        %v7537 = vadd.f32 %v7345, %v7505
        %v7538 = vadd.f32 %v7346, %v7506
        %v7539 = vadd.f32 %v7347, %v7507
        %v7540 = vadd.f32 %v7348, %v7508
        %v7541 = vadd.f32 %v7349, %v7509
        %v7542 = vadd.f32 %v7350, %v7510
        %v7543 = vadd.f32 %v7351, %v7511
        %v7544 = vadd.f32 %v7352, %v7512
        %v7545 = vadd.f32 %v7353, %v7513
        %v7546 = vadd.f32 %v7354, %v7514
        %v7547 = vadd.f32 %v7355, %v7515
        %v7548 = vadd.f32 %v7356, %v7516
        %v7549 = vadd.f32 %v7357, %v7517
        %v7550 = vadd.f32 %v7358, %v7518
        %v7551 = vadd.f32 %v7359, %v7519
        %v7552 = vadd.f32 %v7360, %v7520
        %v7553 = vadd.f32 %v7361, %v7521
        %v7554 = vadd.f32 %v7362, %v7522
        %v7555 = vadd.f32 %v7363, %v7523
        %v7556 = vadd.f32 %v7364, %v7524
        %v7557 = vadd.f32 %v7365, %v7525
        %v7558 = vadd.f32 %v7366, %v7526
        %v7559 = vadd.f32 %v7367, %v7527
        %v7560 = vadd.f32 %v7368, %v7528
        %v7561 = vadd.f32 %v7369, %v7529
        %v7562 = vadd.f32 %v7370, %v7530
        %v7563 = vadd.f32 %v7371, %v7531
        %v7564 = vadd.f32 %v7372, %v7532
        %v7565 = vadd.f32 %v7373, %v7533
        %v7566 = vadd.f32 %v7374, %v7534
        %v7567 = vadd.f32 %v7375, %v7535
        %v7568 = vadd.f32 %v7376, %v7536
        %v7569 = vpack.c.bf16 %v7538, %v7537
        %v7570 = vpack.c.bf16 %v7540, %v7539
        %v7571 = vpack.c.bf16 %v7542, %v7541
        %v7572 = vpack.c.bf16 %v7544, %v7543
        %v7573 = vpack.c.bf16 %v7546, %v7545
        %v7574 = vpack.c.bf16 %v7548, %v7547
        %v7575 = vpack.c.bf16 %v7550, %v7549
        %v7576 = vpack.c.bf16 %v7552, %v7551
        %v7577 = vpack.c.bf16 %v7554, %v7553
        %v7578 = vpack.c.bf16 %v7556, %v7555
        %v7579 = vpack.c.bf16 %v7558, %v7557
        %v7580 = vpack.c.bf16 %v7560, %v7559
        %v7581 = vpack.c.bf16 %v7562, %v7561
        %v7582 = vpack.c.bf16 %v7564, %v7563
        %v7583 = vpack.c.bf16 %v7566, %v7565
        %v7584 = vpack.c.bf16 %v7568, %v7567
        %v7585 = vld [vmem:[%s8] sm:$0xf]
        %v7586 = vld [vmem:[%s8 + $0x4] sm:$0xf]
        %v7587 = vld [vmem:[%s8 + $0x8] sm:$0xf]
        %v7588 = vld [vmem:[%s8 + $0xc] sm:$0xf]
        %7605 = vrot.lane.b32.xlu0 %v7569, 96
        %v7606 = vpop.permute.xlu0 %7605
        %7607 = vrot.lane.b32.xlu0 %v7570, 96
        %v7608 = vpop.permute.xlu0 %7607
        %7609 = vrot.lane.b32.xlu0 %v7571, 96
        %v7610 = vpop.permute.xlu0 %7609
        %7611 = vrot.lane.b32.xlu0 %v7572, 96
        %v7612 = vpop.permute.xlu0 %7611
        %7613 = vrot.lane.b32.xlu0 %v7573, 96
        %v7614 = vpop.permute.xlu0 %7613
        %7615 = vrot.lane.b32.xlu0 %v7574, 96
        %v7616 = vpop.permute.xlu0 %7615
        %7617 = vrot.lane.b32.xlu0 %v7575, 96
        %v7618 = vpop.permute.xlu0 %7617
        %7619 = vrot.lane.b32.xlu0 %v7576, 96
        %v7620 = vpop.permute.xlu0 %7619
        %7621 = vrot.lane.b32.xlu0 %v7577, 96
        %v7622 = vpop.permute.xlu0 %7621
        %7623 = vrot.lane.b32.xlu0 %v7578, 96
        %v7624 = vpop.permute.xlu0 %7623
        %7625 = vrot.lane.b32.xlu0 %v7579, 96
        %v7626 = vpop.permute.xlu0 %7625
        %7627 = vrot.lane.b32.xlu0 %v7580, 96
        %v7628 = vpop.permute.xlu0 %7627
        %7629 = vrot.lane.b32.xlu0 %v7581, 96
        %v7630 = vpop.permute.xlu0 %7629
        %7631 = vrot.lane.b32.xlu0 %v7582, 96
        %v7632 = vpop.permute.xlu0 %7631
        %7633 = vrot.lane.b32.xlu0 %v7583, 96
        %v7634 = vpop.permute.xlu0 %7633
        %7635 = vrot.lane.b32.xlu0 %v7584, 96
        %v7636 = vpop.permute.xlu0 %7635
        %v7641 = vunpack.c.l.b16 %v7585
        %v7642 = vunpack.c.l.b16 %v7586
        %v7643 = vunpack.c.l.b16 %v7587
        %v7644 = vunpack.c.l.b16 %v7588
        %v7645 = vpack.c.b16 %v7642, %v7641
        %v7646 = vpack.c.b16 %v7644, %v7643
        %v7650 = vsel %vm566, %v7606, 0
        %v7653 = vsel %vm566, %v7608, 0
        %v7656 = vsel %vm566, %v7610, 0
        %v7659 = vsel %vm566, %v7612, 0
        %v7662 = vsel %vm566, %v7614, 0
        %v7665 = vsel %vm566, %v7616, 0
        %v7668 = vsel %vm566, %v7618, 0
        %v7671 = vsel %vm566, %v7620, 0
        %v7674 = vsel %vm566, %v7622, 0
        %v7677 = vsel %vm566, %v7624, 0
        %v7680 = vsel %vm566, %v7626, 0
        %v7683 = vsel %vm566, %v7628, 0
        %v7686 = vsel %vm566, %v7630, 0
        %v7689 = vsel %vm566, %v7632, 0
        %v7692 = vsel %vm566, %v7634, 0
        %v7695 = vsel %vm566, %v7636, 0
        %7697 = vmatprep.subr.bf16.mxu0 0
        %7698 = vmatpush1.bf16.msra.mxu0 %v7645
        %7699 = vmatprep.subr.bf16.mxu0 0
        %7700 = vmatpush1.bf16.msra.mxu0 %v7646
        %7701 = vmatprep.subr.bf16.mxu0 0
        %7702 = vmatpush1.bf16.msra.mxu0 0
        %7703 = vmatprep.subr.bf16.mxu0 0
        %7704 = vmatpush1.bf16.msra.mxu0 0
        %7705 = vmatprep.subr.bf16.mxu0 0
        %7706 = vmatpush1.bf16.msra.mxu0 0
        %7707 = vmatprep.subr.bf16.mxu0 0
        %7708 = vmatpush1.bf16.msra.mxu0 0
        %7709 = vmatprep.subr.bf16.mxu0 0
        %7710 = vmatpush1.bf16.msra.mxu0 0
        %7711 = vmatprep.subr.bf16.mxu0 0
        %7712 = vmatpush1.bf16.msra.mxu0 0
        %7713 = vmatprep.subr.bf16.mxu0 0
        %7714 = vmatpush1.bf16.msra.mxu0 0
        %7715 = vmatprep.subr.bf16.mxu0 0
        %7716 = vmatpush1.bf16.msra.mxu0 0
        %7717 = vmatprep.subr.bf16.mxu0 0
        %7718 = vmatpush1.bf16.msra.mxu0 0
        %7719 = vmatprep.subr.bf16.mxu0 0
        %7720 = vmatpush1.bf16.msra.mxu0 0
        %7721 = vmatprep.subr.bf16.mxu0 0
        %7722 = vmatpush1.bf16.msra.mxu0 0
        %7723 = vmatprep.subr.bf16.mxu0 0
        %7724 = vmatpush1.bf16.msra.mxu0 0
        %7725 = vmatprep.subr.bf16.mxu0 0
        %7726 = vmatpush1.bf16.msra.mxu0 0
        %7727 = vmatprep.subr.bf16.mxu0 0
        %7728 = vmatpush1.bf16.msra.mxu0 0
        %7729 = vmatprep.mubr.bf16.mxu0 0
        %7730 = vmatmul.mubr.bf16.gmra.mrb[0].mxu0 %v7650
        %v7731 = vpop.f32.mrb[0].mxu0
        %v7732 = vadd.f32 0.0, %v7731
        %v7733 = vpop.f32.mrb[0].mxu0
        %v7734 = vpop.f32.mrb[0].mxu0
        %v7735 = vadd.f32 0.0, %v7734
        %v7736 = vpop.f32.mrb[0].mxu0
        %7737 = vmatprep.mubr.bf16.mxu0 0
        %7738 = vmatmul.mubr.bf16.gmra.mrb[0].mxu0 %v7653
        %v7739 = vpop.f32.mrb[0].mxu0
        %v7740 = vadd.f32 0.0, %v7739
        %v7741 = vpop.f32.mrb[0].mxu0
        %v7742 = vpop.f32.mrb[0].mxu0
        %v7743 = vadd.f32 0.0, %v7742
        %v7744 = vpop.f32.mrb[0].mxu0
        %7745 = vmatprep.mubr.bf16.mxu0 0
        %7746 = vmatmul.mubr.bf16.gmra.mrb[0].mxu0 %v7656
        %v7747 = vpop.f32.mrb[0].mxu0
        %v7748 = vadd.f32 0.0, %v7747
        %v7749 = vpop.f32.mrb[0].mxu0
        %v7750 = vpop.f32.mrb[0].mxu0
        %v7751 = vadd.f32 0.0, %v7750
        %v7752 = vpop.f32.mrb[0].mxu0
        %7753 = vmatprep.mubr.bf16.mxu0 0
        %7754 = vmatmul.mubr.bf16.gmra.mrb[0].mxu0 %v7659
        %v7755 = vpop.f32.mrb[0].mxu0
        %v7756 = vadd.f32 0.0, %v7755
        %v7757 = vpop.f32.mrb[0].mxu0
        %v7758 = vpop.f32.mrb[0].mxu0
        %v7759 = vadd.f32 0.0, %v7758
        %v7760 = vpop.f32.mrb[0].mxu0
        %7761 = vmatprep.mubr.bf16.mxu0 0
        %7762 = vmatmul.mubr.bf16.gmra.mrb[0].mxu0 %v7662
        %v7763 = vpop.f32.mrb[0].mxu0
        %v7764 = vadd.f32 0.0, %v7763
        %v7765 = vpop.f32.mrb[0].mxu0
        %v7766 = vpop.f32.mrb[0].mxu0
        %v7767 = vadd.f32 0.0, %v7766
        %v7768 = vpop.f32.mrb[0].mxu0
        %7769 = vmatprep.mubr.bf16.mxu0 0
        %7770 = vmatmul.mubr.bf16.gmra.mrb[0].mxu0 %v7665
        %v7771 = vpop.f32.mrb[0].mxu0
        %v7772 = vadd.f32 0.0, %v7771
        %v7773 = vpop.f32.mrb[0].mxu0
        %v7774 = vpop.f32.mrb[0].mxu0
        %v7775 = vadd.f32 0.0, %v7774
        %v7776 = vpop.f32.mrb[0].mxu0
        %7777 = vmatprep.mubr.bf16.mxu0 0
        %7778 = vmatmul.mubr.bf16.gmra.mrb[0].mxu0 %v7668
        %v7779 = vpop.f32.mrb[0].mxu0
        %v7780 = vadd.f32 0.0, %v7779
        %v7781 = vpop.f32.mrb[0].mxu0
        %v7782 = vpop.f32.mrb[0].mxu0
        %v7783 = vadd.f32 0.0, %v7782
        %v7784 = vpop.f32.mrb[0].mxu0
        %7785 = vmatprep.mubr.bf16.mxu0 0
        %7786 = vmatmul.mubr.bf16.gmra.mrb[0].mxu0 %v7671
        %v7787 = vpop.f32.mrb[0].mxu0
        %v7788 = vadd.f32 0.0, %v7787
        %v7789 = vpop.f32.mrb[0].mxu0
        %v7790 = vpop.f32.mrb[0].mxu0
        %v7791 = vadd.f32 0.0, %v7790
        %v7792 = vpop.f32.mrb[0].mxu0
        %7793 = vmatprep.mubr.bf16.mxu0 0
        %7794 = vmatmul.mubr.bf16.gmra.mrb[0].mxu0 %v7674
        %v7795 = vpop.f32.mrb[0].mxu0
        %v7796 = vadd.f32 0.0, %v7795
        %v7797 = vpop.f32.mrb[0].mxu0
        %v7798 = vpop.f32.mrb[0].mxu0
        %v7799 = vadd.f32 0.0, %v7798
        %v7800 = vpop.f32.mrb[0].mxu0
        %7801 = vmatprep.mubr.bf16.mxu0 0
        %7802 = vmatmul.mubr.bf16.gmra.mrb[0].mxu0 %v7677
        %v7803 = vpop.f32.mrb[0].mxu0
        %v7804 = vadd.f32 0.0, %v7803
        %v7805 = vpop.f32.mrb[0].mxu0
        %v7806 = vpop.f32.mrb[0].mxu0
        %v7807 = vadd.f32 0.0, %v7806
        %v7808 = vpop.f32.mrb[0].mxu0
        %7809 = vmatprep.mubr.bf16.mxu0 0
        %7810 = vmatmul.mubr.bf16.gmra.mrb[0].mxu0 %v7680
        %v7811 = vpop.f32.mrb[0].mxu0
        %v7812 = vadd.f32 0.0, %v7811
        %v7813 = vpop.f32.mrb[0].mxu0
        %v7814 = vpop.f32.mrb[0].mxu0
        %v7815 = vadd.f32 0.0, %v7814
        %v7816 = vpop.f32.mrb[0].mxu0
        %7817 = vmatprep.mubr.bf16.mxu0 0
        %7818 = vmatmul.mubr.bf16.gmra.mrb[0].mxu0 %v7683
        %v7819 = vpop.f32.mrb[0].mxu0
        %v7820 = vadd.f32 0.0, %v7819
        %v7821 = vpop.f32.mrb[0].mxu0
        %v7822 = vpop.f32.mrb[0].mxu0
        %v7823 = vadd.f32 0.0, %v7822
        %v7824 = vpop.f32.mrb[0].mxu0
        %7825 = vmatprep.mubr.bf16.mxu0 0
        %7826 = vmatmul.mubr.bf16.gmra.mrb[0].mxu0 %v7686
        %v7827 = vpop.f32.mrb[0].mxu0
        %v7828 = vadd.f32 0.0, %v7827
        %v7829 = vpop.f32.mrb[0].mxu0
        %v7830 = vpop.f32.mrb[0].mxu0
        %v7831 = vadd.f32 0.0, %v7830
        %v7832 = vpop.f32.mrb[0].mxu0
        %7833 = vmatprep.mubr.bf16.mxu0 0
        %7834 = vmatmul.mubr.bf16.gmra.mrb[0].mxu0 %v7689
        %v7835 = vpop.f32.mrb[0].mxu0
        %v7836 = vadd.f32 0.0, %v7835
        %v7837 = vpop.f32.mrb[0].mxu0
        %v7838 = vpop.f32.mrb[0].mxu0
        %v7839 = vadd.f32 0.0, %v7838
        %v7840 = vpop.f32.mrb[0].mxu0
        %7841 = vmatprep.mubr.bf16.mxu0 0
        %7842 = vmatmul.mubr.bf16.gmra.mrb[0].mxu0 %v7692
        %v7843 = vpop.f32.mrb[0].mxu0
        %v7844 = vadd.f32 0.0, %v7843
        %v7845 = vpop.f32.mrb[0].mxu0
        %v7846 = vpop.f32.mrb[0].mxu0
        %v7847 = vadd.f32 0.0, %v7846
        %v7848 = vpop.f32.mrb[0].mxu0
        %7849 = vmatprep.mubr.bf16.mxu0 0
        %7850 = vmatmul.mubr.bf16.gmra.mrb[0].mxu0 %v7695
        %v7851 = vpop.f32.mrb[0].mxu0
        %v7852 = vadd.f32 0.0, %v7851
        %v7853 = vpop.f32.mrb[0].mxu0
        %v7854 = vpop.f32.mrb[0].mxu0
        %v7855 = vadd.f32 0.0, %v7854
        %v7856 = vpop.f32.mrb[0].mxu0
        %7857 = vdwg.mxu0
        %v7858 = vld [vmem:[%s478] sm:$0xff]
        %v7859 = vld [vmem:[%s478 + $0x8] sm:$0xff]
        %v7860 = vld [vmem:[%s478 + $0x10] sm:$0xff]
        %v7861 = vld [vmem:[%s478 + $0x18] sm:$0xff]
        %v7862 = vld [vmem:[%s478 + $0x20] sm:$0xff]
        %v7863 = vld [vmem:[%s478 + $0x28] sm:$0xff]
        %v7864 = vld [vmem:[%s478 + $0x30] sm:$0xff]
        %v7865 = vld [vmem:[%s478 + $0x38] sm:$0xff]
        %v7866 = vld [vmem:[%s478 + $0x40] sm:$0xff]
        %v7867 = vld [vmem:[%s478 + $0x48] sm:$0xff]
        %v7868 = vld [vmem:[%s478 + $0x50] sm:$0xff]
        %v7869 = vld [vmem:[%s478 + $0x58] sm:$0xff]
        %v7870 = vld [vmem:[%s478 + $0x60] sm:$0xff]
        %v7871 = vld [vmem:[%s478 + $0x68] sm:$0xff]
        %v7872 = vld [vmem:[%s478 + $0x70] sm:$0xff]
        %v7873 = vld [vmem:[%s478 + $0x78] sm:$0xff]
        %v7874 = vld [vmem:[%s478 + $0x80] sm:$0xff]
        %v7875 = vld [vmem:[%s478 + $0x88] sm:$0xff]
        %v7876 = vld [vmem:[%s478 + $0x90] sm:$0xff]
        %v7877 = vld [vmem:[%s478 + $0x98] sm:$0xff]
        %v7878 = vld [vmem:[%s478 + $0xa0] sm:$0xff]
        %v7879 = vld [vmem:[%s478 + $0xa8] sm:$0xff]
        %v7880 = vld [vmem:[%s478 + $0xb0] sm:$0xff]
        %v7881 = vld [vmem:[%s478 + $0xb8] sm:$0xff]
        %v7882 = vld [vmem:[%s478 + $0xc0] sm:$0xff]
        %v7883 = vld [vmem:[%s478 + $0xc8] sm:$0xff]
        %v7884 = vld [vmem:[%s478 + $0xd0] sm:$0xff]
        %v7885 = vld [vmem:[%s478 + $0xd8] sm:$0xff]
        %v7886 = vld [vmem:[%s478 + $0xe0] sm:$0xff]
        %v7887 = vld [vmem:[%s478 + $0xe8] sm:$0xff]
        %v7888 = vld [vmem:[%s478 + $0xf0] sm:$0xff]
        %v7889 = vld [vmem:[%s478 + $0xf8] sm:$0xff]
        %7891 = vset.pattern.permute.xlu0 1
        %7892 = vperm.xlu0 %7891, %v7858
        %v7893 = vpop.permute.xlu0 %7892
        %7896 = vset.pattern.permute.xlu0 1
        %7897 = vperm.xlu0 %7896, %v7859
        %v7898 = vpop.permute.xlu0 %7897
        %7901 = vset.pattern.permute.xlu0 1
        %7902 = vperm.xlu0 %7901, %v7860
        %v7903 = vpop.permute.xlu0 %7902
        %7906 = vset.pattern.permute.xlu0 1
        %7907 = vperm.xlu0 %7906, %v7861
        %v7908 = vpop.permute.xlu0 %7907
        %7911 = vset.pattern.permute.xlu0 1
        %7912 = vperm.xlu0 %7911, %v7862
        %v7913 = vpop.permute.xlu0 %7912
        %7916 = vset.pattern.permute.xlu0 1
        %7917 = vperm.xlu0 %7916, %v7863
        %v7918 = vpop.permute.xlu0 %7917
        %7921 = vset.pattern.permute.xlu0 1
        %7922 = vperm.xlu0 %7921, %v7864
        %v7923 = vpop.permute.xlu0 %7922
        %7926 = vset.pattern.permute.xlu0 1
        %7927 = vperm.xlu0 %7926, %v7865
        %v7928 = vpop.permute.xlu0 %7927
        %7931 = vset.pattern.permute.xlu0 1
        %7932 = vperm.xlu0 %7931, %v7866
        %v7933 = vpop.permute.xlu0 %7932
        %7936 = vset.pattern.permute.xlu0 1
        %7937 = vperm.xlu0 %7936, %v7867
        %v7938 = vpop.permute.xlu0 %7937
        %7941 = vset.pattern.permute.xlu0 1
        %7942 = vperm.xlu0 %7941, %v7868
        %v7943 = vpop.permute.xlu0 %7942
        %7946 = vset.pattern.permute.xlu0 1
        %7947 = vperm.xlu0 %7946, %v7869
        %v7948 = vpop.permute.xlu0 %7947
        %7951 = vset.pattern.permute.xlu0 1
        %7952 = vperm.xlu0 %7951, %v7870
        %v7953 = vpop.permute.xlu0 %7952
        %7956 = vset.pattern.permute.xlu0 1
        %7957 = vperm.xlu0 %7956, %v7871
        %v7958 = vpop.permute.xlu0 %7957
        %7961 = vset.pattern.permute.xlu0 1
        %7962 = vperm.xlu0 %7961, %v7872
        %v7963 = vpop.permute.xlu0 %7962
        %7966 = vset.pattern.permute.xlu0 1
        %7967 = vperm.xlu0 %7966, %v7873
        %v7968 = vpop.permute.xlu0 %7967
        %7971 = vset.pattern.permute.xlu0 1
        %7972 = vperm.xlu0 %7971, %v7874
        %v7973 = vpop.permute.xlu0 %7972
        %7976 = vset.pattern.permute.xlu0 1
        %7977 = vperm.xlu0 %7976, %v7875
        %v7978 = vpop.permute.xlu0 %7977
        %7981 = vset.pattern.permute.xlu0 1
        %7982 = vperm.xlu0 %7981, %v7876
        %v7983 = vpop.permute.xlu0 %7982
        %7986 = vset.pattern.permute.xlu0 1
        %7987 = vperm.xlu0 %7986, %v7877
        %v7988 = vpop.permute.xlu0 %7987
        %7991 = vset.pattern.permute.xlu0 1
        %7992 = vperm.xlu0 %7991, %v7878
        %v7993 = vpop.permute.xlu0 %7992
        %7996 = vset.pattern.permute.xlu0 1
        %7997 = vperm.xlu0 %7996, %v7879
        %v7998 = vpop.permute.xlu0 %7997
        %8001 = vset.pattern.permute.xlu0 1
        %8002 = vperm.xlu0 %8001, %v7880
        %v8003 = vpop.permute.xlu0 %8002
        %8006 = vset.pattern.permute.xlu0 1
        %8007 = vperm.xlu0 %8006, %v7881
        %v8008 = vpop.permute.xlu0 %8007
        %8011 = vset.pattern.permute.xlu0 1
        %8012 = vperm.xlu0 %8011, %v7882
        %v8013 = vpop.permute.xlu0 %8012
        %8016 = vset.pattern.permute.xlu0 1
        %8017 = vperm.xlu0 %8016, %v7883
        %v8018 = vpop.permute.xlu0 %8017
        %8021 = vset.pattern.permute.xlu0 1
        %8022 = vperm.xlu0 %8021, %v7884
        %v8023 = vpop.permute.xlu0 %8022
        %8026 = vset.pattern.permute.xlu0 1
        %8027 = vperm.xlu0 %8026, %v7885
        %v8028 = vpop.permute.xlu0 %8027
        %8031 = vset.pattern.permute.xlu0 1
        %8032 = vperm.xlu0 %8031, %v7886
        %v8033 = vpop.permute.xlu0 %8032
        %8036 = vset.pattern.permute.xlu0 1
        %8037 = vperm.xlu0 %8036, %v7887
        %v8038 = vpop.permute.xlu0 %8037
        %8041 = vset.pattern.permute.xlu0 1
        %8042 = vperm.xlu0 %8041, %v7888
        %v8043 = vpop.permute.xlu0 %8042
        %8046 = vset.pattern.permute.xlu0 1
        %8047 = vperm.xlu0 %8046, %v7889
        %v8048 = vpop.permute.xlu0 %8047
        %v8050 = vmul.f32 %v7537, %v7893
        %v8051 = vmul.f32 %v7538, %v7898
        %v8052 = vmul.f32 %v7539, %v7903
        %v8053 = vmul.f32 %v7540, %v7908
        %v8054 = vmul.f32 %v7541, %v7913
        %v8055 = vmul.f32 %v7542, %v7918
        %v8056 = vmul.f32 %v7543, %v7923
        %v8057 = vmul.f32 %v7544, %v7928
        %v8058 = vmul.f32 %v7545, %v7933
        %v8059 = vmul.f32 %v7546, %v7938
        %v8060 = vmul.f32 %v7547, %v7943
        %v8061 = vmul.f32 %v7548, %v7948
        %v8062 = vmul.f32 %v7549, %v7953
        %v8063 = vmul.f32 %v7550, %v7958
        %v8064 = vmul.f32 %v7551, %v7963
        %v8065 = vmul.f32 %v7552, %v7968
        %v8066 = vmul.f32 %v7553, %v7973
        %v8067 = vmul.f32 %v7554, %v7978
        %v8068 = vmul.f32 %v7555, %v7983
        %v8069 = vmul.f32 %v7556, %v7988
        %v8070 = vmul.f32 %v7557, %v7993
        %v8071 = vmul.f32 %v7558, %v7998
        %v8072 = vmul.f32 %v7559, %v8003
        %v8073 = vmul.f32 %v7560, %v8008
        %v8074 = vmul.f32 %v7561, %v8013
        %v8075 = vmul.f32 %v7562, %v8018
        %v8076 = vmul.f32 %v7563, %v8023
        %v8077 = vmul.f32 %v7564, %v8028
        %v8078 = vmul.f32 %v7565, %v8033
        %v8079 = vmul.f32 %v7566, %v8038
        %v8080 = vmul.f32 %v7567, %v8043
        %v8081 = vmul.f32 %v7568, %v8048
        %vm8082 = vcmask 523520
        %v8083 = vsel %vm8082, %v8050, 0.0
        %v8084 = vrot.slane %v8083, 4
        %v8085 = vadd.f32 %v8083, %v8084
        %v8086 = vrot.slane %v8085, 2
        %v8087 = vadd.f32 %v8085, %v8086
        %v8088 = vrot.slane %v8087, 1
        %v8089 = vadd.f32 %v8087, %v8088
        %v8090 = vsel %vm8082, %v8051, 0.0
        %v8091 = vrot.slane %v8090, 4
        %v8092 = vadd.f32 %v8090, %v8091
        %v8093 = vrot.slane %v8092, 2
        %v8094 = vadd.f32 %v8092, %v8093
        %v8095 = vrot.slane %v8094, 1
        %v8096 = vadd.f32 %v8094, %v8095
        %v8097 = vsel %vm8082, %v8052, 0.0
        %v8098 = vrot.slane %v8097, 4
        %v8099 = vadd.f32 %v8097, %v8098
        %v8100 = vrot.slane %v8099, 2
        %v8101 = vadd.f32 %v8099, %v8100
        %v8102 = vrot.slane %v8101, 1
        %v8103 = vadd.f32 %v8101, %v8102
        %v8104 = vsel %vm8082, %v8053, 0.0
        %v8105 = vrot.slane %v8104, 4
        %v8106 = vadd.f32 %v8104, %v8105
        %v8107 = vrot.slane %v8106, 2
        %v8108 = vadd.f32 %v8106, %v8107
        %v8109 = vrot.slane %v8108, 1
        %v8110 = vadd.f32 %v8108, %v8109
        %v8111 = vsel %vm8082, %v8054, 0.0
        %v8112 = vrot.slane %v8111, 4
        %v8113 = vadd.f32 %v8111, %v8112
        %v8114 = vrot.slane %v8113, 2
        %v8115 = vadd.f32 %v8113, %v8114
        %v8116 = vrot.slane %v8115, 1
        %v8117 = vadd.f32 %v8115, %v8116
        %v8118 = vsel %vm8082, %v8055, 0.0
        %v8119 = vrot.slane %v8118, 4
        %v8120 = vadd.f32 %v8118, %v8119
        %v8121 = vrot.slane %v8120, 2
        %v8122 = vadd.f32 %v8120, %v8121
        %v8123 = vrot.slane %v8122, 1
        %v8124 = vadd.f32 %v8122, %v8123
        %v8125 = vsel %vm8082, %v8056, 0.0
        %v8126 = vrot.slane %v8125, 4
        %v8127 = vadd.f32 %v8125, %v8126
        %v8128 = vrot.slane %v8127, 2
        %v8129 = vadd.f32 %v8127, %v8128
        %v8130 = vrot.slane %v8129, 1
        %v8131 = vadd.f32 %v8129, %v8130
        %v8132 = vsel %vm8082, %v8057, 0.0
        %v8133 = vrot.slane %v8132, 4
        %v8134 = vadd.f32 %v8132, %v8133
        %v8135 = vrot.slane %v8134, 2
        %v8136 = vadd.f32 %v8134, %v8135
        %v8137 = vrot.slane %v8136, 1
        %v8138 = vadd.f32 %v8136, %v8137
        %v8139 = vsel %vm8082, %v8058, 0.0
        %v8140 = vrot.slane %v8139, 4
        %v8141 = vadd.f32 %v8139, %v8140
        %v8142 = vrot.slane %v8141, 2
        %v8143 = vadd.f32 %v8141, %v8142
        %v8144 = vrot.slane %v8143, 1
        %v8145 = vadd.f32 %v8143, %v8144
        %v8146 = vsel %vm8082, %v8059, 0.0
        %v8147 = vrot.slane %v8146, 4
        %v8148 = vadd.f32 %v8146, %v8147
        %v8149 = vrot.slane %v8148, 2
        %v8150 = vadd.f32 %v8148, %v8149
        %v8151 = vrot.slane %v8150, 1
        %v8152 = vadd.f32 %v8150, %v8151
        %v8153 = vsel %vm8082, %v8060, 0.0
        %v8154 = vrot.slane %v8153, 4
        %v8155 = vadd.f32 %v8153, %v8154
        %v8156 = vrot.slane %v8155, 2
        %v8157 = vadd.f32 %v8155, %v8156
        %v8158 = vrot.slane %v8157, 1
        %v8159 = vadd.f32 %v8157, %v8158
        %v8160 = vsel %vm8082, %v8061, 0.0
        %v8161 = vrot.slane %v8160, 4
        %v8162 = vadd.f32 %v8160, %v8161
        %v8163 = vrot.slane %v8162, 2
        %v8164 = vadd.f32 %v8162, %v8163
        %v8165 = vrot.slane %v8164, 1
        %v8166 = vadd.f32 %v8164, %v8165
        %v8167 = vsel %vm8082, %v8062, 0.0
        %v8168 = vrot.slane %v8167, 4
        %v8169 = vadd.f32 %v8167, %v8168
        %v8170 = vrot.slane %v8169, 2
        %v8171 = vadd.f32 %v8169, %v8170
        %v8172 = vrot.slane %v8171, 1
        %v8173 = vadd.f32 %v8171, %v8172
        %v8174 = vsel %vm8082, %v8063, 0.0
        %v8175 = vrot.slane %v8174, 4
        %v8176 = vadd.f32 %v8174, %v8175
        %v8177 = vrot.slane %v8176, 2
        %v8178 = vadd.f32 %v8176, %v8177
        %v8179 = vrot.slane %v8178, 1
        %v8180 = vadd.f32 %v8178, %v8179
        %v8181 = vsel %vm8082, %v8064, 0.0
        %v8182 = vrot.slane %v8181, 4
        %v8183 = vadd.f32 %v8181, %v8182
        %v8184 = vrot.slane %v8183, 2
        %v8185 = vadd.f32 %v8183, %v8184
        %v8186 = vrot.slane %v8185, 1
        %v8187 = vadd.f32 %v8185, %v8186
        %v8188 = vsel %vm8082, %v8065, 0.0
        %v8189 = vrot.slane %v8188, 4
        %v8190 = vadd.f32 %v8188, %v8189
        %v8191 = vrot.slane %v8190, 2
        %v8192 = vadd.f32 %v8190, %v8191
        %v8193 = vrot.slane %v8192, 1
        %v8194 = vadd.f32 %v8192, %v8193
        %v8195 = vsel %vm8082, %v8066, 0.0
        %v8196 = vrot.slane %v8195, 4
        %v8197 = vadd.f32 %v8195, %v8196
        %v8198 = vrot.slane %v8197, 2
        %v8199 = vadd.f32 %v8197, %v8198
        %v8200 = vrot.slane %v8199, 1
        %v8201 = vadd.f32 %v8199, %v8200
        %v8202 = vsel %vm8082, %v8067, 0.0
        %v8203 = vrot.slane %v8202, 4
        %v8204 = vadd.f32 %v8202, %v8203
        %v8205 = vrot.slane %v8204, 2
        %v8206 = vadd.f32 %v8204, %v8205
        %v8207 = vrot.slane %v8206, 1
        %v8208 = vadd.f32 %v8206, %v8207
        %v8209 = vsel %vm8082, %v8068, 0.0
        %v8210 = vrot.slane %v8209, 4
        %v8211 = vadd.f32 %v8209, %v8210
        %v8212 = vrot.slane %v8211, 2
        %v8213 = vadd.f32 %v8211, %v8212
        %v8214 = vrot.slane %v8213, 1
        %v8215 = vadd.f32 %v8213, %v8214
        %v8216 = vsel %vm8082, %v8069, 0.0
        %v8217 = vrot.slane %v8216, 4
        %v8218 = vadd.f32 %v8216, %v8217
        %v8219 = vrot.slane %v8218, 2
        %v8220 = vadd.f32 %v8218, %v8219
        %v8221 = vrot.slane %v8220, 1
        %v8222 = vadd.f32 %v8220, %v8221
        %v8223 = vsel %vm8082, %v8070, 0.0
        %v8224 = vrot.slane %v8223, 4
        %v8225 = vadd.f32 %v8223, %v8224
        %v8226 = vrot.slane %v8225, 2
        %v8227 = vadd.f32 %v8225, %v8226
        %v8228 = vrot.slane %v8227, 1
        %v8229 = vadd.f32 %v8227, %v8228
        %v8230 = vsel %vm8082, %v8071, 0.0
        %v8231 = vrot.slane %v8230, 4
        %v8232 = vadd.f32 %v8230, %v8231
        %v8233 = vrot.slane %v8232, 2
        %v8234 = vadd.f32 %v8232, %v8233
        %v8235 = vrot.slane %v8234, 1
        %v8236 = vadd.f32 %v8234, %v8235
        %v8237 = vsel %vm8082, %v8072, 0.0
        %v8238 = vrot.slane %v8237, 4
        %v8239 = vadd.f32 %v8237, %v8238
        %v8240 = vrot.slane %v8239, 2
        %v8241 = vadd.f32 %v8239, %v8240
        %v8242 = vrot.slane %v8241, 1
        %v8243 = vadd.f32 %v8241, %v8242
        %v8244 = vsel %vm8082, %v8073, 0.0
        %v8245 = vrot.slane %v8244, 4
        %v8246 = vadd.f32 %v8244, %v8245
        %v8247 = vrot.slane %v8246, 2
        %v8248 = vadd.f32 %v8246, %v8247
        %v8249 = vrot.slane %v8248, 1
        %v8250 = vadd.f32 %v8248, %v8249
        %v8251 = vsel %vm8082, %v8074, 0.0
        %v8252 = vrot.slane %v8251, 4
        %v8253 = vadd.f32 %v8251, %v8252
        %v8254 = vrot.slane %v8253, 2
        %v8255 = vadd.f32 %v8253, %v8254
        %v8256 = vrot.slane %v8255, 1
        %v8257 = vadd.f32 %v8255, %v8256
        %v8258 = vsel %vm8082, %v8075, 0.0
        %v8259 = vrot.slane %v8258, 4
        %v8260 = vadd.f32 %v8258, %v8259
        %v8261 = vrot.slane %v8260, 2
        %v8262 = vadd.f32 %v8260, %v8261
        %v8263 = vrot.slane %v8262, 1
        %v8264 = vadd.f32 %v8262, %v8263
        %v8265 = vsel %vm8082, %v8076, 0.0
        %v8266 = vrot.slane %v8265, 4
        %v8267 = vadd.f32 %v8265, %v8266
        %v8268 = vrot.slane %v8267, 2
        %v8269 = vadd.f32 %v8267, %v8268
        %v8270 = vrot.slane %v8269, 1
        %v8271 = vadd.f32 %v8269, %v8270
        %v8272 = vsel %vm8082, %v8077, 0.0
        %v8273 = vrot.slane %v8272, 4
        %v8274 = vadd.f32 %v8272, %v8273
        %v8275 = vrot.slane %v8274, 2
        %v8276 = vadd.f32 %v8274, %v8275
        %v8277 = vrot.slane %v8276, 1
        %v8278 = vadd.f32 %v8276, %v8277
        %v8279 = vsel %vm8082, %v8078, 0.0
        %v8280 = vrot.slane %v8279, 4
        %v8281 = vadd.f32 %v8279, %v8280
        %v8282 = vrot.slane %v8281, 2
        %v8283 = vadd.f32 %v8281, %v8282
        %v8284 = vrot.slane %v8283, 1
        %v8285 = vadd.f32 %v8283, %v8284
        %v8286 = vsel %vm8082, %v8079, 0.0
        %v8287 = vrot.slane %v8286, 4
        %v8288 = vadd.f32 %v8286, %v8287
        %v8289 = vrot.slane %v8288, 2
        %v8290 = vadd.f32 %v8288, %v8289
        %v8291 = vrot.slane %v8290, 1
        %v8292 = vadd.f32 %v8290, %v8291
        %v8293 = vsel %vm8082, %v8080, 0.0
        %v8294 = vrot.slane %v8293, 4
        %v8295 = vadd.f32 %v8293, %v8294
        %v8296 = vrot.slane %v8295, 2
        %v8297 = vadd.f32 %v8295, %v8296
        %v8298 = vrot.slane %v8297, 1
        %v8299 = vadd.f32 %v8297, %v8298
        %v8300 = vsel %vm8082, %v8081, 0.0
        %v8301 = vrot.slane %v8300, 4
        %v8302 = vadd.f32 %v8300, %v8301
        %v8303 = vrot.slane %v8302, 2
        %v8304 = vadd.f32 %v8302, %v8303
        %v8305 = vrot.slane %v8304, 1
        %v8306 = vadd.f32 %v8304, %v8305
        %v8307 = vpack.c.bf16 %v8089, %v8089
        %v8308 = vpack.c.bf16 %v8096, %v8096
        %v8309 = vpack.c.bf16 %v8103, %v8103
        %v8310 = vpack.c.bf16 %v8110, %v8110
        %v8311 = vpack.c.bf16 %v8117, %v8117
        %v8312 = vpack.c.bf16 %v8124, %v8124
        %v8313 = vpack.c.bf16 %v8131, %v8131
        %v8314 = vpack.c.bf16 %v8138, %v8138
        %v8315 = vpack.c.bf16 %v8145, %v8145
        %v8316 = vpack.c.bf16 %v8152, %v8152
        %v8317 = vpack.c.bf16 %v8159, %v8159
        %v8318 = vpack.c.bf16 %v8166, %v8166
        %v8319 = vpack.c.bf16 %v8173, %v8173
        %v8320 = vpack.c.bf16 %v8180, %v8180
        %v8321 = vpack.c.bf16 %v8187, %v8187
        %v8322 = vpack.c.bf16 %v8194, %v8194
        %v8323 = vpack.c.bf16 %v8201, %v8201
        %v8324 = vpack.c.bf16 %v8208, %v8208
        %v8325 = vpack.c.bf16 %v8215, %v8215
        %v8326 = vpack.c.bf16 %v8222, %v8222
        %v8327 = vpack.c.bf16 %v8229, %v8229
        %v8328 = vpack.c.bf16 %v8236, %v8236
        %v8329 = vpack.c.bf16 %v8243, %v8243
        %v8330 = vpack.c.bf16 %v8250, %v8250
        %v8331 = vpack.c.bf16 %v8257, %v8257
        %v8332 = vpack.c.bf16 %v8264, %v8264
        %v8333 = vpack.c.bf16 %v8271, %v8271
        %v8334 = vpack.c.bf16 %v8278, %v8278
        %v8335 = vpack.c.bf16 %v8285, %v8285
        %v8336 = vpack.c.bf16 %v8292, %v8292
        %v8337 = vpack.c.bf16 %v8299, %v8299
        %v8338 = vpack.c.bf16 %v8306, %v8306
        %v8339 = vld [vmem:[%s9] sm:$0xf]
        %v8340 = vld [vmem:[%s9 + $0x4] sm:$0xf]
        %v8341 = vld [vmem:[%s9 + $0x8] sm:$0xf]
        %v8342 = vld [vmem:[%s9 + $0xc] sm:$0xf]
        %v8343 = vld [vmem:[%s10] sm:$0x1]
        %v8345 = vlaneseq
        %v8346 = vshrl.u32 %v8345, 7
        %v8347 = vsub.s32 0, %v8346
        %v8348 = vrot.slane %v8343, %v8347
        %v8382 = vunpack.c.l.b16 %v8307
        %v8383 = vunpack.c.l.b16 %v8308
        %v8384 = vunpack.c.l.b16 %v8309
        %v8385 = vunpack.c.l.b16 %v8310
        %v8386 = vunpack.c.l.b16 %v8311
        %v8387 = vunpack.c.l.b16 %v8312
        %v8388 = vunpack.c.l.b16 %v8313
        %v8389 = vunpack.c.l.b16 %v8314
        %v8390 = vunpack.c.l.b16 %v8315
        %v8391 = vunpack.c.l.b16 %v8316
        %v8392 = vunpack.c.l.b16 %v8317
        %v8393 = vunpack.c.l.b16 %v8318
        %v8394 = vunpack.c.l.b16 %v8319
        %v8395 = vunpack.c.l.b16 %v8320
        %v8396 = vunpack.c.l.b16 %v8321
        %v8397 = vunpack.c.l.b16 %v8322
        %v8398 = vunpack.c.l.b16 %v8323
        %v8399 = vunpack.c.l.b16 %v8324
        %v8400 = vunpack.c.l.b16 %v8325
        %v8401 = vunpack.c.l.b16 %v8326
        %v8402 = vunpack.c.l.b16 %v8327
        %v8403 = vunpack.c.l.b16 %v8328
        %v8404 = vunpack.c.l.b16 %v8329
        %v8405 = vunpack.c.l.b16 %v8330
        %v8406 = vunpack.c.l.b16 %v8331
        %v8407 = vunpack.c.l.b16 %v8332
        %v8408 = vunpack.c.l.b16 %v8333
        %v8409 = vunpack.c.l.b16 %v8334
        %v8410 = vunpack.c.l.b16 %v8335
        %v8411 = vunpack.c.l.b16 %v8336
        %v8412 = vunpack.c.l.b16 %v8337
        %v8413 = vunpack.c.l.b16 %v8338
        %vm8414 = vcmask 1041409
        %v8415 = vsel %vm8414, %v8383, %v8382
        %vm8416 = vcmask 1042434
        %v8417 = vsel %vm8416, %v8384, %v8415
        %vm8418 = vcmask 1043459
        %v8419 = vsel %vm8418, %v8385, %v8417
        %vm8420 = vcmask 1044484
        %v8421 = vsel %vm8420, %v8386, %v8419
        %vm8422 = vcmask 1045509
        %v8423 = vsel %vm8422, %v8387, %v8421
        %vm8424 = vcmask 1046534
        %v8425 = vsel %vm8424, %v8388, %v8423
        %vm8426 = vcmask 1047559
        %v8427 = vsel %vm8426, %v8389, %v8425
        %v8428 = vsel %vm8414, %v8391, %v8390
        %v8429 = vsel %vm8416, %v8392, %v8428
        %v8430 = vsel %vm8418, %v8393, %v8429
        %v8431 = vsel %vm8420, %v8394, %v8430
        %v8432 = vsel %vm8422, %v8395, %v8431
        %v8433 = vsel %vm8424, %v8396, %v8432
        %v8434 = vsel %vm8426, %v8397, %v8433
        %v8435 = vsel %vm8414, %v8399, %v8398
        %v8436 = vsel %vm8416, %v8400, %v8435
        %v8437 = vsel %vm8418, %v8401, %v8436
        %v8438 = vsel %vm8420, %v8402, %v8437
        %v8439 = vsel %vm8422, %v8403, %v8438
        %v8440 = vsel %vm8424, %v8404, %v8439
        %v8441 = vsel %vm8426, %v8405, %v8440
        %v8442 = vsel %vm8414, %v8407, %v8406
        %v8443 = vsel %vm8416, %v8408, %v8442
        %v8444 = vsel %vm8418, %v8409, %v8443
        %v8445 = vsel %vm8420, %v8410, %v8444
        %v8446 = vsel %vm8422, %v8411, %v8445
        %v8447 = vsel %vm8424, %v8412, %v8446
        %v8448 = vsel %vm8426, %v8413, %v8447
        %v8449 = vpack.c.b16 %v8434, %v8427
        %v8450 = vpack.c.b16 %v8448, %v8441
        %8451 = vrot.lane.b32.xlu0 %v8449, 96
        %v8452 = vpop.permute.xlu0 %8451
        %8453 = vrot.lane.b32.xlu0 %v8450, 96
        %v8454 = vpop.permute.xlu0 %8453
        %v8459 = vunpack.c.l.b16 %v8339
        %v8460 = vunpack.c.l.b16 %v8340
        %v8461 = vunpack.c.l.b16 %v8341
        %v8462 = vunpack.c.l.b16 %v8342
        %v8463 = vpack.c.b16 %v8460, %v8459
        %v8464 = vpack.c.b16 %v8462, %v8461
        %v8468 = vsel %vm566, %v8452, 0
        %v8471 = vsel %vm566, %v8454, 0
        %8473 = vmatprep.subr.bf16.mxu0 0
        %8474 = vmatpush1.bf16.msra.mxu0 %v8463
        %8475 = vmatprep.subr.bf16.mxu0 0
        %8476 = vmatpush1.bf16.msra.mxu0 %v8464
        %8477 = vmatprep.subr.bf16.mxu0 0
        %8478 = vmatpush1.bf16.msra.mxu0 0
        %8479 = vmatprep.subr.bf16.mxu0 0
        %8480 = vmatpush1.bf16.msra.mxu0 0
        %8481 = vmatprep.subr.bf16.mxu0 0
        %8482 = vmatpush1.bf16.msra.mxu0 0
        %8483 = vmatprep.subr.bf16.mxu0 0
        %8484 = vmatpush1.bf16.msra.mxu0 0
        %8485 = vmatprep.subr.bf16.mxu0 0
        %8486 = vmatpush1.bf16.msra.mxu0 0
        %8487 = vmatprep.subr.bf16.mxu0 0
        %8488 = vmatpush1.bf16.msra.mxu0 0
        %8489 = vmatprep.subr.bf16.mxu0 0
        %8490 = vmatpush1.bf16.msra.mxu0 0
        %8491 = vmatprep.subr.bf16.mxu0 0
        %8492 = vmatpush1.bf16.msra.mxu0 0
        %8493 = vmatprep.subr.bf16.mxu0 0
        %8494 = vmatpush1.bf16.msra.mxu0 0
        %8495 = vmatprep.subr.bf16.mxu0 0
        %8496 = vmatpush1.bf16.msra.mxu0 0
        %8497 = vmatprep.subr.bf16.mxu0 0
        %8498 = vmatpush1.bf16.msra.mxu0 0
        %8499 = vmatprep.subr.bf16.mxu0 0
        %8500 = vmatpush1.bf16.msra.mxu0 0
        %8501 = vmatprep.subr.bf16.mxu0 0
        %8502 = vmatpush1.bf16.msra.mxu0 0
        %8503 = vmatprep.subr.bf16.mxu0 0
        %8504 = vmatpush1.bf16.msra.mxu0 0
        %8505 = vmatprep.mubr.bf16.mxu0 0
        %8506 = vmatmul.mubr.bf16.gmra.mrb[0].mxu0 %v8468
        %v8507 = vpop.f32.mrb[0].mxu0
        %v8508 = vadd.f32 %v8348, %v8507
        %v8509 = vpop.f32.mrb[0].mxu0
        %v8510 = vpop.f32.mrb[0].mxu0
        %v8511 = vadd.f32 %v8348, %v8510
        %v8512 = vpop.f32.mrb[0].mxu0
        %8513 = vmatprep.mubr.bf16.mxu0 0
        %8514 = vmatmul.mubr.bf16.gmra.mrb[0].mxu0 %v8471
        %v8515 = vpop.f32.mrb[0].mxu0
        %v8516 = vadd.f32 %v8348, %v8515
        %v8517 = vpop.f32.mrb[0].mxu0
        %v8518 = vpop.f32.mrb[0].mxu0
        %v8519 = vadd.f32 %v8348, %v8518
        %v8520 = vpop.f32.mrb[0].mxu0
        %8521 = vdwg.mxu0
        %v8526 = vcombine.high %v8508, %v8508
        %v8528 = vunpack.c.l.s4 1966171168
        %v8529 = vunpack.c.0.s8 %v8528
        %v8530 = vlaneseq
        %v8531 = vshrl.u32 %v8530, 7
        %v8532 = vsub.s32 %v8529, %v8531
        %v8533 = vrot.slane %v8508, %v8532
        %v8535 = vunpack.c.l.s4 1966171168
        %v8536 = vunpack.c.0.s8 %v8535
        %v8537 = vlaneseq
        %v8538 = vshrl.u32 %v8537, 7
        %v8539 = vsub.s32 %v8536, %v8538
        %v8540 = vrot.slane %v8526, %v8539
        %v8541 = vcombine.high %v8533, %v8533
        %v8542 = vcombine.high %v8540, %v8540
        %v8544 = vunpack.c.l.s4 1966171168
        %v8545 = vunpack.c.0.s8 %v8544
        %v8546 = vlaneseq
        %v8547 = vshrl.u32 %v8546, 7
        %v8548 = vsub.s32 %v8545, %v8547
        %v8549 = vrot.slane %v8533, %v8548
        %v8551 = vunpack.c.l.s4 1966171168
        %v8552 = vunpack.c.0.s8 %v8551
        %v8553 = vlaneseq
        %v8554 = vshrl.u32 %v8553, 7
        %v8555 = vsub.s32 %v8552, %v8554
        %v8556 = vrot.slane %v8540, %v8555
        %v8558 = vunpack.c.l.s4 1966171168
        %v8559 = vunpack.c.0.s8 %v8558
        %v8560 = vlaneseq
        %v8561 = vshrl.u32 %v8560, 7
        %v8562 = vsub.s32 %v8559, %v8561
        %v8563 = vrot.slane %v8541, %v8562
        %v8565 = vunpack.c.l.s4 1966171168
        %v8566 = vunpack.c.0.s8 %v8565
        %v8567 = vlaneseq
        %v8568 = vshrl.u32 %v8567, 7
        %v8569 = vsub.s32 %v8566, %v8568
        %v8570 = vrot.slane %v8542, %v8569
        %v8571 = vcombine.high %v8549, %v8549
        %v8572 = vcombine.high %v8556, %v8556
        %v8573 = vcombine.high %v8563, %v8563
        %v8574 = vcombine.high %v8570, %v8570
        %v8575 = vcombine.high %v8511, %v8511
        %v8577 = vunpack.c.l.s4 1966171168
        %v8578 = vunpack.c.0.s8 %v8577
        %v8579 = vlaneseq
        %v8580 = vshrl.u32 %v8579, 7
        %v8581 = vsub.s32 %v8578, %v8580
        %v8582 = vrot.slane %v8511, %v8581
        %v8584 = vunpack.c.l.s4 1966171168
        %v8585 = vunpack.c.0.s8 %v8584
        %v8586 = vlaneseq
        %v8587 = vshrl.u32 %v8586, 7
        %v8588 = vsub.s32 %v8585, %v8587
        %v8589 = vrot.slane %v8575, %v8588
        %v8590 = vcombine.high %v8582, %v8582
        %v8591 = vcombine.high %v8589, %v8589
        %v8593 = vunpack.c.l.s4 1966171168
        %v8594 = vunpack.c.0.s8 %v8593
        %v8595 = vlaneseq
        %v8596 = vshrl.u32 %v8595, 7
        %v8597 = vsub.s32 %v8594, %v8596
        %v8598 = vrot.slane %v8582, %v8597
        %v8600 = vunpack.c.l.s4 1966171168
        %v8601 = vunpack.c.0.s8 %v8600
        %v8602 = vlaneseq
        %v8603 = vshrl.u32 %v8602, 7
        %v8604 = vsub.s32 %v8601, %v8603
        %v8605 = vrot.slane %v8589, %v8604
        %v8607 = vunpack.c.l.s4 1966171168
        %v8608 = vunpack.c.0.s8 %v8607
        %v8609 = vlaneseq
        %v8610 = vshrl.u32 %v8609, 7
        %v8611 = vsub.s32 %v8608, %v8610
        %v8612 = vrot.slane %v8590, %v8611
        %v8614 = vunpack.c.l.s4 1966171168
        %v8615 = vunpack.c.0.s8 %v8614
        %v8616 = vlaneseq
        %v8617 = vshrl.u32 %v8616, 7
        %v8618 = vsub.s32 %v8615, %v8617
        %v8619 = vrot.slane %v8591, %v8618
        %v8620 = vcombine.high %v8598, %v8598
        %v8621 = vcombine.high %v8605, %v8605
        %v8622 = vcombine.high %v8612, %v8612
        %v8623 = vcombine.high %v8619, %v8619
        %v8624 = vcombine.high %v8516, %v8516
        %v8626 = vunpack.c.l.s4 1966171168
        %v8627 = vunpack.c.0.s8 %v8626
        %v8628 = vlaneseq
        %v8629 = vshrl.u32 %v8628, 7
        %v8630 = vsub.s32 %v8627, %v8629
        %v8631 = vrot.slane %v8516, %v8630
        %v8633 = vunpack.c.l.s4 1966171168
        %v8634 = vunpack.c.0.s8 %v8633
        %v8635 = vlaneseq
        %v8636 = vshrl.u32 %v8635, 7
        %v8637 = vsub.s32 %v8634, %v8636
        %v8638 = vrot.slane %v8624, %v8637
        %v8639 = vcombine.high %v8631, %v8631
        %v8640 = vcombine.high %v8638, %v8638
        %v8642 = vunpack.c.l.s4 1966171168
        %v8643 = vunpack.c.0.s8 %v8642
        %v8644 = vlaneseq
        %v8645 = vshrl.u32 %v8644, 7
        %v8646 = vsub.s32 %v8643, %v8645
        %v8647 = vrot.slane %v8631, %v8646
        %v8649 = vunpack.c.l.s4 1966171168
        %v8650 = vunpack.c.0.s8 %v8649
        %v8651 = vlaneseq
        %v8652 = vshrl.u32 %v8651, 7
        %v8653 = vsub.s32 %v8650, %v8652
        %v8654 = vrot.slane %v8638, %v8653
        %v8656 = vunpack.c.l.s4 1966171168
        %v8657 = vunpack.c.0.s8 %v8656
        %v8658 = vlaneseq
        %v8659 = vshrl.u32 %v8658, 7
        %v8660 = vsub.s32 %v8657, %v8659
        %v8661 = vrot.slane %v8639, %v8660
        %v8663 = vunpack.c.l.s4 1966171168
        %v8664 = vunpack.c.0.s8 %v8663
        %v8665 = vlaneseq
        %v8666 = vshrl.u32 %v8665, 7
        %v8667 = vsub.s32 %v8664, %v8666
        %v8668 = vrot.slane %v8640, %v8667
        %v8669 = vcombine.high %v8647, %v8647
        %v8670 = vcombine.high %v8654, %v8654
        %v8671 = vcombine.high %v8661, %v8661
        %v8672 = vcombine.high %v8668, %v8668
        %v8673 = vcombine.high %v8519, %v8519
        %v8675 = vunpack.c.l.s4 1966171168
        %v8676 = vunpack.c.0.s8 %v8675
        %v8677 = vlaneseq
        %v8678 = vshrl.u32 %v8677, 7
        %v8679 = vsub.s32 %v8676, %v8678
        %v8680 = vrot.slane %v8519, %v8679
        %v8682 = vunpack.c.l.s4 1966171168
        %v8683 = vunpack.c.0.s8 %v8682
        %v8684 = vlaneseq
        %v8685 = vshrl.u32 %v8684, 7
        %v8686 = vsub.s32 %v8683, %v8685
        %v8687 = vrot.slane %v8673, %v8686
        %v8688 = vcombine.high %v8680, %v8680
        %v8689 = vcombine.high %v8687, %v8687
        %v8691 = vunpack.c.l.s4 1966171168
        %v8692 = vunpack.c.0.s8 %v8691
        %v8693 = vlaneseq
        %v8694 = vshrl.u32 %v8693, 7
        %v8695 = vsub.s32 %v8692, %v8694
        %v8696 = vrot.slane %v8680, %v8695
        %v8698 = vunpack.c.l.s4 1966171168
        %v8699 = vunpack.c.0.s8 %v8698
        %v8700 = vlaneseq
        %v8701 = vshrl.u32 %v8700, 7
        %v8702 = vsub.s32 %v8699, %v8701
        %v8703 = vrot.slane %v8687, %v8702
        %v8705 = vunpack.c.l.s4 1966171168
        %v8706 = vunpack.c.0.s8 %v8705
        %v8707 = vlaneseq
        %v8708 = vshrl.u32 %v8707, 7
        %v8709 = vsub.s32 %v8706, %v8708
        %v8710 = vrot.slane %v8688, %v8709
        %v8712 = vunpack.c.l.s4 1966171168
        %v8713 = vunpack.c.0.s8 %v8712
        %v8714 = vlaneseq
        %v8715 = vshrl.u32 %v8714, 7
        %v8716 = vsub.s32 %v8713, %v8715
        %v8717 = vrot.slane %v8689, %v8716
        %v8718 = vcombine.high %v8696, %v8696
        %v8719 = vcombine.high %v8703, %v8703
        %v8720 = vcombine.high %v8710, %v8710
        %v8721 = vcombine.high %v8717, %v8717
        %v8722 = vlaneseq
        %v8723 = vshrl.u32 %v8722, 7
        %v8724 = vsub.s32 0, %v8723
        %v8725 = vrot.slane %v8549, %v8724
        %v8726 = vlaneseq
        %v8727 = vshrl.u32 %v8726, 7
        %v8728 = vsub.s32 0, %v8727
        %v8729 = vrot.slane %v8563, %v8728
        %v8730 = vlaneseq
        %v8731 = vshrl.u32 %v8730, 7
        %v8732 = vsub.s32 0, %v8731
        %v8733 = vrot.slane %v8571, %v8732
        %v8734 = vlaneseq
        %v8735 = vshrl.u32 %v8734, 7
        %v8736 = vsub.s32 0, %v8735
        %v8737 = vrot.slane %v8573, %v8736
        %v8738 = vlaneseq
        %v8739 = vshrl.u32 %v8738, 7
        %v8740 = vsub.s32 0, %v8739
        %v8741 = vrot.slane %v8556, %v8740
        %v8742 = vlaneseq
        %v8743 = vshrl.u32 %v8742, 7
        %v8744 = vsub.s32 0, %v8743
        %v8745 = vrot.slane %v8570, %v8744
        %v8746 = vlaneseq
        %v8747 = vshrl.u32 %v8746, 7
        %v8748 = vsub.s32 0, %v8747
        %v8749 = vrot.slane %v8572, %v8748
        %v8750 = vlaneseq
        %v8751 = vshrl.u32 %v8750, 7
        %v8752 = vsub.s32 0, %v8751
        %v8753 = vrot.slane %v8574, %v8752
        %v8754 = vlaneseq
        %v8755 = vshrl.u32 %v8754, 7
        %v8756 = vsub.s32 0, %v8755
        %v8757 = vrot.slane %v8598, %v8756
        %v8758 = vlaneseq
        %v8759 = vshrl.u32 %v8758, 7
        %v8760 = vsub.s32 0, %v8759
        %v8761 = vrot.slane %v8612, %v8760
        %v8762 = vlaneseq
        %v8763 = vshrl.u32 %v8762, 7
        %v8764 = vsub.s32 0, %v8763
        %v8765 = vrot.slane %v8620, %v8764
        %v8766 = vlaneseq
        %v8767 = vshrl.u32 %v8766, 7
        %v8768 = vsub.s32 0, %v8767
        %v8769 = vrot.slane %v8622, %v8768
        %v8770 = vlaneseq
        %v8771 = vshrl.u32 %v8770, 7
        %v8772 = vsub.s32 0, %v8771
        %v8773 = vrot.slane %v8605, %v8772
        %v8774 = vlaneseq
        %v8775 = vshrl.u32 %v8774, 7
        %v8776 = vsub.s32 0, %v8775
        %v8777 = vrot.slane %v8619, %v8776
        %v8778 = vlaneseq
        %v8779 = vshrl.u32 %v8778, 7
        %v8780 = vsub.s32 0, %v8779
        %v8781 = vrot.slane %v8621, %v8780
        %v8782 = vlaneseq
        %v8783 = vshrl.u32 %v8782, 7
        %v8784 = vsub.s32 0, %v8783
        %v8785 = vrot.slane %v8623, %v8784
        %v8786 = vlaneseq
        %v8787 = vshrl.u32 %v8786, 7
        %v8788 = vsub.s32 0, %v8787
        %v8789 = vrot.slane %v8647, %v8788
        %v8790 = vlaneseq
        %v8791 = vshrl.u32 %v8790, 7
        %v8792 = vsub.s32 0, %v8791
        %v8793 = vrot.slane %v8661, %v8792
        %v8794 = vlaneseq
        %v8795 = vshrl.u32 %v8794, 7
        %v8796 = vsub.s32 0, %v8795
        %v8797 = vrot.slane %v8669, %v8796
        %v8798 = vlaneseq
        %v8799 = vshrl.u32 %v8798, 7
        %v8800 = vsub.s32 0, %v8799
        %v8801 = vrot.slane %v8671, %v8800
        %v8802 = vlaneseq
        %v8803 = vshrl.u32 %v8802, 7
        %v8804 = vsub.s32 0, %v8803
        %v8805 = vrot.slane %v8654, %v8804
        %v8806 = vlaneseq
        %v8807 = vshrl.u32 %v8806, 7
        %v8808 = vsub.s32 0, %v8807
        %v8809 = vrot.slane %v8668, %v8808
        %v8810 = vlaneseq
        %v8811 = vshrl.u32 %v8810, 7
        %v8812 = vsub.s32 0, %v8811
        %v8813 = vrot.slane %v8670, %v8812
        %v8814 = vlaneseq
        %v8815 = vshrl.u32 %v8814, 7
        %v8816 = vsub.s32 0, %v8815
        %v8817 = vrot.slane %v8672, %v8816
        %v8818 = vlaneseq
        %v8819 = vshrl.u32 %v8818, 7
        %v8820 = vsub.s32 0, %v8819
        %v8821 = vrot.slane %v8696, %v8820
        %v8822 = vlaneseq
        %v8823 = vshrl.u32 %v8822, 7
        %v8824 = vsub.s32 0, %v8823
        %v8825 = vrot.slane %v8710, %v8824
        %v8826 = vlaneseq
        %v8827 = vshrl.u32 %v8826, 7
        %v8828 = vsub.s32 0, %v8827
        %v8829 = vrot.slane %v8718, %v8828
        %v8830 = vlaneseq
        %v8831 = vshrl.u32 %v8830, 7
        %v8832 = vsub.s32 0, %v8831
        %v8833 = vrot.slane %v8720, %v8832
        %v8834 = vlaneseq
        %v8835 = vshrl.u32 %v8834, 7
        %v8836 = vsub.s32 0, %v8835
        %v8837 = vrot.slane %v8703, %v8836
        %v8838 = vlaneseq
        %v8839 = vshrl.u32 %v8838, 7
        %v8840 = vsub.s32 0, %v8839
        %v8841 = vrot.slane %v8717, %v8840
        %v8842 = vlaneseq
        %v8843 = vshrl.u32 %v8842, 7
        %v8844 = vsub.s32 0, %v8843
        %v8845 = vrot.slane %v8719, %v8844
        %v8846 = vlaneseq
        %v8847 = vshrl.u32 %v8846, 7
        %v8848 = vsub.s32 0, %v8847
        %v8849 = vrot.slane %v8721, %v8848
        %v8882 = vadd.f32 %v7732, %v8725
        %v8883 = vadd.f32 %v7735, %v8729
        %v8884 = vadd.f32 %v7740, %v8733
        %v8885 = vadd.f32 %v7743, %v8737
        %v8886 = vadd.f32 %v7748, %v8741
        %v8887 = vadd.f32 %v7751, %v8745
        %v8888 = vadd.f32 %v7756, %v8749
        %v8889 = vadd.f32 %v7759, %v8753
        %v8890 = vadd.f32 %v7764, %v8757
        %v8891 = vadd.f32 %v7767, %v8761
        %v8892 = vadd.f32 %v7772, %v8765
        %v8893 = vadd.f32 %v7775, %v8769
        %v8894 = vadd.f32 %v7780, %v8773
        %v8895 = vadd.f32 %v7783, %v8777
        %v8896 = vadd.f32 %v7788, %v8781
        %v8897 = vadd.f32 %v7791, %v8785
        %v8898 = vadd.f32 %v7796, %v8789
        %v8899 = vadd.f32 %v7799, %v8793
        %v8900 = vadd.f32 %v7804, %v8797
        %v8901 = vadd.f32 %v7807, %v8801
        %v8902 = vadd.f32 %v7812, %v8805
        %v8903 = vadd.f32 %v7815, %v8809
        %v8904 = vadd.f32 %v7820, %v8813
        %v8905 = vadd.f32 %v7823, %v8817
        %v8906 = vadd.f32 %v7828, %v8821
        %v8907 = vadd.f32 %v7831, %v8825
        %v8908 = vadd.f32 %v7836, %v8829
        %v8909 = vadd.f32 %v7839, %v8833
        %v8910 = vadd.f32 %v7844, %v8837
        %v8911 = vadd.f32 %v7847, %v8841
        %v8912 = vadd.f32 %v7852, %v8845
        %v8913 = vadd.f32 %v7855, %v8849
        %v8914 = vxor.u32 %v8882, 2147483648
        %v8915 = vxor.u32 %v8883, 2147483648
        %v8916 = vxor.u32 %v8884, 2147483648
        %v8917 = vxor.u32 %v8885, 2147483648
        %v8918 = vxor.u32 %v8886, 2147483648
        %v8919 = vxor.u32 %v8887, 2147483648
        %v8920 = vxor.u32 %v8888, 2147483648
        %v8921 = vxor.u32 %v8889, 2147483648
        %v8922 = vxor.u32 %v8890, 2147483648
        %v8923 = vxor.u32 %v8891, 2147483648
        %v8924 = vxor.u32 %v8892, 2147483648
        %v8925 = vxor.u32 %v8893, 2147483648
        %v8926 = vxor.u32 %v8894, 2147483648
        %v8927 = vxor.u32 %v8895, 2147483648
        %v8928 = vxor.u32 %v8896, 2147483648
        %v8929 = vxor.u32 %v8897, 2147483648
        %v8930 = vxor.u32 %v8898, 2147483648
        %v8931 = vxor.u32 %v8899, 2147483648
        %v8932 = vxor.u32 %v8900, 2147483648
        %v8933 = vxor.u32 %v8901, 2147483648
        %v8934 = vxor.u32 %v8902, 2147483648
        %v8935 = vxor.u32 %v8903, 2147483648
        %v8936 = vxor.u32 %v8904, 2147483648
        %v8937 = vxor.u32 %v8905, 2147483648
        %v8938 = vxor.u32 %v8906, 2147483648
        %v8939 = vxor.u32 %v8907, 2147483648
        %v8940 = vxor.u32 %v8908, 2147483648
        %v8941 = vxor.u32 %v8909, 2147483648
        %v8942 = vxor.u32 %v8910, 2147483648
        %v8943 = vxor.u32 %v8911, 2147483648
        %v8944 = vxor.u32 %v8912, 2147483648
        %v8945 = vxor.u32 %v8913, 2147483648
        %v8946 = vmul.f32 %v8914, 1.442695
        %v8947 = vpow.pop %v8946
        %v8948 = vmul.f32 %v8915, 1.442695
        %v8949 = vpow.pop %v8948
        %v8950 = vmul.f32 %v8916, 1.442695
        %v8951 = vpow.pop %v8950
        %v8952 = vmul.f32 %v8917, 1.442695
        %v8953 = vpow.pop %v8952
        %v8954 = vmul.f32 %v8918, 1.442695
        %v8955 = vpow.pop %v8954
        %v8956 = vmul.f32 %v8919, 1.442695
        %v8957 = vpow.pop %v8956
        %v8958 = vmul.f32 %v8920, 1.442695
        %v8959 = vpow.pop %v8958
        %v8960 = vmul.f32 %v8921, 1.442695
        %v8961 = vpow.pop %v8960
        %v8962 = vmul.f32 %v8922, 1.442695
        %v8963 = vpow.pop %v8962
        %v8964 = vmul.f32 %v8923, 1.442695
        %v8965 = vpow.pop %v8964
        %v8966 = vmul.f32 %v8924, 1.442695
        %v8967 = vpow.pop %v8966
        %v8968 = vmul.f32 %v8925, 1.442695
        %v8969 = vpow.pop %v8968
        %v8970 = vmul.f32 %v8926, 1.442695
        %v8971 = vpow.pop %v8970
        %v8972 = vmul.f32 %v8927, 1.442695
        %v8973 = vpow.pop %v8972
        %v8974 = vmul.f32 %v8928, 1.442695
        %v8975 = vpow.pop %v8974
        %v8976 = vmul.f32 %v8929, 1.442695
        %v8977 = vpow.pop %v8976
        %v8978 = vmul.f32 %v8930, 1.442695
        %v8979 = vpow.pop %v8978
        %v8980 = vmul.f32 %v8931, 1.442695
        %v8981 = vpow.pop %v8980
        %v8982 = vmul.f32 %v8932, 1.442695
        %v8983 = vpow.pop %v8982
        %v8984 = vmul.f32 %v8933, 1.442695
        %v8985 = vpow.pop %v8984
        %v8986 = vmul.f32 %v8934, 1.442695
        %v8987 = vpow.pop %v8986
        %v8988 = vmul.f32 %v8935, 1.442695
        %v8989 = vpow.pop %v8988
        %v8990 = vmul.f32 %v8936, 1.442695
        %v8991 = vpow.pop %v8990
        %v8992 = vmul.f32 %v8937, 1.442695
        %v8993 = vpow.pop %v8992
        %v8994 = vmul.f32 %v8938, 1.442695
        %v8995 = vpow.pop %v8994
        %v8996 = vmul.f32 %v8939, 1.442695
        %v8997 = vpow.pop %v8996
        %v8998 = vmul.f32 %v8940, 1.442695
        %v8999 = vpow.pop %v8998
        %v9000 = vmul.f32 %v8941, 1.442695
        %v9001 = vpow.pop %v9000
        %v9002 = vmul.f32 %v8942, 1.442695
        %v9003 = vpow.pop %v9002
        %v9004 = vmul.f32 %v8943, 1.442695
        %v9005 = vpow.pop %v9004
        %v9006 = vmul.f32 %v8944, 1.442695
        %v9007 = vpow.pop %v9006
        %v9008 = vmul.f32 %v8945, 1.442695
        %v9009 = vpow.pop %v9008
        %v9010 = vadd.f32 %v8947, 1.0
        %v9011 = vadd.f32 %v8949, 1.0
        %v9012 = vadd.f32 %v8951, 1.0
        %v9013 = vadd.f32 %v8953, 1.0
        %v9014 = vadd.f32 %v8955, 1.0
        %v9015 = vadd.f32 %v8957, 1.0
        %v9016 = vadd.f32 %v8959, 1.0
        %v9017 = vadd.f32 %v8961, 1.0
        %v9018 = vadd.f32 %v8963, 1.0
        %v9019 = vadd.f32 %v8965, 1.0
        %v9020 = vadd.f32 %v8967, 1.0
        %v9021 = vadd.f32 %v8969, 1.0
        %v9022 = vadd.f32 %v8971, 1.0
        %v9023 = vadd.f32 %v8973, 1.0
        %v9024 = vadd.f32 %v8975, 1.0
        %v9025 = vadd.f32 %v8977, 1.0
        %v9026 = vadd.f32 %v8979, 1.0
        %v9027 = vadd.f32 %v8981, 1.0
        %v9028 = vadd.f32 %v8983, 1.0
        %v9029 = vadd.f32 %v8985, 1.0
        %v9030 = vadd.f32 %v8987, 1.0
        %v9031 = vadd.f32 %v8989, 1.0
        %v9032 = vadd.f32 %v8991, 1.0
        %v9033 = vadd.f32 %v8993, 1.0
        %v9034 = vadd.f32 %v8995, 1.0
        %v9035 = vadd.f32 %v8997, 1.0
        %v9036 = vadd.f32 %v8999, 1.0
        %v9037 = vadd.f32 %v9001, 1.0
        %v9038 = vadd.f32 %v9003, 1.0
        %v9039 = vadd.f32 %v9005, 1.0
        %v9040 = vadd.f32 %v9007, 1.0
        %v9041 = vadd.f32 %v9009, 1.0
        %v9042 = vrcp.pop %v9010
        %v9043 = vmul.f32 1.0, %v9042
        %v9044 = vrcp.pop %v9011
        %v9045 = vmul.f32 1.0, %v9044
        %v9046 = vrcp.pop %v9012
        %v9047 = vmul.f32 1.0, %v9046
        %v9048 = vrcp.pop %v9013
        %v9049 = vmul.f32 1.0, %v9048
        %v9050 = vrcp.pop %v9014
        %v9051 = vmul.f32 1.0, %v9050
        %v9052 = vrcp.pop %v9015
        %v9053 = vmul.f32 1.0, %v9052
        %v9054 = vrcp.pop %v9016
        %v9055 = vmul.f32 1.0, %v9054
        %v9056 = vrcp.pop %v9017
        %v9057 = vmul.f32 1.0, %v9056
        %v9058 = vrcp.pop %v9018
        %v9059 = vmul.f32 1.0, %v9058
        %v9060 = vrcp.pop %v9019
        %v9061 = vmul.f32 1.0, %v9060
        %v9062 = vrcp.pop %v9020
        %v9063 = vmul.f32 1.0, %v9062
        %v9064 = vrcp.pop %v9021
        %v9065 = vmul.f32 1.0, %v9064
        %v9066 = vrcp.pop %v9022
        %v9067 = vmul.f32 1.0, %v9066
        %v9068 = vrcp.pop %v9023
        %v9069 = vmul.f32 1.0, %v9068
        %v9070 = vrcp.pop %v9024
        %v9071 = vmul.f32 1.0, %v9070
        %v9072 = vrcp.pop %v9025
        %v9073 = vmul.f32 1.0, %v9072
        %v9074 = vrcp.pop %v9026
        %v9075 = vmul.f32 1.0, %v9074
        %v9076 = vrcp.pop %v9027
        %v9077 = vmul.f32 1.0, %v9076
        %v9078 = vrcp.pop %v9028
        %v9079 = vmul.f32 1.0, %v9078
        %v9080 = vrcp.pop %v9029
        %v9081 = vmul.f32 1.0, %v9080
        %v9082 = vrcp.pop %v9030
        %v9083 = vmul.f32 1.0, %v9082
        %v9084 = vrcp.pop %v9031
        %v9085 = vmul.f32 1.0, %v9084
        %v9086 = vrcp.pop %v9032
        %v9087 = vmul.f32 1.0, %v9086
        %v9088 = vrcp.pop %v9033
        %v9089 = vmul.f32 1.0, %v9088
        %v9090 = vrcp.pop %v9034
        %v9091 = vmul.f32 1.0, %v9090
        %v9092 = vrcp.pop %v9035
        %v9093 = vmul.f32 1.0, %v9092
        %v9094 = vrcp.pop %v9036
        %v9095 = vmul.f32 1.0, %v9094
        %v9096 = vrcp.pop %v9037
        %v9097 = vmul.f32 1.0, %v9096
        %v9098 = vrcp.pop %v9038
        %v9099 = vmul.f32 1.0, %v9098
        %v9100 = vrcp.pop %v9039
        %v9101 = vmul.f32 1.0, %v9100
        %v9102 = vrcp.pop %v9040
        %v9103 = vmul.f32 1.0, %v9102
        %v9104 = vrcp.pop %v9041
        %v9105 = vmul.f32 1.0, %v9104
        %v9106 = vld [vmem:[%s11] sm:$0x1]
        %v9108 = vlaneseq
        %v9109 = vshrl.u32 %v9108, 7
        %v9110 = vsub.s32 0, %v9109
        %v9111 = vrot.slane %v9106, %v9110
        %v9113 = vmul.f32 %v9043, %v9111
        %v9114 = vmul.f32 %v9045, %v9111
        %v9115 = vmul.f32 %v9047, %v9111
        %v9116 = vmul.f32 %v9049, %v9111
        %v9117 = vmul.f32 %v9051, %v9111
        %v9118 = vmul.f32 %v9053, %v9111
        %v9119 = vmul.f32 %v9055, %v9111
        %v9120 = vmul.f32 %v9057, %v9111
        %v9121 = vmul.f32 %v9059, %v9111
        %v9122 = vmul.f32 %v9061, %v9111
        %v9123 = vmul.f32 %v9063, %v9111
        %v9124 = vmul.f32 %v9065, %v9111
        %v9125 = vmul.f32 %v9067, %v9111
        %v9126 = vmul.f32 %v9069, %v9111
        %v9127 = vmul.f32 %v9071, %v9111
        %v9128 = vmul.f32 %v9073, %v9111
        %v9129 = vmul.f32 %v9075, %v9111
        %v9130 = vmul.f32 %v9077, %v9111
        %v9131 = vmul.f32 %v9079, %v9111
        %v9132 = vmul.f32 %v9081, %v9111
        %v9133 = vmul.f32 %v9083, %v9111
        %v9134 = vmul.f32 %v9085, %v9111
        %v9135 = vmul.f32 %v9087, %v9111
        %v9136 = vmul.f32 %v9089, %v9111
        %v9137 = vmul.f32 %v9091, %v9111
        %v9138 = vmul.f32 %v9093, %v9111
        %v9139 = vmul.f32 %v9095, %v9111
        %v9140 = vmul.f32 %v9097, %v9111
        %v9141 = vmul.f32 %v9099, %v9111
        %v9142 = vmul.f32 %v9101, %v9111
        %v9143 = vmul.f32 %v9103, %v9111
        %v9144 = vmul.f32 %v9105, %v9111
        %v9145 = vsel %vm566, %v9113, 0.0
        %9146 = vadd.xlane.f32.xlu0 %v9145
        %v9147 = vpop.xlane.xlu0 %9146
        %v9148 = vsel %vm566, %v9114, 0.0
        %9149 = vadd.xlane.f32.xlu0 %v9148
        %v9150 = vpop.xlane.xlu0 %9149
        %v9151 = vsel %vm566, %v9115, 0.0
        %9152 = vadd.xlane.f32.xlu0 %v9151
        %v9153 = vpop.xlane.xlu0 %9152
        %v9154 = vsel %vm566, %v9116, 0.0
        %9155 = vadd.xlane.f32.xlu0 %v9154
        %v9156 = vpop.xlane.xlu0 %9155
        %v9157 = vsel %vm566, %v9117, 0.0
        %9158 = vadd.xlane.f32.xlu0 %v9157
        %v9159 = vpop.xlane.xlu0 %9158
        %v9160 = vsel %vm566, %v9118, 0.0
        %9161 = vadd.xlane.f32.xlu0 %v9160
        %v9162 = vpop.xlane.xlu0 %9161
        %v9163 = vsel %vm566, %v9119, 0.0
        %9164 = vadd.xlane.f32.xlu0 %v9163
        %v9165 = vpop.xlane.xlu0 %9164
        %v9166 = vsel %vm566, %v9120, 0.0
        %9167 = vadd.xlane.f32.xlu0 %v9166
        %v9168 = vpop.xlane.xlu0 %9167
        %v9169 = vsel %vm566, %v9121, 0.0
        %9170 = vadd.xlane.f32.xlu0 %v9169
        %v9171 = vpop.xlane.xlu0 %9170
        %v9172 = vsel %vm566, %v9122, 0.0
        %9173 = vadd.xlane.f32.xlu0 %v9172
        %v9174 = vpop.xlane.xlu0 %9173
        %v9175 = vsel %vm566, %v9123, 0.0
        %9176 = vadd.xlane.f32.xlu0 %v9175
        %v9177 = vpop.xlane.xlu0 %9176
        %v9178 = vsel %vm566, %v9124, 0.0
        %9179 = vadd.xlane.f32.xlu0 %v9178
        %v9180 = vpop.xlane.xlu0 %9179
        %v9181 = vsel %vm566, %v9125, 0.0
        %9182 = vadd.xlane.f32.xlu0 %v9181
        %v9183 = vpop.xlane.xlu0 %9182
        %v9184 = vsel %vm566, %v9126, 0.0
        %9185 = vadd.xlane.f32.xlu0 %v9184
        %v9186 = vpop.xlane.xlu0 %9185
        %v9187 = vsel %vm566, %v9127, 0.0
        %9188 = vadd.xlane.f32.xlu0 %v9187
        %v9189 = vpop.xlane.xlu0 %9188
        %v9190 = vsel %vm566, %v9128, 0.0
        %9191 = vadd.xlane.f32.xlu0 %v9190
        %v9192 = vpop.xlane.xlu0 %9191
        %v9193 = vsel %vm566, %v9129, 0.0
        %9194 = vadd.xlane.f32.xlu0 %v9193
        %v9195 = vpop.xlane.xlu0 %9194
        %v9196 = vsel %vm566, %v9130, 0.0
        %9197 = vadd.xlane.f32.xlu0 %v9196
        %v9198 = vpop.xlane.xlu0 %9197
        %v9199 = vsel %vm566, %v9131, 0.0
        %9200 = vadd.xlane.f32.xlu0 %v9199
        %v9201 = vpop.xlane.xlu0 %9200
        %v9202 = vsel %vm566, %v9132, 0.0
        %9203 = vadd.xlane.f32.xlu0 %v9202
        %v9204 = vpop.xlane.xlu0 %9203
        %v9205 = vsel %vm566, %v9133, 0.0
        %9206 = vadd.xlane.f32.xlu0 %v9205
        %v9207 = vpop.xlane.xlu0 %9206
        %v9208 = vsel %vm566, %v9134, 0.0
        %9209 = vadd.xlane.f32.xlu0 %v9208
        %v9210 = vpop.xlane.xlu0 %9209
        %v9211 = vsel %vm566, %v9135, 0.0
        %9212 = vadd.xlane.f32.xlu0 %v9211
        %v9213 = vpop.xlane.xlu0 %9212
        %v9214 = vsel %vm566, %v9136, 0.0
        %9215 = vadd.xlane.f32.xlu0 %v9214
        %v9216 = vpop.xlane.xlu0 %9215
        %v9217 = vsel %vm566, %v9137, 0.0
        %9218 = vadd.xlane.f32.xlu0 %v9217
        %v9219 = vpop.xlane.xlu0 %9218
        %v9220 = vsel %vm566, %v9138, 0.0
        %9221 = vadd.xlane.f32.xlu0 %v9220
        %v9222 = vpop.xlane.xlu0 %9221
        %v9223 = vsel %vm566, %v9139, 0.0
        %9224 = vadd.xlane.f32.xlu0 %v9223
        %v9225 = vpop.xlane.xlu0 %9224
        %v9226 = vsel %vm566, %v9140, 0.0
        %9227 = vadd.xlane.f32.xlu0 %v9226
        %v9228 = vpop.xlane.xlu0 %9227
        %v9229 = vsel %vm566, %v9141, 0.0
        %9230 = vadd.xlane.f32.xlu0 %v9229
        %v9231 = vpop.xlane.xlu0 %9230
        %v9232 = vsel %vm566, %v9142, 0.0
        %9233 = vadd.xlane.f32.xlu0 %v9232
        %v9234 = vpop.xlane.xlu0 %9233
        %v9235 = vsel %vm566, %v9143, 0.0
        %9236 = vadd.xlane.f32.xlu0 %v9235
        %v9237 = vpop.xlane.xlu0 %9236
        %v9238 = vsel %vm566, %v9144, 0.0
        %9239 = vadd.xlane.f32.xlu0 %v9238
        %v9240 = vpop.xlane.xlu0 %9239
        %v9241 = vmul.f32 %v9147, %v7858
        %v9242 = vmul.f32 %v9150, %v7859
        %v9243 = vmul.f32 %v9153, %v7860
        %v9244 = vmul.f32 %v9156, %v7861
        %v9245 = vmul.f32 %v9159, %v7862
        %v9246 = vmul.f32 %v9162, %v7863
        %v9247 = vmul.f32 %v9165, %v7864
        %v9248 = vmul.f32 %v9168, %v7865
        %v9249 = vmul.f32 %v9171, %v7866
        %v9250 = vmul.f32 %v9174, %v7867
        %v9251 = vmul.f32 %v9177, %v7868
        %v9252 = vmul.f32 %v9180, %v7869
        %v9253 = vmul.f32 %v9183, %v7870
        %v9254 = vmul.f32 %v9186, %v7871
        %v9255 = vmul.f32 %v9189, %v7872
        %v9256 = vmul.f32 %v9192, %v7873
        %v9257 = vmul.f32 %v9195, %v7874
        %v9258 = vmul.f32 %v9198, %v7875
        %v9259 = vmul.f32 %v9201, %v7876
        %v9260 = vmul.f32 %v9204, %v7877
        %v9261 = vmul.f32 %v9207, %v7878
        %v9262 = vmul.f32 %v9210, %v7879
        %v9263 = vmul.f32 %v9213, %v7880
        %v9264 = vmul.f32 %v9216, %v7881
        %v9265 = vmul.f32 %v9219, %v7882
        %v9266 = vmul.f32 %v9222, %v7883
        %v9267 = vmul.f32 %v9225, %v7884
        %v9268 = vmul.f32 %v9228, %v7885
        %v9269 = vmul.f32 %v9231, %v7886
        %v9270 = vmul.f32 %v9234, %v7887
        %v9271 = vmul.f32 %v9237, %v7888
        %v9272 = vmul.f32 %v9240, %v7889
        %9274 = vset.pattern.permute.xlu0 0
        %9275 = vperm.xlu0 %9274, %v9241
        %v9276 = vpop.permute.xlu0 %9275
        %9279 = vset.pattern.permute.xlu0 0
        %9280 = vperm.xlu0 %9279, %v9242
        %v9281 = vpop.permute.xlu0 %9280
        %9284 = vset.pattern.permute.xlu0 0
        %9285 = vperm.xlu0 %9284, %v9243
        %v9286 = vpop.permute.xlu0 %9285
        %9289 = vset.pattern.permute.xlu0 0
        %9290 = vperm.xlu0 %9289, %v9244
        %v9291 = vpop.permute.xlu0 %9290
        %9294 = vset.pattern.permute.xlu0 0
        %9295 = vperm.xlu0 %9294, %v9245
        %v9296 = vpop.permute.xlu0 %9295
        %9299 = vset.pattern.permute.xlu0 0
        %9300 = vperm.xlu0 %9299, %v9246
        %v9301 = vpop.permute.xlu0 %9300
        %9304 = vset.pattern.permute.xlu0 0
        %9305 = vperm.xlu0 %9304, %v9247
        %v9306 = vpop.permute.xlu0 %9305
        %9309 = vset.pattern.permute.xlu0 0
        %9310 = vperm.xlu0 %9309, %v9248
        %v9311 = vpop.permute.xlu0 %9310
        %9314 = vset.pattern.permute.xlu0 0
        %9315 = vperm.xlu0 %9314, %v9249
        %v9316 = vpop.permute.xlu0 %9315
        %9319 = vset.pattern.permute.xlu0 0
        %9320 = vperm.xlu0 %9319, %v9250
        %v9321 = vpop.permute.xlu0 %9320
        %9324 = vset.pattern.permute.xlu0 0
        %9325 = vperm.xlu0 %9324, %v9251
        %v9326 = vpop.permute.xlu0 %9325
        %9329 = vset.pattern.permute.xlu0 0
        %9330 = vperm.xlu0 %9329, %v9252
        %v9331 = vpop.permute.xlu0 %9330
        %9334 = vset.pattern.permute.xlu0 0
        %9335 = vperm.xlu0 %9334, %v9253
        %v9336 = vpop.permute.xlu0 %9335
        %9339 = vset.pattern.permute.xlu0 0
        %9340 = vperm.xlu0 %9339, %v9254
        %v9341 = vpop.permute.xlu0 %9340
        %9344 = vset.pattern.permute.xlu0 0
        %9345 = vperm.xlu0 %9344, %v9255
        %v9346 = vpop.permute.xlu0 %9345
        %9349 = vset.pattern.permute.xlu0 0
        %9350 = vperm.xlu0 %9349, %v9256
        %v9351 = vpop.permute.xlu0 %9350
        %9354 = vset.pattern.permute.xlu0 0
        %9355 = vperm.xlu0 %9354, %v9257
        %v9356 = vpop.permute.xlu0 %9355
        %9359 = vset.pattern.permute.xlu0 0
        %9360 = vperm.xlu0 %9359, %v9258
        %v9361 = vpop.permute.xlu0 %9360
        %9364 = vset.pattern.permute.xlu0 0
        %9365 = vperm.xlu0 %9364, %v9259
        %v9366 = vpop.permute.xlu0 %9365
        %9369 = vset.pattern.permute.xlu0 0
        %9370 = vperm.xlu0 %9369, %v9260
        %v9371 = vpop.permute.xlu0 %9370
        %9374 = vset.pattern.permute.xlu0 0
        %9375 = vperm.xlu0 %9374, %v9261
        %v9376 = vpop.permute.xlu0 %9375
        %9379 = vset.pattern.permute.xlu0 0
        %9380 = vperm.xlu0 %9379, %v9262
        %v9381 = vpop.permute.xlu0 %9380
        %9384 = vset.pattern.permute.xlu0 0
        %9385 = vperm.xlu0 %9384, %v9263
        %v9386 = vpop.permute.xlu0 %9385
        %9389 = vset.pattern.permute.xlu0 0
        %9390 = vperm.xlu0 %9389, %v9264
        %v9391 = vpop.permute.xlu0 %9390
        %9394 = vset.pattern.permute.xlu0 0
        %9395 = vperm.xlu0 %9394, %v9265
        %v9396 = vpop.permute.xlu0 %9395
        %9399 = vset.pattern.permute.xlu0 0
        %9400 = vperm.xlu0 %9399, %v9266
        %v9401 = vpop.permute.xlu0 %9400
        %9404 = vset.pattern.permute.xlu0 0
        %9405 = vperm.xlu0 %9404, %v9267
        %v9406 = vpop.permute.xlu0 %9405
        %9409 = vset.pattern.permute.xlu0 0
        %9410 = vperm.xlu0 %9409, %v9268
        %v9411 = vpop.permute.xlu0 %9410
        %9414 = vset.pattern.permute.xlu0 0
        %9415 = vperm.xlu0 %9414, %v9269
        %v9416 = vpop.permute.xlu0 %9415
        %9419 = vset.pattern.permute.xlu0 0
        %9420 = vperm.xlu0 %9419, %v9270
        %v9421 = vpop.permute.xlu0 %9420
        %9424 = vset.pattern.permute.xlu0 0
        %9425 = vperm.xlu0 %9424, %v9271
        %v9426 = vpop.permute.xlu0 %9425
        %9429 = vset.pattern.permute.xlu0 0
        %9430 = vperm.xlu0 %9429, %v9272
        %v9431 = vpop.permute.xlu0 %9430
        %v9433 = vmul.f32 %v7537, %v9276
        %v9434 = vmul.f32 %v7538, %v9281
        %v9435 = vmul.f32 %v7539, %v9286
        %v9436 = vmul.f32 %v7540, %v9291
        %v9437 = vmul.f32 %v7541, %v9296
        %v9438 = vmul.f32 %v7542, %v9301
        %v9439 = vmul.f32 %v7543, %v9306
        %v9440 = vmul.f32 %v7544, %v9311
        %v9441 = vmul.f32 %v7545, %v9316
        %v9442 = vmul.f32 %v7546, %v9321
        %v9443 = vmul.f32 %v7547, %v9326
        %v9444 = vmul.f32 %v7548, %v9331
        %v9445 = vmul.f32 %v7549, %v9336
        %v9446 = vmul.f32 %v7550, %v9341
        %v9447 = vmul.f32 %v7551, %v9346
        %v9448 = vmul.f32 %v7552, %v9351
        %v9449 = vmul.f32 %v7553, %v9356
        %v9450 = vmul.f32 %v7554, %v9361
        %v9451 = vmul.f32 %v7555, %v9366
        %v9452 = vmul.f32 %v7556, %v9371
        %v9453 = vmul.f32 %v7557, %v9376
        %v9454 = vmul.f32 %v7558, %v9381
        %v9455 = vmul.f32 %v7559, %v9386
        %v9456 = vmul.f32 %v7560, %v9391
        %v9457 = vmul.f32 %v7561, %v9396
        %v9458 = vmul.f32 %v7562, %v9401
        %v9459 = vmul.f32 %v7563, %v9406
        %v9460 = vmul.f32 %v7564, %v9411
        %v9461 = vmul.f32 %v7565, %v9416
        %v9462 = vmul.f32 %v7566, %v9421
        %v9463 = vmul.f32 %v7567, %v9426
        %v9464 = vmul.f32 %v7568, %v9431
        %v9465 = vsel %vm8082, %v9433, 0.0
        %v9466 = vrot.slane %v9465, 4
        %v9467 = vadd.f32 %v9465, %v9466
        %v9468 = vrot.slane %v9467, 2
        %v9469 = vadd.f32 %v9467, %v9468
        %v9470 = vrot.slane %v9469, 1
        %v9471 = vadd.f32 %v9469, %v9470
        %v9472 = vsel %vm8082, %v9434, 0.0
        %v9473 = vrot.slane %v9472, 4
        %v9474 = vadd.f32 %v9472, %v9473
        %v9475 = vrot.slane %v9474, 2
        %v9476 = vadd.f32 %v9474, %v9475
        %v9477 = vrot.slane %v9476, 1
        %v9478 = vadd.f32 %v9476, %v9477
        %v9479 = vsel %vm8082, %v9435, 0.0
        %v9480 = vrot.slane %v9479, 4
        %v9481 = vadd.f32 %v9479, %v9480
        %v9482 = vrot.slane %v9481, 2
        %v9483 = vadd.f32 %v9481, %v9482
        %v9484 = vrot.slane %v9483, 1
        %v9485 = vadd.f32 %v9483, %v9484
        %v9486 = vsel %vm8082, %v9436, 0.0
        %v9487 = vrot.slane %v9486, 4
        %v9488 = vadd.f32 %v9486, %v9487
        %v9489 = vrot.slane %v9488, 2
        %v9490 = vadd.f32 %v9488, %v9489
        %v9491 = vrot.slane %v9490, 1
        %v9492 = vadd.f32 %v9490, %v9491
        %v9493 = vsel %vm8082, %v9437, 0.0
        %v9494 = vrot.slane %v9493, 4
        %v9495 = vadd.f32 %v9493, %v9494
        %v9496 = vrot.slane %v9495, 2
        %v9497 = vadd.f32 %v9495, %v9496
        %v9498 = vrot.slane %v9497, 1
        %v9499 = vadd.f32 %v9497, %v9498
        %v9500 = vsel %vm8082, %v9438, 0.0
        %v9501 = vrot.slane %v9500, 4
        %v9502 = vadd.f32 %v9500, %v9501
        %v9503 = vrot.slane %v9502, 2
        %v9504 = vadd.f32 %v9502, %v9503
        %v9505 = vrot.slane %v9504, 1
        %v9506 = vadd.f32 %v9504, %v9505
        %v9507 = vsel %vm8082, %v9439, 0.0
        %v9508 = vrot.slane %v9507, 4
        %v9509 = vadd.f32 %v9507, %v9508
        %v9510 = vrot.slane %v9509, 2
        %v9511 = vadd.f32 %v9509, %v9510
        %v9512 = vrot.slane %v9511, 1
        %v9513 = vadd.f32 %v9511, %v9512
        %v9514 = vsel %vm8082, %v9440, 0.0
        %v9515 = vrot.slane %v9514, 4
        %v9516 = vadd.f32 %v9514, %v9515
        %v9517 = vrot.slane %v9516, 2
        %v9518 = vadd.f32 %v9516, %v9517
        %v9519 = vrot.slane %v9518, 1
        %v9520 = vadd.f32 %v9518, %v9519
        %v9521 = vsel %vm8082, %v9441, 0.0
        %v9522 = vrot.slane %v9521, 4
        %v9523 = vadd.f32 %v9521, %v9522
        %v9524 = vrot.slane %v9523, 2
        %v9525 = vadd.f32 %v9523, %v9524
        %v9526 = vrot.slane %v9525, 1
        %v9527 = vadd.f32 %v9525, %v9526
        %v9528 = vsel %vm8082, %v9442, 0.0
        %v9529 = vrot.slane %v9528, 4
        %v9530 = vadd.f32 %v9528, %v9529
        %v9531 = vrot.slane %v9530, 2
        %v9532 = vadd.f32 %v9530, %v9531
        %v9533 = vrot.slane %v9532, 1
        %v9534 = vadd.f32 %v9532, %v9533
        %v9535 = vsel %vm8082, %v9443, 0.0
        %v9536 = vrot.slane %v9535, 4
        %v9537 = vadd.f32 %v9535, %v9536
        %v9538 = vrot.slane %v9537, 2
        %v9539 = vadd.f32 %v9537, %v9538
        %v9540 = vrot.slane %v9539, 1
        %v9541 = vadd.f32 %v9539, %v9540
        %v9542 = vsel %vm8082, %v9444, 0.0
        %v9543 = vrot.slane %v9542, 4
        %v9544 = vadd.f32 %v9542, %v9543
        %v9545 = vrot.slane %v9544, 2
        %v9546 = vadd.f32 %v9544, %v9545
        %v9547 = vrot.slane %v9546, 1
        %v9548 = vadd.f32 %v9546, %v9547
        %v9549 = vsel %vm8082, %v9445, 0.0
        %v9550 = vrot.slane %v9549, 4
        %v9551 = vadd.f32 %v9549, %v9550
        %v9552 = vrot.slane %v9551, 2
        %v9553 = vadd.f32 %v9551, %v9552
        %v9554 = vrot.slane %v9553, 1
        %v9555 = vadd.f32 %v9553, %v9554
        %v9556 = vsel %vm8082, %v9446, 0.0
        %v9557 = vrot.slane %v9556, 4
        %v9558 = vadd.f32 %v9556, %v9557
        %v9559 = vrot.slane %v9558, 2
        %v9560 = vadd.f32 %v9558, %v9559
        %v9561 = vrot.slane %v9560, 1
        %v9562 = vadd.f32 %v9560, %v9561
        %v9563 = vsel %vm8082, %v9447, 0.0
        %v9564 = vrot.slane %v9563, 4
        %v9565 = vadd.f32 %v9563, %v9564
        %v9566 = vrot.slane %v9565, 2
        %v9567 = vadd.f32 %v9565, %v9566
        %v9568 = vrot.slane %v9567, 1
        %v9569 = vadd.f32 %v9567, %v9568
        %v9570 = vsel %vm8082, %v9448, 0.0
        %v9571 = vrot.slane %v9570, 4
        %v9572 = vadd.f32 %v9570, %v9571
        %v9573 = vrot.slane %v9572, 2
        %v9574 = vadd.f32 %v9572, %v9573
        %v9575 = vrot.slane %v9574, 1
        %v9576 = vadd.f32 %v9574, %v9575
        %v9577 = vsel %vm8082, %v9449, 0.0
        %v9578 = vrot.slane %v9577, 4
        %v9579 = vadd.f32 %v9577, %v9578
        %v9580 = vrot.slane %v9579, 2
        %v9581 = vadd.f32 %v9579, %v9580
        %v9582 = vrot.slane %v9581, 1
        %v9583 = vadd.f32 %v9581, %v9582
        %v9584 = vsel %vm8082, %v9450, 0.0
        %v9585 = vrot.slane %v9584, 4
        %v9586 = vadd.f32 %v9584, %v9585
        %v9587 = vrot.slane %v9586, 2
        %v9588 = vadd.f32 %v9586, %v9587
        %v9589 = vrot.slane %v9588, 1
        %v9590 = vadd.f32 %v9588, %v9589
        %v9591 = vsel %vm8082, %v9451, 0.0
        %v9592 = vrot.slane %v9591, 4
        %v9593 = vadd.f32 %v9591, %v9592
        %v9594 = vrot.slane %v9593, 2
        %v9595 = vadd.f32 %v9593, %v9594
        %v9596 = vrot.slane %v9595, 1
        %v9597 = vadd.f32 %v9595, %v9596
        %v9598 = vsel %vm8082, %v9452, 0.0
        %v9599 = vrot.slane %v9598, 4
        %v9600 = vadd.f32 %v9598, %v9599
        %v9601 = vrot.slane %v9600, 2
        %v9602 = vadd.f32 %v9600, %v9601
        %v9603 = vrot.slane %v9602, 1
        %v9604 = vadd.f32 %v9602, %v9603
        %v9605 = vsel %vm8082, %v9453, 0.0
        %v9606 = vrot.slane %v9605, 4
        %v9607 = vadd.f32 %v9605, %v9606
        %v9608 = vrot.slane %v9607, 2
        %v9609 = vadd.f32 %v9607, %v9608
        %v9610 = vrot.slane %v9609, 1
        %v9611 = vadd.f32 %v9609, %v9610
        %v9612 = vsel %vm8082, %v9454, 0.0
        %v9613 = vrot.slane %v9612, 4
        %v9614 = vadd.f32 %v9612, %v9613
        %v9615 = vrot.slane %v9614, 2
        %v9616 = vadd.f32 %v9614, %v9615
        %v9617 = vrot.slane %v9616, 1
        %v9618 = vadd.f32 %v9616, %v9617
        %v9619 = vsel %vm8082, %v9455, 0.0
        %v9620 = vrot.slane %v9619, 4
        %v9621 = vadd.f32 %v9619, %v9620
        %v9622 = vrot.slane %v9621, 2
        %v9623 = vadd.f32 %v9621, %v9622
        %v9624 = vrot.slane %v9623, 1
        %v9625 = vadd.f32 %v9623, %v9624
        %v9626 = vsel %vm8082, %v9456, 0.0
        %v9627 = vrot.slane %v9626, 4
        %v9628 = vadd.f32 %v9626, %v9627
        %v9629 = vrot.slane %v9628, 2
        %v9630 = vadd.f32 %v9628, %v9629
        %v9631 = vrot.slane %v9630, 1
        %v9632 = vadd.f32 %v9630, %v9631
        %v9633 = vsel %vm8082, %v9457, 0.0
        %v9634 = vrot.slane %v9633, 4
        %v9635 = vadd.f32 %v9633, %v9634
        %v9636 = vrot.slane %v9635, 2
        %v9637 = vadd.f32 %v9635, %v9636
        %v9638 = vrot.slane %v9637, 1
        %v9639 = vadd.f32 %v9637, %v9638
        %v9640 = vsel %vm8082, %v9458, 0.0
        %v9641 = vrot.slane %v9640, 4
        %v9642 = vadd.f32 %v9640, %v9641
        %v9643 = vrot.slane %v9642, 2
        %v9644 = vadd.f32 %v9642, %v9643
        %v9645 = vrot.slane %v9644, 1
        %v9646 = vadd.f32 %v9644, %v9645
        %v9647 = vsel %vm8082, %v9459, 0.0
        %v9648 = vrot.slane %v9647, 4
        %v9649 = vadd.f32 %v9647, %v9648
        %v9650 = vrot.slane %v9649, 2
        %v9651 = vadd.f32 %v9649, %v9650
        %v9652 = vrot.slane %v9651, 1
        %v9653 = vadd.f32 %v9651, %v9652
        %v9654 = vsel %vm8082, %v9460, 0.0
        %v9655 = vrot.slane %v9654, 4
        %v9656 = vadd.f32 %v9654, %v9655
        %v9657 = vrot.slane %v9656, 2
        %v9658 = vadd.f32 %v9656, %v9657
        %v9659 = vrot.slane %v9658, 1
        %v9660 = vadd.f32 %v9658, %v9659
        %v9661 = vsel %vm8082, %v9461, 0.0
        %v9662 = vrot.slane %v9661, 4
        %v9663 = vadd.f32 %v9661, %v9662
        %v9664 = vrot.slane %v9663, 2
        %v9665 = vadd.f32 %v9663, %v9664
        %v9666 = vrot.slane %v9665, 1
        %v9667 = vadd.f32 %v9665, %v9666
        %v9668 = vsel %vm8082, %v9462, 0.0
        %v9669 = vrot.slane %v9668, 4
        %v9670 = vadd.f32 %v9668, %v9669
        %v9671 = vrot.slane %v9670, 2
        %v9672 = vadd.f32 %v9670, %v9671
        %v9673 = vrot.slane %v9672, 1
        %v9674 = vadd.f32 %v9672, %v9673
        %v9675 = vsel %vm8082, %v9463, 0.0
        %v9676 = vrot.slane %v9675, 4
        %v9677 = vadd.f32 %v9675, %v9676
        %v9678 = vrot.slane %v9677, 2
        %v9679 = vadd.f32 %v9677, %v9678
        %v9680 = vrot.slane %v9679, 1
        %v9681 = vadd.f32 %v9679, %v9680
        %v9682 = vsel %vm8082, %v9464, 0.0
        %v9683 = vrot.slane %v9682, 4
        %v9684 = vadd.f32 %v9682, %v9683
        %v9685 = vrot.slane %v9684, 2
        %v9686 = vadd.f32 %v9684, %v9685
        %v9687 = vrot.slane %v9686, 1
        %v9688 = vadd.f32 %v9686, %v9687
        %v9721 = vsel %vm8414, %v9478, %v9471
        %v9722 = vsel %vm8416, %v9485, %v9721
        %v9723 = vsel %vm8418, %v9492, %v9722
        %v9724 = vsel %vm8420, %v9499, %v9723
        %v9725 = vsel %vm8422, %v9506, %v9724
        %v9726 = vsel %vm8424, %v9513, %v9725
        %v9727 = vsel %vm8426, %v9520, %v9726
        %v9728 = vsel %vm8414, %v9534, %v9527
        %v9729 = vsel %vm8416, %v9541, %v9728
        %v9730 = vsel %vm8418, %v9548, %v9729
        %v9731 = vsel %vm8420, %v9555, %v9730
        %v9732 = vsel %vm8422, %v9562, %v9731
        %v9733 = vsel %vm8424, %v9569, %v9732
        %v9734 = vsel %vm8426, %v9576, %v9733
        %v9735 = vsel %vm8414, %v9590, %v9583
        %v9736 = vsel %vm8416, %v9597, %v9735
        %v9737 = vsel %vm8418, %v9604, %v9736
        %v9738 = vsel %vm8420, %v9611, %v9737
        %v9739 = vsel %vm8422, %v9618, %v9738
        %v9740 = vsel %vm8424, %v9625, %v9739
        %v9741 = vsel %vm8426, %v9632, %v9740
        %v9742 = vsel %vm8414, %v9646, %v9639
        %v9743 = vsel %vm8416, %v9653, %v9742
        %v9744 = vsel %vm8418, %v9660, %v9743
        %v9745 = vsel %vm8420, %v9667, %v9744
        %v9746 = vsel %vm8422, %v9674, %v9745
        %v9747 = vsel %vm8424, %v9681, %v9746
        %v9748 = vsel %vm8426, %v9688, %v9747
        %9749 = vrot.lane.b32.xlu0 %v9727, 96
        %v9750 = vpop.permute.xlu0 %9749
        %9751 = vrot.lane.b32.xlu0 %v9734, 96
        %v9752 = vpop.permute.xlu0 %9751
        %9753 = vrot.lane.b32.xlu0 %v9741, 96
        %v9754 = vpop.permute.xlu0 %9753
        %9755 = vrot.lane.b32.xlu0 %v9748, 96
        %v9756 = vpop.permute.xlu0 %9755
        %v9793 = vsel %vm8414, %v8096, %v8089
        %v9794 = vsel %vm8416, %v8103, %v9793
        %v9795 = vsel %vm8418, %v8110, %v9794
        %v9796 = vsel %vm8420, %v8117, %v9795
        %v9797 = vsel %vm8422, %v8124, %v9796
        %v9798 = vsel %vm8424, %v8131, %v9797
        %v9799 = vsel %vm8426, %v8138, %v9798
        %v9800 = vsel %vm8414, %v8152, %v8145
        %v9801 = vsel %vm8416, %v8159, %v9800
        %v9802 = vsel %vm8418, %v8166, %v9801
        %v9803 = vsel %vm8420, %v8173, %v9802
        %v9804 = vsel %vm8422, %v8180, %v9803
        %v9805 = vsel %vm8424, %v8187, %v9804
        %v9806 = vsel %vm8426, %v8194, %v9805
        %v9807 = vsel %vm8414, %v8208, %v8201
        %v9808 = vsel %vm8416, %v8215, %v9807
        %v9809 = vsel %vm8418, %v8222, %v9808
        %v9810 = vsel %vm8420, %v8229, %v9809
        %v9811 = vsel %vm8422, %v8236, %v9810
        %v9812 = vsel %vm8424, %v8243, %v9811
        %v9813 = vsel %vm8426, %v8250, %v9812
        %v9814 = vsel %vm8414, %v8264, %v8257
        %v9815 = vsel %vm8416, %v8271, %v9814
        %v9816 = vsel %vm8418, %v8278, %v9815
        %v9817 = vsel %vm8420, %v8285, %v9816
        %v9818 = vsel %vm8422, %v8292, %v9817
        %v9819 = vsel %vm8424, %v8299, %v9818
        %v9820 = vsel %vm8426, %v8306, %v9819
        %v9825 = vsel %vm566, %v9750, %v9799
        %v9826 = vsel %vm566, %v9752, %v9806
        %v9827 = vsel %vm566, %v9754, %v9813
        %v9828 = vsel %vm566, %v9756, %v9820
        %9829 = vst.msk [vmem:[%s455] sm:$0xff] %vm6399, %v9825
        %9830 = vst.msk [vmem:[%s455 + $0x8] sm:$0xff] %vm6399, %v9826
        %9831 = vst.msk [vmem:[%s455 + $0x10] sm:$0xff] %vm6399, %v9827
        %9832 = vst.msk [vmem:[%s455 + $0x18] sm:$0xff] %vm6399, %v9828
        %s9833 = sand.u32 %s306, 1
        %s9834 = scalar_lea.sflag [#allocation3], %s9833
        %s9835 = sand.u32 %s306, 1
        %s9836 = smul.addr %s9835, 32
        %s9837 = scalar_lea.vmem [#allocation2], %s9836
        // Predicated region
        $region69: #{srgnn_layer.1} parent=67 // pred_check
          %p9838 = pneg %p316
        $region70: #{srgnn_layer.1} parent=67 // pred_check_branch
          %9840 = sbr.rel (%p9838) target = $region72
        $region71: #{srgnn_layer.1} parent=67 // pred_region
          %s9841 = smul.u32 4, %s26
          %s9843 = ssub.s32 512, 512
          %9844 = vsyncadd %s9834, %s9843
          %s9845 = smul.addr %s9841, 128
          %s9846 = scalar_lea.hbm %s12, %s9845
          %s9847 = sshll.u32 %s9837, 4
          %s9848 = int_to_ptr.vmem [resolvable:$true] %s9847
          %9853 = dma.vmem_to_hbm [thread:$0]  %s9848, 512, %s9846, %s9834, 128, 128, 8
        $region72: #{srgnn_layer.1} parent=67 // pred_fallthru
          _
      $region68: #{srgnn_layer.1} parent=5 // pred_fallthru
        _
      %p9854 = scmp.le.s32.totalorder 2, %s21
      // Predicated region
      $region73: #{srgnn_layer.1} parent=5 // pred_check
        %p9855 = pneg %p9854
      $region74: #{srgnn_layer.1} parent=5 // pred_check_branch
        %9857 = sbr.rel (%p9855) target = $region76
      $region75: #{srgnn_layer.1} parent=5 // pred_region
        %s9858 = ssub.s32 %s21, 2
        // Predicated region
        $region77: #{srgnn_layer.1} parent=75 // pred_check
          %p9859 = pneg %p322
        $region78: #{srgnn_layer.1} parent=75 // pred_check_branch
          %9861 = sbr.rel (%p9859) target = $region80
        $region79: #{srgnn_layer.1} parent=75 // pred_region
          %s9862 = sand.u32 %s307, 1
          %s9863 = scalar_lea.sflag [#allocation3], %s9862
          %s9864 = sand.u32 %s307, 1
          %s9865 = smul.addr %s9864, 32
          %s9866 = scalar_lea.vmem [#allocation2], %s9865
          %9867 = dma.done %s9863, 512
        $region80: #{srgnn_layer.1} parent=75 // pred_fallthru
          _
      $region76: #{srgnn_layer.1} parent=5 // pred_fallthru
        _
    $region6: #{srgnn_layer.1} parent=1 // loop_footer
      %s25 = sadd.s32 1, %s21
    $region7: #{srgnn_layer.1} parent=1 // loop_footer_branch
      %20 = sbr.rel target = $region3
    $region8: #{srgnn_layer.1} parent=1 // loop_exit
      _
    %9868 = vsyncpa [#allocation3], 1
    %s9869 = scalar_lea.sflag [#allocation3], 1
    %9870 = vsyncpa %s9869, 1

</llo_original>
